<compile_context>
chip_gen: v7x
topology: tpu7x:2x2x1
jax: 0.10.0
libtpu: 0.0.40
codegen_flags: <defaults>
</compile_context>

<pallas_src>
import functools

import jax
import jax.numpy as jnp
from jax.experimental import pallas as pl
from jax.experimental.pallas import tpu as pltpu

NEG_SLOPE = 0.2
IN_EPS = 1e-5


# ----------------------------------------------------------------------------
# Pallas kernels
# ----------------------------------------------------------------------------
def _matmul_bias_act_kernel(x_ref, w_ref, b_ref, o_ref, *, apply_lrelu, neg_slope):
    """o = (x @ w + b), optionally LeakyReLU.  x/w bf16 -> f32 accumulate."""
    acc = jnp.dot(x_ref[...], w_ref[...], preferred_element_type=jnp.float32)
    acc = acc + b_ref[...]                      # (1, Cout) broadcasts over rows
    if apply_lrelu:
        acc = jnp.where(acc >= 0, acc, neg_slope * acc)
    o_ref[...] = acc.astype(o_ref.dtype)


def _conv_s2_in_lrelu_kernel(x_ref, w_ref, o_ref, *, Ho, Wo, k, eps, neg_slope):
    """Fused stride-2 kxk conv + InstanceNorm2d + LeakyReLU for ONE sample.

    x_ref: (1, 8, (Ho+1)*Wo, Cin) bf16  phase-split padded activation.
           slot s = (i%2)*4 + (j%2)*2 + (j//2); row p*Wo+ow of slot s holds
           x_pad[2p + i%2, 2*(ow + j//2) + j%2].
    w_ref: (k*k, Cin, Cout) bf16  per-tap weight slabs (tap index = i*k + j).
    o_ref: (1, Ho*Wo, Cout) bf16  normalized activation.
    """
    m = Ho * Wo
    cout = o_ref.shape[-1]
    acc = jnp.zeros((m, cout), jnp.float32)
    for i in range(k):
        for j in range(k):
            s = (i % 2) * 4 + (j % 2) * 2 + (j // 2)
            r0 = (i // 2) * Wo
            slab = x_ref[0, s, r0:r0 + m, :]            # (Ho*Wo, Cin) bf16
            acc = acc + jnp.dot(slab, w_ref[i * k + j],
                                preferred_element_type=jnp.float32)
    # InstanceNorm2d defaults (affine=False, biased variance) over the spatial
    # axis, then LeakyReLU — all in f32.  Conv bias omitted: it is exactly
    # cancelled by the mean subtraction.
    mean = jnp.mean(acc, axis=0, keepdims=True)
    var = jnp.mean(jnp.square(acc - mean), axis=0, keepdims=True)
    y = (acc - mean) * jax.lax.rsqrt(var + eps)
    y = jnp.where(y >= 0, y, neg_slope * y)
    o_ref[0] = y.astype(o_ref.dtype)


# ----------------------------------------------------------------------------
# Host-side layout helpers (XLA glue)
# ----------------------------------------------------------------------------
def _im2col(x_nhwc, k, stride, pad):
    """kxk patches -> (N*Ho*Wo, k*k*C) with (kh, kw, Cin) inner ordering."""
    if pad > 0:
        x_nhwc = jnp.pad(x_nhwc, ((0, 0), (pad, pad), (pad, pad), (0, 0)))
    N, H, W, C = x_nhwc.shape
    Ho = (H - k) // stride + 1
    Wo = (W - k) // stride + 1
    cols = []
    for i in range(k):
        for j in range(k):
            cols.append(x_nhwc[:, i:i + stride * Ho:stride,
                               j:j + stride * Wo:stride, :])
    patches = jnp.stack(cols, axis=3)                    # (N, Ho, Wo, k*k, C)
    return patches.reshape(N * Ho * Wo, k * k * C), Ho, Wo


def _phase_split_s2(x_nhwc, Ho, Wo, pad=1):
    """Rearrange for stride-2 4x4 tap matmuls: (N, 8, (Ho+1)*Wo, C)."""
    xp = jnp.pad(x_nhwc, ((0, 0), (pad, pad), (pad, pad), (0, 0)))
    N, Hp, Wp, C = xp.shape                              # Hp = 2*(Ho+1)
    slots = []
    for di in range(2):
        for dj in range(2):
            phase = xp[:, di::2, dj::2, :]               # (N, Ho+1, Wo+1, C)
            for qj in range(2):
                s = phase[:, :, qj:qj + Wo, :]           # (N, Ho+1, Wo, C)
                slots.append(s.reshape(N, (Ho + 1) * Wo, C))
    return jnp.stack(slots, axis=1)                      # (N, 8, (Ho+1)*Wo, C)


# ----------------------------------------------------------------------------
# Layer wrappers
# ----------------------------------------------------------------------------
def _conv_matmul_pallas(x_nhwc, w, b, *, stride, pad, lrelu, out_dtype,
                        cout_pad=None, tm=512):
    """Conv2d as im2col + M-tiled Pallas matmul (+bias, optional LeakyReLU)."""
    cout, cin, kh, kw = w.shape
    patches, Ho, Wo = _im2col(x_nhwc.astype(jnp.bfloat16), kh, stride, pad)
    M, K = patches.shape
    TM = M if M <= tm else tm
    Mp = pl.cdiv(M, TM) * TM
    if Mp != M:
        patches = jnp.pad(patches, ((0, Mp - M), (0, 0)))

    w2d = jnp.transpose(w, (2, 3, 1, 0)).reshape(K, cout)   # (kh,kw,Cin,Cout)
    b2d = b.reshape(1, cout)
    co = cout
    if cout_pad is not None and cout < cout_pad:             # lane-dense output
        w2d = jnp.pad(w2d, ((0, 0), (0, cout_pad - cout)))
        b2d = jnp.pad(b2d, ((0, 0), (0, cout_pad - cout)))
        co = cout_pad
    w2d = w2d.astype(jnp.bfloat16)
    b2d = b2d.astype(jnp.float32)

    out2d = pl.pallas_call(
        functools.partial(_matmul_bias_act_kernel,
                          apply_lrelu=lrelu, neg_slope=NEG_SLOPE),
        out_shape=jax.ShapeDtypeStruct((Mp, co), out_dtype),
        grid=(Mp // TM,),
        in_specs=[
            pl.BlockSpec((TM, K), lambda i: (i, 0)),
            pl.BlockSpec((K, co), lambda i: (0, 0)),
            pl.BlockSpec((1, co), lambda i: (0, 0)),
        ],
        out_specs=pl.BlockSpec((TM, co), lambda i: (i, 0)),
        compiler_params=pltpu.CompilerParams(
            dimension_semantics=("parallel",)),
    )(patches, w2d, b2d)

    N = x_nhwc.shape[0]
    return out2d[:M, :cout].reshape(N, Ho, Wo, cout)


def conv_in_lrelu_pallas(x_nhwc, w):
    """Conv2d(k=4, s=2, p=1, bias dropped) + InstanceNorm2d + LeakyReLU(0.2)."""
    N, H, W, cin = x_nhwc.shape
    cout, _, k, _ = w.shape
    Ho, Wo = H // 2, W // 2
    xs = _phase_split_s2(x_nhwc.astype(jnp.bfloat16), Ho, Wo, pad=1)
    wt = jnp.transpose(w, (2, 3, 1, 0)).reshape(k * k, cin, cout)
    wt = wt.astype(jnp.bfloat16)

    out = pl.pallas_call(
        functools.partial(_conv_s2_in_lrelu_kernel, Ho=Ho, Wo=Wo, k=k,
                          eps=IN_EPS, neg_slope=NEG_SLOPE),
        out_shape=jax.ShapeDtypeStruct((N, Ho * Wo, cout), jnp.bfloat16),
        grid=(N,),
        in_specs=[
            pl.BlockSpec((1, 8, (Ho + 1) * Wo, cin), lambda n: (n, 0, 0, 0)),
            pl.BlockSpec((k * k, cin, cout), lambda n: (0, 0, 0)),
        ],
        out_specs=pl.BlockSpec((1, Ho * Wo, cout), lambda n: (n, 0, 0)),
        compiler_params=pltpu.CompilerParams(
            dimension_semantics=("parallel",)),
    )(xs, wt)
    return out.reshape(N, Ho, Wo, cout)


# ----------------------------------------------------------------------------
# Full Discriminator forward
# ----------------------------------------------------------------------------
def discriminator_forward(img_nchw, params):
    """Conv(3->64,4,2,1)+LReLU ; [Conv+IN+LReLU]x2 ; ZeroPad2d((1,0,1,0)) ; Conv(256->1,4,1,1)."""
    x = jnp.transpose(img_nchw, (0, 2, 3, 1))            # NCHW -> NHWC

    x = _conv_matmul_pallas(x, params["w1"], params["b1"], stride=2, pad=1,
                            lrelu=True, out_dtype=jnp.bfloat16)

    x = conv_in_lrelu_pallas(x, params["w2"])            # b2 cancelled by IN
    x = conv_in_lrelu_pallas(x, params["w3"])            # b3 cancelled by IN

    # ZeroPad2d((left=1,right=0,top=1,bottom=0)) folded with the conv's pad=1.
    x = jnp.pad(x, ((0, 0), (2, 1), (2, 1), (0, 0)))
    x = _conv_matmul_pallas(x, params["w4"], params["b4"], stride=1, pad=0,
                            lrelu=False, out_dtype=jnp.float32, cout_pad=128)

    return jnp.transpose(x, (0, 3, 1, 2))                # NHWC -> NCHW


# ----------------------------------------------------------------------------
# Pure-JAX reference (same bf16-operand / f32-accumulate numerics policy)
# ----------------------------------------------------------------------------
def _ref_conv(x, w, b, stride, pad):
    y = jax.lax.conv_general_dilated(
        x.astype(jnp.bfloat16),
        jnp.transpose(w, (2, 3, 1, 0)).astype(jnp.bfloat16),
        window_strides=(stride, stride),
        padding=((pad, pad), (pad, pad)),
        dimension_numbers=("NHWC", "HWIO", "NHWC"),
        preferred_element_type=jnp.float32)
    return y + b.reshape(1, 1, 1, -1)


def _ref_instnorm_lrelu(x, eps=IN_EPS, slope=NEG_SLOPE):
    m = jnp.mean(x, axis=(1, 2), keepdims=True)
    v = jnp.mean((x - m) ** 2, axis=(1, 2), keepdims=True)
    y = (x - m) * jax.lax.rsqrt(v + eps)
    return jnp.where(y >= 0, y, slope * y)


def _ref_forward(img_nchw, p):
    x = jnp.transpose(img_nchw, (0, 2, 3, 1))
    x = _ref_conv(x, p["w1"], p["b1"], 2, 1)
    x = jnp.where(x >= 0, x, NEG_SLOPE * x).astype(jnp.bfloat16)
    x = _ref_instnorm_lrelu(_ref_conv(x, p["w2"], p["b2"], 2, 1)).astype(jnp.bfloat16)
    x = _ref_instnorm_lrelu(_ref_conv(x, p["w3"], p["b3"], 2, 1)).astype(jnp.bfloat16)
    x = jnp.pad(x, ((0, 0), (1, 0), (1, 0), (0, 0)))
    x = _ref_conv(x, p["w4"], p["b4"], 1, 1)
    return jnp.transpose(x, (0, 3, 1, 2))


# ----------------------------------------------------------------------------
# Deterministic parameter init (PyTorch-style uniform(-1/sqrt(fan_in), ...))
# ----------------------------------------------------------------------------
def init_params(key):
    shapes = {
        "w1": (64, 3, 4, 4), "b1": (64,),
        "w2": (128, 64, 4, 4), "b2": (128,),
        "w3": (256, 128, 4, 4), "b3": (256,),
        "w4": (1, 256, 4, 4), "b4": (1,),
    }
    params = {}
    keys = jax.random.split(key, len(shapes))
    for k_rng, (name, shp) in zip(keys, shapes.items()):
        if name.startswith("w"):
            fan_in = shp[1] * shp[2] * shp[3]
        else:
            fan_in = shapes["w" + name[1]][1] * 16
        bound = 1.0 / (fan_in ** 0.5)
        params[name] = jax.random.uniform(
            k_rng, shp, dtype=jnp.float32, minval=-bound, maxval=bound)
    return params


if __name__ == "__main__":
    key = jax.random.PRNGKey(0)
    pkey, xkey = jax.random.split(key)
    params = init_params(pkey)

    # NCHW, in_channels=3, 16x16 spatial (small but consistent with the module).
    img = jax.random.normal(xkey, (2, 3, 16, 16), dtype=jnp.float32)

    out = jax.jit(discriminator_forward)(img, params)
    out = jax.block_until_ready(out)

    ref = _ref_forward(img, params)
    assert out.shape == (2, 1, 2, 2), out.shape
    max_err = float(jnp.max(jnp.abs(out - ref)))
    assert jnp.allclose(out, ref, atol=2e-2, rtol=2e-2), max_err

    print("KERNEL_OK")
</pallas_src>

<mosaic_0001>
module attributes {stable_mosaic.version = 11 : i64} {
  func.func @_matmul_bias_act_kernel(%arg0: i32, %arg1: memref<128x48xbf16, #tpu.memory_space<vmem>>, %arg2: memref<48x64xbf16, #tpu.memory_space<vmem>>, %arg3: memref<1x64xf32, #tpu.memory_space<vmem>>, %arg4: memref<128x64xbf16, #tpu.memory_space<vmem>>) attributes {dimension_semantics = [#tpu.dimension_semantics<parallel>], iteration_bounds = array<i64: 1>, scalar_prefetch = 0 : i64, scratch_operands = 0 : i64, tpu.core_type = #tpu.core_type<tc>, window_params = [{transform_indices = @transform_0, window_bounds = array<i64: 128, 48>}, {pipeline_mode = #tpu.pipeline_mode<synchronous>, transform_indices = @transform_1, window_bounds = array<i64: 48, 64>}, {pipeline_mode = #tpu.pipeline_mode<synchronous>, transform_indices = @transform_2, window_bounds = array<i64: 1, 64>}, {transform_indices = @transform_3, window_bounds = array<i64: 128, 64>}]} {
    %c0 = arith.constant 0 : index
    %c0_0 = arith.constant 0 : index
    %0 = vector.load %arg1[%c0, %c0_0] : memref<128x48xbf16, #tpu.memory_space<vmem>>, vector<128x48xbf16>
    %c0_1 = arith.constant 0 : index
    %c0_2 = arith.constant 0 : index
    %1 = vector.load %arg2[%c0_1, %c0_2] : memref<48x64xbf16, #tpu.memory_space<vmem>>, vector<48x64xbf16>
    %cst = arith.constant dense<0.000000e+00> : vector<128x64xf32>
    %2 = tpu.matmul %0, %1, %cst {dimension_numbers = #tpu.dot_dimension_numbers<[1], [0], [0], [1], [0, 0, 1, 1], [], []>} : vector<128x48xbf16>, vector<48x64xbf16>, vector<128x64xf32> -> vector<128x64xf32>
    %c0_3 = arith.constant 0 : index
    %c0_4 = arith.constant 0 : index
    %3 = vector.load %arg3[%c0_3, %c0_4] : memref<1x64xf32, #tpu.memory_space<vmem>>, vector<1x64xf32>
    %4 = vector.broadcast %3 : vector<1x64xf32> to vector<128x64xf32>
    %5 = arith.addf %2, %4 : vector<128x64xf32>
    %cst_5 = arith.constant 0.000000e+00 : f32
    %6 = vector.broadcast %cst_5 : f32 to vector<128x64xf32>
    %7 = arith.cmpf oge, %5, %6 : vector<128x64xf32>
    %cst_6 = arith.constant 2.000000e-01 : f32
    %8 = vector.broadcast %cst_6 : f32 to vector<128x64xf32>
    %9 = arith.mulf %8, %5 : vector<128x64xf32>
    %10 = arith.select %7, %5, %9 : vector<128x64xi1>, vector<128x64xf32>
    %11 = arith.truncf %10 : vector<128x64xf32> to vector<128x64xbf16>
    %c0_7 = arith.constant 0 : index
    %c0_8 = arith.constant 0 : index
    %12 = vector.load %arg4[%c0_7, %c0_8] : memref<128x64xbf16, #tpu.memory_space<vmem>>, vector<128x64xbf16>
    tpu.vector_store %arg4[%c0_7, %c0_8], %11 {strides = array<i32>} : memref<128x64xbf16, #tpu.memory_space<vmem>>, vector<128x64xbf16>,
    return
  }
  func.func @transform_0(%arg0: i32) -> (i32, i32) {
    %c0_i32 = arith.constant 0 : i32
    %c0_i32_0 = arith.constant 0 : i32
    return %arg0, %c0_i32 : i32, i32
  }
  func.func @transform_1(%arg0: i32) -> (i32, i32) {
    %c0_i32 = arith.constant 0 : i32
    %c0_i32_0 = arith.constant 0 : i32
    %c0_i32_1 = arith.constant 0 : i32
    return %c0_i32, %c0_i32_0 : i32, i32
  }
  func.func @transform_2(%arg0: i32) -> (i32, i32) {
    %c0_i32 = arith.constant 0 : i32
    %c0_i32_0 = arith.constant 0 : i32
    %c0_i32_1 = arith.constant 0 : i32
    return %c0_i32, %c0_i32_0 : i32, i32
  }
  func.func @transform_3(%arg0: i32) -> (i32, i32) {
    %c0_i32 = arith.constant 0 : i32
    %c0_i32_0 = arith.constant 0 : i32
    return %arg0, %c0_i32 : i32, i32
  }
}

module attributes {stable_mosaic.version = 11 : i64} {
  func.func @_conv_s2_in_lrelu_kernel(%arg0: i32, %arg1: memref<1x8x20x64xbf16, #tpu.memory_space<vmem>>, %arg2: memref<16x64x128xbf16, #tpu.memory_space<vmem>>, %arg3: memref<1x16x128xbf16, #tpu.memory_space<vmem>>) attributes {dimension_semantics = [#tpu.dimension_semantics<parallel>], iteration_bounds = array<i64: 2>, scalar_prefetch = 0 : i64, scratch_operands = 0 : i64, tpu.core_type = #tpu.core_type<tc>, window_params = [{transform_indices = @transform_0, window_bounds = array<i64: 1, 8, 20, 64>}, {pipeline_mode = #tpu.pipeline_mode<synchronous>, transform_indices = @transform_1, window_bounds = array<i64: 16, 64, 128>}, {transform_indices = @transform_2, window_bounds = array<i64: 1, 16, 128>}]} {
    %cst = arith.constant 0.000000e+00 : f32
    %0 = vector.broadcast %cst : f32 to vector<16x128xf32>
    %c0 = arith.constant 0 : index
    %c0_0 = arith.constant 0 : index
    %c0_1 = arith.constant 0 : index
    %c0_2 = arith.constant 0 : index
    %1 = vector.load %arg1[%c0, %c0_0, %c0_1, %c0_2] : memref<1x8x20x64xbf16, #tpu.memory_space<vmem>>, vector<1x1x16x64xbf16>
    %2 = vector.shape_cast %1 : vector<1x1x16x64xbf16> to vector<16x64xbf16>
    %c0_3 = arith.constant 0 : index
    %c0_4 = arith.constant 0 : index
    %c0_5 = arith.constant 0 : index
    %3 = vector.load %arg2[%c0_3, %c0_4, %c0_5] : memref<16x64x128xbf16, #tpu.memory_space<vmem>>, vector<1x64x128xbf16>
    %4 = vector.shape_cast %3 : vector<1x64x128xbf16> to vector<64x128xbf16>
    %cst_6 = arith.constant dense<0.000000e+00> : vector<16x128xf32>
    %5 = tpu.matmul %2, %4, %cst_6 {dimension_numbers = #tpu.dot_dimension_numbers<[1], [0], [0], [1], [0, 0, 1, 1], [], []>} : vector<16x64xbf16>, vector<64x128xbf16>, vector<16x128xf32> -> vector<16x128xf32>
    %6 = arith.addf %0, %5 : vector<16x128xf32>
    %c0_7 = arith.constant 0 : index
    %c2 = arith.constant 2 : index
    %c0_8 = arith.constant 0 : index
    %c0_9 = arith.constant 0 : index
    %7 = vector.load %arg1[%c0_7, %c2, %c0_8, %c0_9] : memref<1x8x20x64xbf16, #tpu.memory_space<vmem>>, vector<1x1x16x64xbf16>
    %8 = vector.shape_cast %7 : vector<1x1x16x64xbf16> to vector<16x64xbf16>
    %c1 = arith.constant 1 : index
    %c0_10 = arith.constant 0 : index
    %c0_11 = arith.constant 0 : index
    %9 = vector.load %arg2[%c1, %c0_10, %c0_11] : memref<16x64x128xbf16, #tpu.memory_space<vmem>>, vector<1x64x128xbf16>
    %10 = vector.shape_cast %9 : vector<1x64x128xbf16> to vector<64x128xbf16>
    %cst_12 = arith.constant dense<0.000000e+00> : vector<16x128xf32>
    %11 = tpu.matmul %8, %10, %cst_12 {dimension_numbers = #tpu.dot_dimension_numbers<[1], [0], [0], [1], [0, 0, 1, 1], [], []>} : vector<16x64xbf16>, vector<64x128xbf16>, vector<16x128xf32> -> vector<16x128xf32>
    %12 = arith.addf %6, %11 : vector<16x128xf32>
    %c0_13 = arith.constant 0 : index
    %c1_14 = arith.constant 1 : index
    %c0_15 = arith.constant 0 : index
    %c0_16 = arith.constant 0 : index
    %13 = vector.load %arg1[%c0_13, %c1_14, %c0_15, %c0_16] : memref<1x8x20x64xbf16, #tpu.memory_space<vmem>>, vector<1x1x16x64xbf16>
    %14 = vector.shape_cast %13 : vector<1x1x16x64xbf16> to vector<16x64xbf16>
    %c2_17 = arith.constant 2 : index
    %c0_18 = arith.constant 0 : index
    %c0_19 = arith.constant 0 : index
    %15 = vector.load %arg2[%c2_17, %c0_18, %c0_19] : memref<16x64x128xbf16, #tpu.memory_space<vmem>>, vector<1x64x128xbf16>
    %16 = vector.shape_cast %15 : vector<1x64x128xbf16> to vector<64x128xbf16>
    %cst_20 = arith.constant dense<0.000000e+00> : vector<16x128xf32>
    %17 = tpu.matmul %14, %16, %cst_20 {dimension_numbers = #tpu.dot_dimension_numbers<[1], [0], [0], [1], [0, 0, 1, 1], [], []>} : vector<16x64xbf16>, vector<64x128xbf16>, vector<16x128xf32> -> vector<16x128xf32>
    %18 = arith.addf %12, %17 : vector<16x128xf32>
    %c0_21 = arith.constant 0 : index
    %c3 = arith.constant 3 : index
    %c0_22 = arith.constant 0 : index
    %c0_23 = arith.constant 0 : index
    %19 = vector.load %arg1[%c0_21, %c3, %c0_22, %c0_23] : memref<1x8x20x64xbf16, #tpu.memory_space<vmem>>, vector<1x1x16x64xbf16>
    %20 = vector.shape_cast %19 : vector<1x1x16x64xbf16> to vector<16x64xbf16>
    %c3_24 = arith.constant 3 : index
    %c0_25 = arith.constant 0 : index
    %c0_26 = arith.constant 0 : index
    %21 = vector.load %arg2[%c3_24, %c0_25, %c0_26] : memref<16x64x128xbf16, #tpu.memory_space<vmem>>, vector<1x64x128xbf16>
    %22 = vector.shape_cast %21 : vector<1x64x128xbf16> to vector<64x128xbf16>
    %cst_27 = arith.constant dense<0.000000e+00> : vector<16x128xf32>
    %23 = tpu.matmul %20, %22, %cst_27 {dimension_numbers = #tpu.dot_dimension_numbers<[1], [0], [0], [1], [0, 0, 1, 1], [], []>} : vector<16x64xbf16>, vector<64x128xbf16>, vector<16x128xf32> -> vector<16x128xf32>
    %24 = arith.addf %18, %23 : vector<16x128xf32>
    %c0_28 = arith.constant 0 : index
    %c4 = arith.constant 4 : index
    %c0_29 = arith.constant 0 : index
    %c0_30 = arith.constant 0 : index
    %25 = vector.load %arg1[%c0_28, %c4, %c0_29, %c0_30] : memref<1x8x20x64xbf16, #tpu.memory_space<vmem>>, vector<1x1x16x64xbf16>
    %26 = vector.shape_cast %25 : vector<1x1x16x64xbf16> to vector<16x64xbf16>
    %c4_31 = arith.constant 4 : index
    %c0_32 = arith.constant 0 : index
    %c0_33 = arith.constant 0 : index
    %27 = vector.load %arg2[%c4_31, %c0_32, %c0_33] : memref<16x64x128xbf16, #tpu.memory_space<vmem>>, vector<1x64x128xbf16>
    %28 = vector.shape_cast %27 : vector<1x64x128xbf16> to vector<64x128xbf16>
    %cst_34 = arith.constant dense<0.000000e+00> : vector<16x128xf32>
    %29 = tpu.matmul %26, %28, %cst_34 {dimension_numbers = #tpu.dot_dimension_numbers<[1], [0], [0], [1], [0, 0, 1, 1], [], []>} : vector<16x64xbf16>, vector<64x128xbf16>, vector<16x128xf32> -> vector<16x128xf32>
    %30 = arith.addf %24, %29 : vector<16x128xf32>
    %c0_35 = arith.constant 0 : index
    %c6 = arith.constant 6 : index
    %c0_36 = arith.constant 0 : index
    %c0_37 = arith.constant 0 : index
    %31 = vector.load %arg1[%c0_35, %c6, %c0_36, %c0_37] : memref<1x8x20x64xbf16, #tpu.memory_space<vmem>>, vector<1x1x16x64xbf16>
    %32 = vector.shape_cast %31 : vector<1x1x16x64xbf16> to vector<16x64xbf16>
    %c5 = arith.constant 5 : index
    %c0_38 = arith.constant 0 : index
    %c0_39 = arith.constant 0 : index
    %33 = vector.load %arg2[%c5, %c0_38, %c0_39] : memref<16x64x128xbf16, #tpu.memory_space<vmem>>, vector<1x64x128xbf16>
    %34 = vector.shape_cast %33 : vector<1x64x128xbf16> to vector<64x128xbf16>
    %cst_40 = arith.constant dense<0.000000e+00> : vector<16x128xf32>
    %35 = tpu.matmul %32, %34, %cst_40 {dimension_numbers = #tpu.dot_dimension_numbers<[1], [0], [0], [1], [0, 0, 1, 1], [], []>} : vector<16x64xbf16>, vector<64x128xbf16>, vector<16x128xf32> -> vector<16x128xf32>
    %36 = arith.addf %30, %35 : vector<16x128xf32>
    %c0_41 = arith.constant 0 : index
    %c5_42 = arith.constant 5 : index
    %c0_43 = arith.constant 0 : index
    %c0_44 = arith.constant 0 : index
    %37 = vector.load %arg1[%c0_41, %c5_42, %c0_43, %c0_44] : memref<1x8x20x64xbf16, #tpu.memory_space<vmem>>, vector<1x1x16x64xbf16>
    %38 = vector.shape_cast %37 : vector<1x1x16x64xbf16> to vector<16x64xbf16>
    %c6_45 = arith.constant 6 : index
    %c0_46 = arith.constant 0 : index
    %c0_47 = arith.constant 0 : index
    %39 = vector.load %arg2[%c6_45, %c0_46, %c0_47] : memref<16x64x128xbf16, #tpu.memory_space<vmem>>, vector<1x64x128xbf16>
    %40 = vector.shape_cast %39 : vector<1x64x128xbf16> to vector<64x128xbf16>
    %cst_48 = arith.constant dense<0.000000e+00> : vector<16x128xf32>
    %41 = tpu.matmul %38, %40, %cst_48 {dimension_numbers = #tpu.dot_dimension_numbers<[1], [0], [0], [1], [0, 0, 1, 1], [], []>} : vector<16x64xbf16>, vector<64x128xbf16>, vector<16x128xf32> -> vector<16x128xf32>
    %42 = arith.addf %36, %41 : vector<16x128xf32>
    %c0_49 = arith.constant 0 : index
    %c7 = arith.constant 7 : index
    %c0_50 = arith.constant 0 : index
    %c0_51 = arith.constant 0 : index
    %43 = vector.load %arg1[%c0_49, %c7, %c0_50, %c0_51] : memref<1x8x20x64xbf16, #tpu.memory_space<vmem>>, vector<1x1x16x64xbf16>
    %44 = vector.shape_cast %43 : vector<1x1x16x64xbf16> to vector<16x64xbf16>
    %c7_52 = arith.constant 7 : index
    %c0_53 = arith.constant 0 : index
    %c0_54 = arith.constant 0 : index
    %45 = vector.load %arg2[%c7_52, %c0_53, %c0_54] : memref<16x64x128xbf16, #tpu.memory_space<vmem>>, vector<1x64x128xbf16>
    %46 = vector.shape_cast %45 : vector<1x64x128xbf16> to vector<64x128xbf16>
    %cst_55 = arith.constant dense<0.000000e+00> : vector<16x128xf32>
    %47 = tpu.matmul %44, %46, %cst_55 {dimension_numbers = #tpu.dot_dimension_numbers<[1], [0], [0], [1], [0, 0, 1, 1], [], []>} : vector<16x64xbf16>, vector<64x128xbf16>, vector<16x128xf32> -> vector<16x128xf32>
    %48 = arith.addf %42, %47 : vector<16x128xf32>
    %c0_56 = arith.constant 0 : index
    %c0_57 = arith.constant 0 : index
    %c4_58 = arith.constant 4 : index
    %c0_59 = arith.constant 0 : index
    %49 = vector.load %arg1[%c0_56, %c0_57, %c4_58, %c0_59] : memref<1x8x20x64xbf16, #tpu.memory_space<vmem>>, vector<1x1x16x64xbf16>
    %50 = vector.shape_cast %49 : vector<1x1x16x64xbf16> to vector<16x64xbf16>
    %c8 = arith.constant 8 : index
    %c0_60 = arith.constant 0 : index
    %c0_61 = arith.constant 0 : index
    %51 = vector.load %arg2[%c8, %c0_60, %c0_61] : memref<16x64x128xbf16, #tpu.memory_space<vmem>>, vector<1x64x128xbf16>
    %52 = vector.shape_cast %51 : vector<1x64x128xbf16> to vector<64x128xbf16>
    %cst_62 = arith.constant dense<0.000000e+00> : vector<16x128xf32>
    %53 = tpu.matmul %50, %52, %cst_62 {dimension_numbers = #tpu.dot_dimension_numbers<[1], [0], [0], [1], [0, 0, 1, 1], [], []>} : vector<16x64xbf16>, vector<64x128xbf16>, vector<16x128xf32> -> vector<16x128xf32>
    %54 = arith.addf %48, %53 : vector<16x128xf32>
    %c0_63 = arith.constant 0 : index
    %c2_64 = arith.constant 2 : index
    %c4_65 = arith.constant 4 : index
    %c0_66 = arith.constant 0 : index
    %55 = vector.load %arg1[%c0_63, %c2_64, %c4_65, %c0_66] : memref<1x8x20x64xbf16, #tpu.memory_space<vmem>>, vector<1x1x16x64xbf16>
    %56 = vector.shape_cast %55 : vector<1x1x16x64xbf16> to vector<16x64xbf16>
    %c9 = arith.constant 9 : index
    %c0_67 = arith.constant 0 : index
    %c0_68 = arith.constant 0 : index
    %57 = vector.load %arg2[%c9, %c0_67, %c0_68] : memref<16x64x128xbf16, #tpu.memory_space<vmem>>, vector<1x64x128xbf16>
    %58 = vector.shape_cast %57 : vector<1x64x128xbf16> to vector<64x128xbf16>
    %cst_69 = arith.constant dense<0.000000e+00> : vector<16x128xf32>
    %59 = tpu.matmul %56, %58, %cst_69 {dimension_numbers = #tpu.dot_dimension_numbers<[1], [0], [0], [1], [0, 0, 1, 1], [], []>} : vector<16x64xbf16>, vector<64x128xbf16>, vector<16x128xf32> -> vector<16x128xf32>
    %60 = arith.addf %54, %59 : vector<16x128xf32>
    %c0_70 = arith.constant 0 : index
    %c1_71 = arith.constant 1 : index
    %c4_72 = arith.constant 4 : index
    %c0_73 = arith.constant 0 : index
    %61 = vector.load %arg1[%c0_70, %c1_71, %c4_72, %c0_73] : memref<1x8x20x64xbf16, #tpu.memory_space<vmem>>, vector<1x1x16x64xbf16>
    %62 = vector.shape_cast %61 : vector<1x1x16x64xbf16> to vector<16x64xbf16>
    %c10 = arith.constant 10 : index
    %c0_74 = arith.constant 0 : index
    %c0_75 = arith.constant 0 : index
    %63 = vector.load %arg2[%c10, %c0_74, %c0_75] : memref<16x64x128xbf16, #tpu.memory_space<vmem>>, vector<1x64x128xbf16>
    %64 = vector.shape_cast %63 : vector<1x64x128xbf16> to vector<64x128xbf16>
    %cst_76 = arith.constant dense<0.000000e+00> : vector<16x128xf32>
    %65 = tpu.matmul %62, %64, %cst_76 {dimension_numbers = #tpu.dot_dimension_numbers<[1], [0], [0], [1], [0, 0, 1, 1], [], []>} : vector<16x64xbf16>, vector<64x128xbf16>, vector<16x128xf32> -> vector<16x128xf32>
    %66 = arith.addf %60, %65 : vector<16x128xf32>
    %c0_77 = arith.constant 0 : index
    %c3_78 = arith.constant 3 : index
    %c4_79 = arith.constant 4 : index
    %c0_80 = arith.constant 0 : index
    %67 = vector.load %arg1[%c0_77, %c3_78, %c4_79, %c0_80] : memref<1x8x20x64xbf16, #tpu.memory_space<vmem>>, vector<1x1x16x64xbf16>
    %68 = vector.shape_cast %67 : vector<1x1x16x64xbf16> to vector<16x64xbf16>
    %c11 = arith.constant 11 : index
    %c0_81 = arith.constant 0 : index
    %c0_82 = arith.constant 0 : index
    %69 = vector.load %arg2[%c11, %c0_81, %c0_82] : memref<16x64x128xbf16, #tpu.memory_space<vmem>>, vector<1x64x128xbf16>
    %70 = vector.shape_cast %69 : vector<1x64x128xbf16> to vector<64x128xbf16>
    %cst_83 = arith.constant dense<0.000000e+00> : vector<16x128xf32>
    %71 = tpu.matmul %68, %70, %cst_83 {dimension_numbers = #tpu.dot_dimension_numbers<[1], [0], [0], [1], [0, 0, 1, 1], [], []>} : vector<16x64xbf16>, vector<64x128xbf16>, vector<16x128xf32> -> vector<16x128xf32>
    %72 = arith.addf %66, %71 : vector<16x128xf32>
    %c0_84 = arith.constant 0 : index
    %c4_85 = arith.constant 4 : index
    %c4_86 = arith.constant 4 : index
    %c0_87 = arith.constant 0 : index
    %73 = vector.load %arg1[%c0_84, %c4_85, %c4_86, %c0_87] : memref<1x8x20x64xbf16, #tpu.memory_space<vmem>>, vector<1x1x16x64xbf16>
    %74 = vector.shape_cast %73 : vector<1x1x16x64xbf16> to vector<16x64xbf16>
    %c12 = arith.constant 12 : index
    %c0_88 = arith.constant 0 : index
    %c0_89 = arith.constant 0 : index
    %75 = vector.load %arg2[%c12, %c0_88, %c0_89] : memref<16x64x128xbf16, #tpu.memory_space<vmem>>, vector<1x64x128xbf16>
    %76 = vector.shape_cast %75 : vector<1x64x128xbf16> to vector<64x128xbf16>
    %cst_90 = arith.constant dense<0.000000e+00> : vector<16x128xf32>
    %77 = tpu.matmul %74, %76, %cst_90 {dimension_numbers = #tpu.dot_dimension_numbers<[1], [0], [0], [1], [0, 0, 1, 1], [], []>} : vector<16x64xbf16>, vector<64x128xbf16>, vector<16x128xf32> -> vector<16x128xf32>
    %78 = arith.addf %72, %77 : vector<16x128xf32>
    %c0_91 = arith.constant 0 : index
    %c6_92 = arith.constant 6 : index
    %c4_93 = arith.constant 4 : index
    %c0_94 = arith.constant 0 : index
    %79 = vector.load %arg1[%c0_91, %c6_92, %c4_93, %c0_94] : memref<1x8x20x64xbf16, #tpu.memory_space<vmem>>, vector<1x1x16x64xbf16>
    %80 = vector.shape_cast %79 : vector<1x1x16x64xbf16> to vector<16x64xbf16>
    %c13 = arith.constant 13 : index
    %c0_95 = arith.constant 0 : index
    %c0_96 = arith.constant 0 : index
    %81 = vector.load %arg2[%c13, %c0_95, %c0_96] : memref<16x64x128xbf16, #tpu.memory_space<vmem>>, vector<1x64x128xbf16>
    %82 = vector.shape_cast %81 : vector<1x64x128xbf16> to vector<64x128xbf16>
    %cst_97 = arith.constant dense<0.000000e+00> : vector<16x128xf32>
    %83 = tpu.matmul %80, %82, %cst_97 {dimension_numbers = #tpu.dot_dimension_numbers<[1], [0], [0], [1], [0, 0, 1, 1], [], []>} : vector<16x64xbf16>, vector<64x128xbf16>, vector<16x128xf32> -> vector<16x128xf32>
    %84 = arith.addf %78, %83 : vector<16x128xf32>
    %c0_98 = arith.constant 0 : index
    %c5_99 = arith.constant 5 : index
    %c4_100 = arith.constant 4 : index
    %c0_101 = arith.constant 0 : index
    %85 = vector.load %arg1[%c0_98, %c5_99, %c4_100, %c0_101] : memref<1x8x20x64xbf16, #tpu.memory_space<vmem>>, vector<1x1x16x64xbf16>
    %86 = vector.shape_cast %85 : vector<1x1x16x64xbf16> to vector<16x64xbf16>
    %c14 = arith.constant 14 : index
    %c0_102 = arith.constant 0 : index
    %c0_103 = arith.constant 0 : index
    %87 = vector.load %arg2[%c14, %c0_102, %c0_103] : memref<16x64x128xbf16, #tpu.memory_space<vmem>>, vector<1x64x128xbf16>
    %88 = vector.shape_cast %87 : vector<1x64x128xbf16> to vector<64x128xbf16>
    %cst_104 = arith.constant dense<0.000000e+00> : vector<16x128xf32>
    %89 = tpu.matmul %86, %88, %cst_104 {dimension_numbers = #tpu.dot_dimension_numbers<[1], [0], [0], [1], [0, 0, 1, 1], [], []>} : vector<16x64xbf16>, vector<64x128xbf16>, vector<16x128xf32> -> vector<16x128xf32>
    %90 = arith.addf %84, %89 : vector<16x128xf32>
    %c0_105 = arith.constant 0 : index
    %c7_106 = arith.constant 7 : index
    %c4_107 = arith.constant 4 : index
    %c0_108 = arith.constant 0 : index
    %91 = vector.load %arg1[%c0_105, %c7_106, %c4_107, %c0_108] : memref<1x8x20x64xbf16, #tpu.memory_space<vmem>>, vector<1x1x16x64xbf16>
    %92 = vector.shape_cast %91 : vector<1x1x16x64xbf16> to vector<16x64xbf16>
    %c15 = arith.constant 15 : index
    %c0_109 = arith.constant 0 : index
    %c0_110 = arith.constant 0 : index
    %93 = vector.load %arg2[%c15, %c0_109, %c0_110] : memref<16x64x128xbf16, #tpu.memory_space<vmem>>, vector<1x64x128xbf16>
    %94 = vector.shape_cast %93 : vector<1x64x128xbf16> to vector<64x128xbf16>
    %cst_111 = arith.constant dense<0.000000e+00> : vector<16x128xf32>
    %95 = tpu.matmul %92, %94, %cst_111 {dimension_numbers = #tpu.dot_dimension_numbers<[1], [0], [0], [1], [0, 0, 1, 1], [], []>} : vector<16x64xbf16>, vector<64x128xbf16>, vector<16x128xf32> -> vector<16x128xf32>
    %96 = arith.addf %90, %95 : vector<16x128xf32>
    %cst_112 = arith.constant dense<0.000000e+00> : vector<128xf32>
    %97 = vector.multi_reduction <add>, %96, %cst_112 [0] : vector<16x128xf32> to vector<128xf32>
    %98 = vector.shape_cast %97 : vector<128xf32> to vector<1x128xf32>
    %cst_113 = arith.constant 1.600000e+01 : f32
    %99 = vector.broadcast %cst_113 : f32 to vector<1x128xf32>
    %100 = arith.divf %98, %99 : vector<1x128xf32>
    %101 = vector.broadcast %100 : vector<1x128xf32> to vector<16x128xf32>
    %102 = arith.subf %96, %101 : vector<16x128xf32>
    %103 = arith.mulf %102, %102 : vector<16x128xf32>
    %cst_114 = arith.constant dense<0.000000e+00> : vector<128xf32>
    %104 = vector.multi_reduction <add>, %103, %cst_114 [0] : vector<16x128xf32> to vector<128xf32>
    %105 = vector.shape_cast %104 : vector<128xf32> to vector<1x128xf32>
    %cst_115 = arith.constant 1.600000e+01 : f32
    %106 = vector.broadcast %cst_115 : f32 to vector<1x128xf32>
    %107 = arith.divf %105, %106 : vector<1x128xf32>
    %108 = vector.broadcast %100 : vector<1x128xf32> to vector<16x128xf32>
    %109 = arith.subf %96, %108 : vector<16x128xf32>
    %cst_116 = arith.constant 9.99999974E-6 : f32
    %110 = vector.broadcast %cst_116 : f32 to vector<1x128xf32>
    %111 = arith.addf %107, %110 : vector<1x128xf32>
    %112 = math.rsqrt %111 : vector<1x128xf32>
    %113 = vector.broadcast %112 : vector<1x128xf32> to vector<16x128xf32>
    %114 = arith.mulf %109, %113 : vector<16x128xf32>
    %cst_117 = arith.constant 0.000000e+00 : f32
    %115 = vector.broadcast %cst_117 : f32 to vector<16x128xf32>
    %116 = arith.cmpf oge, %114, %115 : vector<16x128xf32>
    %cst_118 = arith.constant 2.000000e-01 : f32
    %117 = vector.broadcast %cst_118 : f32 to vector<16x128xf32>
    %118 = arith.mulf %117, %114 : vector<16x128xf32>
    %119 = arith.select %116, %114, %118 : vector<16x128xi1>, vector<16x128xf32>
    %120 = arith.truncf %119 : vector<16x128xf32> to vector<16x128xbf16>
    %c0_119 = arith.constant 0 : index
    %c0_120 = arith.constant 0 : index
    %c0_121 = arith.constant 0 : index
    %121 = vector.load %arg3[%c0_119, %c0_120, %c0_121] : memref<1x16x128xbf16, #tpu.memory_space<vmem>>, vector<1x16x128xbf16>
    %122 = vector.shape_cast %121 : vector<1x16x128xbf16> to vector<16x128xbf16>
    %123 = vector.shape_cast %120 : vector<16x128xbf16> to vector<1x16x128xbf16>
    tpu.vector_store %arg3[%c0_119, %c0_120, %c0_121], %123 {strides = array<i32>} : memref<1x16x128xbf16, #tpu.memory_space<vmem>>, vector<1x16x128xbf16>,
    return
  }
  func.func @transform_0(%arg0: i32) -> (i32, i32, i32, i32) {
    %c0_i32 = arith.constant 0 : i32
    %c0_i32_0 = arith.constant 0 : i32
    %c0_i32_1 = arith.constant 0 : i32
    %c0_i32_2 = arith.constant 0 : i32
    return %arg0, %c0_i32, %c0_i32_0, %c0_i32_1 : i32, i32, i32, i32
  }
  func.func @transform_1(%arg0: i32) -> (i32, i32, i32) {
    %c0_i32 = arith.constant 0 : i32
    %c0_i32_0 = arith.constant 0 : i32
    %c0_i32_1 = arith.constant 0 : i32
    %c0_i32_2 = arith.constant 0 : i32
    return %c0_i32, %c0_i32_0, %c0_i32_1 : i32, i32, i32
  }
  func.func @transform_2(%arg0: i32) -> (i32, i32, i32) {
    %c0_i32 = arith.constant 0 : i32
    %c0_i32_0 = arith.constant 0 : i32
    %c0_i32_1 = arith.constant 0 : i32
    return %arg0, %c0_i32, %c0_i32_0 : i32, i32, i32
  }
}

module attributes {stable_mosaic.version = 11 : i64} {
  func.func @_conv_s2_in_lrelu_kernel(%arg0: i32, %arg1: memref<1x8x6x128xbf16, #tpu.memory_space<vmem>>, %arg2: memref<16x128x256xbf16, #tpu.memory_space<vmem>>, %arg3: memref<1x4x256xbf16, #tpu.memory_space<vmem>>) attributes {dimension_semantics = [#tpu.dimension_semantics<parallel>], iteration_bounds = array<i64: 2>, scalar_prefetch = 0 : i64, scratch_operands = 0 : i64, tpu.core_type = #tpu.core_type<tc>, window_params = [{transform_indices = @transform_0, window_bounds = array<i64: 1, 8, 6, 128>}, {pipeline_mode = #tpu.pipeline_mode<synchronous>, transform_indices = @transform_1, window_bounds = array<i64: 16, 128, 256>}, {transform_indices = @transform_2, window_bounds = array<i64: 1, 4, 256>}]} {
    %cst = arith.constant 0.000000e+00 : f32
    %0 = vector.broadcast %cst : f32 to vector<4x256xf32>
    %c0 = arith.constant 0 : index
    %c0_0 = arith.constant 0 : index
    %c0_1 = arith.constant 0 : index
    %c0_2 = arith.constant 0 : index
    %1 = vector.load %arg1[%c0, %c0_0, %c0_1, %c0_2] : memref<1x8x6x128xbf16, #tpu.memory_space<vmem>>, vector<1x1x4x128xbf16>
    %2 = vector.shape_cast %1 : vector<1x1x4x128xbf16> to vector<4x128xbf16>
    %c0_3 = arith.constant 0 : index
    %c0_4 = arith.constant 0 : index
    %c0_5 = arith.constant 0 : index
    %3 = vector.load %arg2[%c0_3, %c0_4, %c0_5] : memref<16x128x256xbf16, #tpu.memory_space<vmem>>, vector<1x128x256xbf16>
    %4 = vector.shape_cast %3 : vector<1x128x256xbf16> to vector<128x256xbf16>
    %cst_6 = arith.constant dense<0.000000e+00> : vector<4x256xf32>
    %5 = tpu.matmul %2, %4, %cst_6 {dimension_numbers = #tpu.dot_dimension_numbers<[1], [0], [0], [1], [0, 0, 1, 1], [], []>} : vector<4x128xbf16>, vector<128x256xbf16>, vector<4x256xf32> -> vector<4x256xf32>
    %6 = arith.addf %0, %5 : vector<4x256xf32>
    %c0_7 = arith.constant 0 : index
    %c2 = arith.constant 2 : index
    %c0_8 = arith.constant 0 : index
    %c0_9 = arith.constant 0 : index
    %7 = vector.load %arg1[%c0_7, %c2, %c0_8, %c0_9] : memref<1x8x6x128xbf16, #tpu.memory_space<vmem>>, vector<1x1x4x128xbf16>
    %8 = vector.shape_cast %7 : vector<1x1x4x128xbf16> to vector<4x128xbf16>
    %c1 = arith.constant 1 : index
    %c0_10 = arith.constant 0 : index
    %c0_11 = arith.constant 0 : index
    %9 = vector.load %arg2[%c1, %c0_10, %c0_11] : memref<16x128x256xbf16, #tpu.memory_space<vmem>>, vector<1x128x256xbf16>
    %10 = vector.shape_cast %9 : vector<1x128x256xbf16> to vector<128x256xbf16>
    %cst_12 = arith.constant dense<0.000000e+00> : vector<4x256xf32>
    %11 = tpu.matmul %8, %10, %cst_12 {dimension_numbers = #tpu.dot_dimension_numbers<[1], [0], [0], [1], [0, 0, 1, 1], [], []>} : vector<4x128xbf16>, vector<128x256xbf16>, vector<4x256xf32> -> vector<4x256xf32>
    %12 = arith.addf %6, %11 : vector<4x256xf32>
    %c0_13 = arith.constant 0 : index
    %c1_14 = arith.constant 1 : index
    %c0_15 = arith.constant 0 : index
    %c0_16 = arith.constant 0 : index
    %13 = vector.load %arg1[%c0_13, %c1_14, %c0_15, %c0_16] : memref<1x8x6x128xbf16, #tpu.memory_space<vmem>>, vector<1x1x4x128xbf16>
    %14 = vector.shape_cast %13 : vector<1x1x4x128xbf16> to vector<4x128xbf16>
    %c2_17 = arith.constant 2 : index
    %c0_18 = arith.constant 0 : index
    %c0_19 = arith.constant 0 : index
    %15 = vector.load %arg2[%c2_17, %c0_18, %c0_19] : memref<16x128x256xbf16, #tpu.memory_space<vmem>>, vector<1x128x256xbf16>
    %16 = vector.shape_cast %15 : vector<1x128x256xbf16> to vector<128x256xbf16>
    %cst_20 = arith.constant dense<0.000000e+00> : vector<4x256xf32>
    %17 = tpu.matmul %14, %16, %cst_20 {dimension_numbers = #tpu.dot_dimension_numbers<[1], [0], [0], [1], [0, 0, 1, 1], [], []>} : vector<4x128xbf16>, vector<128x256xbf16>, vector<4x256xf32> -> vector<4x256xf32>
    %18 = arith.addf %12, %17 : vector<4x256xf32>
    %c0_21 = arith.constant 0 : index
    %c3 = arith.constant 3 : index
    %c0_22 = arith.constant 0 : index
    %c0_23 = arith.constant 0 : index
    %19 = vector.load %arg1[%c0_21, %c3, %c0_22, %c0_23] : memref<1x8x6x128xbf16, #tpu.memory_space<vmem>>, vector<1x1x4x128xbf16>
    %20 = vector.shape_cast %19 : vector<1x1x4x128xbf16> to vector<4x128xbf16>
    %c3_24 = arith.constant 3 : index
    %c0_25 = arith.constant 0 : index
    %c0_26 = arith.constant 0 : index
    %21 = vector.load %arg2[%c3_24, %c0_25, %c0_26] : memref<16x128x256xbf16, #tpu.memory_space<vmem>>, vector<1x128x256xbf16>
    %22 = vector.shape_cast %21 : vector<1x128x256xbf16> to vector<128x256xbf16>
    %cst_27 = arith.constant dense<0.000000e+00> : vector<4x256xf32>
    %23 = tpu.matmul %20, %22, %cst_27 {dimension_numbers = #tpu.dot_dimension_numbers<[1], [0], [0], [1], [0, 0, 1, 1], [], []>} : vector<4x128xbf16>, vector<128x256xbf16>, vector<4x256xf32> -> vector<4x256xf32>
    %24 = arith.addf %18, %23 : vector<4x256xf32>
    %c0_28 = arith.constant 0 : index
    %c4 = arith.constant 4 : index
    %c0_29 = arith.constant 0 : index
    %c0_30 = arith.constant 0 : index
    %25 = vector.load %arg1[%c0_28, %c4, %c0_29, %c0_30] : memref<1x8x6x128xbf16, #tpu.memory_space<vmem>>, vector<1x1x4x128xbf16>
    %26 = vector.shape_cast %25 : vector<1x1x4x128xbf16> to vector<4x128xbf16>
    %c4_31 = arith.constant 4 : index
    %c0_32 = arith.constant 0 : index
    %c0_33 = arith.constant 0 : index
    %27 = vector.load %arg2[%c4_31, %c0_32, %c0_33] : memref<16x128x256xbf16, #tpu.memory_space<vmem>>, vector<1x128x256xbf16>
    %28 = vector.shape_cast %27 : vector<1x128x256xbf16> to vector<128x256xbf16>
    %cst_34 = arith.constant dense<0.000000e+00> : vector<4x256xf32>
    %29 = tpu.matmul %26, %28, %cst_34 {dimension_numbers = #tpu.dot_dimension_numbers<[1], [0], [0], [1], [0, 0, 1, 1], [], []>} : vector<4x128xbf16>, vector<128x256xbf16>, vector<4x256xf32> -> vector<4x256xf32>
    %30 = arith.addf %24, %29 : vector<4x256xf32>
    %c0_35 = arith.constant 0 : index
    %c6 = arith.constant 6 : index
    %c0_36 = arith.constant 0 : index
    %c0_37 = arith.constant 0 : index
    %31 = vector.load %arg1[%c0_35, %c6, %c0_36, %c0_37] : memref<1x8x6x128xbf16, #tpu.memory_space<vmem>>, vector<1x1x4x128xbf16>
    %32 = vector.shape_cast %31 : vector<1x1x4x128xbf16> to vector<4x128xbf16>
    %c5 = arith.constant 5 : index
    %c0_38 = arith.constant 0 : index
    %c0_39 = arith.constant 0 : index
    %33 = vector.load %arg2[%c5, %c0_38, %c0_39] : memref<16x128x256xbf16, #tpu.memory_space<vmem>>, vector<1x128x256xbf16>
    %34 = vector.shape_cast %33 : vector<1x128x256xbf16> to vector<128x256xbf16>
    %cst_40 = arith.constant dense<0.000000e+00> : vector<4x256xf32>
    %35 = tpu.matmul %32, %34, %cst_40 {dimension_numbers = #tpu.dot_dimension_numbers<[1], [0], [0], [1], [0, 0, 1, 1], [], []>} : vector<4x128xbf16>, vector<128x256xbf16>, vector<4x256xf32> -> vector<4x256xf32>
    %36 = arith.addf %30, %35 : vector<4x256xf32>
    %c0_41 = arith.constant 0 : index
    %c5_42 = arith.constant 5 : index
    %c0_43 = arith.constant 0 : index
    %c0_44 = arith.constant 0 : index
    %37 = vector.load %arg1[%c0_41, %c5_42, %c0_43, %c0_44] : memref<1x8x6x128xbf16, #tpu.memory_space<vmem>>, vector<1x1x4x128xbf16>
    %38 = vector.shape_cast %37 : vector<1x1x4x128xbf16> to vector<4x128xbf16>
    %c6_45 = arith.constant 6 : index
    %c0_46 = arith.constant 0 : index
    %c0_47 = arith.constant 0 : index
    %39 = vector.load %arg2[%c6_45, %c0_46, %c0_47] : memref<16x128x256xbf16, #tpu.memory_space<vmem>>, vector<1x128x256xbf16>
    %40 = vector.shape_cast %39 : vector<1x128x256xbf16> to vector<128x256xbf16>
    %cst_48 = arith.constant dense<0.000000e+00> : vector<4x256xf32>
    %41 = tpu.matmul %38, %40, %cst_48 {dimension_numbers = #tpu.dot_dimension_numbers<[1], [0], [0], [1], [0, 0, 1, 1], [], []>} : vector<4x128xbf16>, vector<128x256xbf16>, vector<4x256xf32> -> vector<4x256xf32>
    %42 = arith.addf %36, %41 : vector<4x256xf32>
    %c0_49 = arith.constant 0 : index
    %c7 = arith.constant 7 : index
    %c0_50 = arith.constant 0 : index
    %c0_51 = arith.constant 0 : index
    %43 = vector.load %arg1[%c0_49, %c7, %c0_50, %c0_51] : memref<1x8x6x128xbf16, #tpu.memory_space<vmem>>, vector<1x1x4x128xbf16>
    %44 = vector.shape_cast %43 : vector<1x1x4x128xbf16> to vector<4x128xbf16>
    %c7_52 = arith.constant 7 : index
    %c0_53 = arith.constant 0 : index
    %c0_54 = arith.constant 0 : index
    %45 = vector.load %arg2[%c7_52, %c0_53, %c0_54] : memref<16x128x256xbf16, #tpu.memory_space<vmem>>, vector<1x128x256xbf16>
    %46 = vector.shape_cast %45 : vector<1x128x256xbf16> to vector<128x256xbf16>
    %cst_55 = arith.constant dense<0.000000e+00> : vector<4x256xf32>
    %47 = tpu.matmul %44, %46, %cst_55 {dimension_numbers = #tpu.dot_dimension_numbers<[1], [0], [0], [1], [0, 0, 1, 1], [], []>} : vector<4x128xbf16>, vector<128x256xbf16>, vector<4x256xf32> -> vector<4x256xf32>
    %48 = arith.addf %42, %47 : vector<4x256xf32>
    %c0_56 = arith.constant 0 : index
    %c0_57 = arith.constant 0 : index
    %c2_58 = arith.constant 2 : index
    %c0_59 = arith.constant 0 : index
    %49 = vector.load %arg1[%c0_56, %c0_57, %c2_58, %c0_59] : memref<1x8x6x128xbf16, #tpu.memory_space<vmem>>, vector<1x1x4x128xbf16>
    %50 = vector.shape_cast %49 : vector<1x1x4x128xbf16> to vector<4x128xbf16>
    %c8 = arith.constant 8 : index
    %c0_60 = arith.constant 0 : index
    %c0_61 = arith.constant 0 : index
    %51 = vector.load %arg2[%c8, %c0_60, %c0_61] : memref<16x128x256xbf16, #tpu.memory_space<vmem>>, vector<1x128x256xbf16>
    %52 = vector.shape_cast %51 : vector<1x128x256xbf16> to vector<128x256xbf16>
    %cst_62 = arith.constant dense<0.000000e+00> : vector<4x256xf32>
    %53 = tpu.matmul %50, %52, %cst_62 {dimension_numbers = #tpu.dot_dimension_numbers<[1], [0], [0], [1], [0, 0, 1, 1], [], []>} : vector<4x128xbf16>, vector<128x256xbf16>, vector<4x256xf32> -> vector<4x256xf32>
    %54 = arith.addf %48, %53 : vector<4x256xf32>
    %c0_63 = arith.constant 0 : index
    %c2_64 = arith.constant 2 : index
    %c2_65 = arith.constant 2 : index
    %c0_66 = arith.constant 0 : index
    %55 = vector.load %arg1[%c0_63, %c2_64, %c2_65, %c0_66] : memref<1x8x6x128xbf16, #tpu.memory_space<vmem>>, vector<1x1x4x128xbf16>
    %56 = vector.shape_cast %55 : vector<1x1x4x128xbf16> to vector<4x128xbf16>
    %c9 = arith.constant 9 : index
    %c0_67 = arith.constant 0 : index
    %c0_68 = arith.constant 0 : index
    %57 = vector.load %arg2[%c9, %c0_67, %c0_68] : memref<16x128x256xbf16, #tpu.memory_space<vmem>>, vector<1x128x256xbf16>
    %58 = vector.shape_cast %57 : vector<1x128x256xbf16> to vector<128x256xbf16>
    %cst_69 = arith.constant dense<0.000000e+00> : vector<4x256xf32>
    %59 = tpu.matmul %56, %58, %cst_69 {dimension_numbers = #tpu.dot_dimension_numbers<[1], [0], [0], [1], [0, 0, 1, 1], [], []>} : vector<4x128xbf16>, vector<128x256xbf16>, vector<4x256xf32> -> vector<4x256xf32>
    %60 = arith.addf %54, %59 : vector<4x256xf32>
    %c0_70 = arith.constant 0 : index
    %c1_71 = arith.constant 1 : index
    %c2_72 = arith.constant 2 : index
    %c0_73 = arith.constant 0 : index
    %61 = vector.load %arg1[%c0_70, %c1_71, %c2_72, %c0_73] : memref<1x8x6x128xbf16, #tpu.memory_space<vmem>>, vector<1x1x4x128xbf16>
    %62 = vector.shape_cast %61 : vector<1x1x4x128xbf16> to vector<4x128xbf16>
    %c10 = arith.constant 10 : index
    %c0_74 = arith.constant 0 : index
    %c0_75 = arith.constant 0 : index
    %63 = vector.load %arg2[%c10, %c0_74, %c0_75] : memref<16x128x256xbf16, #tpu.memory_space<vmem>>, vector<1x128x256xbf16>
    %64 = vector.shape_cast %63 : vector<1x128x256xbf16> to vector<128x256xbf16>
    %cst_76 = arith.constant dense<0.000000e+00> : vector<4x256xf32>
    %65 = tpu.matmul %62, %64, %cst_76 {dimension_numbers = #tpu.dot_dimension_numbers<[1], [0], [0], [1], [0, 0, 1, 1], [], []>} : vector<4x128xbf16>, vector<128x256xbf16>, vector<4x256xf32> -> vector<4x256xf32>
    %66 = arith.addf %60, %65 : vector<4x256xf32>
    %c0_77 = arith.constant 0 : index
    %c3_78 = arith.constant 3 : index
    %c2_79 = arith.constant 2 : index
    %c0_80 = arith.constant 0 : index
    %67 = vector.load %arg1[%c0_77, %c3_78, %c2_79, %c0_80] : memref<1x8x6x128xbf16, #tpu.memory_space<vmem>>, vector<1x1x4x128xbf16>
    %68 = vector.shape_cast %67 : vector<1x1x4x128xbf16> to vector<4x128xbf16>
    %c11 = arith.constant 11 : index
    %c0_81 = arith.constant 0 : index
    %c0_82 = arith.constant 0 : index
    %69 = vector.load %arg2[%c11, %c0_81, %c0_82] : memref<16x128x256xbf16, #tpu.memory_space<vmem>>, vector<1x128x256xbf16>
    %70 = vector.shape_cast %69 : vector<1x128x256xbf16> to vector<128x256xbf16>
    %cst_83 = arith.constant dense<0.000000e+00> : vector<4x256xf32>
    %71 = tpu.matmul %68, %70, %cst_83 {dimension_numbers = #tpu.dot_dimension_numbers<[1], [0], [0], [1], [0, 0, 1, 1], [], []>} : vector<4x128xbf16>, vector<128x256xbf16>, vector<4x256xf32> -> vector<4x256xf32>
    %72 = arith.addf %66, %71 : vector<4x256xf32>
    %c0_84 = arith.constant 0 : index
    %c4_85 = arith.constant 4 : index
    %c2_86 = arith.constant 2 : index
    %c0_87 = arith.constant 0 : index
    %73 = vector.load %arg1[%c0_84, %c4_85, %c2_86, %c0_87] : memref<1x8x6x128xbf16, #tpu.memory_space<vmem>>, vector<1x1x4x128xbf16>
    %74 = vector.shape_cast %73 : vector<1x1x4x128xbf16> to vector<4x128xbf16>
    %c12 = arith.constant 12 : index
    %c0_88 = arith.constant 0 : index
    %c0_89 = arith.constant 0 : index
    %75 = vector.load %arg2[%c12, %c0_88, %c0_89] : memref<16x128x256xbf16, #tpu.memory_space<vmem>>, vector<1x128x256xbf16>
    %76 = vector.shape_cast %75 : vector<1x128x256xbf16> to vector<128x256xbf16>
    %cst_90 = arith.constant dense<0.000000e+00> : vector<4x256xf32>
    %77 = tpu.matmul %74, %76, %cst_90 {dimension_numbers = #tpu.dot_dimension_numbers<[1], [0], [0], [1], [0, 0, 1, 1], [], []>} : vector<4x128xbf16>, vector<128x256xbf16>, vector<4x256xf32> -> vector<4x256xf32>
    %78 = arith.addf %72, %77 : vector<4x256xf32>
    %c0_91 = arith.constant 0 : index
    %c6_92 = arith.constant 6 : index
    %c2_93 = arith.constant 2 : index
    %c0_94 = arith.constant 0 : index
    %79 = vector.load %arg1[%c0_91, %c6_92, %c2_93, %c0_94] : memref<1x8x6x128xbf16, #tpu.memory_space<vmem>>, vector<1x1x4x128xbf16>
    %80 = vector.shape_cast %79 : vector<1x1x4x128xbf16> to vector<4x128xbf16>
    %c13 = arith.constant 13 : index
    %c0_95 = arith.constant 0 : index
    %c0_96 = arith.constant 0 : index
    %81 = vector.load %arg2[%c13, %c0_95, %c0_96] : memref<16x128x256xbf16, #tpu.memory_space<vmem>>, vector<1x128x256xbf16>
    %82 = vector.shape_cast %81 : vector<1x128x256xbf16> to vector<128x256xbf16>
    %cst_97 = arith.constant dense<0.000000e+00> : vector<4x256xf32>
    %83 = tpu.matmul %80, %82, %cst_97 {dimension_numbers = #tpu.dot_dimension_numbers<[1], [0], [0], [1], [0, 0, 1, 1], [], []>} : vector<4x128xbf16>, vector<128x256xbf16>, vector<4x256xf32> -> vector<4x256xf32>
    %84 = arith.addf %78, %83 : vector<4x256xf32>
    %c0_98 = arith.constant 0 : index
    %c5_99 = arith.constant 5 : index
    %c2_100 = arith.constant 2 : index
    %c0_101 = arith.constant 0 : index
    %85 = vector.load %arg1[%c0_98, %c5_99, %c2_100, %c0_101] : memref<1x8x6x128xbf16, #tpu.memory_space<vmem>>, vector<1x1x4x128xbf16>
    %86 = vector.shape_cast %85 : vector<1x1x4x128xbf16> to vector<4x128xbf16>
    %c14 = arith.constant 14 : index
    %c0_102 = arith.constant 0 : index
    %c0_103 = arith.constant 0 : index
    %87 = vector.load %arg2[%c14, %c0_102, %c0_103] : memref<16x128x256xbf16, #tpu.memory_space<vmem>>, vector<1x128x256xbf16>
    %88 = vector.shape_cast %87 : vector<1x128x256xbf16> to vector<128x256xbf16>
    %cst_104 = arith.constant dense<0.000000e+00> : vector<4x256xf32>
    %89 = tpu.matmul %86, %88, %cst_104 {dimension_numbers = #tpu.dot_dimension_numbers<[1], [0], [0], [1], [0, 0, 1, 1], [], []>} : vector<4x128xbf16>, vector<128x256xbf16>, vector<4x256xf32> -> vector<4x256xf32>
    %90 = arith.addf %84, %89 : vector<4x256xf32>
    %c0_105 = arith.constant 0 : index
    %c7_106 = arith.constant 7 : index
    %c2_107 = arith.constant 2 : index
    %c0_108 = arith.constant 0 : index
    %91 = vector.load %arg1[%c0_105, %c7_106, %c2_107, %c0_108] : memref<1x8x6x128xbf16, #tpu.memory_space<vmem>>, vector<1x1x4x128xbf16>
    %92 = vector.shape_cast %91 : vector<1x1x4x128xbf16> to vector<4x128xbf16>
    %c15 = arith.constant 15 : index
    %c0_109 = arith.constant 0 : index
    %c0_110 = arith.constant 0 : index
    %93 = vector.load %arg2[%c15, %c0_109, %c0_110] : memref<16x128x256xbf16, #tpu.memory_space<vmem>>, vector<1x128x256xbf16>
    %94 = vector.shape_cast %93 : vector<1x128x256xbf16> to vector<128x256xbf16>
    %cst_111 = arith.constant dense<0.000000e+00> : vector<4x256xf32>
    %95 = tpu.matmul %92, %94, %cst_111 {dimension_numbers = #tpu.dot_dimension_numbers<[1], [0], [0], [1], [0, 0, 1, 1], [], []>} : vector<4x128xbf16>, vector<128x256xbf16>, vector<4x256xf32> -> vector<4x256xf32>
    %96 = arith.addf %90, %95 : vector<4x256xf32>
    %cst_112 = arith.constant dense<0.000000e+00> : vector<256xf32>
    %97 = vector.multi_reduction <add>, %96, %cst_112 [0] : vector<4x256xf32> to vector<256xf32>
    %98 = vector.shape_cast %97 : vector<256xf32> to vector<1x256xf32>
    %cst_113 = arith.constant 4.000000e+00 : f32
    %99 = vector.broadcast %cst_113 : f32 to vector<1x256xf32>
    %100 = arith.divf %98, %99 : vector<1x256xf32>
    %101 = vector.broadcast %100 : vector<1x256xf32> to vector<4x256xf32>
    %102 = arith.subf %96, %101 : vector<4x256xf32>
    %103 = arith.mulf %102, %102 : vector<4x256xf32>
    %cst_114 = arith.constant dense<0.000000e+00> : vector<256xf32>
    %104 = vector.multi_reduction <add>, %103, %cst_114 [0] : vector<4x256xf32> to vector<256xf32>
    %105 = vector.shape_cast %104 : vector<256xf32> to vector<1x256xf32>
    %cst_115 = arith.constant 4.000000e+00 : f32
    %106 = vector.broadcast %cst_115 : f32 to vector<1x256xf32>
    %107 = arith.divf %105, %106 : vector<1x256xf32>
    %108 = vector.broadcast %100 : vector<1x256xf32> to vector<4x256xf32>
    %109 = arith.subf %96, %108 : vector<4x256xf32>
    %cst_116 = arith.constant 9.99999974E-6 : f32
    %110 = vector.broadcast %cst_116 : f32 to vector<1x256xf32>
    %111 = arith.addf %107, %110 : vector<1x256xf32>
    %112 = math.rsqrt %111 : vector<1x256xf32>
    %113 = vector.broadcast %112 : vector<1x256xf32> to vector<4x256xf32>
    %114 = arith.mulf %109, %113 : vector<4x256xf32>
    %cst_117 = arith.constant 0.000000e+00 : f32
    %115 = vector.broadcast %cst_117 : f32 to vector<4x256xf32>
    %116 = arith.cmpf oge, %114, %115 : vector<4x256xf32>
    %cst_118 = arith.constant 2.000000e-01 : f32
    %117 = vector.broadcast %cst_118 : f32 to vector<4x256xf32>
    %118 = arith.mulf %117, %114 : vector<4x256xf32>
    %119 = arith.select %116, %114, %118 : vector<4x256xi1>, vector<4x256xf32>
    %120 = arith.truncf %119 : vector<4x256xf32> to vector<4x256xbf16>
    %c0_119 = arith.constant 0 : index
    %c0_120 = arith.constant 0 : index
    %c0_121 = arith.constant 0 : index
    %121 = vector.load %arg3[%c0_119, %c0_120, %c0_121] : memref<1x4x256xbf16, #tpu.memory_space<vmem>>, vector<1x4x256xbf16>
    %122 = vector.shape_cast %121 : vector<1x4x256xbf16> to vector<4x256xbf16>
    %123 = vector.shape_cast %120 : vector<4x256xbf16> to vector<1x4x256xbf16>
    tpu.vector_store %arg3[%c0_119, %c0_120, %c0_121], %123 {strides = array<i32>} : memref<1x4x256xbf16, #tpu.memory_space<vmem>>, vector<1x4x256xbf16>,
    return
  }
  func.func @transform_0(%arg0: i32) -> (i32, i32, i32, i32) {
    %c0_i32 = arith.constant 0 : i32
    %c0_i32_0 = arith.constant 0 : i32
    %c0_i32_1 = arith.constant 0 : i32
    %c0_i32_2 = arith.constant 0 : i32
    return %arg0, %c0_i32, %c0_i32_0, %c0_i32_1 : i32, i32, i32, i32
  }
  func.func @transform_1(%arg0: i32) -> (i32, i32, i32) {
    %c0_i32 = arith.constant 0 : i32
    %c0_i32_0 = arith.constant 0 : i32
    %c0_i32_1 = arith.constant 0 : i32
    %c0_i32_2 = arith.constant 0 : i32
    return %c0_i32, %c0_i32_0, %c0_i32_1 : i32, i32, i32
  }
  func.func @transform_2(%arg0: i32) -> (i32, i32, i32) {
    %c0_i32 = arith.constant 0 : i32
    %c0_i32_0 = arith.constant 0 : i32
    %c0_i32_1 = arith.constant 0 : i32
    return %arg0, %c0_i32, %c0_i32_0 : i32, i32, i32
  }
}

module attributes {stable_mosaic.version = 11 : i64} {
  func.func @_matmul_bias_act_kernel(%arg0: i32, %arg1: memref<8x4096xbf16, #tpu.memory_space<vmem>>, %arg2: memref<4096x128xbf16, #tpu.memory_space<vmem>>, %arg3: memref<1x128xf32, #tpu.memory_space<vmem>>, %arg4: memref<8x128xf32, #tpu.memory_space<vmem>>) attributes {dimension_semantics = [#tpu.dimension_semantics<parallel>], iteration_bounds = array<i64: 1>, scalar_prefetch = 0 : i64, scratch_operands = 0 : i64, tpu.core_type = #tpu.core_type<tc>, window_params = [{transform_indices = @transform_0, window_bounds = array<i64: 8, 4096>}, {pipeline_mode = #tpu.pipeline_mode<synchronous>, transform_indices = @transform_1, window_bounds = array<i64: 4096, 128>}, {pipeline_mode = #tpu.pipeline_mode<synchronous>, transform_indices = @transform_2, window_bounds = array<i64: 1, 128>}, {transform_indices = @transform_3, window_bounds = array<i64: 8, 128>}]} {
    %c0 = arith.constant 0 : index
    %c0_0 = arith.constant 0 : index
    %0 = vector.load %arg1[%c0, %c0_0] : memref<8x4096xbf16, #tpu.memory_space<vmem>>, vector<8x4096xbf16>
    %c0_1 = arith.constant 0 : index
    %c0_2 = arith.constant 0 : index
    %1 = vector.load %arg2[%c0_1, %c0_2] : memref<4096x128xbf16, #tpu.memory_space<vmem>>, vector<4096x128xbf16>
    %cst = arith.constant dense<0.000000e+00> : vector<8x128xf32>
    %2 = tpu.matmul %0, %1, %cst {dimension_numbers = #tpu.dot_dimension_numbers<[1], [0], [0], [1], [0, 0, 1, 1], [], []>} : vector<8x4096xbf16>, vector<4096x128xbf16>, vector<8x128xf32> -> vector<8x128xf32>
    %c0_3 = arith.constant 0 : index
    %c0_4 = arith.constant 0 : index
    %3 = vector.load %arg3[%c0_3, %c0_4] : memref<1x128xf32, #tpu.memory_space<vmem>>, vector<1x128xf32>
    %4 = vector.broadcast %3 : vector<1x128xf32> to vector<8x128xf32>
    %5 = arith.addf %2, %4 : vector<8x128xf32>
    %c0_5 = arith.constant 0 : index
    %c0_6 = arith.constant 0 : index
    %6 = vector.load %arg4[%c0_5, %c0_6] : memref<8x128xf32, #tpu.memory_space<vmem>>, vector<8x128xf32>
    tpu.vector_store %arg4[%c0_5, %c0_6], %5 {strides = array<i32>} : memref<8x128xf32, #tpu.memory_space<vmem>>, vector<8x128xf32>,
    return
  }
  func.func @transform_0(%arg0: i32) -> (i32, i32) {
    %c0_i32 = arith.constant 0 : i32
    %c0_i32_0 = arith.constant 0 : i32
    return %arg0, %c0_i32 : i32, i32
  }
  func.func @transform_1(%arg0: i32) -> (i32, i32) {
    %c0_i32 = arith.constant 0 : i32
    %c0_i32_0 = arith.constant 0 : i32
    %c0_i32_1 = arith.constant 0 : i32
    return %c0_i32, %c0_i32_0 : i32, i32
  }
  func.func @transform_2(%arg0: i32) -> (i32, i32) {
    %c0_i32 = arith.constant 0 : i32
    %c0_i32_0 = arith.constant 0 : i32
    %c0_i32_1 = arith.constant 0 : i32
    return %c0_i32, %c0_i32_0 : i32, i32
  }
  func.func @transform_3(%arg0: i32) -> (i32, i32) {
    %c0_i32 = arith.constant 0 : i32
    %c0_i32_0 = arith.constant 0 : i32
    return %arg0, %c0_i32 : i32, i32
  }
}

</mosaic_0001>

<llo_original>
// kernel: discriminator_forward.4
$region0: #{discriminator_forward.4}
  #allocation0 [shape = 'u32[]', space=smem, size = 0x4, offset = 0x4, fixed_abs, tag = 'smem constant byte address 0x4 - core index']
  #allocation1 [shape = 'u32[144,128]{1,0:T(1,128)}', space=vmem, size = 0x12000, scoped, tag = 'internal scratch']
  %s0 = inlined_call_operand.vmem [shape: bf16[128,48], index: 0, kind: input, shape index: {}]
  %s1 = inlined_call_operand.vmem [shape: bf16[48,64], index: 1, kind: input, shape index: {}]
  %s2 = inlined_call_operand.hbm [shape: f32[1,64], index: 2, kind: input, shape index: {}]
  %s3 = inlined_call_operand.vmem [shape: bf16[128,64], index: 3, kind: output, shape index: {}]
  %s4 = sld [smem:[#allocation0]]
  $region26: #{discriminator_forward.4} parent=0
    _
  %s6 = ssub.s32 1, %s4
  %s7 = scalar_select 0, %s6, %s4
  $region1: #{discriminator_forward.4} parent=0
    #allocation2 [shape = 'u8[512]{0}', space=vmem, size = 0x400, scoped, tag = 'input window, operand 2, single buffered']
    #allocation3 [shape = 's32[1]{0}', space=sflag, size = 0x4, scoped, tag = 'scoped memory for discriminator_forward.4']
    %8 = vsyncpa [#allocation3], 0
    // Predicated region
    $region2: #{discriminator_forward.4} parent=1 // pred_check
      _
    $region3: #{discriminator_forward.4} parent=1 // pred_check_branch
      %10 = sbr.rel (0) target = $region5
    $region4: #{discriminator_forward.4} parent=1 // pred_region
      _
    $region5: #{discriminator_forward.4} parent=1 // pred_fallthru
      _
    // Predicated region
    $region6: #{discriminator_forward.4} parent=1 // pred_check
      _
    $region7: #{discriminator_forward.4} parent=1 // pred_check_branch
      %12 = sbr.rel (0) target = $region9
    $region8: #{discriminator_forward.4} parent=1 // pred_region
      _
    $region9: #{discriminator_forward.4} parent=1 // pred_fallthru
      _
    // Predicated region
    $region10: #{discriminator_forward.4} parent=1 // pred_check
      _
    $region11: #{discriminator_forward.4} parent=1 // pred_check_branch
      %14 = sbr.rel (0) target = $region13
    $region12: #{discriminator_forward.4} parent=1 // pred_region
      %s16 = ssub.s32 16, 16
      %17 = vsyncadd [#allocation3], %s16
      %s19 = sshll.u32 [#allocation2], 4
      %s20 = int_to_ptr.vmem [resolvable:$true] %s19
      %22 = dma.hbm_to_vmem [thread:$0]  %s2, 16, %s20, [#allocation3]
    $region13: #{discriminator_forward.4} parent=1 // pred_fallthru
      _
    // Predicated region
    $region14: #{discriminator_forward.4} parent=1 // pred_check
      _
    $region15: #{discriminator_forward.4} parent=1 // pred_check_branch
      %24 = sbr.rel (0) target = $region17
    $region16: #{discriminator_forward.4} parent=1 // pred_region
      %25 = dma.done [#allocation3], 16
    $region17: #{discriminator_forward.4} parent=1 // pred_fallthru
      _
    %v27 = vld [vmem:[%s0] sm:$0xf]
    %v28 = vld [vmem:[%s0 + $0x4] sm:$0xf]
    %v29 = vld [vmem:[%s0 + $0x8] sm:$0xf]
    %v30 = vld [vmem:[%s0 + $0xc] sm:$0xf]
    %v31 = vld [vmem:[%s0 + $0x10] sm:$0xf]
    %v32 = vld [vmem:[%s0 + $0x14] sm:$0xf]
    %v33 = vld [vmem:[%s0 + $0x18] sm:$0xf]
    %v34 = vld [vmem:[%s0 + $0x1c] sm:$0xf]
    %v35 = vld [vmem:[%s0 + $0x20] sm:$0xf]
    %v36 = vld [vmem:[%s0 + $0x24] sm:$0xf]
    %v37 = vld [vmem:[%s0 + $0x28] sm:$0xf]
    %v38 = vld [vmem:[%s0 + $0x2c] sm:$0xf]
    %v39 = vld [vmem:[%s0 + $0x30] sm:$0xf]
    %v40 = vld [vmem:[%s0 + $0x34] sm:$0xf]
    %v41 = vld [vmem:[%s0 + $0x38] sm:$0xf]
    %v42 = vld [vmem:[%s0 + $0x3c] sm:$0xf]
    %v43 = vld [vmem:[%s1] sm:$0xf]
    %v44 = vld [vmem:[%s1 + $0x4] sm:$0xf]
    %v45 = vld [vmem:[%s1 + $0x8] sm:$0xf]
    %v46 = vld [vmem:[%s1 + $0xc] sm:$0xf]
    %v47 = vld [vmem:[%s1 + $0x10] sm:$0xf]
    %v48 = vld [vmem:[%s1 + $0x14] sm:$0xf]
    %v49 = vld [vmem:[#allocation2] sm:$0x1]
    %v51 = vlaneseq
    %v52 = vshrl.u32 %v51, 7
    %v53 = vsub.s32 0, %v52
    %v54 = vrot.slane %v49, %v53
    %v72 = vunpack.c.l.b16 %v27
    %v73 = vunpack.c.l.b16 %v28
    %v74 = vunpack.c.l.b16 %v29
    %v75 = vunpack.c.l.b16 %v30
    %v76 = vunpack.c.l.b16 %v31
    %v77 = vunpack.c.l.b16 %v32
    %v78 = vunpack.c.l.b16 %v33
    %v79 = vunpack.c.l.b16 %v34
    %v80 = vunpack.c.l.b16 %v35
    %v81 = vunpack.c.l.b16 %v36
    %v82 = vunpack.c.l.b16 %v37
    %v83 = vunpack.c.l.b16 %v38
    %v84 = vunpack.c.l.b16 %v39
    %v85 = vunpack.c.l.b16 %v40
    %v86 = vunpack.c.l.b16 %v41
    %v87 = vunpack.c.l.b16 %v42
    %v88 = vpack.c.b16 %v73, %v72
    %v89 = vpack.c.b16 %v75, %v74
    %v90 = vpack.c.b16 %v77, %v76
    %v91 = vpack.c.b16 %v79, %v78
    %v92 = vpack.c.b16 %v81, %v80
    %v93 = vpack.c.b16 %v83, %v82
    %v94 = vpack.c.b16 %v85, %v84
    %v95 = vpack.c.b16 %v87, %v86
    %v102 = vunpack.c.l.b16 %v43
    %v103 = vunpack.c.l.b16 %v44
    %v104 = vunpack.c.l.b16 %v45
    %v105 = vunpack.c.l.b16 %v46
    %v106 = vunpack.c.l.b16 %v47
    %v107 = vunpack.c.l.b16 %v48
    %v108 = vpack.c.b16 %v103, %v102
    %v109 = vpack.c.b16 %v105, %v104
    %v110 = vpack.c.b16 %v107, %v106
    %vm114 = vcmask 392192
    %v116 = vsel %vm114, %v88, 0
    %v119 = vsel %vm114, %v89, 0
    %v122 = vsel %vm114, %v90, 0
    %v125 = vsel %vm114, %v91, 0
    %v128 = vsel %vm114, %v92, 0
    %v131 = vsel %vm114, %v93, 0
    %v134 = vsel %vm114, %v94, 0
    %v137 = vsel %vm114, %v95, 0
    %139 = vmatprep.subr.bf16.mxu0 0
    %140 = vmatpush1.bf16.msra.mxu0 %v108
    %141 = vmatprep.subr.bf16.mxu0 0
    %142 = vmatpush1.bf16.msra.mxu0 %v109
    %143 = vmatprep.subr.bf16.mxu0 0
    %144 = vmatpush1.bf16.msra.mxu0 %v110
    %145 = vmatprep.subr.bf16.mxu0 0
    %146 = vmatpush1.bf16.msra.mxu0 0
    %147 = vmatprep.subr.bf16.mxu0 0
    %148 = vmatpush1.bf16.msra.mxu0 0
    %149 = vmatprep.subr.bf16.mxu0 0
    %150 = vmatpush1.bf16.msra.mxu0 0
    %151 = vmatprep.subr.bf16.mxu0 0
    %152 = vmatpush1.bf16.msra.mxu0 0
    %153 = vmatprep.subr.bf16.mxu0 0
    %154 = vmatpush1.bf16.msra.mxu0 0
    %155 = vmatprep.subr.bf16.mxu0 0
    %156 = vmatpush1.bf16.msra.mxu0 0
    %157 = vmatprep.subr.bf16.mxu0 0
    %158 = vmatpush1.bf16.msra.mxu0 0
    %159 = vmatprep.subr.bf16.mxu0 0
    %160 = vmatpush1.bf16.msra.mxu0 0
    %161 = vmatprep.subr.bf16.mxu0 0
    %162 = vmatpush1.bf16.msra.mxu0 0
    %163 = vmatprep.subr.bf16.mxu0 0
    %164 = vmatpush1.bf16.msra.mxu0 0
    %165 = vmatprep.subr.bf16.mxu0 0
    %166 = vmatpush1.bf16.msra.mxu0 0
    %167 = vmatprep.subr.bf16.mxu0 0
    %168 = vmatpush1.bf16.msra.mxu0 0
    %169 = vmatprep.subr.bf16.mxu0 0
    %170 = vmatpush1.bf16.msra.mxu0 0
    %171 = vmatprep.mubr.bf16.mxu0 0
    %172 = vmatmul.mubr.bf16.gmra.mrb[0].mxu0 %v116
    %v173 = vpop.f32.mrb[0].mxu0
    %v174 = vadd.f32 %v54, %v173
    %v175 = vpop.f32.mrb[0].mxu0
    %v176 = vpop.f32.mrb[0].mxu0
    %v177 = vadd.f32 %v54, %v176
    %v178 = vpop.f32.mrb[0].mxu0
    %179 = vmatprep.mubr.bf16.mxu0 0
    %180 = vmatmul.mubr.bf16.gmra.mrb[0].mxu0 %v119
    %v181 = vpop.f32.mrb[0].mxu0
    %v182 = vadd.f32 %v54, %v181
    %v183 = vpop.f32.mrb[0].mxu0
    %v184 = vpop.f32.mrb[0].mxu0
    %v185 = vadd.f32 %v54, %v184
    %v186 = vpop.f32.mrb[0].mxu0
    %187 = vmatprep.mubr.bf16.mxu0 0
    %188 = vmatmul.mubr.bf16.gmra.mrb[0].mxu0 %v122
    %v189 = vpop.f32.mrb[0].mxu0
    %v190 = vadd.f32 %v54, %v189
    %v191 = vpop.f32.mrb[0].mxu0
    %v192 = vpop.f32.mrb[0].mxu0
    %v193 = vadd.f32 %v54, %v192
    %v194 = vpop.f32.mrb[0].mxu0
    %195 = vmatprep.mubr.bf16.mxu0 0
    %196 = vmatmul.mubr.bf16.gmra.mrb[0].mxu0 %v125
    %v197 = vpop.f32.mrb[0].mxu0
    %v198 = vadd.f32 %v54, %v197
    %v199 = vpop.f32.mrb[0].mxu0
    %v200 = vpop.f32.mrb[0].mxu0
    %v201 = vadd.f32 %v54, %v200
    %v202 = vpop.f32.mrb[0].mxu0
    %203 = vmatprep.mubr.bf16.mxu0 0
    %204 = vmatmul.mubr.bf16.gmra.mrb[0].mxu0 %v128
    %v205 = vpop.f32.mrb[0].mxu0
    %v206 = vadd.f32 %v54, %v205
    %v207 = vpop.f32.mrb[0].mxu0
    %v208 = vpop.f32.mrb[0].mxu0
    %v209 = vadd.f32 %v54, %v208
    %v210 = vpop.f32.mrb[0].mxu0
    %211 = vmatprep.mubr.bf16.mxu0 0
    %212 = vmatmul.mubr.bf16.gmra.mrb[0].mxu0 %v131
    %v213 = vpop.f32.mrb[0].mxu0
    %v214 = vadd.f32 %v54, %v213
    %v215 = vpop.f32.mrb[0].mxu0
    %v216 = vpop.f32.mrb[0].mxu0
    %v217 = vadd.f32 %v54, %v216
    %v218 = vpop.f32.mrb[0].mxu0
    %219 = vmatprep.mubr.bf16.mxu0 0
    %220 = vmatmul.mubr.bf16.gmra.mrb[0].mxu0 %v134
    %v221 = vpop.f32.mrb[0].mxu0
    %v222 = vadd.f32 %v54, %v221
    %v223 = vpop.f32.mrb[0].mxu0
    %v224 = vpop.f32.mrb[0].mxu0
    %v225 = vadd.f32 %v54, %v224
    %v226 = vpop.f32.mrb[0].mxu0
    %227 = vmatprep.mubr.bf16.mxu0 0
    %228 = vmatmul.mubr.bf16.gmra.mrb[0].mxu0 %v137
    %v229 = vpop.f32.mrb[0].mxu0
    %v230 = vadd.f32 %v54, %v229
    %v231 = vpop.f32.mrb[0].mxu0
    %v232 = vpop.f32.mrb[0].mxu0
    %v233 = vadd.f32 %v54, %v232
    %v234 = vpop.f32.mrb[0].mxu0
    %235 = vdwg.mxu0
    %vm236 = vcmp.ge.f32.partialorder %v174, 0.0
    %vm237 = vcmp.ge.f32.partialorder %v177, 0.0
    %vm238 = vcmp.ge.f32.partialorder %v182, 0.0
    %vm239 = vcmp.ge.f32.partialorder %v185, 0.0
    %vm240 = vcmp.ge.f32.partialorder %v190, 0.0
    %vm241 = vcmp.ge.f32.partialorder %v193, 0.0
    %vm242 = vcmp.ge.f32.partialorder %v198, 0.0
    %vm243 = vcmp.ge.f32.partialorder %v201, 0.0
    %vm244 = vcmp.ge.f32.partialorder %v206, 0.0
    %vm245 = vcmp.ge.f32.partialorder %v209, 0.0
    %vm246 = vcmp.ge.f32.partialorder %v214, 0.0
    %vm247 = vcmp.ge.f32.partialorder %v217, 0.0
    %vm248 = vcmp.ge.f32.partialorder %v222, 0.0
    %vm249 = vcmp.ge.f32.partialorder %v225, 0.0
    %vm250 = vcmp.ge.f32.partialorder %v230, 0.0
    %vm251 = vcmp.ge.f32.partialorder %v233, 0.0
    %v252 = vmul.f32 %v174, 0.2
    %v253 = vmul.f32 %v177, 0.2
    %v254 = vmul.f32 %v182, 0.2
    %v255 = vmul.f32 %v185, 0.2
    %v256 = vmul.f32 %v190, 0.2
    %v257 = vmul.f32 %v193, 0.2
    %v258 = vmul.f32 %v198, 0.2
    %v259 = vmul.f32 %v201, 0.2
    %v260 = vmul.f32 %v206, 0.2
    %v261 = vmul.f32 %v209, 0.2
    %v262 = vmul.f32 %v214, 0.2
    %v263 = vmul.f32 %v217, 0.2
    %v264 = vmul.f32 %v222, 0.2
    %v265 = vmul.f32 %v225, 0.2
    %v266 = vmul.f32 %v230, 0.2
    %v267 = vmul.f32 %v233, 0.2
    %v268 = vsel %vm236, %v174, %v252
    %v269 = vsel %vm237, %v177, %v253
    %v270 = vsel %vm238, %v182, %v254
    %v271 = vsel %vm239, %v185, %v255
    %v272 = vsel %vm240, %v190, %v256
    %v273 = vsel %vm241, %v193, %v257
    %v274 = vsel %vm242, %v198, %v258
    %v275 = vsel %vm243, %v201, %v259
    %v276 = vsel %vm244, %v206, %v260
    %v277 = vsel %vm245, %v209, %v261
    %v278 = vsel %vm246, %v214, %v262
    %v279 = vsel %vm247, %v217, %v263
    %v280 = vsel %vm248, %v222, %v264
    %v281 = vsel %vm249, %v225, %v265
    %v282 = vsel %vm250, %v230, %v266
    %v283 = vsel %vm251, %v233, %v267
    %v284 = vpack.c.bf16 %v269, %v268
    %v285 = vpack.c.bf16 %v271, %v270
    %v286 = vpack.c.bf16 %v273, %v272
    %v287 = vpack.c.bf16 %v275, %v274
    %v288 = vpack.c.bf16 %v277, %v276
    %v289 = vpack.c.bf16 %v279, %v278
    %v290 = vpack.c.bf16 %v281, %v280
    %v291 = vpack.c.bf16 %v283, %v282
    %v300 = vunpack.c.l.b16 %v284
    %v301 = vunpack.c.h.b16 %v284
    %v302 = vunpack.c.l.b16 %v285
    %v303 = vunpack.c.h.b16 %v285
    %v304 = vunpack.c.l.b16 %v286
    %v305 = vunpack.c.h.b16 %v286
    %v306 = vunpack.c.l.b16 %v287
    %v307 = vunpack.c.h.b16 %v287
    %v308 = vunpack.c.l.b16 %v288
    %v309 = vunpack.c.h.b16 %v288
    %v310 = vunpack.c.l.b16 %v289
    %v311 = vunpack.c.h.b16 %v289
    %v312 = vunpack.c.l.b16 %v290
    %v313 = vunpack.c.h.b16 %v290
    %v314 = vunpack.c.l.b16 %v291
    %v315 = vunpack.c.h.b16 %v291
    %v316 = vpack.c.b16 %v300, %v300
    %v317 = vpack.c.b16 %v301, %v301
    %v318 = vpack.c.b16 %v302, %v302
    %v319 = vpack.c.b16 %v303, %v303
    %v320 = vpack.c.b16 %v304, %v304
    %v321 = vpack.c.b16 %v305, %v305
    %v322 = vpack.c.b16 %v306, %v306
    %v323 = vpack.c.b16 %v307, %v307
    %v324 = vpack.c.b16 %v308, %v308
    %v325 = vpack.c.b16 %v309, %v309
    %v326 = vpack.c.b16 %v310, %v310
    %v327 = vpack.c.b16 %v311, %v311
    %v328 = vpack.c.b16 %v312, %v312
    %v329 = vpack.c.b16 %v313, %v313
    %v330 = vpack.c.b16 %v314, %v314
    %v331 = vpack.c.b16 %v315, %v315
    %vm348 = vcmask 519168
    %349 = vst.msk [vmem:[%s3] sm:$0xf] %vm348, %v316
    %350 = vst.msk [vmem:[%s3 + $0x4] sm:$0xf] %vm348, %v317
    %351 = vst.msk [vmem:[%s3 + $0x8] sm:$0xf] %vm348, %v318
    %352 = vst.msk [vmem:[%s3 + $0xc] sm:$0xf] %vm348, %v319
    %353 = vst.msk [vmem:[%s3 + $0x10] sm:$0xf] %vm348, %v320
    %354 = vst.msk [vmem:[%s3 + $0x14] sm:$0xf] %vm348, %v321
    %355 = vst.msk [vmem:[%s3 + $0x18] sm:$0xf] %vm348, %v322
    %356 = vst.msk [vmem:[%s3 + $0x1c] sm:$0xf] %vm348, %v323
    %357 = vst.msk [vmem:[%s3 + $0x20] sm:$0xf] %vm348, %v324
    %358 = vst.msk [vmem:[%s3 + $0x24] sm:$0xf] %vm348, %v325
    %359 = vst.msk [vmem:[%s3 + $0x28] sm:$0xf] %vm348, %v326
    %360 = vst.msk [vmem:[%s3 + $0x2c] sm:$0xf] %vm348, %v327
    %361 = vst.msk [vmem:[%s3 + $0x30] sm:$0xf] %vm348, %v328
    %362 = vst.msk [vmem:[%s3 + $0x34] sm:$0xf] %vm348, %v329
    %363 = vst.msk [vmem:[%s3 + $0x38] sm:$0xf] %vm348, %v330
    %364 = vst.msk [vmem:[%s3 + $0x3c] sm:$0xf] %vm348, %v331
    // Predicated region
    $region18: #{discriminator_forward.4} parent=1 // pred_check
      _
    $region19: #{discriminator_forward.4} parent=1 // pred_check_branch
      %366 = sbr.rel (0) target = $region21
    $region20: #{discriminator_forward.4} parent=1 // pred_region
      _
    $region21: #{discriminator_forward.4} parent=1 // pred_fallthru
      _
    // Predicated region
    $region22: #{discriminator_forward.4} parent=1 // pred_check
      _
    $region23: #{discriminator_forward.4} parent=1 // pred_check_branch
      %368 = sbr.rel (0) target = $region25
    $region24: #{discriminator_forward.4} parent=1 // pred_region
      _
    $region25: #{discriminator_forward.4} parent=1 // pred_fallthru
      _
    %369 = vsyncpa [#allocation3], 1

// kernel: discriminator_forward.5
$region0: #{discriminator_forward.5}
  #allocation0 [shape = 'u32[]', space=smem, size = 0x4, offset = 0x4, fixed_abs, tag = 'smem constant byte address 0x4 - core index']
  #allocation1 [shape = 'u32[144,128]{1,0:T(1,128)}', space=vmem, size = 0x12000, scoped, tag = 'internal scratch']
  %s0 = inlined_call_operand.vmem [shape: bf16[2,8,20,64], index: 0, kind: input, shape index: {}]
  %s1 = inlined_call_operand.vmem [shape: bf16[16,64,128], index: 1, kind: input, shape index: {}]
  %s2 = inlined_call_operand.vmem [shape: bf16[2,16,128], index: 2, kind: output, shape index: {}]
  %s3 = sld [smem:[#allocation0]]
  $region41: #{discriminator_forward.5} parent=0
    _
  %s5 = ssub.s32 1, %s3
  %s6 = scalar_select 0, %s5, %s3
  loop: start=0, step=1, limit=4
  $region2: #{discriminator_forward.5} parent=0 // loop_pre_header
    _
  $region3: #{discriminator_forward.5} parent=0 // loop_header
    %s8 = sphi 0, %s12
    %p9 = scmp.ge.s32.totalorder %s8, 4
    %s18 = sphi 0, %s20
    %s21 = sphi 0, %s18
    %s22 = sphi 0, %s21
    %s38 = sphi 0, %s22
    %s42 = sphi 0, %s42
    %s44 = sphi 0, %s42
    %s45 = sphi 0, %s44
    %s59 = sphi 0, %s45
    %s65 = sphi 0, %s67
    %s68 = sphi 0, %s65
    %s69 = sphi 0, %s68
    %s85 = sphi 0, %s69
  $region4: #{discriminator_forward.5} parent=0 // loop_header_branch
    %11 = sbr.rel (%p9) target = $region8
  $region5: #{discriminator_forward.5} parent=0 // loop_body
    %s13 = ssub.s32 %s8, 1
    %s14 = ssub.s32 %s8, 2
    %s15 = sadd.s32 %s8, 1
    %s16 = ssub.s32 %s8, %s15
    %p17 = scmp.eq.s32.totalorder %s16, 0
    %s19 = sadd.s32 %s18, 1
    %s20 = scalar_select %p17, %s18, %s19
    %p23 = pneg %p17
    %p24 = scmp.eq.s32.totalorder %s8, 1
    %p25 = por %p23, %p24
    %p26 = scmp.ne.s32.totalorder %s18, %s21
    %p27 = scmp.eq.s32.totalorder %s8, 0
    %p28 = por %p26, %p27
    %p29 = scmp.ne.s32.totalorder %s18, %s21
    %p30 = scmp.eq.s32.totalorder %s13, 1
    %p31 = por %p29, %p30
    %p32 = scmp.ne.s32.totalorder %s21, %s22
    %p33 = scmp.eq.s32.totalorder %s13, 0
    %p34 = por %p32, %p33
    %p35 = scmp.ne.s32.totalorder %s21, %s22
    %p36 = scmp.eq.s32.totalorder %s14, 1
    %p37 = por %p35, %p36
    %p39 = scmp.ne.s32.totalorder %s22, %s38
    %p40 = scmp.eq.s32.totalorder %s14, 0
    %p41 = por %p39, %p40
    %s43 = sadd.s32 %s42, 1
    %p46 = scmp.eq.s32.totalorder %s8, 1
    %p47 = scmp.ne.s32.totalorder %s42, %s44
    %p48 = scmp.eq.s32.totalorder %s8, 0
    %p49 = por %p47, %p48
    %p50 = scmp.ne.s32.totalorder %s42, %s44
    %p51 = scmp.eq.s32.totalorder %s13, 1
    %p52 = por %p50, %p51
    %p53 = scmp.ne.s32.totalorder %s44, %s45
    %p54 = scmp.eq.s32.totalorder %s13, 0
    %p55 = por %p53, %p54
    %p56 = scmp.ne.s32.totalorder %s44, %s45
    %p57 = scmp.eq.s32.totalorder %s14, 1
    %p58 = por %p56, %p57
    %p60 = scmp.ne.s32.totalorder %s45, %s59
    %p61 = scmp.eq.s32.totalorder %s14, 0
    %p62 = por %p60, %p61
    %s63 = ssub.s32 %s8, %s15
    %p64 = scmp.eq.s32.totalorder %s63, 0
    %s66 = sadd.s32 %s65, 1
    %s67 = scalar_select %p64, %s65, %s66
    %p70 = pneg %p64
    %p71 = scmp.eq.s32.totalorder %s8, 1
    %p72 = por %p70, %p71
    %p73 = scmp.ne.s32.totalorder %s65, %s68
    %p74 = scmp.eq.s32.totalorder %s8, 0
    %p75 = por %p73, %p74
    %p76 = scmp.ne.s32.totalorder %s65, %s68
    %p77 = scmp.eq.s32.totalorder %s13, 1
    %p78 = por %p76, %p77
    %p79 = scmp.ne.s32.totalorder %s68, %s69
    %p80 = scmp.eq.s32.totalorder %s13, 0
    %p81 = por %p79, %p80
    %p82 = scmp.ne.s32.totalorder %s68, %s69
    %p83 = scmp.eq.s32.totalorder %s14, 1
    %p84 = por %p82, %p83
    %p86 = scmp.ne.s32.totalorder %s69, %s85
    %p87 = scmp.eq.s32.totalorder %s14, 0
    %p88 = por %p86, %p87
    %p89 = scmp.le.s32.totalorder 1, %s8
    %p90 = scmp.lt.s32.totalorder %s8, 3
    %p91 = pnand %p89, %p90
    %p92 = pneg %p91
    // Predicated region
    $region9: #{discriminator_forward.5} parent=5 // pred_check
      _
    $region10: #{discriminator_forward.5} parent=5 // pred_check_branch
      %94 = sbr.rel (%p91) target = $region12
    $region11: #{discriminator_forward.5} parent=5 // pred_region
      %s95 = ssub.s32 %s8, 1
      // Predicated region
      $region13: #{discriminator_forward.5} parent=11 // pred_check
        %p96 = pneg %p55
      $region14: #{discriminator_forward.5} parent=11 // pred_check_branch
        %98 = sbr.rel (%p96) target = $region16
      $region15: #{discriminator_forward.5} parent=11 // pred_region
        _
      $region16: #{discriminator_forward.5} parent=11 // pred_fallthru
        _
    $region12: #{discriminator_forward.5} parent=5 // pred_fallthru
      _
    %p99 = scmp.lt.s32.totalorder %s8, 2
    // Predicated region
    $region17: #{discriminator_forward.5} parent=5 // pred_check
      %p100 = pneg %p99
    $region18: #{discriminator_forward.5} parent=5 // pred_check_branch
      %102 = sbr.rel (%p100) target = $region20
    $region19: #{discriminator_forward.5} parent=5 // pred_region
      // Predicated region
      $region21: #{discriminator_forward.5} parent=19 // pred_check
        %p103 = pneg %p28
      $region22: #{discriminator_forward.5} parent=19 // pred_check_branch
        %105 = sbr.rel (%p103) target = $region24
      $region23: #{discriminator_forward.5} parent=19 // pred_region
        %p106 = scmp.lt.s32.totalorder %s8, 1
        %s107 = scalar_select %p106, %s8, 1
        %s108 = smul.addr %s107, 24
        %s109 = smul.addr %s108, 4
        %s110 = scalar_lea.vmem %s0, %s109
      $region24: #{discriminator_forward.5} parent=19 // pred_fallthru
        _
    $region20: #{discriminator_forward.5} parent=5 // pred_fallthru
      _
    %p111 = scmp.le.s32.totalorder 1, %s8
    %p112 = scmp.lt.s32.totalorder %s8, 3
    %p113 = pnand %p111, %p112
    %p114 = pneg %p113
    // Predicated region
    $region25: #{discriminator_forward.5} parent=5 // pred_check
      _
    $region26: #{discriminator_forward.5} parent=5 // pred_check_branch
      %116 = sbr.rel (%p113) target = $region28
    $region27: #{discriminator_forward.5} parent=5 // pred_region
      %s117 = ssub.s32 %s8, 1
      %p118 = scmp.lt.s32.totalorder %s13, 1
      %s119 = scalar_select %p118, %s13, 1
      %s120 = smul.addr %s119, 24
      %s121 = smul.addr %s120, 4
      %s122 = scalar_lea.vmem %s0, %s121
      %p123 = pneg %p34
      %p124 = pneg %p31
      %p125 = pneg %p55
      %p126 = pneg %p52
      %p127 = pneg %p81
      %p128 = pneg %p78
      %p129 = scmp.lt.s32.totalorder %s13, 1
      %s130 = scalar_select %p129, %s13, 1
      %s131 = smul.addr %s130, 2
      %s132 = smul.addr %s131, 4
      %s133 = scalar_lea.vmem %s2, %s132
      %p134 = scmp.lt.s32.totalorder %s13, 1
      %s135 = scalar_select %p134, %s13, 1
      %s136 = smul.addr %s135, 24
      %s137 = smul.addr %s136, 4
      %s138 = scalar_lea.vmem %s0, %s137
      %p139 = scmp.lt.s32.totalorder %s13, 1
      %s140 = scalar_select %p139, %s13, 1
      %s141 = smul.addr %s140, 2
      %s142 = smul.addr %s141, 4
      %s143 = scalar_lea.vmem %s2, %s142
      %v145 = vld [vmem:[%s138] sm:$0xf]
      %v146 = vld [vmem:[%s138 + $0x4] sm:$0xf]
      %v147 = vld [vmem:[%s1] sm:$0xf]
      %v148 = vld [vmem:[%s1 + $0x4] sm:$0xf]
      %v149 = vld [vmem:[%s1 + $0x8] sm:$0xf]
      %v150 = vld [vmem:[%s1 + $0xc] sm:$0xf]
      %v151 = vld [vmem:[%s1 + $0x10] sm:$0xf]
      %v152 = vld [vmem:[%s1 + $0x14] sm:$0xf]
      %v153 = vld [vmem:[%s1 + $0x18] sm:$0xf]
      %v154 = vld [vmem:[%s1 + $0x1c] sm:$0xf]
      %s155 = scalar_lea.vmem %s138, 24
      %v156 = vld [vmem:[%s155] sm:$0xf]
      %v157 = vld [vmem:[%s155 + $0x4] sm:$0xf]
      %s158 = scalar_lea.vmem %s1, 32
      %v159 = vld [vmem:[%s158] sm:$0xf]
      %v160 = vld [vmem:[%s158 + $0x4] sm:$0xf]
      %v161 = vld [vmem:[%s158 + $0x8] sm:$0xf]
      %v162 = vld [vmem:[%s158 + $0xc] sm:$0xf]
      %v163 = vld [vmem:[%s158 + $0x10] sm:$0xf]
      %v164 = vld [vmem:[%s158 + $0x14] sm:$0xf]
      %v165 = vld [vmem:[%s158 + $0x18] sm:$0xf]
      %v166 = vld [vmem:[%s158 + $0x1c] sm:$0xf]
      %v169 = vunpack.c.l.b16 %v156
      %v170 = vunpack.c.l.b16 %v157
      %v171 = vpack.c.b16 %v170, %v169
      %v180 = vunpack.c.l.b16 %v159
      %v181 = vunpack.c.l.b16 %v160
      %v182 = vunpack.c.l.b16 %v161
      %v183 = vunpack.c.l.b16 %v162
      %v184 = vunpack.c.l.b16 %v163
      %v185 = vunpack.c.l.b16 %v164
      %v186 = vunpack.c.l.b16 %v165
      %v187 = vunpack.c.l.b16 %v166
      %v188 = vpack.c.b16 %v181, %v180
      %v189 = vpack.c.b16 %v183, %v182
      %v190 = vpack.c.b16 %v185, %v184
      %v191 = vpack.c.b16 %v187, %v186
      %vm196 = vcmask 523264
      %v198 = vsel %vm196, %v171, 0
      %200 = vmatprep.subr.bf16.mxu0 0
      %201 = vmatpush1.bf16.msra.mxu0 %v188
      %202 = vmatprep.subr.bf16.mxu0 0
      %203 = vmatpush1.bf16.msra.mxu0 %v189
      %204 = vmatprep.subr.bf16.mxu0 0
      %205 = vmatpush1.bf16.msra.mxu0 %v190
      %206 = vmatprep.subr.bf16.mxu0 0
      %207 = vmatpush1.bf16.msra.mxu0 %v191
      %208 = vmatprep.subr.bf16.mxu0 0
      %209 = vmatpush1.bf16.msra.mxu0 0
      %210 = vmatprep.subr.bf16.mxu0 0
      %211 = vmatpush1.bf16.msra.mxu0 0
      %212 = vmatprep.subr.bf16.mxu0 0
      %213 = vmatpush1.bf16.msra.mxu0 0
      %214 = vmatprep.subr.bf16.mxu0 0
      %215 = vmatpush1.bf16.msra.mxu0 0
      %216 = vmatprep.subr.bf16.mxu0 0
      %217 = vmatpush1.bf16.msra.mxu0 0
      %218 = vmatprep.subr.bf16.mxu0 0
      %219 = vmatpush1.bf16.msra.mxu0 0
      %220 = vmatprep.subr.bf16.mxu0 0
      %221 = vmatpush1.bf16.msra.mxu0 0
      %222 = vmatprep.subr.bf16.mxu0 0
      %223 = vmatpush1.bf16.msra.mxu0 0
      %224 = vmatprep.subr.bf16.mxu0 0
      %225 = vmatpush1.bf16.msra.mxu0 0
      %226 = vmatprep.subr.bf16.mxu0 0
      %227 = vmatpush1.bf16.msra.mxu0 0
      %228 = vmatprep.subr.bf16.mxu0 0
      %229 = vmatpush1.bf16.msra.mxu0 0
      %230 = vmatprep.subr.bf16.mxu0 0
      %231 = vmatpush1.bf16.msra.mxu0 0
      %232 = vmatprep.mubr.bf16.mxu0 0
      %233 = vmatmul.mubr.bf16.gmra.mrb[0].mxu0 %v198
      %v234 = vpop.f32.mrb[0].mxu0
      %v235 = vadd.f32 0.0, %v234
      %v236 = vpop.f32.mrb[0].mxu0
      %v237 = vpop.f32.mrb[0].mxu0
      %v238 = vadd.f32 0.0, %v237
      %v239 = vpop.f32.mrb[0].mxu0
      %240 = vdwg.mxu0
      %v243 = vunpack.c.l.b16 %v145
      %v244 = vunpack.c.l.b16 %v146
      %v245 = vpack.c.b16 %v244, %v243
      %v254 = vunpack.c.l.b16 %v147
      %v255 = vunpack.c.l.b16 %v148
      %v256 = vunpack.c.l.b16 %v149
      %v257 = vunpack.c.l.b16 %v150
      %v258 = vunpack.c.l.b16 %v151
      %v259 = vunpack.c.l.b16 %v152
      %v260 = vunpack.c.l.b16 %v153
      %v261 = vunpack.c.l.b16 %v154
      %v262 = vpack.c.b16 %v255, %v254
      %v263 = vpack.c.b16 %v257, %v256
      %v264 = vpack.c.b16 %v259, %v258
      %v265 = vpack.c.b16 %v261, %v260
      %v271 = vsel %vm196, %v245, 0
      %273 = vmatprep.subr.bf16.mxu0 0
      %274 = vmatpush1.bf16.msra.mxu0 %v262
      %275 = vmatprep.subr.bf16.mxu0 0
      %276 = vmatpush1.bf16.msra.mxu0 %v263
      %277 = vmatprep.subr.bf16.mxu0 0
      %278 = vmatpush1.bf16.msra.mxu0 %v264
      %279 = vmatprep.subr.bf16.mxu0 0
      %280 = vmatpush1.bf16.msra.mxu0 %v265
      %281 = vmatprep.subr.bf16.mxu0 0
      %282 = vmatpush1.bf16.msra.mxu0 0
      %283 = vmatprep.subr.bf16.mxu0 0
      %284 = vmatpush1.bf16.msra.mxu0 0
      %285 = vmatprep.subr.bf16.mxu0 0
      %286 = vmatpush1.bf16.msra.mxu0 0
      %287 = vmatprep.subr.bf16.mxu0 0
      %288 = vmatpush1.bf16.msra.mxu0 0
      %289 = vmatprep.subr.bf16.mxu0 0
      %290 = vmatpush1.bf16.msra.mxu0 0
      %291 = vmatprep.subr.bf16.mxu0 0
      %292 = vmatpush1.bf16.msra.mxu0 0
      %293 = vmatprep.subr.bf16.mxu0 0
      %294 = vmatpush1.bf16.msra.mxu0 0
      %295 = vmatprep.subr.bf16.mxu0 0
      %296 = vmatpush1.bf16.msra.mxu0 0
      %297 = vmatprep.subr.bf16.mxu0 0
      %298 = vmatpush1.bf16.msra.mxu0 0
      %299 = vmatprep.subr.bf16.mxu0 0
      %300 = vmatpush1.bf16.msra.mxu0 0
      %301 = vmatprep.subr.bf16.mxu0 0
      %302 = vmatpush1.bf16.msra.mxu0 0
      %303 = vmatprep.subr.bf16.mxu0 0
      %304 = vmatpush1.bf16.msra.mxu0 0
      %305 = vmatprep.mubr.bf16.mxu0 0
      %306 = vmatmul.mubr.bf16.gmra.mrb[0].mxu0 %v271
      %v307 = vpop.f32.mrb[0].mxu0
      %v308 = vadd.f32 %v235, %v307
      %v309 = vpop.f32.mrb[0].mxu0
      %v310 = vpop.f32.mrb[0].mxu0
      %v311 = vadd.f32 %v238, %v310
      %v312 = vpop.f32.mrb[0].mxu0
      %313 = vdwg.mxu0
      %s314 = scalar_lea.vmem %s138, 12
      %v315 = vld [vmem:[%s314] sm:$0xf]
      %v316 = vld [vmem:[%s314 + $0x4] sm:$0xf]
      %s317 = scalar_lea.vmem %s1, 64
      %v318 = vld [vmem:[%s317] sm:$0xf]
      %v319 = vld [vmem:[%s317 + $0x4] sm:$0xf]
      %v320 = vld [vmem:[%s317 + $0x8] sm:$0xf]
      %v321 = vld [vmem:[%s317 + $0xc] sm:$0xf]
      %v322 = vld [vmem:[%s317 + $0x10] sm:$0xf]
      %v323 = vld [vmem:[%s317 + $0x14] sm:$0xf]
      %v324 = vld [vmem:[%s317 + $0x18] sm:$0xf]
      %v325 = vld [vmem:[%s317 + $0x1c] sm:$0xf]
      %v328 = vunpack.c.l.b16 %v315
      %v329 = vunpack.c.l.b16 %v316
      %v330 = vpack.c.b16 %v329, %v328
      %v339 = vunpack.c.l.b16 %v318
      %v340 = vunpack.c.l.b16 %v319
      %v341 = vunpack.c.l.b16 %v320
      %v342 = vunpack.c.l.b16 %v321
      %v343 = vunpack.c.l.b16 %v322
      %v344 = vunpack.c.l.b16 %v323
      %v345 = vunpack.c.l.b16 %v324
      %v346 = vunpack.c.l.b16 %v325
      %v347 = vpack.c.b16 %v340, %v339
      %v348 = vpack.c.b16 %v342, %v341
      %v349 = vpack.c.b16 %v344, %v343
      %v350 = vpack.c.b16 %v346, %v345
      %v356 = vsel %vm196, %v330, 0
      %358 = vmatprep.subr.bf16.mxu0 0
      %359 = vmatpush1.bf16.msra.mxu0 %v347
      %360 = vmatprep.subr.bf16.mxu0 0
      %361 = vmatpush1.bf16.msra.mxu0 %v348
      %362 = vmatprep.subr.bf16.mxu0 0
      %363 = vmatpush1.bf16.msra.mxu0 %v349
      %364 = vmatprep.subr.bf16.mxu0 0
      %365 = vmatpush1.bf16.msra.mxu0 %v350
      %366 = vmatprep.subr.bf16.mxu0 0
      %367 = vmatpush1.bf16.msra.mxu0 0
      %368 = vmatprep.subr.bf16.mxu0 0
      %369 = vmatpush1.bf16.msra.mxu0 0
      %370 = vmatprep.subr.bf16.mxu0 0
      %371 = vmatpush1.bf16.msra.mxu0 0
      %372 = vmatprep.subr.bf16.mxu0 0
      %373 = vmatpush1.bf16.msra.mxu0 0
      %374 = vmatprep.subr.bf16.mxu0 0
      %375 = vmatpush1.bf16.msra.mxu0 0
      %376 = vmatprep.subr.bf16.mxu0 0
      %377 = vmatpush1.bf16.msra.mxu0 0
      %378 = vmatprep.subr.bf16.mxu0 0
      %379 = vmatpush1.bf16.msra.mxu0 0
      %380 = vmatprep.subr.bf16.mxu0 0
      %381 = vmatpush1.bf16.msra.mxu0 0
      %382 = vmatprep.subr.bf16.mxu0 0
      %383 = vmatpush1.bf16.msra.mxu0 0
      %384 = vmatprep.subr.bf16.mxu0 0
      %385 = vmatpush1.bf16.msra.mxu0 0
      %386 = vmatprep.subr.bf16.mxu0 0
      %387 = vmatpush1.bf16.msra.mxu0 0
      %388 = vmatprep.subr.bf16.mxu0 0
      %389 = vmatpush1.bf16.msra.mxu0 0
      %390 = vmatprep.mubr.bf16.mxu0 0
      %391 = vmatmul.mubr.bf16.gmra.mrb[0].mxu0 %v356
      %v392 = vpop.f32.mrb[0].mxu0
      %v393 = vadd.f32 0.0, %v392
      %v394 = vpop.f32.mrb[0].mxu0
      %v395 = vpop.f32.mrb[0].mxu0
      %v396 = vadd.f32 0.0, %v395
      %v397 = vpop.f32.mrb[0].mxu0
      %398 = vdwg.mxu0
      %v399 = vadd.f32 %v308, %v393
      %v400 = vadd.f32 %v311, %v396
      %s401 = scalar_lea.vmem %s138, 36
      %v402 = vld [vmem:[%s401] sm:$0xf]
      %v403 = vld [vmem:[%s401 + $0x4] sm:$0xf]
      %s404 = scalar_lea.vmem %s1, 96
      %v405 = vld [vmem:[%s404] sm:$0xf]
      %v406 = vld [vmem:[%s404 + $0x4] sm:$0xf]
      %v407 = vld [vmem:[%s404 + $0x8] sm:$0xf]
      %v408 = vld [vmem:[%s404 + $0xc] sm:$0xf]
      %v409 = vld [vmem:[%s404 + $0x10] sm:$0xf]
      %v410 = vld [vmem:[%s404 + $0x14] sm:$0xf]
      %v411 = vld [vmem:[%s404 + $0x18] sm:$0xf]
      %v412 = vld [vmem:[%s404 + $0x1c] sm:$0xf]
      %v415 = vunpack.c.l.b16 %v402
      %v416 = vunpack.c.l.b16 %v403
      %v417 = vpack.c.b16 %v416, %v415
      %v426 = vunpack.c.l.b16 %v405
      %v427 = vunpack.c.l.b16 %v406
      %v428 = vunpack.c.l.b16 %v407
      %v429 = vunpack.c.l.b16 %v408
      %v430 = vunpack.c.l.b16 %v409
      %v431 = vunpack.c.l.b16 %v410
      %v432 = vunpack.c.l.b16 %v411
      %v433 = vunpack.c.l.b16 %v412
      %v434 = vpack.c.b16 %v427, %v426
      %v435 = vpack.c.b16 %v429, %v428
      %v436 = vpack.c.b16 %v431, %v430
      %v437 = vpack.c.b16 %v433, %v432
      %v443 = vsel %vm196, %v417, 0
      %445 = vmatprep.subr.bf16.mxu0 0
      %446 = vmatpush1.bf16.msra.mxu0 %v434
      %447 = vmatprep.subr.bf16.mxu0 0
      %448 = vmatpush1.bf16.msra.mxu0 %v435
      %449 = vmatprep.subr.bf16.mxu0 0
      %450 = vmatpush1.bf16.msra.mxu0 %v436
      %451 = vmatprep.subr.bf16.mxu0 0
      %452 = vmatpush1.bf16.msra.mxu0 %v437
      %453 = vmatprep.subr.bf16.mxu0 0
      %454 = vmatpush1.bf16.msra.mxu0 0
      %455 = vmatprep.subr.bf16.mxu0 0
      %456 = vmatpush1.bf16.msra.mxu0 0
      %457 = vmatprep.subr.bf16.mxu0 0
      %458 = vmatpush1.bf16.msra.mxu0 0
      %459 = vmatprep.subr.bf16.mxu0 0
      %460 = vmatpush1.bf16.msra.mxu0 0
      %461 = vmatprep.subr.bf16.mxu0 0
      %462 = vmatpush1.bf16.msra.mxu0 0
      %463 = vmatprep.subr.bf16.mxu0 0
      %464 = vmatpush1.bf16.msra.mxu0 0
      %465 = vmatprep.subr.bf16.mxu0 0
      %466 = vmatpush1.bf16.msra.mxu0 0
      %467 = vmatprep.subr.bf16.mxu0 0
      %468 = vmatpush1.bf16.msra.mxu0 0
      %469 = vmatprep.subr.bf16.mxu0 0
      %470 = vmatpush1.bf16.msra.mxu0 0
      %471 = vmatprep.subr.bf16.mxu0 0
      %472 = vmatpush1.bf16.msra.mxu0 0
      %473 = vmatprep.subr.bf16.mxu0 0
      %474 = vmatpush1.bf16.msra.mxu0 0
      %475 = vmatprep.subr.bf16.mxu0 0
      %476 = vmatpush1.bf16.msra.mxu0 0
      %477 = vmatprep.mubr.bf16.mxu0 0
      %478 = vmatmul.mubr.bf16.gmra.mrb[0].mxu0 %v443
      %v479 = vpop.f32.mrb[0].mxu0
      %v480 = vadd.f32 0.0, %v479
      %v481 = vpop.f32.mrb[0].mxu0
      %v482 = vpop.f32.mrb[0].mxu0
      %v483 = vadd.f32 0.0, %v482
      %v484 = vpop.f32.mrb[0].mxu0
      %485 = vdwg.mxu0
      %v486 = vadd.f32 %v399, %v480
      %v487 = vadd.f32 %v400, %v483
      %s488 = scalar_lea.vmem %s138, 48
      %v489 = vld [vmem:[%s488] sm:$0xf]
      %v490 = vld [vmem:[%s488 + $0x4] sm:$0xf]
      %s491 = scalar_lea.vmem %s1, 128
      %v492 = vld [vmem:[%s491] sm:$0xf]
      %v493 = vld [vmem:[%s491 + $0x4] sm:$0xf]
      %v494 = vld [vmem:[%s491 + $0x8] sm:$0xf]
      %v495 = vld [vmem:[%s491 + $0xc] sm:$0xf]
      %v496 = vld [vmem:[%s491 + $0x10] sm:$0xf]
      %v497 = vld [vmem:[%s491 + $0x14] sm:$0xf]
      %v498 = vld [vmem:[%s491 + $0x18] sm:$0xf]
      %v499 = vld [vmem:[%s491 + $0x1c] sm:$0xf]
      %v502 = vunpack.c.l.b16 %v489
      %v503 = vunpack.c.l.b16 %v490
      %v504 = vpack.c.b16 %v503, %v502
      %v513 = vunpack.c.l.b16 %v492
      %v514 = vunpack.c.l.b16 %v493
      %v515 = vunpack.c.l.b16 %v494
      %v516 = vunpack.c.l.b16 %v495
      %v517 = vunpack.c.l.b16 %v496
      %v518 = vunpack.c.l.b16 %v497
      %v519 = vunpack.c.l.b16 %v498
      %v520 = vunpack.c.l.b16 %v499
      %v521 = vpack.c.b16 %v514, %v513
      %v522 = vpack.c.b16 %v516, %v515
      %v523 = vpack.c.b16 %v518, %v517
      %v524 = vpack.c.b16 %v520, %v519
      %v530 = vsel %vm196, %v504, 0
      %532 = vmatprep.subr.bf16.mxu0 0
      %533 = vmatpush1.bf16.msra.mxu0 %v521
      %534 = vmatprep.subr.bf16.mxu0 0
      %535 = vmatpush1.bf16.msra.mxu0 %v522
      %536 = vmatprep.subr.bf16.mxu0 0
      %537 = vmatpush1.bf16.msra.mxu0 %v523
      %538 = vmatprep.subr.bf16.mxu0 0
      %539 = vmatpush1.bf16.msra.mxu0 %v524
      %540 = vmatprep.subr.bf16.mxu0 0
      %541 = vmatpush1.bf16.msra.mxu0 0
      %542 = vmatprep.subr.bf16.mxu0 0
      %543 = vmatpush1.bf16.msra.mxu0 0
      %544 = vmatprep.subr.bf16.mxu0 0
      %545 = vmatpush1.bf16.msra.mxu0 0
      %546 = vmatprep.subr.bf16.mxu0 0
      %547 = vmatpush1.bf16.msra.mxu0 0
      %548 = vmatprep.subr.bf16.mxu0 0
      %549 = vmatpush1.bf16.msra.mxu0 0
      %550 = vmatprep.subr.bf16.mxu0 0
      %551 = vmatpush1.bf16.msra.mxu0 0
      %552 = vmatprep.subr.bf16.mxu0 0
      %553 = vmatpush1.bf16.msra.mxu0 0
      %554 = vmatprep.subr.bf16.mxu0 0
      %555 = vmatpush1.bf16.msra.mxu0 0
      %556 = vmatprep.subr.bf16.mxu0 0
      %557 = vmatpush1.bf16.msra.mxu0 0
      %558 = vmatprep.subr.bf16.mxu0 0
      %559 = vmatpush1.bf16.msra.mxu0 0
      %560 = vmatprep.subr.bf16.mxu0 0
      %561 = vmatpush1.bf16.msra.mxu0 0
      %562 = vmatprep.subr.bf16.mxu0 0
      %563 = vmatpush1.bf16.msra.mxu0 0
      %564 = vmatprep.mubr.bf16.mxu0 0
      %565 = vmatmul.mubr.bf16.gmra.mrb[0].mxu0 %v530
      %v566 = vpop.f32.mrb[0].mxu0
      %v567 = vadd.f32 0.0, %v566
      %v568 = vpop.f32.mrb[0].mxu0
      %v569 = vpop.f32.mrb[0].mxu0
      %v570 = vadd.f32 0.0, %v569
      %v571 = vpop.f32.mrb[0].mxu0
      %572 = vdwg.mxu0
      %v573 = vadd.f32 %v486, %v567
      %v574 = vadd.f32 %v487, %v570
      %s575 = scalar_lea.vmem %s138, 72
      %v576 = vld [vmem:[%s575] sm:$0xf]
      %v577 = vld [vmem:[%s575 + $0x4] sm:$0xf]
      %s578 = scalar_lea.vmem %s1, 160
      %v579 = vld [vmem:[%s578] sm:$0xf]
      %v580 = vld [vmem:[%s578 + $0x4] sm:$0xf]
      %v581 = vld [vmem:[%s578 + $0x8] sm:$0xf]
      %v582 = vld [vmem:[%s578 + $0xc] sm:$0xf]
      %v583 = vld [vmem:[%s578 + $0x10] sm:$0xf]
      %v584 = vld [vmem:[%s578 + $0x14] sm:$0xf]
      %v585 = vld [vmem:[%s578 + $0x18] sm:$0xf]
      %v586 = vld [vmem:[%s578 + $0x1c] sm:$0xf]
      %v589 = vunpack.c.l.b16 %v576
      %v590 = vunpack.c.l.b16 %v577
      %v591 = vpack.c.b16 %v590, %v589
      %v600 = vunpack.c.l.b16 %v579
      %v601 = vunpack.c.l.b16 %v580
      %v602 = vunpack.c.l.b16 %v581
      %v603 = vunpack.c.l.b16 %v582
      %v604 = vunpack.c.l.b16 %v583
      %v605 = vunpack.c.l.b16 %v584
      %v606 = vunpack.c.l.b16 %v585
      %v607 = vunpack.c.l.b16 %v586
      %v608 = vpack.c.b16 %v601, %v600
      %v609 = vpack.c.b16 %v603, %v602
      %v610 = vpack.c.b16 %v605, %v604
      %v611 = vpack.c.b16 %v607, %v606
      %v617 = vsel %vm196, %v591, 0
      %619 = vmatprep.subr.bf16.mxu0 0
      %620 = vmatpush1.bf16.msra.mxu0 %v608
      %621 = vmatprep.subr.bf16.mxu0 0
      %622 = vmatpush1.bf16.msra.mxu0 %v609
      %623 = vmatprep.subr.bf16.mxu0 0
      %624 = vmatpush1.bf16.msra.mxu0 %v610
      %625 = vmatprep.subr.bf16.mxu0 0
      %626 = vmatpush1.bf16.msra.mxu0 %v611
      %627 = vmatprep.subr.bf16.mxu0 0
      %628 = vmatpush1.bf16.msra.mxu0 0
      %629 = vmatprep.subr.bf16.mxu0 0
      %630 = vmatpush1.bf16.msra.mxu0 0
      %631 = vmatprep.subr.bf16.mxu0 0
      %632 = vmatpush1.bf16.msra.mxu0 0
      %633 = vmatprep.subr.bf16.mxu0 0
      %634 = vmatpush1.bf16.msra.mxu0 0
      %635 = vmatprep.subr.bf16.mxu0 0
      %636 = vmatpush1.bf16.msra.mxu0 0
      %637 = vmatprep.subr.bf16.mxu0 0
      %638 = vmatpush1.bf16.msra.mxu0 0
      %639 = vmatprep.subr.bf16.mxu0 0
      %640 = vmatpush1.bf16.msra.mxu0 0
      %641 = vmatprep.subr.bf16.mxu0 0
      %642 = vmatpush1.bf16.msra.mxu0 0
      %643 = vmatprep.subr.bf16.mxu0 0
      %644 = vmatpush1.bf16.msra.mxu0 0
      %645 = vmatprep.subr.bf16.mxu0 0
      %646 = vmatpush1.bf16.msra.mxu0 0
      %647 = vmatprep.subr.bf16.mxu0 0
      %648 = vmatpush1.bf16.msra.mxu0 0
      %649 = vmatprep.subr.bf16.mxu0 0
      %650 = vmatpush1.bf16.msra.mxu0 0
      %651 = vmatprep.mubr.bf16.mxu0 0
      %652 = vmatmul.mubr.bf16.gmra.mrb[0].mxu0 %v617
      %v653 = vpop.f32.mrb[0].mxu0
      %v654 = vadd.f32 0.0, %v653
      %v655 = vpop.f32.mrb[0].mxu0
      %v656 = vpop.f32.mrb[0].mxu0
      %v657 = vadd.f32 0.0, %v656
      %v658 = vpop.f32.mrb[0].mxu0
      %659 = vdwg.mxu0
      %v660 = vadd.f32 %v573, %v654
      %v661 = vadd.f32 %v574, %v657
      %s662 = scalar_lea.vmem %s138, 60
      %v663 = vld [vmem:[%s662] sm:$0xf]
      %v664 = vld [vmem:[%s662 + $0x4] sm:$0xf]
      %s665 = scalar_lea.vmem %s1, 192
      %v666 = vld [vmem:[%s665] sm:$0xf]
      %v667 = vld [vmem:[%s665 + $0x4] sm:$0xf]
      %v668 = vld [vmem:[%s665 + $0x8] sm:$0xf]
      %v669 = vld [vmem:[%s665 + $0xc] sm:$0xf]
      %v670 = vld [vmem:[%s665 + $0x10] sm:$0xf]
      %v671 = vld [vmem:[%s665 + $0x14] sm:$0xf]
      %v672 = vld [vmem:[%s665 + $0x18] sm:$0xf]
      %v673 = vld [vmem:[%s665 + $0x1c] sm:$0xf]
      %v676 = vunpack.c.l.b16 %v663
      %v677 = vunpack.c.l.b16 %v664
      %v678 = vpack.c.b16 %v677, %v676
      %v687 = vunpack.c.l.b16 %v666
      %v688 = vunpack.c.l.b16 %v667
      %v689 = vunpack.c.l.b16 %v668
      %v690 = vunpack.c.l.b16 %v669
      %v691 = vunpack.c.l.b16 %v670
      %v692 = vunpack.c.l.b16 %v671
      %v693 = vunpack.c.l.b16 %v672
      %v694 = vunpack.c.l.b16 %v673
      %v695 = vpack.c.b16 %v688, %v687
      %v696 = vpack.c.b16 %v690, %v689
      %v697 = vpack.c.b16 %v692, %v691
      %v698 = vpack.c.b16 %v694, %v693
      %v704 = vsel %vm196, %v678, 0
      %706 = vmatprep.subr.bf16.mxu0 0
      %707 = vmatpush1.bf16.msra.mxu0 %v695
      %708 = vmatprep.subr.bf16.mxu0 0
      %709 = vmatpush1.bf16.msra.mxu0 %v696
      %710 = vmatprep.subr.bf16.mxu0 0
      %711 = vmatpush1.bf16.msra.mxu0 %v697
      %712 = vmatprep.subr.bf16.mxu0 0
      %713 = vmatpush1.bf16.msra.mxu0 %v698
      %714 = vmatprep.subr.bf16.mxu0 0
      %715 = vmatpush1.bf16.msra.mxu0 0
      %716 = vmatprep.subr.bf16.mxu0 0
      %717 = vmatpush1.bf16.msra.mxu0 0
      %718 = vmatprep.subr.bf16.mxu0 0
      %719 = vmatpush1.bf16.msra.mxu0 0
      %720 = vmatprep.subr.bf16.mxu0 0
      %721 = vmatpush1.bf16.msra.mxu0 0
      %722 = vmatprep.subr.bf16.mxu0 0
      %723 = vmatpush1.bf16.msra.mxu0 0
      %724 = vmatprep.subr.bf16.mxu0 0
      %725 = vmatpush1.bf16.msra.mxu0 0
      %726 = vmatprep.subr.bf16.mxu0 0
      %727 = vmatpush1.bf16.msra.mxu0 0
      %728 = vmatprep.subr.bf16.mxu0 0
      %729 = vmatpush1.bf16.msra.mxu0 0
      %730 = vmatprep.subr.bf16.mxu0 0
      %731 = vmatpush1.bf16.msra.mxu0 0
      %732 = vmatprep.subr.bf16.mxu0 0
      %733 = vmatpush1.bf16.msra.mxu0 0
      %734 = vmatprep.subr.bf16.mxu0 0
      %735 = vmatpush1.bf16.msra.mxu0 0
      %736 = vmatprep.subr.bf16.mxu0 0
      %737 = vmatpush1.bf16.msra.mxu0 0
      %738 = vmatprep.mubr.bf16.mxu0 0
      %739 = vmatmul.mubr.bf16.gmra.mrb[0].mxu0 %v704
      %v740 = vpop.f32.mrb[0].mxu0
      %v741 = vadd.f32 0.0, %v740
      %v742 = vpop.f32.mrb[0].mxu0
      %v743 = vpop.f32.mrb[0].mxu0
      %v744 = vadd.f32 0.0, %v743
      %v745 = vpop.f32.mrb[0].mxu0
      %746 = vdwg.mxu0
      %v747 = vadd.f32 %v660, %v741
      %v748 = vadd.f32 %v661, %v744
      %s749 = scalar_lea.vmem %s138, 84
      %v750 = vld [vmem:[%s749] sm:$0xf]
      %v751 = vld [vmem:[%s749 + $0x4] sm:$0xf]
      %s752 = scalar_lea.vmem %s1, 224
      %v753 = vld [vmem:[%s752] sm:$0xf]
      %v754 = vld [vmem:[%s752 + $0x4] sm:$0xf]
      %v755 = vld [vmem:[%s752 + $0x8] sm:$0xf]
      %v756 = vld [vmem:[%s752 + $0xc] sm:$0xf]
      %v757 = vld [vmem:[%s752 + $0x10] sm:$0xf]
      %v758 = vld [vmem:[%s752 + $0x14] sm:$0xf]
      %v759 = vld [vmem:[%s752 + $0x18] sm:$0xf]
      %v760 = vld [vmem:[%s752 + $0x1c] sm:$0xf]
      %v763 = vunpack.c.l.b16 %v750
      %v764 = vunpack.c.l.b16 %v751
      %v765 = vpack.c.b16 %v764, %v763
      %v774 = vunpack.c.l.b16 %v753
      %v775 = vunpack.c.l.b16 %v754
      %v776 = vunpack.c.l.b16 %v755
      %v777 = vunpack.c.l.b16 %v756
      %v778 = vunpack.c.l.b16 %v757
      %v779 = vunpack.c.l.b16 %v758
      %v780 = vunpack.c.l.b16 %v759
      %v781 = vunpack.c.l.b16 %v760
      %v782 = vpack.c.b16 %v775, %v774
      %v783 = vpack.c.b16 %v777, %v776
      %v784 = vpack.c.b16 %v779, %v778
      %v785 = vpack.c.b16 %v781, %v780
      %v791 = vsel %vm196, %v765, 0
      %793 = vmatprep.subr.bf16.mxu0 0
      %794 = vmatpush1.bf16.msra.mxu0 %v782
      %795 = vmatprep.subr.bf16.mxu0 0
      %796 = vmatpush1.bf16.msra.mxu0 %v783
      %797 = vmatprep.subr.bf16.mxu0 0
      %798 = vmatpush1.bf16.msra.mxu0 %v784
      %799 = vmatprep.subr.bf16.mxu0 0
      %800 = vmatpush1.bf16.msra.mxu0 %v785
      %801 = vmatprep.subr.bf16.mxu0 0
      %802 = vmatpush1.bf16.msra.mxu0 0
      %803 = vmatprep.subr.bf16.mxu0 0
      %804 = vmatpush1.bf16.msra.mxu0 0
      %805 = vmatprep.subr.bf16.mxu0 0
      %806 = vmatpush1.bf16.msra.mxu0 0
      %807 = vmatprep.subr.bf16.mxu0 0
      %808 = vmatpush1.bf16.msra.mxu0 0
      %809 = vmatprep.subr.bf16.mxu0 0
      %810 = vmatpush1.bf16.msra.mxu0 0
      %811 = vmatprep.subr.bf16.mxu0 0
      %812 = vmatpush1.bf16.msra.mxu0 0
      %813 = vmatprep.subr.bf16.mxu0 0
      %814 = vmatpush1.bf16.msra.mxu0 0
      %815 = vmatprep.subr.bf16.mxu0 0
      %816 = vmatpush1.bf16.msra.mxu0 0
      %817 = vmatprep.subr.bf16.mxu0 0
      %818 = vmatpush1.bf16.msra.mxu0 0
      %819 = vmatprep.subr.bf16.mxu0 0
      %820 = vmatpush1.bf16.msra.mxu0 0
      %821 = vmatprep.subr.bf16.mxu0 0
      %822 = vmatpush1.bf16.msra.mxu0 0
      %823 = vmatprep.subr.bf16.mxu0 0
      %824 = vmatpush1.bf16.msra.mxu0 0
      %825 = vmatprep.mubr.bf16.mxu0 0
      %826 = vmatmul.mubr.bf16.gmra.mrb[0].mxu0 %v791
      %v827 = vpop.f32.mrb[0].mxu0
      %v828 = vadd.f32 0.0, %v827
      %v829 = vpop.f32.mrb[0].mxu0
      %v830 = vpop.f32.mrb[0].mxu0
      %v831 = vadd.f32 0.0, %v830
      %v832 = vpop.f32.mrb[0].mxu0
      %833 = vdwg.mxu0
      %v834 = vadd.f32 %v747, %v828
      %v835 = vadd.f32 %v748, %v831
      %v836 = vld [vmem:[%s138] sm:$0xc]
      %v837 = vld [vmem:[%s138 + $0x4] sm:$0xf]
      %v838 = vld [vmem:[%s138 + $0x8] sm:$0x3]
      %s839 = scalar_lea.vmem %s1, 256
      %v840 = vld [vmem:[%s839] sm:$0xf]
      %v841 = vld [vmem:[%s839 + $0x4] sm:$0xf]
      %v842 = vld [vmem:[%s839 + $0x8] sm:$0xf]
      %v843 = vld [vmem:[%s839 + $0xc] sm:$0xf]
      %v844 = vld [vmem:[%s839 + $0x10] sm:$0xf]
      %v845 = vld [vmem:[%s839 + $0x14] sm:$0xf]
      %v846 = vld [vmem:[%s839 + $0x18] sm:$0xf]
      %v847 = vld [vmem:[%s839 + $0x1c] sm:$0xf]
      %v851 = vunpack.c.l.b16 %v836
      %v852 = vunpack.c.l.b16 %v837
      %v853 = vunpack.c.l.b16 %v838
      %v854 = vpack.c.b16 %v852, %v851
      %v855 = vpack.c.b16 %v853, %v853
      %vm856 = vcmask 1045504
      %v857 = vrot.slane %v854, 2
      %v858 = vrot.slane %v855, 2
      %v859 = vsel %vm856, %v857, %v858
      %v868 = vunpack.c.l.b16 %v840
      %v869 = vunpack.c.l.b16 %v841
      %v870 = vunpack.c.l.b16 %v842
      %v871 = vunpack.c.l.b16 %v843
      %v872 = vunpack.c.l.b16 %v844
      %v873 = vunpack.c.l.b16 %v845
      %v874 = vunpack.c.l.b16 %v846
      %v875 = vunpack.c.l.b16 %v847
      %v876 = vpack.c.b16 %v869, %v868
      %v877 = vpack.c.b16 %v871, %v870
      %v878 = vpack.c.b16 %v873, %v872
      %v879 = vpack.c.b16 %v875, %v874
      %v885 = vsel %vm196, %v859, 0
      %887 = vmatprep.subr.bf16.mxu0 0
      %888 = vmatpush1.bf16.msra.mxu0 %v876
      %889 = vmatprep.subr.bf16.mxu0 0
      %890 = vmatpush1.bf16.msra.mxu0 %v877
      %891 = vmatprep.subr.bf16.mxu0 0
      %892 = vmatpush1.bf16.msra.mxu0 %v878
      %893 = vmatprep.subr.bf16.mxu0 0
      %894 = vmatpush1.bf16.msra.mxu0 %v879
      %895 = vmatprep.subr.bf16.mxu0 0
      %896 = vmatpush1.bf16.msra.mxu0 0
      %897 = vmatprep.subr.bf16.mxu0 0
      %898 = vmatpush1.bf16.msra.mxu0 0
      %899 = vmatprep.subr.bf16.mxu0 0
      %900 = vmatpush1.bf16.msra.mxu0 0
      %901 = vmatprep.subr.bf16.mxu0 0
      %902 = vmatpush1.bf16.msra.mxu0 0
      %903 = vmatprep.subr.bf16.mxu0 0
      %904 = vmatpush1.bf16.msra.mxu0 0
      %905 = vmatprep.subr.bf16.mxu0 0
      %906 = vmatpush1.bf16.msra.mxu0 0
      %907 = vmatprep.subr.bf16.mxu0 0
      %908 = vmatpush1.bf16.msra.mxu0 0
      %909 = vmatprep.subr.bf16.mxu0 0
      %910 = vmatpush1.bf16.msra.mxu0 0
      %911 = vmatprep.subr.bf16.mxu0 0
      %912 = vmatpush1.bf16.msra.mxu0 0
      %913 = vmatprep.subr.bf16.mxu0 0
      %914 = vmatpush1.bf16.msra.mxu0 0
      %915 = vmatprep.subr.bf16.mxu0 0
      %916 = vmatpush1.bf16.msra.mxu0 0
      %917 = vmatprep.subr.bf16.mxu0 0
      %918 = vmatpush1.bf16.msra.mxu0 0
      %919 = vmatprep.mubr.bf16.mxu0 0
      %920 = vmatmul.mubr.bf16.gmra.mrb[0].mxu0 %v885
      %v921 = vpop.f32.mrb[0].mxu0
      %v922 = vadd.f32 0.0, %v921
      %v923 = vpop.f32.mrb[0].mxu0
      %v924 = vpop.f32.mrb[0].mxu0
      %v925 = vadd.f32 0.0, %v924
      %v926 = vpop.f32.mrb[0].mxu0
      %927 = vdwg.mxu0
      %v928 = vadd.f32 %v834, %v922
      %v929 = vadd.f32 %v835, %v925
      %v930 = vld [vmem:[%s155] sm:$0xc]
      %v931 = vld [vmem:[%s155 + $0x4] sm:$0xf]
      %v932 = vld [vmem:[%s155 + $0x8] sm:$0x3]
      %s933 = scalar_lea.vmem %s1, 288
      %v934 = vld [vmem:[%s933] sm:$0xf]
      %v935 = vld [vmem:[%s933 + $0x4] sm:$0xf]
      %v936 = vld [vmem:[%s933 + $0x8] sm:$0xf]
      %v937 = vld [vmem:[%s933 + $0xc] sm:$0xf]
      %v938 = vld [vmem:[%s933 + $0x10] sm:$0xf]
      %v939 = vld [vmem:[%s933 + $0x14] sm:$0xf]
      %v940 = vld [vmem:[%s933 + $0x18] sm:$0xf]
      %v941 = vld [vmem:[%s933 + $0x1c] sm:$0xf]
      %v945 = vunpack.c.l.b16 %v930
      %v946 = vunpack.c.l.b16 %v931
      %v947 = vunpack.c.l.b16 %v932
      %v948 = vpack.c.b16 %v946, %v945
      %v949 = vpack.c.b16 %v947, %v947
      %v950 = vrot.slane %v948, 2
      %v951 = vrot.slane %v949, 2
      %v952 = vsel %vm856, %v950, %v951
      %v961 = vunpack.c.l.b16 %v934
      %v962 = vunpack.c.l.b16 %v935
      %v963 = vunpack.c.l.b16 %v936
      %v964 = vunpack.c.l.b16 %v937
      %v965 = vunpack.c.l.b16 %v938
      %v966 = vunpack.c.l.b16 %v939
      %v967 = vunpack.c.l.b16 %v940
      %v968 = vunpack.c.l.b16 %v941
      %v969 = vpack.c.b16 %v962, %v961
      %v970 = vpack.c.b16 %v964, %v963
      %v971 = vpack.c.b16 %v966, %v965
      %v972 = vpack.c.b16 %v968, %v967
      %v978 = vsel %vm196, %v952, 0
      %980 = vmatprep.subr.bf16.mxu0 0
      %981 = vmatpush1.bf16.msra.mxu0 %v969
      %982 = vmatprep.subr.bf16.mxu0 0
      %983 = vmatpush1.bf16.msra.mxu0 %v970
      %984 = vmatprep.subr.bf16.mxu0 0
      %985 = vmatpush1.bf16.msra.mxu0 %v971
      %986 = vmatprep.subr.bf16.mxu0 0
      %987 = vmatpush1.bf16.msra.mxu0 %v972
      %988 = vmatprep.subr.bf16.mxu0 0
      %989 = vmatpush1.bf16.msra.mxu0 0
      %990 = vmatprep.subr.bf16.mxu0 0
      %991 = vmatpush1.bf16.msra.mxu0 0
      %992 = vmatprep.subr.bf16.mxu0 0
      %993 = vmatpush1.bf16.msra.mxu0 0
      %994 = vmatprep.subr.bf16.mxu0 0
      %995 = vmatpush1.bf16.msra.mxu0 0
      %996 = vmatprep.subr.bf16.mxu0 0
      %997 = vmatpush1.bf16.msra.mxu0 0
      %998 = vmatprep.subr.bf16.mxu0 0
      %999 = vmatpush1.bf16.msra.mxu0 0
      %1000 = vmatprep.subr.bf16.mxu0 0
      %1001 = vmatpush1.bf16.msra.mxu0 0
      %1002 = vmatprep.subr.bf16.mxu0 0
      %1003 = vmatpush1.bf16.msra.mxu0 0
      %1004 = vmatprep.subr.bf16.mxu0 0
      %1005 = vmatpush1.bf16.msra.mxu0 0
      %1006 = vmatprep.subr.bf16.mxu0 0
      %1007 = vmatpush1.bf16.msra.mxu0 0
      %1008 = vmatprep.subr.bf16.mxu0 0
      %1009 = vmatpush1.bf16.msra.mxu0 0
      %1010 = vmatprep.subr.bf16.mxu0 0
      %1011 = vmatpush1.bf16.msra.mxu0 0
      %1012 = vmatprep.mubr.bf16.mxu0 0
      %1013 = vmatmul.mubr.bf16.gmra.mrb[0].mxu0 %v978
      %v1014 = vpop.f32.mrb[0].mxu0
      %v1015 = vadd.f32 0.0, %v1014
      %v1016 = vpop.f32.mrb[0].mxu0
      %v1017 = vpop.f32.mrb[0].mxu0
      %v1018 = vadd.f32 0.0, %v1017
      %v1019 = vpop.f32.mrb[0].mxu0
      %1020 = vdwg.mxu0
      %v1021 = vadd.f32 %v928, %v1015
      %v1022 = vadd.f32 %v929, %v1018
      %v1023 = vld [vmem:[%s314] sm:$0xc]
      %v1024 = vld [vmem:[%s314 + $0x4] sm:$0xf]
      %v1025 = vld [vmem:[%s314 + $0x8] sm:$0x3]
      %s1026 = scalar_lea.vmem %s1, 320
      %v1027 = vld [vmem:[%s1026] sm:$0xf]
      %v1028 = vld [vmem:[%s1026 + $0x4] sm:$0xf]
      %v1029 = vld [vmem:[%s1026 + $0x8] sm:$0xf]
      %v1030 = vld [vmem:[%s1026 + $0xc] sm:$0xf]
      %v1031 = vld [vmem:[%s1026 + $0x10] sm:$0xf]
      %v1032 = vld [vmem:[%s1026 + $0x14] sm:$0xf]
      %v1033 = vld [vmem:[%s1026 + $0x18] sm:$0xf]
      %v1034 = vld [vmem:[%s1026 + $0x1c] sm:$0xf]
      %v1038 = vunpack.c.l.b16 %v1023
      %v1039 = vunpack.c.l.b16 %v1024
      %v1040 = vunpack.c.l.b16 %v1025
      %v1041 = vpack.c.b16 %v1039, %v1038
      %v1042 = vpack.c.b16 %v1040, %v1040
      %v1043 = vrot.slane %v1041, 2
      %v1044 = vrot.slane %v1042, 2
      %v1045 = vsel %vm856, %v1043, %v1044
      %v1054 = vunpack.c.l.b16 %v1027
      %v1055 = vunpack.c.l.b16 %v1028
      %v1056 = vunpack.c.l.b16 %v1029
      %v1057 = vunpack.c.l.b16 %v1030
      %v1058 = vunpack.c.l.b16 %v1031
      %v1059 = vunpack.c.l.b16 %v1032
      %v1060 = vunpack.c.l.b16 %v1033
      %v1061 = vunpack.c.l.b16 %v1034
      %v1062 = vpack.c.b16 %v1055, %v1054
      %v1063 = vpack.c.b16 %v1057, %v1056
      %v1064 = vpack.c.b16 %v1059, %v1058
      %v1065 = vpack.c.b16 %v1061, %v1060
      %v1071 = vsel %vm196, %v1045, 0
      %1073 = vmatprep.subr.bf16.mxu0 0
      %1074 = vmatpush1.bf16.msra.mxu0 %v1062
      %1075 = vmatprep.subr.bf16.mxu0 0
      %1076 = vmatpush1.bf16.msra.mxu0 %v1063
      %1077 = vmatprep.subr.bf16.mxu0 0
      %1078 = vmatpush1.bf16.msra.mxu0 %v1064
      %1079 = vmatprep.subr.bf16.mxu0 0
      %1080 = vmatpush1.bf16.msra.mxu0 %v1065
      %1081 = vmatprep.subr.bf16.mxu0 0
      %1082 = vmatpush1.bf16.msra.mxu0 0
      %1083 = vmatprep.subr.bf16.mxu0 0
      %1084 = vmatpush1.bf16.msra.mxu0 0
      %1085 = vmatprep.subr.bf16.mxu0 0
      %1086 = vmatpush1.bf16.msra.mxu0 0
      %1087 = vmatprep.subr.bf16.mxu0 0
      %1088 = vmatpush1.bf16.msra.mxu0 0
      %1089 = vmatprep.subr.bf16.mxu0 0
      %1090 = vmatpush1.bf16.msra.mxu0 0
      %1091 = vmatprep.subr.bf16.mxu0 0
      %1092 = vmatpush1.bf16.msra.mxu0 0
      %1093 = vmatprep.subr.bf16.mxu0 0
      %1094 = vmatpush1.bf16.msra.mxu0 0
      %1095 = vmatprep.subr.bf16.mxu0 0
      %1096 = vmatpush1.bf16.msra.mxu0 0
      %1097 = vmatprep.subr.bf16.mxu0 0
      %1098 = vmatpush1.bf16.msra.mxu0 0
      %1099 = vmatprep.subr.bf16.mxu0 0
      %1100 = vmatpush1.bf16.msra.mxu0 0
      %1101 = vmatprep.subr.bf16.mxu0 0
      %1102 = vmatpush1.bf16.msra.mxu0 0
      %1103 = vmatprep.subr.bf16.mxu0 0
      %1104 = vmatpush1.bf16.msra.mxu0 0
      %1105 = vmatprep.mubr.bf16.mxu0 0
      %1106 = vmatmul.mubr.bf16.gmra.mrb[0].mxu0 %v1071
      %v1107 = vpop.f32.mrb[0].mxu0
      %v1108 = vadd.f32 0.0, %v1107
      %v1109 = vpop.f32.mrb[0].mxu0
      %v1110 = vpop.f32.mrb[0].mxu0
      %v1111 = vadd.f32 0.0, %v1110
      %v1112 = vpop.f32.mrb[0].mxu0
      %1113 = vdwg.mxu0
      %v1114 = vadd.f32 %v1021, %v1108
      %v1115 = vadd.f32 %v1022, %v1111
      %v1116 = vld [vmem:[%s401] sm:$0xc]
      %v1117 = vld [vmem:[%s401 + $0x4] sm:$0xf]
      %v1118 = vld [vmem:[%s401 + $0x8] sm:$0x3]
      %s1119 = scalar_lea.vmem %s1, 352
      %v1120 = vld [vmem:[%s1119] sm:$0xf]
      %v1121 = vld [vmem:[%s1119 + $0x4] sm:$0xf]
      %v1122 = vld [vmem:[%s1119 + $0x8] sm:$0xf]
      %v1123 = vld [vmem:[%s1119 + $0xc] sm:$0xf]
      %v1124 = vld [vmem:[%s1119 + $0x10] sm:$0xf]
      %v1125 = vld [vmem:[%s1119 + $0x14] sm:$0xf]
      %v1126 = vld [vmem:[%s1119 + $0x18] sm:$0xf]
      %v1127 = vld [vmem:[%s1119 + $0x1c] sm:$0xf]
      %v1131 = vunpack.c.l.b16 %v1116
      %v1132 = vunpack.c.l.b16 %v1117
      %v1133 = vunpack.c.l.b16 %v1118
      %v1134 = vpack.c.b16 %v1132, %v1131
      %v1135 = vpack.c.b16 %v1133, %v1133
      %v1136 = vrot.slane %v1134, 2
      %v1137 = vrot.slane %v1135, 2
      %v1138 = vsel %vm856, %v1136, %v1137
      %v1147 = vunpack.c.l.b16 %v1120
      %v1148 = vunpack.c.l.b16 %v1121
      %v1149 = vunpack.c.l.b16 %v1122
      %v1150 = vunpack.c.l.b16 %v1123
      %v1151 = vunpack.c.l.b16 %v1124
      %v1152 = vunpack.c.l.b16 %v1125
      %v1153 = vunpack.c.l.b16 %v1126
      %v1154 = vunpack.c.l.b16 %v1127
      %v1155 = vpack.c.b16 %v1148, %v1147
      %v1156 = vpack.c.b16 %v1150, %v1149
      %v1157 = vpack.c.b16 %v1152, %v1151
      %v1158 = vpack.c.b16 %v1154, %v1153
      %v1164 = vsel %vm196, %v1138, 0
      %1166 = vmatprep.subr.bf16.mxu0 0
      %1167 = vmatpush1.bf16.msra.mxu0 %v1155
      %1168 = vmatprep.subr.bf16.mxu0 0
      %1169 = vmatpush1.bf16.msra.mxu0 %v1156
      %1170 = vmatprep.subr.bf16.mxu0 0
      %1171 = vmatpush1.bf16.msra.mxu0 %v1157
      %1172 = vmatprep.subr.bf16.mxu0 0
      %1173 = vmatpush1.bf16.msra.mxu0 %v1158
      %1174 = vmatprep.subr.bf16.mxu0 0
      %1175 = vmatpush1.bf16.msra.mxu0 0
      %1176 = vmatprep.subr.bf16.mxu0 0
      %1177 = vmatpush1.bf16.msra.mxu0 0
      %1178 = vmatprep.subr.bf16.mxu0 0
      %1179 = vmatpush1.bf16.msra.mxu0 0
      %1180 = vmatprep.subr.bf16.mxu0 0
      %1181 = vmatpush1.bf16.msra.mxu0 0
      %1182 = vmatprep.subr.bf16.mxu0 0
      %1183 = vmatpush1.bf16.msra.mxu0 0
      %1184 = vmatprep.subr.bf16.mxu0 0
      %1185 = vmatpush1.bf16.msra.mxu0 0
      %1186 = vmatprep.subr.bf16.mxu0 0
      %1187 = vmatpush1.bf16.msra.mxu0 0
      %1188 = vmatprep.subr.bf16.mxu0 0
      %1189 = vmatpush1.bf16.msra.mxu0 0
      %1190 = vmatprep.subr.bf16.mxu0 0
      %1191 = vmatpush1.bf16.msra.mxu0 0
      %1192 = vmatprep.subr.bf16.mxu0 0
      %1193 = vmatpush1.bf16.msra.mxu0 0
      %1194 = vmatprep.subr.bf16.mxu0 0
      %1195 = vmatpush1.bf16.msra.mxu0 0
      %1196 = vmatprep.subr.bf16.mxu0 0
      %1197 = vmatpush1.bf16.msra.mxu0 0
      %1198 = vmatprep.mubr.bf16.mxu0 0
      %1199 = vmatmul.mubr.bf16.gmra.mrb[0].mxu0 %v1164
      %v1200 = vpop.f32.mrb[0].mxu0
      %v1201 = vadd.f32 0.0, %v1200
      %v1202 = vpop.f32.mrb[0].mxu0
      %v1203 = vpop.f32.mrb[0].mxu0
      %v1204 = vadd.f32 0.0, %v1203
      %v1205 = vpop.f32.mrb[0].mxu0
      %1206 = vdwg.mxu0
      %v1207 = vadd.f32 %v1114, %v1201
      %v1208 = vadd.f32 %v1115, %v1204
      %v1209 = vld [vmem:[%s488] sm:$0xc]
      %v1210 = vld [vmem:[%s488 + $0x4] sm:$0xf]
      %v1211 = vld [vmem:[%s488 + $0x8] sm:$0x3]
      %s1212 = scalar_lea.vmem %s1, 384
      %v1213 = vld [vmem:[%s1212] sm:$0xf]
      %v1214 = vld [vmem:[%s1212 + $0x4] sm:$0xf]
      %v1215 = vld [vmem:[%s1212 + $0x8] sm:$0xf]
      %v1216 = vld [vmem:[%s1212 + $0xc] sm:$0xf]
      %v1217 = vld [vmem:[%s1212 + $0x10] sm:$0xf]
      %v1218 = vld [vmem:[%s1212 + $0x14] sm:$0xf]
      %v1219 = vld [vmem:[%s1212 + $0x18] sm:$0xf]
      %v1220 = vld [vmem:[%s1212 + $0x1c] sm:$0xf]
      %v1224 = vunpack.c.l.b16 %v1209
      %v1225 = vunpack.c.l.b16 %v1210
      %v1226 = vunpack.c.l.b16 %v1211
      %v1227 = vpack.c.b16 %v1225, %v1224
      %v1228 = vpack.c.b16 %v1226, %v1226
      %v1229 = vrot.slane %v1227, 2
      %v1230 = vrot.slane %v1228, 2
      %v1231 = vsel %vm856, %v1229, %v1230
      %v1240 = vunpack.c.l.b16 %v1213
      %v1241 = vunpack.c.l.b16 %v1214
      %v1242 = vunpack.c.l.b16 %v1215
      %v1243 = vunpack.c.l.b16 %v1216
      %v1244 = vunpack.c.l.b16 %v1217
      %v1245 = vunpack.c.l.b16 %v1218
      %v1246 = vunpack.c.l.b16 %v1219
      %v1247 = vunpack.c.l.b16 %v1220
      %v1248 = vpack.c.b16 %v1241, %v1240
      %v1249 = vpack.c.b16 %v1243, %v1242
      %v1250 = vpack.c.b16 %v1245, %v1244
      %v1251 = vpack.c.b16 %v1247, %v1246
      %v1257 = vsel %vm196, %v1231, 0
      %1259 = vmatprep.subr.bf16.mxu0 0
      %1260 = vmatpush1.bf16.msra.mxu0 %v1248
      %1261 = vmatprep.subr.bf16.mxu0 0
      %1262 = vmatpush1.bf16.msra.mxu0 %v1249
      %1263 = vmatprep.subr.bf16.mxu0 0
      %1264 = vmatpush1.bf16.msra.mxu0 %v1250
      %1265 = vmatprep.subr.bf16.mxu0 0
      %1266 = vmatpush1.bf16.msra.mxu0 %v1251
      %1267 = vmatprep.subr.bf16.mxu0 0
      %1268 = vmatpush1.bf16.msra.mxu0 0
      %1269 = vmatprep.subr.bf16.mxu0 0
      %1270 = vmatpush1.bf16.msra.mxu0 0
      %1271 = vmatprep.subr.bf16.mxu0 0
      %1272 = vmatpush1.bf16.msra.mxu0 0
      %1273 = vmatprep.subr.bf16.mxu0 0
      %1274 = vmatpush1.bf16.msra.mxu0 0
      %1275 = vmatprep.subr.bf16.mxu0 0
      %1276 = vmatpush1.bf16.msra.mxu0 0
      %1277 = vmatprep.subr.bf16.mxu0 0
      %1278 = vmatpush1.bf16.msra.mxu0 0
      %1279 = vmatprep.subr.bf16.mxu0 0
      %1280 = vmatpush1.bf16.msra.mxu0 0
      %1281 = vmatprep.subr.bf16.mxu0 0
      %1282 = vmatpush1.bf16.msra.mxu0 0
      %1283 = vmatprep.subr.bf16.mxu0 0
      %1284 = vmatpush1.bf16.msra.mxu0 0
      %1285 = vmatprep.subr.bf16.mxu0 0
      %1286 = vmatpush1.bf16.msra.mxu0 0
      %1287 = vmatprep.subr.bf16.mxu0 0
      %1288 = vmatpush1.bf16.msra.mxu0 0
      %1289 = vmatprep.subr.bf16.mxu0 0
      %1290 = vmatpush1.bf16.msra.mxu0 0
      %1291 = vmatprep.mubr.bf16.mxu0 0
      %1292 = vmatmul.mubr.bf16.gmra.mrb[0].mxu0 %v1257
      %v1293 = vpop.f32.mrb[0].mxu0
      %v1294 = vadd.f32 0.0, %v1293
      %v1295 = vpop.f32.mrb[0].mxu0
      %v1296 = vpop.f32.mrb[0].mxu0
      %v1297 = vadd.f32 0.0, %v1296
      %v1298 = vpop.f32.mrb[0].mxu0
      %1299 = vdwg.mxu0
      %v1300 = vadd.f32 %v1207, %v1294
      %v1301 = vadd.f32 %v1208, %v1297
      %v1302 = vld [vmem:[%s575] sm:$0xc]
      %v1303 = vld [vmem:[%s575 + $0x4] sm:$0xf]
      %v1304 = vld [vmem:[%s575 + $0x8] sm:$0x3]
      %s1305 = scalar_lea.vmem %s1, 416
      %v1306 = vld [vmem:[%s1305] sm:$0xf]
      %v1307 = vld [vmem:[%s1305 + $0x4] sm:$0xf]
      %v1308 = vld [vmem:[%s1305 + $0x8] sm:$0xf]
      %v1309 = vld [vmem:[%s1305 + $0xc] sm:$0xf]
      %v1310 = vld [vmem:[%s1305 + $0x10] sm:$0xf]
      %v1311 = vld [vmem:[%s1305 + $0x14] sm:$0xf]
      %v1312 = vld [vmem:[%s1305 + $0x18] sm:$0xf]
      %v1313 = vld [vmem:[%s1305 + $0x1c] sm:$0xf]
      %v1317 = vunpack.c.l.b16 %v1302
      %v1318 = vunpack.c.l.b16 %v1303
      %v1319 = vunpack.c.l.b16 %v1304
      %v1320 = vpack.c.b16 %v1318, %v1317
      %v1321 = vpack.c.b16 %v1319, %v1319
      %v1322 = vrot.slane %v1320, 2
      %v1323 = vrot.slane %v1321, 2
      %v1324 = vsel %vm856, %v1322, %v1323
      %v1333 = vunpack.c.l.b16 %v1306
      %v1334 = vunpack.c.l.b16 %v1307
      %v1335 = vunpack.c.l.b16 %v1308
      %v1336 = vunpack.c.l.b16 %v1309
      %v1337 = vunpack.c.l.b16 %v1310
      %v1338 = vunpack.c.l.b16 %v1311
      %v1339 = vunpack.c.l.b16 %v1312
      %v1340 = vunpack.c.l.b16 %v1313
      %v1341 = vpack.c.b16 %v1334, %v1333
      %v1342 = vpack.c.b16 %v1336, %v1335
      %v1343 = vpack.c.b16 %v1338, %v1337
      %v1344 = vpack.c.b16 %v1340, %v1339
      %v1350 = vsel %vm196, %v1324, 0
      %1352 = vmatprep.subr.bf16.mxu0 0
      %1353 = vmatpush1.bf16.msra.mxu0 %v1341
      %1354 = vmatprep.subr.bf16.mxu0 0
      %1355 = vmatpush1.bf16.msra.mxu0 %v1342
      %1356 = vmatprep.subr.bf16.mxu0 0
      %1357 = vmatpush1.bf16.msra.mxu0 %v1343
      %1358 = vmatprep.subr.bf16.mxu0 0
      %1359 = vmatpush1.bf16.msra.mxu0 %v1344
      %1360 = vmatprep.subr.bf16.mxu0 0
      %1361 = vmatpush1.bf16.msra.mxu0 0
      %1362 = vmatprep.subr.bf16.mxu0 0
      %1363 = vmatpush1.bf16.msra.mxu0 0
      %1364 = vmatprep.subr.bf16.mxu0 0
      %1365 = vmatpush1.bf16.msra.mxu0 0
      %1366 = vmatprep.subr.bf16.mxu0 0
      %1367 = vmatpush1.bf16.msra.mxu0 0
      %1368 = vmatprep.subr.bf16.mxu0 0
      %1369 = vmatpush1.bf16.msra.mxu0 0
      %1370 = vmatprep.subr.bf16.mxu0 0
      %1371 = vmatpush1.bf16.msra.mxu0 0
      %1372 = vmatprep.subr.bf16.mxu0 0
      %1373 = vmatpush1.bf16.msra.mxu0 0
      %1374 = vmatprep.subr.bf16.mxu0 0
      %1375 = vmatpush1.bf16.msra.mxu0 0
      %1376 = vmatprep.subr.bf16.mxu0 0
      %1377 = vmatpush1.bf16.msra.mxu0 0
      %1378 = vmatprep.subr.bf16.mxu0 0
      %1379 = vmatpush1.bf16.msra.mxu0 0
      %1380 = vmatprep.subr.bf16.mxu0 0
      %1381 = vmatpush1.bf16.msra.mxu0 0
      %1382 = vmatprep.subr.bf16.mxu0 0
      %1383 = vmatpush1.bf16.msra.mxu0 0
      %1384 = vmatprep.mubr.bf16.mxu0 0
      %1385 = vmatmul.mubr.bf16.gmra.mrb[0].mxu0 %v1350
      %v1386 = vpop.f32.mrb[0].mxu0
      %v1387 = vadd.f32 0.0, %v1386
      %v1388 = vpop.f32.mrb[0].mxu0
      %v1389 = vpop.f32.mrb[0].mxu0
      %v1390 = vadd.f32 0.0, %v1389
      %v1391 = vpop.f32.mrb[0].mxu0
      %1392 = vdwg.mxu0
      %v1393 = vadd.f32 %v1300, %v1387
      %v1394 = vadd.f32 %v1301, %v1390
      %v1395 = vld [vmem:[%s662] sm:$0xc]
      %v1396 = vld [vmem:[%s662 + $0x4] sm:$0xf]
      %v1397 = vld [vmem:[%s662 + $0x8] sm:$0x3]
      %s1398 = scalar_lea.vmem %s1, 448
      %v1399 = vld [vmem:[%s1398] sm:$0xf]
      %v1400 = vld [vmem:[%s1398 + $0x4] sm:$0xf]
      %v1401 = vld [vmem:[%s1398 + $0x8] sm:$0xf]
      %v1402 = vld [vmem:[%s1398 + $0xc] sm:$0xf]
      %v1403 = vld [vmem:[%s1398 + $0x10] sm:$0xf]
      %v1404 = vld [vmem:[%s1398 + $0x14] sm:$0xf]
      %v1405 = vld [vmem:[%s1398 + $0x18] sm:$0xf]
      %v1406 = vld [vmem:[%s1398 + $0x1c] sm:$0xf]
      %v1410 = vunpack.c.l.b16 %v1395
      %v1411 = vunpack.c.l.b16 %v1396
      %v1412 = vunpack.c.l.b16 %v1397
      %v1413 = vpack.c.b16 %v1411, %v1410
      %v1414 = vpack.c.b16 %v1412, %v1412
      %v1415 = vrot.slane %v1413, 2
      %v1416 = vrot.slane %v1414, 2
      %v1417 = vsel %vm856, %v1415, %v1416
      %v1426 = vunpack.c.l.b16 %v1399
      %v1427 = vunpack.c.l.b16 %v1400
      %v1428 = vunpack.c.l.b16 %v1401
      %v1429 = vunpack.c.l.b16 %v1402
      %v1430 = vunpack.c.l.b16 %v1403
      %v1431 = vunpack.c.l.b16 %v1404
      %v1432 = vunpack.c.l.b16 %v1405
      %v1433 = vunpack.c.l.b16 %v1406
      %v1434 = vpack.c.b16 %v1427, %v1426
      %v1435 = vpack.c.b16 %v1429, %v1428
      %v1436 = vpack.c.b16 %v1431, %v1430
      %v1437 = vpack.c.b16 %v1433, %v1432
      %v1443 = vsel %vm196, %v1417, 0
      %1445 = vmatprep.subr.bf16.mxu0 0
      %1446 = vmatpush1.bf16.msra.mxu0 %v1434
      %1447 = vmatprep.subr.bf16.mxu0 0
      %1448 = vmatpush1.bf16.msra.mxu0 %v1435
      %1449 = vmatprep.subr.bf16.mxu0 0
      %1450 = vmatpush1.bf16.msra.mxu0 %v1436
      %1451 = vmatprep.subr.bf16.mxu0 0
      %1452 = vmatpush1.bf16.msra.mxu0 %v1437
      %1453 = vmatprep.subr.bf16.mxu0 0
      %1454 = vmatpush1.bf16.msra.mxu0 0
      %1455 = vmatprep.subr.bf16.mxu0 0
      %1456 = vmatpush1.bf16.msra.mxu0 0
      %1457 = vmatprep.subr.bf16.mxu0 0
      %1458 = vmatpush1.bf16.msra.mxu0 0
      %1459 = vmatprep.subr.bf16.mxu0 0
      %1460 = vmatpush1.bf16.msra.mxu0 0
      %1461 = vmatprep.subr.bf16.mxu0 0
      %1462 = vmatpush1.bf16.msra.mxu0 0
      %1463 = vmatprep.subr.bf16.mxu0 0
      %1464 = vmatpush1.bf16.msra.mxu0 0
      %1465 = vmatprep.subr.bf16.mxu0 0
      %1466 = vmatpush1.bf16.msra.mxu0 0
      %1467 = vmatprep.subr.bf16.mxu0 0
      %1468 = vmatpush1.bf16.msra.mxu0 0
      %1469 = vmatprep.subr.bf16.mxu0 0
      %1470 = vmatpush1.bf16.msra.mxu0 0
      %1471 = vmatprep.subr.bf16.mxu0 0
      %1472 = vmatpush1.bf16.msra.mxu0 0
      %1473 = vmatprep.subr.bf16.mxu0 0
      %1474 = vmatpush1.bf16.msra.mxu0 0
      %1475 = vmatprep.subr.bf16.mxu0 0
      %1476 = vmatpush1.bf16.msra.mxu0 0
      %1477 = vmatprep.mubr.bf16.mxu0 0
      %1478 = vmatmul.mubr.bf16.gmra.mrb[0].mxu0 %v1443
      %v1479 = vpop.f32.mrb[0].mxu0
      %v1480 = vadd.f32 0.0, %v1479
      %v1481 = vpop.f32.mrb[0].mxu0
      %v1482 = vpop.f32.mrb[0].mxu0
      %v1483 = vadd.f32 0.0, %v1482
      %v1484 = vpop.f32.mrb[0].mxu0
      %1485 = vdwg.mxu0
      %v1486 = vadd.f32 %v1393, %v1480
      %v1487 = vadd.f32 %v1394, %v1483
      %v1488 = vld [vmem:[%s749] sm:$0xc]
      %v1489 = vld [vmem:[%s749 + $0x4] sm:$0xf]
      %v1490 = vld [vmem:[%s749 + $0x8] sm:$0x3]
      %s1491 = scalar_lea.vmem %s1, 480
      %v1492 = vld [vmem:[%s1491] sm:$0xf]
      %v1493 = vld [vmem:[%s1491 + $0x4] sm:$0xf]
      %v1494 = vld [vmem:[%s1491 + $0x8] sm:$0xf]
      %v1495 = vld [vmem:[%s1491 + $0xc] sm:$0xf]
      %v1496 = vld [vmem:[%s1491 + $0x10] sm:$0xf]
      %v1497 = vld [vmem:[%s1491 + $0x14] sm:$0xf]
      %v1498 = vld [vmem:[%s1491 + $0x18] sm:$0xf]
      %v1499 = vld [vmem:[%s1491 + $0x1c] sm:$0xf]
      %v1503 = vunpack.c.l.b16 %v1488
      %v1504 = vunpack.c.l.b16 %v1489
      %v1505 = vunpack.c.l.b16 %v1490
      %v1506 = vpack.c.b16 %v1504, %v1503
      %v1507 = vpack.c.b16 %v1505, %v1505
      %v1508 = vrot.slane %v1506, 2
      %v1509 = vrot.slane %v1507, 2
      %v1510 = vsel %vm856, %v1508, %v1509
      %v1519 = vunpack.c.l.b16 %v1492
      %v1520 = vunpack.c.l.b16 %v1493
      %v1521 = vunpack.c.l.b16 %v1494
      %v1522 = vunpack.c.l.b16 %v1495
      %v1523 = vunpack.c.l.b16 %v1496
      %v1524 = vunpack.c.l.b16 %v1497
      %v1525 = vunpack.c.l.b16 %v1498
      %v1526 = vunpack.c.l.b16 %v1499
      %v1527 = vpack.c.b16 %v1520, %v1519
      %v1528 = vpack.c.b16 %v1522, %v1521
      %v1529 = vpack.c.b16 %v1524, %v1523
      %v1530 = vpack.c.b16 %v1526, %v1525
      %v1536 = vsel %vm196, %v1510, 0
      %1538 = vmatprep.subr.bf16.mxu0 0
      %1539 = vmatpush1.bf16.msra.mxu0 %v1527
      %1540 = vmatprep.subr.bf16.mxu0 0
      %1541 = vmatpush1.bf16.msra.mxu0 %v1528
      %1542 = vmatprep.subr.bf16.mxu0 0
      %1543 = vmatpush1.bf16.msra.mxu0 %v1529
      %1544 = vmatprep.subr.bf16.mxu0 0
      %1545 = vmatpush1.bf16.msra.mxu0 %v1530
      %1546 = vmatprep.subr.bf16.mxu0 0
      %1547 = vmatpush1.bf16.msra.mxu0 0
      %1548 = vmatprep.subr.bf16.mxu0 0
      %1549 = vmatpush1.bf16.msra.mxu0 0
      %1550 = vmatprep.subr.bf16.mxu0 0
      %1551 = vmatpush1.bf16.msra.mxu0 0
      %1552 = vmatprep.subr.bf16.mxu0 0
      %1553 = vmatpush1.bf16.msra.mxu0 0
      %1554 = vmatprep.subr.bf16.mxu0 0
      %1555 = vmatpush1.bf16.msra.mxu0 0
      %1556 = vmatprep.subr.bf16.mxu0 0
      %1557 = vmatpush1.bf16.msra.mxu0 0
      %1558 = vmatprep.subr.bf16.mxu0 0
      %1559 = vmatpush1.bf16.msra.mxu0 0
      %1560 = vmatprep.subr.bf16.mxu0 0
      %1561 = vmatpush1.bf16.msra.mxu0 0
      %1562 = vmatprep.subr.bf16.mxu0 0
      %1563 = vmatpush1.bf16.msra.mxu0 0
      %1564 = vmatprep.subr.bf16.mxu0 0
      %1565 = vmatpush1.bf16.msra.mxu0 0
      %1566 = vmatprep.subr.bf16.mxu0 0
      %1567 = vmatpush1.bf16.msra.mxu0 0
      %1568 = vmatprep.subr.bf16.mxu0 0
      %1569 = vmatpush1.bf16.msra.mxu0 0
      %1570 = vmatprep.mubr.bf16.mxu0 0
      %1571 = vmatmul.mubr.bf16.gmra.mrb[0].mxu0 %v1536
      %v1572 = vpop.f32.mrb[0].mxu0
      %v1573 = vadd.f32 0.0, %v1572
      %v1574 = vpop.f32.mrb[0].mxu0
      %v1575 = vpop.f32.mrb[0].mxu0
      %v1576 = vadd.f32 0.0, %v1575
      %v1577 = vpop.f32.mrb[0].mxu0
      %1578 = vdwg.mxu0
      %v1579 = vadd.f32 %v1486, %v1573
      %v1580 = vadd.f32 %v1487, %v1576
      %v1581 = vadd.f32 %v1579, %v1580
      %v1582 = vrot.slane %v1581, 4
      %v1583 = vadd.f32 %v1581, %v1582
      %v1584 = vrot.slane %v1583, 2
      %v1585 = vadd.f32 %v1583, %v1584
      %v1586 = vrot.slane %v1585, 1
      %v1587 = vadd.f32 %v1585, %v1586
      %v1588 = vrcp.pop 16.0
      %v1589 = vmul.f32 %v1587, %v1588
      %v1590 = vsub.f32 %v1579, %v1589
      %v1591 = vsub.f32 %v1580, %v1589
      %v1592 = vmul.f32 %v1590, %v1590
      %v1593 = vmul.f32 %v1591, %v1591
      %v1594 = vadd.f32 %v1592, %v1593
      %v1595 = vrot.slane %v1594, 4
      %v1596 = vadd.f32 %v1594, %v1595
      %v1597 = vrot.slane %v1596, 2
      %v1598 = vadd.f32 %v1596, %v1597
      %v1599 = vrot.slane %v1598, 1
      %v1600 = vadd.f32 %v1598, %v1599
      %v1601 = vmul.f32 %v1600, %v1588
      %v1602 = vadd.f32 %v1601, 1e-05
      %v1603 = vrsqrt.pop %v1602
      %v1604 = vmul.f32 %v1590, %v1603
      %v1605 = vmul.f32 %v1591, %v1603
      %vm1606 = vcmp.ge.f32.partialorder %v1604, 0.0
      %vm1607 = vcmp.ge.f32.partialorder %v1605, 0.0
      %v1608 = vmul.f32 %v1604, 0.2
      %v1609 = vmul.f32 %v1605, 0.2
      %v1610 = vsel %vm1606, %v1604, %v1608
      %v1611 = vsel %vm1607, %v1605, %v1609
      %v1612 = vpack.c.bf16 %v1611, %v1610
      %v1614 = vunpack.c.l.b16 %v1612
      %v1615 = vunpack.c.h.b16 %v1612
      %v1616 = vpack.c.b16 %v1614, %v1614
      %v1617 = vpack.c.b16 %v1615, %v1615
      %1620 = vst [vmem:[%s143] sm:$0xf] %v1616
      %1621 = vst [vmem:[%s143 + $0x4] sm:$0xf] %v1617
      %p1622 = scmp.lt.s32.totalorder %s13, 1
      %s1623 = scalar_select %p1622, %s13, 1
      %s1624 = smul.addr %s1623, 2
      %s1625 = smul.addr %s1624, 4
      %s1626 = scalar_lea.vmem %s2, %s1625
      // Predicated region
      $region29: #{discriminator_forward.5} parent=27 // pred_check
        %p1627 = pneg %p78
      $region30: #{discriminator_forward.5} parent=27 // pred_check_branch
        %1629 = sbr.rel (%p1627) target = $region32
      $region31: #{discriminator_forward.5} parent=27 // pred_region
        _
      $region32: #{discriminator_forward.5} parent=27 // pred_fallthru
        _
    $region28: #{discriminator_forward.5} parent=5 // pred_fallthru
      _
    %p1630 = scmp.le.s32.totalorder 2, %s8
    // Predicated region
    $region33: #{discriminator_forward.5} parent=5 // pred_check
      %p1631 = pneg %p1630
    $region34: #{discriminator_forward.5} parent=5 // pred_check_branch
      %1633 = sbr.rel (%p1631) target = $region36
    $region35: #{discriminator_forward.5} parent=5 // pred_region
      %s1634 = ssub.s32 %s8, 2
      // Predicated region
      $region37: #{discriminator_forward.5} parent=35 // pred_check
        %p1635 = pneg %p84
      $region38: #{discriminator_forward.5} parent=35 // pred_check_branch
        %1637 = sbr.rel (%p1635) target = $region40
      $region39: #{discriminator_forward.5} parent=35 // pred_region
        %p1638 = scmp.lt.s32.totalorder %s14, 1
        %s1639 = scalar_select %p1638, %s14, 1
        %s1640 = smul.addr %s1639, 2
        %s1641 = smul.addr %s1640, 4
        %s1642 = scalar_lea.vmem %s2, %s1641
      $region40: #{discriminator_forward.5} parent=35 // pred_fallthru
        _
    $region36: #{discriminator_forward.5} parent=5 // pred_fallthru
      _
  $region6: #{discriminator_forward.5} parent=0 // loop_footer
    %s12 = sadd.s32 1, %s8
  $region7: #{discriminator_forward.5} parent=0 // loop_footer_branch
    %7 = sbr.rel target = $region3
  $region8: #{discriminator_forward.5} parent=0 // loop_exit
    _

// kernel: discriminator_forward.6
$region0: #{discriminator_forward.6}
  #allocation0 [shape = 'u32[]', space=smem, size = 0x4, offset = 0x4, fixed_abs, tag = 'smem constant byte address 0x4 - core index']
  #allocation1 [shape = 'u32[144,128]{1,0:T(1,128)}', space=vmem, size = 0x12000, scoped, tag = 'internal scratch']
  %s0 = inlined_call_operand.vmem [shape: bf16[2,8,6,128], index: 0, kind: input, shape index: {}]
  %s1 = inlined_call_operand.vmem [shape: bf16[16,128,256], index: 1, kind: input, shape index: {}]
  %s2 = inlined_call_operand.vmem [shape: bf16[2,4,256], index: 2, kind: output, shape index: {}]
  %s3 = sld [smem:[#allocation0]]
  $region41: #{discriminator_forward.6} parent=0
    _
  %s5 = ssub.s32 1, %s3
  %s6 = scalar_select 0, %s5, %s3
  loop: start=0, step=1, limit=4
  $region2: #{discriminator_forward.6} parent=0 // loop_pre_header
    _
  $region3: #{discriminator_forward.6} parent=0 // loop_header
    %s8 = sphi 0, %s12
    %p9 = scmp.ge.s32.totalorder %s8, 4
    %s18 = sphi 0, %s20
    %s21 = sphi 0, %s18
    %s22 = sphi 0, %s21
    %s38 = sphi 0, %s22
    %s42 = sphi 0, %s42
    %s44 = sphi 0, %s42
    %s45 = sphi 0, %s44
    %s59 = sphi 0, %s45
    %s65 = sphi 0, %s67
    %s68 = sphi 0, %s65
    %s69 = sphi 0, %s68
    %s85 = sphi 0, %s69
  $region4: #{discriminator_forward.6} parent=0 // loop_header_branch
    %11 = sbr.rel (%p9) target = $region8
  $region5: #{discriminator_forward.6} parent=0 // loop_body
    %s13 = ssub.s32 %s8, 1
    %s14 = ssub.s32 %s8, 2
    %s15 = sadd.s32 %s8, 1
    %s16 = ssub.s32 %s8, %s15
    %p17 = scmp.eq.s32.totalorder %s16, 0
    %s19 = sadd.s32 %s18, 1
    %s20 = scalar_select %p17, %s18, %s19
    %p23 = pneg %p17
    %p24 = scmp.eq.s32.totalorder %s8, 1
    %p25 = por %p23, %p24
    %p26 = scmp.ne.s32.totalorder %s18, %s21
    %p27 = scmp.eq.s32.totalorder %s8, 0
    %p28 = por %p26, %p27
    %p29 = scmp.ne.s32.totalorder %s18, %s21
    %p30 = scmp.eq.s32.totalorder %s13, 1
    %p31 = por %p29, %p30
    %p32 = scmp.ne.s32.totalorder %s21, %s22
    %p33 = scmp.eq.s32.totalorder %s13, 0
    %p34 = por %p32, %p33
    %p35 = scmp.ne.s32.totalorder %s21, %s22
    %p36 = scmp.eq.s32.totalorder %s14, 1
    %p37 = por %p35, %p36
    %p39 = scmp.ne.s32.totalorder %s22, %s38
    %p40 = scmp.eq.s32.totalorder %s14, 0
    %p41 = por %p39, %p40
    %s43 = sadd.s32 %s42, 1
    %p46 = scmp.eq.s32.totalorder %s8, 1
    %p47 = scmp.ne.s32.totalorder %s42, %s44
    %p48 = scmp.eq.s32.totalorder %s8, 0
    %p49 = por %p47, %p48
    %p50 = scmp.ne.s32.totalorder %s42, %s44
    %p51 = scmp.eq.s32.totalorder %s13, 1
    %p52 = por %p50, %p51
    %p53 = scmp.ne.s32.totalorder %s44, %s45
    %p54 = scmp.eq.s32.totalorder %s13, 0
    %p55 = por %p53, %p54
    %p56 = scmp.ne.s32.totalorder %s44, %s45
    %p57 = scmp.eq.s32.totalorder %s14, 1
    %p58 = por %p56, %p57
    %p60 = scmp.ne.s32.totalorder %s45, %s59
    %p61 = scmp.eq.s32.totalorder %s14, 0
    %p62 = por %p60, %p61
    %s63 = ssub.s32 %s8, %s15
    %p64 = scmp.eq.s32.totalorder %s63, 0
    %s66 = sadd.s32 %s65, 1
    %s67 = scalar_select %p64, %s65, %s66
    %p70 = pneg %p64
    %p71 = scmp.eq.s32.totalorder %s8, 1
    %p72 = por %p70, %p71
    %p73 = scmp.ne.s32.totalorder %s65, %s68
    %p74 = scmp.eq.s32.totalorder %s8, 0
    %p75 = por %p73, %p74
    %p76 = scmp.ne.s32.totalorder %s65, %s68
    %p77 = scmp.eq.s32.totalorder %s13, 1
    %p78 = por %p76, %p77
    %p79 = scmp.ne.s32.totalorder %s68, %s69
    %p80 = scmp.eq.s32.totalorder %s13, 0
    %p81 = por %p79, %p80
    %p82 = scmp.ne.s32.totalorder %s68, %s69
    %p83 = scmp.eq.s32.totalorder %s14, 1
    %p84 = por %p82, %p83
    %p86 = scmp.ne.s32.totalorder %s69, %s85
    %p87 = scmp.eq.s32.totalorder %s14, 0
    %p88 = por %p86, %p87
    %p89 = scmp.le.s32.totalorder 1, %s8
    %p90 = scmp.lt.s32.totalorder %s8, 3
    %p91 = pnand %p89, %p90
    %p92 = pneg %p91
    // Predicated region
    $region9: #{discriminator_forward.6} parent=5 // pred_check
      _
    $region10: #{discriminator_forward.6} parent=5 // pred_check_branch
      %94 = sbr.rel (%p91) target = $region12
    $region11: #{discriminator_forward.6} parent=5 // pred_region
      %s95 = ssub.s32 %s8, 1
      // Predicated region
      $region13: #{discriminator_forward.6} parent=11 // pred_check
        %p96 = pneg %p55
      $region14: #{discriminator_forward.6} parent=11 // pred_check_branch
        %98 = sbr.rel (%p96) target = $region16
      $region15: #{discriminator_forward.6} parent=11 // pred_region
        _
      $region16: #{discriminator_forward.6} parent=11 // pred_fallthru
        _
    $region12: #{discriminator_forward.6} parent=5 // pred_fallthru
      _
    %p99 = scmp.lt.s32.totalorder %s8, 2
    // Predicated region
    $region17: #{discriminator_forward.6} parent=5 // pred_check
      %p100 = pneg %p99
    $region18: #{discriminator_forward.6} parent=5 // pred_check_branch
      %102 = sbr.rel (%p100) target = $region20
    $region19: #{discriminator_forward.6} parent=5 // pred_region
      // Predicated region
      $region21: #{discriminator_forward.6} parent=19 // pred_check
        %p103 = pneg %p28
      $region22: #{discriminator_forward.6} parent=19 // pred_check_branch
        %105 = sbr.rel (%p103) target = $region24
      $region23: #{discriminator_forward.6} parent=19 // pred_region
        %p106 = scmp.lt.s32.totalorder %s8, 1
        %s107 = scalar_select %p106, %s8, 1
        %s108 = smul.addr %s107, 8
        %s109 = smul.addr %s108, 4
        %s110 = scalar_lea.vmem %s0, %s109
      $region24: #{discriminator_forward.6} parent=19 // pred_fallthru
        _
    $region20: #{discriminator_forward.6} parent=5 // pred_fallthru
      _
    %p111 = scmp.le.s32.totalorder 1, %s8
    %p112 = scmp.lt.s32.totalorder %s8, 3
    %p113 = pnand %p111, %p112
    %p114 = pneg %p113
    // Predicated region
    $region25: #{discriminator_forward.6} parent=5 // pred_check
      _
    $region26: #{discriminator_forward.6} parent=5 // pred_check_branch
      %116 = sbr.rel (%p113) target = $region28
    $region27: #{discriminator_forward.6} parent=5 // pred_region
      %s117 = ssub.s32 %s8, 1
      %p118 = scmp.lt.s32.totalorder %s13, 1
      %s119 = scalar_select %p118, %s13, 1
      %s120 = smul.addr %s119, 8
      %s121 = smul.addr %s120, 4
      %s122 = scalar_lea.vmem %s0, %s121
      %p123 = pneg %p34
      %p124 = pneg %p31
      %p125 = pneg %p55
      %p126 = pneg %p52
      %p127 = pneg %p81
      %p128 = pneg %p78
      %p129 = scmp.lt.s32.totalorder %s13, 1
      %s130 = scalar_select %p129, %s13, 1
      %s131 = smul.addr %s130, 2
      %s132 = smul.addr %s131, 2
      %s133 = scalar_lea.vmem %s2, %s132
      %p134 = scmp.lt.s32.totalorder %s13, 1
      %s135 = scalar_select %p134, %s13, 1
      %s136 = smul.addr %s135, 8
      %s137 = smul.addr %s136, 4
      %s138 = scalar_lea.vmem %s0, %s137
      %p139 = scmp.lt.s32.totalorder %s13, 1
      %s140 = scalar_select %p139, %s13, 1
      %s141 = smul.addr %s140, 2
      %s142 = smul.addr %s141, 2
      %s143 = scalar_lea.vmem %s2, %s142
      %v145 = vld [vmem:[%s138] sm:$0x3]
      %v146 = vld [vmem:[%s1] sm:$0xff]
      %v147 = vld [vmem:[%s1 + $0x8] sm:$0xff]
      %v148 = vld [vmem:[%s1 + $0x10] sm:$0xff]
      %v149 = vld [vmem:[%s1 + $0x18] sm:$0xff]
      %v150 = vld [vmem:[%s1 + $0x20] sm:$0xff]
      %v151 = vld [vmem:[%s1 + $0x28] sm:$0xff]
      %v152 = vld [vmem:[%s1 + $0x30] sm:$0xff]
      %v153 = vld [vmem:[%s1 + $0x38] sm:$0xff]
      %v154 = vld [vmem:[%s1 + $0x40] sm:$0xff]
      %v155 = vld [vmem:[%s1 + $0x48] sm:$0xff]
      %v156 = vld [vmem:[%s1 + $0x50] sm:$0xff]
      %v157 = vld [vmem:[%s1 + $0x58] sm:$0xff]
      %v158 = vld [vmem:[%s1 + $0x60] sm:$0xff]
      %v159 = vld [vmem:[%s1 + $0x68] sm:$0xff]
      %v160 = vld [vmem:[%s1 + $0x70] sm:$0xff]
      %v161 = vld [vmem:[%s1 + $0x78] sm:$0xff]
      %s162 = scalar_lea.vmem %s138, 8
      %v163 = vld [vmem:[%s162] sm:$0x3]
      %s164 = scalar_lea.vmem %s1, 128
      %v165 = vld [vmem:[%s164] sm:$0xff]
      %v166 = vld [vmem:[%s164 + $0x8] sm:$0xff]
      %v167 = vld [vmem:[%s164 + $0x10] sm:$0xff]
      %v168 = vld [vmem:[%s164 + $0x18] sm:$0xff]
      %v169 = vld [vmem:[%s164 + $0x20] sm:$0xff]
      %v170 = vld [vmem:[%s164 + $0x28] sm:$0xff]
      %v171 = vld [vmem:[%s164 + $0x30] sm:$0xff]
      %v172 = vld [vmem:[%s164 + $0x38] sm:$0xff]
      %v173 = vld [vmem:[%s164 + $0x40] sm:$0xff]
      %v174 = vld [vmem:[%s164 + $0x48] sm:$0xff]
      %v175 = vld [vmem:[%s164 + $0x50] sm:$0xff]
      %v176 = vld [vmem:[%s164 + $0x58] sm:$0xff]
      %v177 = vld [vmem:[%s164 + $0x60] sm:$0xff]
      %v178 = vld [vmem:[%s164 + $0x68] sm:$0xff]
      %v179 = vld [vmem:[%s164 + $0x70] sm:$0xff]
      %v180 = vld [vmem:[%s164 + $0x78] sm:$0xff]
      %v197 = vunpack.c.l.b16 %v165
      %v198 = vunpack.c.h.b16 %v165
      %v199 = vunpack.c.l.b16 %v166
      %v200 = vunpack.c.h.b16 %v166
      %v201 = vunpack.c.l.b16 %v167
      %v202 = vunpack.c.h.b16 %v167
      %v203 = vunpack.c.l.b16 %v168
      %v204 = vunpack.c.h.b16 %v168
      %v205 = vunpack.c.l.b16 %v169
      %v206 = vunpack.c.h.b16 %v169
      %v207 = vunpack.c.l.b16 %v170
      %v208 = vunpack.c.h.b16 %v170
      %v209 = vunpack.c.l.b16 %v171
      %v210 = vunpack.c.h.b16 %v171
      %v211 = vunpack.c.l.b16 %v172
      %v212 = vunpack.c.h.b16 %v172
      %v213 = vunpack.c.l.b16 %v173
      %v214 = vunpack.c.h.b16 %v173
      %v215 = vunpack.c.l.b16 %v174
      %v216 = vunpack.c.h.b16 %v174
      %v217 = vunpack.c.l.b16 %v175
      %v218 = vunpack.c.h.b16 %v175
      %v219 = vunpack.c.l.b16 %v176
      %v220 = vunpack.c.h.b16 %v176
      %v221 = vunpack.c.l.b16 %v177
      %v222 = vunpack.c.h.b16 %v177
      %v223 = vunpack.c.l.b16 %v178
      %v224 = vunpack.c.h.b16 %v178
      %v225 = vunpack.c.l.b16 %v179
      %v226 = vunpack.c.h.b16 %v179
      %v227 = vunpack.c.l.b16 %v180
      %v228 = vunpack.c.h.b16 %v180
      %v229 = vpack.c.b16 %v199, %v197
      %v230 = vpack.c.b16 %v200, %v198
      %v231 = vpack.c.b16 %v203, %v201
      %v232 = vpack.c.b16 %v204, %v202
      %v233 = vpack.c.b16 %v207, %v205
      %v234 = vpack.c.b16 %v208, %v206
      %v235 = vpack.c.b16 %v211, %v209
      %v236 = vpack.c.b16 %v212, %v210
      %v237 = vpack.c.b16 %v215, %v213
      %v238 = vpack.c.b16 %v216, %v214
      %v239 = vpack.c.b16 %v219, %v217
      %v240 = vpack.c.b16 %v220, %v218
      %v241 = vpack.c.b16 %v223, %v221
      %v242 = vpack.c.b16 %v224, %v222
      %v243 = vpack.c.b16 %v227, %v225
      %v244 = vpack.c.b16 %v228, %v226
      %261 = vmatprep.subr.bf16.mxu0 %v230
      %262 = vmatpush1.bf16.msra.mxu0 %v229
      %263 = vmatprep.subr.bf16.mxu0 %v232
      %264 = vmatpush1.bf16.msra.mxu0 %v231
      %265 = vmatprep.subr.bf16.mxu0 %v234
      %266 = vmatpush1.bf16.msra.mxu0 %v233
      %267 = vmatprep.subr.bf16.mxu0 %v236
      %268 = vmatpush1.bf16.msra.mxu0 %v235
      %269 = vmatprep.subr.bf16.mxu0 %v238
      %270 = vmatpush1.bf16.msra.mxu0 %v237
      %271 = vmatprep.subr.bf16.mxu0 %v240
      %272 = vmatpush1.bf16.msra.mxu0 %v239
      %273 = vmatprep.subr.bf16.mxu0 %v242
      %274 = vmatpush1.bf16.msra.mxu0 %v241
      %275 = vmatprep.subr.bf16.mxu0 %v244
      %276 = vmatpush1.bf16.msra.mxu0 %v243
      %277 = vmatprep.subr.bf16.mxu0 0
      %278 = vmatpush1.bf16.msra.mxu0 0
      %279 = vmatprep.subr.bf16.mxu0 0
      %280 = vmatpush1.bf16.msra.mxu0 0
      %281 = vmatprep.subr.bf16.mxu0 0
      %282 = vmatpush1.bf16.msra.mxu0 0
      %283 = vmatprep.subr.bf16.mxu0 0
      %284 = vmatpush1.bf16.msra.mxu0 0
      %285 = vmatprep.subr.bf16.mxu0 0
      %286 = vmatpush1.bf16.msra.mxu0 0
      %287 = vmatprep.subr.bf16.mxu0 0
      %288 = vmatpush1.bf16.msra.mxu0 0
      %289 = vmatprep.subr.bf16.mxu0 0
      %290 = vmatpush1.bf16.msra.mxu0 0
      %291 = vmatprep.subr.bf16.mxu0 0
      %292 = vmatpush1.bf16.msra.mxu0 0
      %293 = vmatprep.mubr.bf16.mxu0 0
      %294 = vmatmul.mubr.bf16.gmra.mrb[0].mxu0 %v163
      %v295 = vpop.f32.mrb[0].mxu0
      %v296 = vadd.f32 0.0, %v295
      %v297 = vpop.f32.mrb[0].mxu0
      %v298 = vadd.f32 0.0, %v297
      %v299 = vpop.f32.mrb[0].mxu0
      %v300 = vpop.f32.mrb[0].mxu0
      %301 = vdwg.mxu0
      %v318 = vunpack.c.l.b16 %v146
      %v319 = vunpack.c.h.b16 %v146
      %v320 = vunpack.c.l.b16 %v147
      %v321 = vunpack.c.h.b16 %v147
      %v322 = vunpack.c.l.b16 %v148
      %v323 = vunpack.c.h.b16 %v148
      %v324 = vunpack.c.l.b16 %v149
      %v325 = vunpack.c.h.b16 %v149
      %v326 = vunpack.c.l.b16 %v150
      %v327 = vunpack.c.h.b16 %v150
      %v328 = vunpack.c.l.b16 %v151
      %v329 = vunpack.c.h.b16 %v151
      %v330 = vunpack.c.l.b16 %v152
      %v331 = vunpack.c.h.b16 %v152
      %v332 = vunpack.c.l.b16 %v153
      %v333 = vunpack.c.h.b16 %v153
      %v334 = vunpack.c.l.b16 %v154
      %v335 = vunpack.c.h.b16 %v154
      %v336 = vunpack.c.l.b16 %v155
      %v337 = vunpack.c.h.b16 %v155
      %v338 = vunpack.c.l.b16 %v156
      %v339 = vunpack.c.h.b16 %v156
      %v340 = vunpack.c.l.b16 %v157
      %v341 = vunpack.c.h.b16 %v157
      %v342 = vunpack.c.l.b16 %v158
      %v343 = vunpack.c.h.b16 %v158
      %v344 = vunpack.c.l.b16 %v159
      %v345 = vunpack.c.h.b16 %v159
      %v346 = vunpack.c.l.b16 %v160
      %v347 = vunpack.c.h.b16 %v160
      %v348 = vunpack.c.l.b16 %v161
      %v349 = vunpack.c.h.b16 %v161
      %v350 = vpack.c.b16 %v320, %v318
      %v351 = vpack.c.b16 %v321, %v319
      %v352 = vpack.c.b16 %v324, %v322
      %v353 = vpack.c.b16 %v325, %v323
      %v354 = vpack.c.b16 %v328, %v326
      %v355 = vpack.c.b16 %v329, %v327
      %v356 = vpack.c.b16 %v332, %v330
      %v357 = vpack.c.b16 %v333, %v331
      %v358 = vpack.c.b16 %v336, %v334
      %v359 = vpack.c.b16 %v337, %v335
      %v360 = vpack.c.b16 %v340, %v338
      %v361 = vpack.c.b16 %v341, %v339
      %v362 = vpack.c.b16 %v344, %v342
      %v363 = vpack.c.b16 %v345, %v343
      %v364 = vpack.c.b16 %v348, %v346
      %v365 = vpack.c.b16 %v349, %v347
      %382 = vmatprep.subr.bf16.mxu0 %v351
      %383 = vmatpush1.bf16.msra.mxu0 %v350
      %384 = vmatprep.subr.bf16.mxu0 %v353
      %385 = vmatpush1.bf16.msra.mxu0 %v352
      %386 = vmatprep.subr.bf16.mxu0 %v355
      %387 = vmatpush1.bf16.msra.mxu0 %v354
      %388 = vmatprep.subr.bf16.mxu0 %v357
      %389 = vmatpush1.bf16.msra.mxu0 %v356
      %390 = vmatprep.subr.bf16.mxu0 %v359
      %391 = vmatpush1.bf16.msra.mxu0 %v358
      %392 = vmatprep.subr.bf16.mxu0 %v361
      %393 = vmatpush1.bf16.msra.mxu0 %v360
      %394 = vmatprep.subr.bf16.mxu0 %v363
      %395 = vmatpush1.bf16.msra.mxu0 %v362
      %396 = vmatprep.subr.bf16.mxu0 %v365
      %397 = vmatpush1.bf16.msra.mxu0 %v364
      %398 = vmatprep.subr.bf16.mxu0 0
      %399 = vmatpush1.bf16.msra.mxu0 0
      %400 = vmatprep.subr.bf16.mxu0 0
      %401 = vmatpush1.bf16.msra.mxu0 0
      %402 = vmatprep.subr.bf16.mxu0 0
      %403 = vmatpush1.bf16.msra.mxu0 0
      %404 = vmatprep.subr.bf16.mxu0 0
      %405 = vmatpush1.bf16.msra.mxu0 0
      %406 = vmatprep.subr.bf16.mxu0 0
      %407 = vmatpush1.bf16.msra.mxu0 0
      %408 = vmatprep.subr.bf16.mxu0 0
      %409 = vmatpush1.bf16.msra.mxu0 0
      %410 = vmatprep.subr.bf16.mxu0 0
      %411 = vmatpush1.bf16.msra.mxu0 0
      %412 = vmatprep.subr.bf16.mxu0 0
      %413 = vmatpush1.bf16.msra.mxu0 0
      %414 = vmatprep.mubr.bf16.mxu0 0
      %415 = vmatmul.mubr.bf16.gmra.mrb[0].mxu0 %v145
      %v416 = vpop.f32.mrb[0].mxu0
      %v417 = vadd.f32 %v296, %v416
      %v418 = vpop.f32.mrb[0].mxu0
      %v419 = vadd.f32 %v298, %v418
      %v420 = vpop.f32.mrb[0].mxu0
      %v421 = vpop.f32.mrb[0].mxu0
      %422 = vdwg.mxu0
      %s423 = scalar_lea.vmem %s138, 4
      %v424 = vld [vmem:[%s423] sm:$0x3]
      %s425 = scalar_lea.vmem %s1, 256
      %v426 = vld [vmem:[%s425] sm:$0xff]
      %v427 = vld [vmem:[%s425 + $0x8] sm:$0xff]
      %v428 = vld [vmem:[%s425 + $0x10] sm:$0xff]
      %v429 = vld [vmem:[%s425 + $0x18] sm:$0xff]
      %v430 = vld [vmem:[%s425 + $0x20] sm:$0xff]
      %v431 = vld [vmem:[%s425 + $0x28] sm:$0xff]
      %v432 = vld [vmem:[%s425 + $0x30] sm:$0xff]
      %v433 = vld [vmem:[%s425 + $0x38] sm:$0xff]
      %v434 = vld [vmem:[%s425 + $0x40] sm:$0xff]
      %v435 = vld [vmem:[%s425 + $0x48] sm:$0xff]
      %v436 = vld [vmem:[%s425 + $0x50] sm:$0xff]
      %v437 = vld [vmem:[%s425 + $0x58] sm:$0xff]
      %v438 = vld [vmem:[%s425 + $0x60] sm:$0xff]
      %v439 = vld [vmem:[%s425 + $0x68] sm:$0xff]
      %v440 = vld [vmem:[%s425 + $0x70] sm:$0xff]
      %v441 = vld [vmem:[%s425 + $0x78] sm:$0xff]
      %v458 = vunpack.c.l.b16 %v426
      %v459 = vunpack.c.h.b16 %v426
      %v460 = vunpack.c.l.b16 %v427
      %v461 = vunpack.c.h.b16 %v427
      %v462 = vunpack.c.l.b16 %v428
      %v463 = vunpack.c.h.b16 %v428
      %v464 = vunpack.c.l.b16 %v429
      %v465 = vunpack.c.h.b16 %v429
      %v466 = vunpack.c.l.b16 %v430
      %v467 = vunpack.c.h.b16 %v430
      %v468 = vunpack.c.l.b16 %v431
      %v469 = vunpack.c.h.b16 %v431
      %v470 = vunpack.c.l.b16 %v432
      %v471 = vunpack.c.h.b16 %v432
      %v472 = vunpack.c.l.b16 %v433
      %v473 = vunpack.c.h.b16 %v433
      %v474 = vunpack.c.l.b16 %v434
      %v475 = vunpack.c.h.b16 %v434
      %v476 = vunpack.c.l.b16 %v435
      %v477 = vunpack.c.h.b16 %v435
      %v478 = vunpack.c.l.b16 %v436
      %v479 = vunpack.c.h.b16 %v436
      %v480 = vunpack.c.l.b16 %v437
      %v481 = vunpack.c.h.b16 %v437
      %v482 = vunpack.c.l.b16 %v438
      %v483 = vunpack.c.h.b16 %v438
      %v484 = vunpack.c.l.b16 %v439
      %v485 = vunpack.c.h.b16 %v439
      %v486 = vunpack.c.l.b16 %v440
      %v487 = vunpack.c.h.b16 %v440
      %v488 = vunpack.c.l.b16 %v441
      %v489 = vunpack.c.h.b16 %v441
      %v490 = vpack.c.b16 %v460, %v458
      %v491 = vpack.c.b16 %v461, %v459
      %v492 = vpack.c.b16 %v464, %v462
      %v493 = vpack.c.b16 %v465, %v463
      %v494 = vpack.c.b16 %v468, %v466
      %v495 = vpack.c.b16 %v469, %v467
      %v496 = vpack.c.b16 %v472, %v470
      %v497 = vpack.c.b16 %v473, %v471
      %v498 = vpack.c.b16 %v476, %v474
      %v499 = vpack.c.b16 %v477, %v475
      %v500 = vpack.c.b16 %v480, %v478
      %v501 = vpack.c.b16 %v481, %v479
      %v502 = vpack.c.b16 %v484, %v482
      %v503 = vpack.c.b16 %v485, %v483
      %v504 = vpack.c.b16 %v488, %v486
      %v505 = vpack.c.b16 %v489, %v487
      %522 = vmatprep.subr.bf16.mxu0 %v491
      %523 = vmatpush1.bf16.msra.mxu0 %v490
      %524 = vmatprep.subr.bf16.mxu0 %v493
      %525 = vmatpush1.bf16.msra.mxu0 %v492
      %526 = vmatprep.subr.bf16.mxu0 %v495
      %527 = vmatpush1.bf16.msra.mxu0 %v494
      %528 = vmatprep.subr.bf16.mxu0 %v497
      %529 = vmatpush1.bf16.msra.mxu0 %v496
      %530 = vmatprep.subr.bf16.mxu0 %v499
      %531 = vmatpush1.bf16.msra.mxu0 %v498
      %532 = vmatprep.subr.bf16.mxu0 %v501
      %533 = vmatpush1.bf16.msra.mxu0 %v500
      %534 = vmatprep.subr.bf16.mxu0 %v503
      %535 = vmatpush1.bf16.msra.mxu0 %v502
      %536 = vmatprep.subr.bf16.mxu0 %v505
      %537 = vmatpush1.bf16.msra.mxu0 %v504
      %538 = vmatprep.subr.bf16.mxu0 0
      %539 = vmatpush1.bf16.msra.mxu0 0
      %540 = vmatprep.subr.bf16.mxu0 0
      %541 = vmatpush1.bf16.msra.mxu0 0
      %542 = vmatprep.subr.bf16.mxu0 0
      %543 = vmatpush1.bf16.msra.mxu0 0
      %544 = vmatprep.subr.bf16.mxu0 0
      %545 = vmatpush1.bf16.msra.mxu0 0
      %546 = vmatprep.subr.bf16.mxu0 0
      %547 = vmatpush1.bf16.msra.mxu0 0
      %548 = vmatprep.subr.bf16.mxu0 0
      %549 = vmatpush1.bf16.msra.mxu0 0
      %550 = vmatprep.subr.bf16.mxu0 0
      %551 = vmatpush1.bf16.msra.mxu0 0
      %552 = vmatprep.subr.bf16.mxu0 0
      %553 = vmatpush1.bf16.msra.mxu0 0
      %554 = vmatprep.mubr.bf16.mxu0 0
      %555 = vmatmul.mubr.bf16.gmra.mrb[0].mxu0 %v424
      %v556 = vpop.f32.mrb[0].mxu0
      %v557 = vadd.f32 0.0, %v556
      %v558 = vpop.f32.mrb[0].mxu0
      %v559 = vadd.f32 0.0, %v558
      %v560 = vpop.f32.mrb[0].mxu0
      %v561 = vpop.f32.mrb[0].mxu0
      %562 = vdwg.mxu0
      %v563 = vadd.f32 %v417, %v557
      %v564 = vadd.f32 %v419, %v559
      %s565 = scalar_lea.vmem %s138, 12
      %v566 = vld [vmem:[%s565] sm:$0x3]
      %s567 = scalar_lea.vmem %s1, 384
      %v568 = vld [vmem:[%s567] sm:$0xff]
      %v569 = vld [vmem:[%s567 + $0x8] sm:$0xff]
      %v570 = vld [vmem:[%s567 + $0x10] sm:$0xff]
      %v571 = vld [vmem:[%s567 + $0x18] sm:$0xff]
      %v572 = vld [vmem:[%s567 + $0x20] sm:$0xff]
      %v573 = vld [vmem:[%s567 + $0x28] sm:$0xff]
      %v574 = vld [vmem:[%s567 + $0x30] sm:$0xff]
      %v575 = vld [vmem:[%s567 + $0x38] sm:$0xff]
      %v576 = vld [vmem:[%s567 + $0x40] sm:$0xff]
      %v577 = vld [vmem:[%s567 + $0x48] sm:$0xff]
      %v578 = vld [vmem:[%s567 + $0x50] sm:$0xff]
      %v579 = vld [vmem:[%s567 + $0x58] sm:$0xff]
      %v580 = vld [vmem:[%s567 + $0x60] sm:$0xff]
      %v581 = vld [vmem:[%s567 + $0x68] sm:$0xff]
      %v582 = vld [vmem:[%s567 + $0x70] sm:$0xff]
      %v583 = vld [vmem:[%s567 + $0x78] sm:$0xff]
      %v600 = vunpack.c.l.b16 %v568
      %v601 = vunpack.c.h.b16 %v568
      %v602 = vunpack.c.l.b16 %v569
      %v603 = vunpack.c.h.b16 %v569
      %v604 = vunpack.c.l.b16 %v570
      %v605 = vunpack.c.h.b16 %v570
      %v606 = vunpack.c.l.b16 %v571
      %v607 = vunpack.c.h.b16 %v571
      %v608 = vunpack.c.l.b16 %v572
      %v609 = vunpack.c.h.b16 %v572
      %v610 = vunpack.c.l.b16 %v573
      %v611 = vunpack.c.h.b16 %v573
      %v612 = vunpack.c.l.b16 %v574
      %v613 = vunpack.c.h.b16 %v574
      %v614 = vunpack.c.l.b16 %v575
      %v615 = vunpack.c.h.b16 %v575
      %v616 = vunpack.c.l.b16 %v576
      %v617 = vunpack.c.h.b16 %v576
      %v618 = vunpack.c.l.b16 %v577
      %v619 = vunpack.c.h.b16 %v577
      %v620 = vunpack.c.l.b16 %v578
      %v621 = vunpack.c.h.b16 %v578
      %v622 = vunpack.c.l.b16 %v579
      %v623 = vunpack.c.h.b16 %v579
      %v624 = vunpack.c.l.b16 %v580
      %v625 = vunpack.c.h.b16 %v580
      %v626 = vunpack.c.l.b16 %v581
      %v627 = vunpack.c.h.b16 %v581
      %v628 = vunpack.c.l.b16 %v582
      %v629 = vunpack.c.h.b16 %v582
      %v630 = vunpack.c.l.b16 %v583
      %v631 = vunpack.c.h.b16 %v583
      %v632 = vpack.c.b16 %v602, %v600
      %v633 = vpack.c.b16 %v603, %v601
      %v634 = vpack.c.b16 %v606, %v604
      %v635 = vpack.c.b16 %v607, %v605
      %v636 = vpack.c.b16 %v610, %v608
      %v637 = vpack.c.b16 %v611, %v609
      %v638 = vpack.c.b16 %v614, %v612
      %v639 = vpack.c.b16 %v615, %v613
      %v640 = vpack.c.b16 %v618, %v616
      %v641 = vpack.c.b16 %v619, %v617
      %v642 = vpack.c.b16 %v622, %v620
      %v643 = vpack.c.b16 %v623, %v621
      %v644 = vpack.c.b16 %v626, %v624
      %v645 = vpack.c.b16 %v627, %v625
      %v646 = vpack.c.b16 %v630, %v628
      %v647 = vpack.c.b16 %v631, %v629
      %664 = vmatprep.subr.bf16.mxu0 %v633
      %665 = vmatpush1.bf16.msra.mxu0 %v632
      %666 = vmatprep.subr.bf16.mxu0 %v635
      %667 = vmatpush1.bf16.msra.mxu0 %v634
      %668 = vmatprep.subr.bf16.mxu0 %v637
      %669 = vmatpush1.bf16.msra.mxu0 %v636
      %670 = vmatprep.subr.bf16.mxu0 %v639
      %671 = vmatpush1.bf16.msra.mxu0 %v638
      %672 = vmatprep.subr.bf16.mxu0 %v641
      %673 = vmatpush1.bf16.msra.mxu0 %v640
      %674 = vmatprep.subr.bf16.mxu0 %v643
      %675 = vmatpush1.bf16.msra.mxu0 %v642
      %676 = vmatprep.subr.bf16.mxu0 %v645
      %677 = vmatpush1.bf16.msra.mxu0 %v644
      %678 = vmatprep.subr.bf16.mxu0 %v647
      %679 = vmatpush1.bf16.msra.mxu0 %v646
      %680 = vmatprep.subr.bf16.mxu0 0
      %681 = vmatpush1.bf16.msra.mxu0 0
      %682 = vmatprep.subr.bf16.mxu0 0
      %683 = vmatpush1.bf16.msra.mxu0 0
      %684 = vmatprep.subr.bf16.mxu0 0
      %685 = vmatpush1.bf16.msra.mxu0 0
      %686 = vmatprep.subr.bf16.mxu0 0
      %687 = vmatpush1.bf16.msra.mxu0 0
      %688 = vmatprep.subr.bf16.mxu0 0
      %689 = vmatpush1.bf16.msra.mxu0 0
      %690 = vmatprep.subr.bf16.mxu0 0
      %691 = vmatpush1.bf16.msra.mxu0 0
      %692 = vmatprep.subr.bf16.mxu0 0
      %693 = vmatpush1.bf16.msra.mxu0 0
      %694 = vmatprep.subr.bf16.mxu0 0
      %695 = vmatpush1.bf16.msra.mxu0 0
      %696 = vmatprep.mubr.bf16.mxu0 0
      %697 = vmatmul.mubr.bf16.gmra.mrb[0].mxu0 %v566
      %v698 = vpop.f32.mrb[0].mxu0
      %v699 = vadd.f32 0.0, %v698
      %v700 = vpop.f32.mrb[0].mxu0
      %v701 = vadd.f32 0.0, %v700
      %v702 = vpop.f32.mrb[0].mxu0
      %v703 = vpop.f32.mrb[0].mxu0
      %704 = vdwg.mxu0
      %v705 = vadd.f32 %v563, %v699
      %v706 = vadd.f32 %v564, %v701
      %s707 = scalar_lea.vmem %s138, 16
      %v708 = vld [vmem:[%s707] sm:$0x3]
      %s709 = scalar_lea.vmem %s1, 512
      %v710 = vld [vmem:[%s709] sm:$0xff]
      %v711 = vld [vmem:[%s709 + $0x8] sm:$0xff]
      %v712 = vld [vmem:[%s709 + $0x10] sm:$0xff]
      %v713 = vld [vmem:[%s709 + $0x18] sm:$0xff]
      %v714 = vld [vmem:[%s709 + $0x20] sm:$0xff]
      %v715 = vld [vmem:[%s709 + $0x28] sm:$0xff]
      %v716 = vld [vmem:[%s709 + $0x30] sm:$0xff]
      %v717 = vld [vmem:[%s709 + $0x38] sm:$0xff]
      %v718 = vld [vmem:[%s709 + $0x40] sm:$0xff]
      %v719 = vld [vmem:[%s709 + $0x48] sm:$0xff]
      %v720 = vld [vmem:[%s709 + $0x50] sm:$0xff]
      %v721 = vld [vmem:[%s709 + $0x58] sm:$0xff]
      %v722 = vld [vmem:[%s709 + $0x60] sm:$0xff]
      %v723 = vld [vmem:[%s709 + $0x68] sm:$0xff]
      %v724 = vld [vmem:[%s709 + $0x70] sm:$0xff]
      %v725 = vld [vmem:[%s709 + $0x78] sm:$0xff]
      %v742 = vunpack.c.l.b16 %v710
      %v743 = vunpack.c.h.b16 %v710
      %v744 = vunpack.c.l.b16 %v711
      %v745 = vunpack.c.h.b16 %v711
      %v746 = vunpack.c.l.b16 %v712
      %v747 = vunpack.c.h.b16 %v712
      %v748 = vunpack.c.l.b16 %v713
      %v749 = vunpack.c.h.b16 %v713
      %v750 = vunpack.c.l.b16 %v714
      %v751 = vunpack.c.h.b16 %v714
      %v752 = vunpack.c.l.b16 %v715
      %v753 = vunpack.c.h.b16 %v715
      %v754 = vunpack.c.l.b16 %v716
      %v755 = vunpack.c.h.b16 %v716
      %v756 = vunpack.c.l.b16 %v717
      %v757 = vunpack.c.h.b16 %v717
      %v758 = vunpack.c.l.b16 %v718
      %v759 = vunpack.c.h.b16 %v718
      %v760 = vunpack.c.l.b16 %v719
      %v761 = vunpack.c.h.b16 %v719
      %v762 = vunpack.c.l.b16 %v720
      %v763 = vunpack.c.h.b16 %v720
      %v764 = vunpack.c.l.b16 %v721
      %v765 = vunpack.c.h.b16 %v721
      %v766 = vunpack.c.l.b16 %v722
      %v767 = vunpack.c.h.b16 %v722
      %v768 = vunpack.c.l.b16 %v723
      %v769 = vunpack.c.h.b16 %v723
      %v770 = vunpack.c.l.b16 %v724
      %v771 = vunpack.c.h.b16 %v724
      %v772 = vunpack.c.l.b16 %v725
      %v773 = vunpack.c.h.b16 %v725
      %v774 = vpack.c.b16 %v744, %v742
      %v775 = vpack.c.b16 %v745, %v743
      %v776 = vpack.c.b16 %v748, %v746
      %v777 = vpack.c.b16 %v749, %v747
      %v778 = vpack.c.b16 %v752, %v750
      %v779 = vpack.c.b16 %v753, %v751
      %v780 = vpack.c.b16 %v756, %v754
      %v781 = vpack.c.b16 %v757, %v755
      %v782 = vpack.c.b16 %v760, %v758
      %v783 = vpack.c.b16 %v761, %v759
      %v784 = vpack.c.b16 %v764, %v762
      %v785 = vpack.c.b16 %v765, %v763
      %v786 = vpack.c.b16 %v768, %v766
      %v787 = vpack.c.b16 %v769, %v767
      %v788 = vpack.c.b16 %v772, %v770
      %v789 = vpack.c.b16 %v773, %v771
      %806 = vmatprep.subr.bf16.mxu0 %v775
      %807 = vmatpush1.bf16.msra.mxu0 %v774
      %808 = vmatprep.subr.bf16.mxu0 %v777
      %809 = vmatpush1.bf16.msra.mxu0 %v776
      %810 = vmatprep.subr.bf16.mxu0 %v779
      %811 = vmatpush1.bf16.msra.mxu0 %v778
      %812 = vmatprep.subr.bf16.mxu0 %v781
      %813 = vmatpush1.bf16.msra.mxu0 %v780
      %814 = vmatprep.subr.bf16.mxu0 %v783
      %815 = vmatpush1.bf16.msra.mxu0 %v782
      %816 = vmatprep.subr.bf16.mxu0 %v785
      %817 = vmatpush1.bf16.msra.mxu0 %v784
      %818 = vmatprep.subr.bf16.mxu0 %v787
      %819 = vmatpush1.bf16.msra.mxu0 %v786
      %820 = vmatprep.subr.bf16.mxu0 %v789
      %821 = vmatpush1.bf16.msra.mxu0 %v788
      %822 = vmatprep.subr.bf16.mxu0 0
      %823 = vmatpush1.bf16.msra.mxu0 0
      %824 = vmatprep.subr.bf16.mxu0 0
      %825 = vmatpush1.bf16.msra.mxu0 0
      %826 = vmatprep.subr.bf16.mxu0 0
      %827 = vmatpush1.bf16.msra.mxu0 0
      %828 = vmatprep.subr.bf16.mxu0 0
      %829 = vmatpush1.bf16.msra.mxu0 0
      %830 = vmatprep.subr.bf16.mxu0 0
      %831 = vmatpush1.bf16.msra.mxu0 0
      %832 = vmatprep.subr.bf16.mxu0 0
      %833 = vmatpush1.bf16.msra.mxu0 0
      %834 = vmatprep.subr.bf16.mxu0 0
      %835 = vmatpush1.bf16.msra.mxu0 0
      %836 = vmatprep.subr.bf16.mxu0 0
      %837 = vmatpush1.bf16.msra.mxu0 0
      %838 = vmatprep.mubr.bf16.mxu0 0
      %839 = vmatmul.mubr.bf16.gmra.mrb[0].mxu0 %v708
      %v840 = vpop.f32.mrb[0].mxu0
      %v841 = vadd.f32 0.0, %v840
      %v842 = vpop.f32.mrb[0].mxu0
      %v843 = vadd.f32 0.0, %v842
      %v844 = vpop.f32.mrb[0].mxu0
      %v845 = vpop.f32.mrb[0].mxu0
      %846 = vdwg.mxu0
      %v847 = vadd.f32 %v705, %v841
      %v848 = vadd.f32 %v706, %v843
      %s849 = scalar_lea.vmem %s138, 24
      %v850 = vld [vmem:[%s849] sm:$0x3]
      %s851 = scalar_lea.vmem %s1, 640
      %v852 = vld [vmem:[%s851] sm:$0xff]
      %v853 = vld [vmem:[%s851 + $0x8] sm:$0xff]
      %v854 = vld [vmem:[%s851 + $0x10] sm:$0xff]
      %v855 = vld [vmem:[%s851 + $0x18] sm:$0xff]
      %v856 = vld [vmem:[%s851 + $0x20] sm:$0xff]
      %v857 = vld [vmem:[%s851 + $0x28] sm:$0xff]
      %v858 = vld [vmem:[%s851 + $0x30] sm:$0xff]
      %v859 = vld [vmem:[%s851 + $0x38] sm:$0xff]
      %v860 = vld [vmem:[%s851 + $0x40] sm:$0xff]
      %v861 = vld [vmem:[%s851 + $0x48] sm:$0xff]
      %v862 = vld [vmem:[%s851 + $0x50] sm:$0xff]
      %v863 = vld [vmem:[%s851 + $0x58] sm:$0xff]
      %v864 = vld [vmem:[%s851 + $0x60] sm:$0xff]
      %v865 = vld [vmem:[%s851 + $0x68] sm:$0xff]
      %v866 = vld [vmem:[%s851 + $0x70] sm:$0xff]
      %v867 = vld [vmem:[%s851 + $0x78] sm:$0xff]
      %v884 = vunpack.c.l.b16 %v852
      %v885 = vunpack.c.h.b16 %v852
      %v886 = vunpack.c.l.b16 %v853
      %v887 = vunpack.c.h.b16 %v853
      %v888 = vunpack.c.l.b16 %v854
      %v889 = vunpack.c.h.b16 %v854
      %v890 = vunpack.c.l.b16 %v855
      %v891 = vunpack.c.h.b16 %v855
      %v892 = vunpack.c.l.b16 %v856
      %v893 = vunpack.c.h.b16 %v856
      %v894 = vunpack.c.l.b16 %v857
      %v895 = vunpack.c.h.b16 %v857
      %v896 = vunpack.c.l.b16 %v858
      %v897 = vunpack.c.h.b16 %v858
      %v898 = vunpack.c.l.b16 %v859
      %v899 = vunpack.c.h.b16 %v859
      %v900 = vunpack.c.l.b16 %v860
      %v901 = vunpack.c.h.b16 %v860
      %v902 = vunpack.c.l.b16 %v861
      %v903 = vunpack.c.h.b16 %v861
      %v904 = vunpack.c.l.b16 %v862
      %v905 = vunpack.c.h.b16 %v862
      %v906 = vunpack.c.l.b16 %v863
      %v907 = vunpack.c.h.b16 %v863
      %v908 = vunpack.c.l.b16 %v864
      %v909 = vunpack.c.h.b16 %v864
      %v910 = vunpack.c.l.b16 %v865
      %v911 = vunpack.c.h.b16 %v865
      %v912 = vunpack.c.l.b16 %v866
      %v913 = vunpack.c.h.b16 %v866
      %v914 = vunpack.c.l.b16 %v867
      %v915 = vunpack.c.h.b16 %v867
      %v916 = vpack.c.b16 %v886, %v884
      %v917 = vpack.c.b16 %v887, %v885
      %v918 = vpack.c.b16 %v890, %v888
      %v919 = vpack.c.b16 %v891, %v889
      %v920 = vpack.c.b16 %v894, %v892
      %v921 = vpack.c.b16 %v895, %v893
      %v922 = vpack.c.b16 %v898, %v896
      %v923 = vpack.c.b16 %v899, %v897
      %v924 = vpack.c.b16 %v902, %v900
      %v925 = vpack.c.b16 %v903, %v901
      %v926 = vpack.c.b16 %v906, %v904
      %v927 = vpack.c.b16 %v907, %v905
      %v928 = vpack.c.b16 %v910, %v908
      %v929 = vpack.c.b16 %v911, %v909
      %v930 = vpack.c.b16 %v914, %v912
      %v931 = vpack.c.b16 %v915, %v913
      %948 = vmatprep.subr.bf16.mxu0 %v917
      %949 = vmatpush1.bf16.msra.mxu0 %v916
      %950 = vmatprep.subr.bf16.mxu0 %v919
      %951 = vmatpush1.bf16.msra.mxu0 %v918
      %952 = vmatprep.subr.bf16.mxu0 %v921
      %953 = vmatpush1.bf16.msra.mxu0 %v920
      %954 = vmatprep.subr.bf16.mxu0 %v923
      %955 = vmatpush1.bf16.msra.mxu0 %v922
      %956 = vmatprep.subr.bf16.mxu0 %v925
      %957 = vmatpush1.bf16.msra.mxu0 %v924
      %958 = vmatprep.subr.bf16.mxu0 %v927
      %959 = vmatpush1.bf16.msra.mxu0 %v926
      %960 = vmatprep.subr.bf16.mxu0 %v929
      %961 = vmatpush1.bf16.msra.mxu0 %v928
      %962 = vmatprep.subr.bf16.mxu0 %v931
      %963 = vmatpush1.bf16.msra.mxu0 %v930
      %964 = vmatprep.subr.bf16.mxu0 0
      %965 = vmatpush1.bf16.msra.mxu0 0
      %966 = vmatprep.subr.bf16.mxu0 0
      %967 = vmatpush1.bf16.msra.mxu0 0
      %968 = vmatprep.subr.bf16.mxu0 0
      %969 = vmatpush1.bf16.msra.mxu0 0
      %970 = vmatprep.subr.bf16.mxu0 0
      %971 = vmatpush1.bf16.msra.mxu0 0
      %972 = vmatprep.subr.bf16.mxu0 0
      %973 = vmatpush1.bf16.msra.mxu0 0
      %974 = vmatprep.subr.bf16.mxu0 0
      %975 = vmatpush1.bf16.msra.mxu0 0
      %976 = vmatprep.subr.bf16.mxu0 0
      %977 = vmatpush1.bf16.msra.mxu0 0
      %978 = vmatprep.subr.bf16.mxu0 0
      %979 = vmatpush1.bf16.msra.mxu0 0
      %980 = vmatprep.mubr.bf16.mxu0 0
      %981 = vmatmul.mubr.bf16.gmra.mrb[0].mxu0 %v850
      %v982 = vpop.f32.mrb[0].mxu0
      %v983 = vadd.f32 0.0, %v982
      %v984 = vpop.f32.mrb[0].mxu0
      %v985 = vadd.f32 0.0, %v984
      %v986 = vpop.f32.mrb[0].mxu0
      %v987 = vpop.f32.mrb[0].mxu0
      %988 = vdwg.mxu0
      %v989 = vadd.f32 %v847, %v983
      %v990 = vadd.f32 %v848, %v985
      %s991 = scalar_lea.vmem %s138, 20
      %v992 = vld [vmem:[%s991] sm:$0x3]
      %s993 = scalar_lea.vmem %s1, 768
      %v994 = vld [vmem:[%s993] sm:$0xff]
      %v995 = vld [vmem:[%s993 + $0x8] sm:$0xff]
      %v996 = vld [vmem:[%s993 + $0x10] sm:$0xff]
      %v997 = vld [vmem:[%s993 + $0x18] sm:$0xff]
      %v998 = vld [vmem:[%s993 + $0x20] sm:$0xff]
      %v999 = vld [vmem:[%s993 + $0x28] sm:$0xff]
      %v1000 = vld [vmem:[%s993 + $0x30] sm:$0xff]
      %v1001 = vld [vmem:[%s993 + $0x38] sm:$0xff]
      %v1002 = vld [vmem:[%s993 + $0x40] sm:$0xff]
      %v1003 = vld [vmem:[%s993 + $0x48] sm:$0xff]
      %v1004 = vld [vmem:[%s993 + $0x50] sm:$0xff]
      %v1005 = vld [vmem:[%s993 + $0x58] sm:$0xff]
      %v1006 = vld [vmem:[%s993 + $0x60] sm:$0xff]
      %v1007 = vld [vmem:[%s993 + $0x68] sm:$0xff]
      %v1008 = vld [vmem:[%s993 + $0x70] sm:$0xff]
      %v1009 = vld [vmem:[%s993 + $0x78] sm:$0xff]
      %v1026 = vunpack.c.l.b16 %v994
      %v1027 = vunpack.c.h.b16 %v994
      %v1028 = vunpack.c.l.b16 %v995
      %v1029 = vunpack.c.h.b16 %v995
      %v1030 = vunpack.c.l.b16 %v996
      %v1031 = vunpack.c.h.b16 %v996
      %v1032 = vunpack.c.l.b16 %v997
      %v1033 = vunpack.c.h.b16 %v997
      %v1034 = vunpack.c.l.b16 %v998
      %v1035 = vunpack.c.h.b16 %v998
      %v1036 = vunpack.c.l.b16 %v999
      %v1037 = vunpack.c.h.b16 %v999
      %v1038 = vunpack.c.l.b16 %v1000
      %v1039 = vunpack.c.h.b16 %v1000
      %v1040 = vunpack.c.l.b16 %v1001
      %v1041 = vunpack.c.h.b16 %v1001
      %v1042 = vunpack.c.l.b16 %v1002
      %v1043 = vunpack.c.h.b16 %v1002
      %v1044 = vunpack.c.l.b16 %v1003
      %v1045 = vunpack.c.h.b16 %v1003
      %v1046 = vunpack.c.l.b16 %v1004
      %v1047 = vunpack.c.h.b16 %v1004
      %v1048 = vunpack.c.l.b16 %v1005
      %v1049 = vunpack.c.h.b16 %v1005
      %v1050 = vunpack.c.l.b16 %v1006
      %v1051 = vunpack.c.h.b16 %v1006
      %v1052 = vunpack.c.l.b16 %v1007
      %v1053 = vunpack.c.h.b16 %v1007
      %v1054 = vunpack.c.l.b16 %v1008
      %v1055 = vunpack.c.h.b16 %v1008
      %v1056 = vunpack.c.l.b16 %v1009
      %v1057 = vunpack.c.h.b16 %v1009
      %v1058 = vpack.c.b16 %v1028, %v1026
      %v1059 = vpack.c.b16 %v1029, %v1027
      %v1060 = vpack.c.b16 %v1032, %v1030
      %v1061 = vpack.c.b16 %v1033, %v1031
      %v1062 = vpack.c.b16 %v1036, %v1034
      %v1063 = vpack.c.b16 %v1037, %v1035
      %v1064 = vpack.c.b16 %v1040, %v1038
      %v1065 = vpack.c.b16 %v1041, %v1039
      %v1066 = vpack.c.b16 %v1044, %v1042
      %v1067 = vpack.c.b16 %v1045, %v1043
      %v1068 = vpack.c.b16 %v1048, %v1046
      %v1069 = vpack.c.b16 %v1049, %v1047
      %v1070 = vpack.c.b16 %v1052, %v1050
      %v1071 = vpack.c.b16 %v1053, %v1051
      %v1072 = vpack.c.b16 %v1056, %v1054
      %v1073 = vpack.c.b16 %v1057, %v1055
      %1090 = vmatprep.subr.bf16.mxu0 %v1059
      %1091 = vmatpush1.bf16.msra.mxu0 %v1058
      %1092 = vmatprep.subr.bf16.mxu0 %v1061
      %1093 = vmatpush1.bf16.msra.mxu0 %v1060
      %1094 = vmatprep.subr.bf16.mxu0 %v1063
      %1095 = vmatpush1.bf16.msra.mxu0 %v1062
      %1096 = vmatprep.subr.bf16.mxu0 %v1065
      %1097 = vmatpush1.bf16.msra.mxu0 %v1064
      %1098 = vmatprep.subr.bf16.mxu0 %v1067
      %1099 = vmatpush1.bf16.msra.mxu0 %v1066
      %1100 = vmatprep.subr.bf16.mxu0 %v1069
      %1101 = vmatpush1.bf16.msra.mxu0 %v1068
      %1102 = vmatprep.subr.bf16.mxu0 %v1071
      %1103 = vmatpush1.bf16.msra.mxu0 %v1070
      %1104 = vmatprep.subr.bf16.mxu0 %v1073
      %1105 = vmatpush1.bf16.msra.mxu0 %v1072
      %1106 = vmatprep.subr.bf16.mxu0 0
      %1107 = vmatpush1.bf16.msra.mxu0 0
      %1108 = vmatprep.subr.bf16.mxu0 0
      %1109 = vmatpush1.bf16.msra.mxu0 0
      %1110 = vmatprep.subr.bf16.mxu0 0
      %1111 = vmatpush1.bf16.msra.mxu0 0
      %1112 = vmatprep.subr.bf16.mxu0 0
      %1113 = vmatpush1.bf16.msra.mxu0 0
      %1114 = vmatprep.subr.bf16.mxu0 0
      %1115 = vmatpush1.bf16.msra.mxu0 0
      %1116 = vmatprep.subr.bf16.mxu0 0
      %1117 = vmatpush1.bf16.msra.mxu0 0
      %1118 = vmatprep.subr.bf16.mxu0 0
      %1119 = vmatpush1.bf16.msra.mxu0 0
      %1120 = vmatprep.subr.bf16.mxu0 0
      %1121 = vmatpush1.bf16.msra.mxu0 0
      %1122 = vmatprep.mubr.bf16.mxu0 0
      %1123 = vmatmul.mubr.bf16.gmra.mrb[0].mxu0 %v992
      %v1124 = vpop.f32.mrb[0].mxu0
      %v1125 = vadd.f32 0.0, %v1124
      %v1126 = vpop.f32.mrb[0].mxu0
      %v1127 = vadd.f32 0.0, %v1126
      %v1128 = vpop.f32.mrb[0].mxu0
      %v1129 = vpop.f32.mrb[0].mxu0
      %1130 = vdwg.mxu0
      %v1131 = vadd.f32 %v989, %v1125
      %v1132 = vadd.f32 %v990, %v1127
      %s1133 = scalar_lea.vmem %s138, 28
      %v1134 = vld [vmem:[%s1133] sm:$0x3]
      %s1135 = scalar_lea.vmem %s1, 896
      %v1136 = vld [vmem:[%s1135] sm:$0xff]
      %v1137 = vld [vmem:[%s1135 + $0x8] sm:$0xff]
      %v1138 = vld [vmem:[%s1135 + $0x10] sm:$0xff]
      %v1139 = vld [vmem:[%s1135 + $0x18] sm:$0xff]
      %v1140 = vld [vmem:[%s1135 + $0x20] sm:$0xff]
      %v1141 = vld [vmem:[%s1135 + $0x28] sm:$0xff]
      %v1142 = vld [vmem:[%s1135 + $0x30] sm:$0xff]
      %v1143 = vld [vmem:[%s1135 + $0x38] sm:$0xff]
      %v1144 = vld [vmem:[%s1135 + $0x40] sm:$0xff]
      %v1145 = vld [vmem:[%s1135 + $0x48] sm:$0xff]
      %v1146 = vld [vmem:[%s1135 + $0x50] sm:$0xff]
      %v1147 = vld [vmem:[%s1135 + $0x58] sm:$0xff]
      %v1148 = vld [vmem:[%s1135 + $0x60] sm:$0xff]
      %v1149 = vld [vmem:[%s1135 + $0x68] sm:$0xff]
      %v1150 = vld [vmem:[%s1135 + $0x70] sm:$0xff]
      %v1151 = vld [vmem:[%s1135 + $0x78] sm:$0xff]
      %v1168 = vunpack.c.l.b16 %v1136
      %v1169 = vunpack.c.h.b16 %v1136
      %v1170 = vunpack.c.l.b16 %v1137
      %v1171 = vunpack.c.h.b16 %v1137
      %v1172 = vunpack.c.l.b16 %v1138
      %v1173 = vunpack.c.h.b16 %v1138
      %v1174 = vunpack.c.l.b16 %v1139
      %v1175 = vunpack.c.h.b16 %v1139
      %v1176 = vunpack.c.l.b16 %v1140
      %v1177 = vunpack.c.h.b16 %v1140
      %v1178 = vunpack.c.l.b16 %v1141
      %v1179 = vunpack.c.h.b16 %v1141
      %v1180 = vunpack.c.l.b16 %v1142
      %v1181 = vunpack.c.h.b16 %v1142
      %v1182 = vunpack.c.l.b16 %v1143
      %v1183 = vunpack.c.h.b16 %v1143
      %v1184 = vunpack.c.l.b16 %v1144
      %v1185 = vunpack.c.h.b16 %v1144
      %v1186 = vunpack.c.l.b16 %v1145
      %v1187 = vunpack.c.h.b16 %v1145
      %v1188 = vunpack.c.l.b16 %v1146
      %v1189 = vunpack.c.h.b16 %v1146
      %v1190 = vunpack.c.l.b16 %v1147
      %v1191 = vunpack.c.h.b16 %v1147
      %v1192 = vunpack.c.l.b16 %v1148
      %v1193 = vunpack.c.h.b16 %v1148
      %v1194 = vunpack.c.l.b16 %v1149
      %v1195 = vunpack.c.h.b16 %v1149
      %v1196 = vunpack.c.l.b16 %v1150
      %v1197 = vunpack.c.h.b16 %v1150
      %v1198 = vunpack.c.l.b16 %v1151
      %v1199 = vunpack.c.h.b16 %v1151
      %v1200 = vpack.c.b16 %v1170, %v1168
      %v1201 = vpack.c.b16 %v1171, %v1169
      %v1202 = vpack.c.b16 %v1174, %v1172
      %v1203 = vpack.c.b16 %v1175, %v1173
      %v1204 = vpack.c.b16 %v1178, %v1176
      %v1205 = vpack.c.b16 %v1179, %v1177
      %v1206 = vpack.c.b16 %v1182, %v1180
      %v1207 = vpack.c.b16 %v1183, %v1181
      %v1208 = vpack.c.b16 %v1186, %v1184
      %v1209 = vpack.c.b16 %v1187, %v1185
      %v1210 = vpack.c.b16 %v1190, %v1188
      %v1211 = vpack.c.b16 %v1191, %v1189
      %v1212 = vpack.c.b16 %v1194, %v1192
      %v1213 = vpack.c.b16 %v1195, %v1193
      %v1214 = vpack.c.b16 %v1198, %v1196
      %v1215 = vpack.c.b16 %v1199, %v1197
      %1232 = vmatprep.subr.bf16.mxu0 %v1201
      %1233 = vmatpush1.bf16.msra.mxu0 %v1200
      %1234 = vmatprep.subr.bf16.mxu0 %v1203
      %1235 = vmatpush1.bf16.msra.mxu0 %v1202
      %1236 = vmatprep.subr.bf16.mxu0 %v1205
      %1237 = vmatpush1.bf16.msra.mxu0 %v1204
      %1238 = vmatprep.subr.bf16.mxu0 %v1207
      %1239 = vmatpush1.bf16.msra.mxu0 %v1206
      %1240 = vmatprep.subr.bf16.mxu0 %v1209
      %1241 = vmatpush1.bf16.msra.mxu0 %v1208
      %1242 = vmatprep.subr.bf16.mxu0 %v1211
      %1243 = vmatpush1.bf16.msra.mxu0 %v1210
      %1244 = vmatprep.subr.bf16.mxu0 %v1213
      %1245 = vmatpush1.bf16.msra.mxu0 %v1212
      %1246 = vmatprep.subr.bf16.mxu0 %v1215
      %1247 = vmatpush1.bf16.msra.mxu0 %v1214
      %1248 = vmatprep.subr.bf16.mxu0 0
      %1249 = vmatpush1.bf16.msra.mxu0 0
      %1250 = vmatprep.subr.bf16.mxu0 0
      %1251 = vmatpush1.bf16.msra.mxu0 0
      %1252 = vmatprep.subr.bf16.mxu0 0
      %1253 = vmatpush1.bf16.msra.mxu0 0
      %1254 = vmatprep.subr.bf16.mxu0 0
      %1255 = vmatpush1.bf16.msra.mxu0 0
      %1256 = vmatprep.subr.bf16.mxu0 0
      %1257 = vmatpush1.bf16.msra.mxu0 0
      %1258 = vmatprep.subr.bf16.mxu0 0
      %1259 = vmatpush1.bf16.msra.mxu0 0
      %1260 = vmatprep.subr.bf16.mxu0 0
      %1261 = vmatpush1.bf16.msra.mxu0 0
      %1262 = vmatprep.subr.bf16.mxu0 0
      %1263 = vmatpush1.bf16.msra.mxu0 0
      %1264 = vmatprep.mubr.bf16.mxu0 0
      %1265 = vmatmul.mubr.bf16.gmra.mrb[0].mxu0 %v1134
      %v1266 = vpop.f32.mrb[0].mxu0
      %v1267 = vadd.f32 0.0, %v1266
      %v1268 = vpop.f32.mrb[0].mxu0
      %v1269 = vadd.f32 0.0, %v1268
      %v1270 = vpop.f32.mrb[0].mxu0
      %v1271 = vpop.f32.mrb[0].mxu0
      %1272 = vdwg.mxu0
      %v1273 = vadd.f32 %v1131, %v1267
      %v1274 = vadd.f32 %v1132, %v1269
      %v1275 = vld [vmem:[%s138] sm:$0x6]
      %s1276 = scalar_lea.vmem %s1, 1024
      %v1277 = vld [vmem:[%s1276] sm:$0xff]
      %v1278 = vld [vmem:[%s1276 + $0x8] sm:$0xff]
      %v1279 = vld [vmem:[%s1276 + $0x10] sm:$0xff]
      %v1280 = vld [vmem:[%s1276 + $0x18] sm:$0xff]
      %v1281 = vld [vmem:[%s1276 + $0x20] sm:$0xff]
      %v1282 = vld [vmem:[%s1276 + $0x28] sm:$0xff]
      %v1283 = vld [vmem:[%s1276 + $0x30] sm:$0xff]
      %v1284 = vld [vmem:[%s1276 + $0x38] sm:$0xff]
      %v1285 = vld [vmem:[%s1276 + $0x40] sm:$0xff]
      %v1286 = vld [vmem:[%s1276 + $0x48] sm:$0xff]
      %v1287 = vld [vmem:[%s1276 + $0x50] sm:$0xff]
      %v1288 = vld [vmem:[%s1276 + $0x58] sm:$0xff]
      %v1289 = vld [vmem:[%s1276 + $0x60] sm:$0xff]
      %v1290 = vld [vmem:[%s1276 + $0x68] sm:$0xff]
      %v1291 = vld [vmem:[%s1276 + $0x70] sm:$0xff]
      %v1292 = vld [vmem:[%s1276 + $0x78] sm:$0xff]
      %v1294 = vunpack.c.l.b16 %v1275
      %v1295 = vpack.c.b16 %v1294, %v1294
      %v1296 = vrot.slane %v1295, 1
      %v1314 = vunpack.c.l.b16 %v1277
      %v1315 = vunpack.c.h.b16 %v1277
      %v1316 = vunpack.c.l.b16 %v1278
      %v1317 = vunpack.c.h.b16 %v1278
      %v1318 = vunpack.c.l.b16 %v1279
      %v1319 = vunpack.c.h.b16 %v1279
      %v1320 = vunpack.c.l.b16 %v1280
      %v1321 = vunpack.c.h.b16 %v1280
      %v1322 = vunpack.c.l.b16 %v1281
      %v1323 = vunpack.c.h.b16 %v1281
      %v1324 = vunpack.c.l.b16 %v1282
      %v1325 = vunpack.c.h.b16 %v1282
      %v1326 = vunpack.c.l.b16 %v1283
      %v1327 = vunpack.c.h.b16 %v1283
      %v1328 = vunpack.c.l.b16 %v1284
      %v1329 = vunpack.c.h.b16 %v1284
      %v1330 = vunpack.c.l.b16 %v1285
      %v1331 = vunpack.c.h.b16 %v1285
      %v1332 = vunpack.c.l.b16 %v1286
      %v1333 = vunpack.c.h.b16 %v1286
      %v1334 = vunpack.c.l.b16 %v1287
      %v1335 = vunpack.c.h.b16 %v1287
      %v1336 = vunpack.c.l.b16 %v1288
      %v1337 = vunpack.c.h.b16 %v1288
      %v1338 = vunpack.c.l.b16 %v1289
      %v1339 = vunpack.c.h.b16 %v1289
      %v1340 = vunpack.c.l.b16 %v1290
      %v1341 = vunpack.c.h.b16 %v1290
      %v1342 = vunpack.c.l.b16 %v1291
      %v1343 = vunpack.c.h.b16 %v1291
      %v1344 = vunpack.c.l.b16 %v1292
      %v1345 = vunpack.c.h.b16 %v1292
      %v1346 = vpack.c.b16 %v1316, %v1314
      %v1347 = vpack.c.b16 %v1317, %v1315
      %v1348 = vpack.c.b16 %v1320, %v1318
      %v1349 = vpack.c.b16 %v1321, %v1319
      %v1350 = vpack.c.b16 %v1324, %v1322
      %v1351 = vpack.c.b16 %v1325, %v1323
      %v1352 = vpack.c.b16 %v1328, %v1326
      %v1353 = vpack.c.b16 %v1329, %v1327
      %v1354 = vpack.c.b16 %v1332, %v1330
      %v1355 = vpack.c.b16 %v1333, %v1331
      %v1356 = vpack.c.b16 %v1336, %v1334
      %v1357 = vpack.c.b16 %v1337, %v1335
      %v1358 = vpack.c.b16 %v1340, %v1338
      %v1359 = vpack.c.b16 %v1341, %v1339
      %v1360 = vpack.c.b16 %v1344, %v1342
      %v1361 = vpack.c.b16 %v1345, %v1343
      %1378 = vmatprep.subr.bf16.mxu0 %v1347
      %1379 = vmatpush1.bf16.msra.mxu0 %v1346
      %1380 = vmatprep.subr.bf16.mxu0 %v1349
      %1381 = vmatpush1.bf16.msra.mxu0 %v1348
      %1382 = vmatprep.subr.bf16.mxu0 %v1351
      %1383 = vmatpush1.bf16.msra.mxu0 %v1350
      %1384 = vmatprep.subr.bf16.mxu0 %v1353
      %1385 = vmatpush1.bf16.msra.mxu0 %v1352
      %1386 = vmatprep.subr.bf16.mxu0 %v1355
      %1387 = vmatpush1.bf16.msra.mxu0 %v1354
      %1388 = vmatprep.subr.bf16.mxu0 %v1357
      %1389 = vmatpush1.bf16.msra.mxu0 %v1356
      %1390 = vmatprep.subr.bf16.mxu0 %v1359
      %1391 = vmatpush1.bf16.msra.mxu0 %v1358
      %1392 = vmatprep.subr.bf16.mxu0 %v1361
      %1393 = vmatpush1.bf16.msra.mxu0 %v1360
      %1394 = vmatprep.subr.bf16.mxu0 0
      %1395 = vmatpush1.bf16.msra.mxu0 0
      %1396 = vmatprep.subr.bf16.mxu0 0
      %1397 = vmatpush1.bf16.msra.mxu0 0
      %1398 = vmatprep.subr.bf16.mxu0 0
      %1399 = vmatpush1.bf16.msra.mxu0 0
      %1400 = vmatprep.subr.bf16.mxu0 0
      %1401 = vmatpush1.bf16.msra.mxu0 0
      %1402 = vmatprep.subr.bf16.mxu0 0
      %1403 = vmatpush1.bf16.msra.mxu0 0
      %1404 = vmatprep.subr.bf16.mxu0 0
      %1405 = vmatpush1.bf16.msra.mxu0 0
      %1406 = vmatprep.subr.bf16.mxu0 0
      %1407 = vmatpush1.bf16.msra.mxu0 0
      %1408 = vmatprep.subr.bf16.mxu0 0
      %1409 = vmatpush1.bf16.msra.mxu0 0
      %1410 = vmatprep.mubr.bf16.mxu0 0
      %1411 = vmatmul.mubr.bf16.gmra.mrb[0].mxu0 %v1296
      %v1412 = vpop.f32.mrb[0].mxu0
      %v1413 = vadd.f32 0.0, %v1412
      %v1414 = vpop.f32.mrb[0].mxu0
      %v1415 = vadd.f32 0.0, %v1414
      %v1416 = vpop.f32.mrb[0].mxu0
      %v1417 = vpop.f32.mrb[0].mxu0
      %1418 = vdwg.mxu0
      %v1419 = vadd.f32 %v1273, %v1413
      %v1420 = vadd.f32 %v1274, %v1415
      %v1421 = vld [vmem:[%s162] sm:$0x6]
      %s1422 = scalar_lea.vmem %s1, 1152
      %v1423 = vld [vmem:[%s1422] sm:$0xff]
      %v1424 = vld [vmem:[%s1422 + $0x8] sm:$0xff]
      %v1425 = vld [vmem:[%s1422 + $0x10] sm:$0xff]
      %v1426 = vld [vmem:[%s1422 + $0x18] sm:$0xff]
      %v1427 = vld [vmem:[%s1422 + $0x20] sm:$0xff]
      %v1428 = vld [vmem:[%s1422 + $0x28] sm:$0xff]
      %v1429 = vld [vmem:[%s1422 + $0x30] sm:$0xff]
      %v1430 = vld [vmem:[%s1422 + $0x38] sm:$0xff]
      %v1431 = vld [vmem:[%s1422 + $0x40] sm:$0xff]
      %v1432 = vld [vmem:[%s1422 + $0x48] sm:$0xff]
      %v1433 = vld [vmem:[%s1422 + $0x50] sm:$0xff]
      %v1434 = vld [vmem:[%s1422 + $0x58] sm:$0xff]
      %v1435 = vld [vmem:[%s1422 + $0x60] sm:$0xff]
      %v1436 = vld [vmem:[%s1422 + $0x68] sm:$0xff]
      %v1437 = vld [vmem:[%s1422 + $0x70] sm:$0xff]
      %v1438 = vld [vmem:[%s1422 + $0x78] sm:$0xff]
      %v1440 = vunpack.c.l.b16 %v1421
      %v1441 = vpack.c.b16 %v1440, %v1440
      %v1442 = vrot.slane %v1441, 1
      %v1460 = vunpack.c.l.b16 %v1423
      %v1461 = vunpack.c.h.b16 %v1423
      %v1462 = vunpack.c.l.b16 %v1424
      %v1463 = vunpack.c.h.b16 %v1424
      %v1464 = vunpack.c.l.b16 %v1425
      %v1465 = vunpack.c.h.b16 %v1425
      %v1466 = vunpack.c.l.b16 %v1426
      %v1467 = vunpack.c.h.b16 %v1426
      %v1468 = vunpack.c.l.b16 %v1427
      %v1469 = vunpack.c.h.b16 %v1427
      %v1470 = vunpack.c.l.b16 %v1428
      %v1471 = vunpack.c.h.b16 %v1428
      %v1472 = vunpack.c.l.b16 %v1429
      %v1473 = vunpack.c.h.b16 %v1429
      %v1474 = vunpack.c.l.b16 %v1430
      %v1475 = vunpack.c.h.b16 %v1430
      %v1476 = vunpack.c.l.b16 %v1431
      %v1477 = vunpack.c.h.b16 %v1431
      %v1478 = vunpack.c.l.b16 %v1432
      %v1479 = vunpack.c.h.b16 %v1432
      %v1480 = vunpack.c.l.b16 %v1433
      %v1481 = vunpack.c.h.b16 %v1433
      %v1482 = vunpack.c.l.b16 %v1434
      %v1483 = vunpack.c.h.b16 %v1434
      %v1484 = vunpack.c.l.b16 %v1435
      %v1485 = vunpack.c.h.b16 %v1435
      %v1486 = vunpack.c.l.b16 %v1436
      %v1487 = vunpack.c.h.b16 %v1436
      %v1488 = vunpack.c.l.b16 %v1437
      %v1489 = vunpack.c.h.b16 %v1437
      %v1490 = vunpack.c.l.b16 %v1438
      %v1491 = vunpack.c.h.b16 %v1438
      %v1492 = vpack.c.b16 %v1462, %v1460
      %v1493 = vpack.c.b16 %v1463, %v1461
      %v1494 = vpack.c.b16 %v1466, %v1464
      %v1495 = vpack.c.b16 %v1467, %v1465
      %v1496 = vpack.c.b16 %v1470, %v1468
      %v1497 = vpack.c.b16 %v1471, %v1469
      %v1498 = vpack.c.b16 %v1474, %v1472
      %v1499 = vpack.c.b16 %v1475, %v1473
      %v1500 = vpack.c.b16 %v1478, %v1476
      %v1501 = vpack.c.b16 %v1479, %v1477
      %v1502 = vpack.c.b16 %v1482, %v1480
      %v1503 = vpack.c.b16 %v1483, %v1481
      %v1504 = vpack.c.b16 %v1486, %v1484
      %v1505 = vpack.c.b16 %v1487, %v1485
      %v1506 = vpack.c.b16 %v1490, %v1488
      %v1507 = vpack.c.b16 %v1491, %v1489
      %1524 = vmatprep.subr.bf16.mxu0 %v1493
      %1525 = vmatpush1.bf16.msra.mxu0 %v1492
      %1526 = vmatprep.subr.bf16.mxu0 %v1495
      %1527 = vmatpush1.bf16.msra.mxu0 %v1494
      %1528 = vmatprep.subr.bf16.mxu0 %v1497
      %1529 = vmatpush1.bf16.msra.mxu0 %v1496
      %1530 = vmatprep.subr.bf16.mxu0 %v1499
      %1531 = vmatpush1.bf16.msra.mxu0 %v1498
      %1532 = vmatprep.subr.bf16.mxu0 %v1501
      %1533 = vmatpush1.bf16.msra.mxu0 %v1500
      %1534 = vmatprep.subr.bf16.mxu0 %v1503
      %1535 = vmatpush1.bf16.msra.mxu0 %v1502
      %1536 = vmatprep.subr.bf16.mxu0 %v1505
      %1537 = vmatpush1.bf16.msra.mxu0 %v1504
      %1538 = vmatprep.subr.bf16.mxu0 %v1507
      %1539 = vmatpush1.bf16.msra.mxu0 %v1506
      %1540 = vmatprep.subr.bf16.mxu0 0
      %1541 = vmatpush1.bf16.msra.mxu0 0
      %1542 = vmatprep.subr.bf16.mxu0 0
      %1543 = vmatpush1.bf16.msra.mxu0 0
      %1544 = vmatprep.subr.bf16.mxu0 0
      %1545 = vmatpush1.bf16.msra.mxu0 0
      %1546 = vmatprep.subr.bf16.mxu0 0
      %1547 = vmatpush1.bf16.msra.mxu0 0
      %1548 = vmatprep.subr.bf16.mxu0 0
      %1549 = vmatpush1.bf16.msra.mxu0 0
      %1550 = vmatprep.subr.bf16.mxu0 0
      %1551 = vmatpush1.bf16.msra.mxu0 0
      %1552 = vmatprep.subr.bf16.mxu0 0
      %1553 = vmatpush1.bf16.msra.mxu0 0
      %1554 = vmatprep.subr.bf16.mxu0 0
      %1555 = vmatpush1.bf16.msra.mxu0 0
      %1556 = vmatprep.mubr.bf16.mxu0 0
      %1557 = vmatmul.mubr.bf16.gmra.mrb[0].mxu0 %v1442
      %v1558 = vpop.f32.mrb[0].mxu0
      %v1559 = vadd.f32 0.0, %v1558
      %v1560 = vpop.f32.mrb[0].mxu0
      %v1561 = vadd.f32 0.0, %v1560
      %v1562 = vpop.f32.mrb[0].mxu0
      %v1563 = vpop.f32.mrb[0].mxu0
      %1564 = vdwg.mxu0
      %v1565 = vadd.f32 %v1419, %v1559
      %v1566 = vadd.f32 %v1420, %v1561
      %v1567 = vld [vmem:[%s423] sm:$0x6]
      %s1568 = scalar_lea.vmem %s1, 1280
      %v1569 = vld [vmem:[%s1568] sm:$0xff]
      %v1570 = vld [vmem:[%s1568 + $0x8] sm:$0xff]
      %v1571 = vld [vmem:[%s1568 + $0x10] sm:$0xff]
      %v1572 = vld [vmem:[%s1568 + $0x18] sm:$0xff]
      %v1573 = vld [vmem:[%s1568 + $0x20] sm:$0xff]
      %v1574 = vld [vmem:[%s1568 + $0x28] sm:$0xff]
      %v1575 = vld [vmem:[%s1568 + $0x30] sm:$0xff]
      %v1576 = vld [vmem:[%s1568 + $0x38] sm:$0xff]
      %v1577 = vld [vmem:[%s1568 + $0x40] sm:$0xff]
      %v1578 = vld [vmem:[%s1568 + $0x48] sm:$0xff]
      %v1579 = vld [vmem:[%s1568 + $0x50] sm:$0xff]
      %v1580 = vld [vmem:[%s1568 + $0x58] sm:$0xff]
      %v1581 = vld [vmem:[%s1568 + $0x60] sm:$0xff]
      %v1582 = vld [vmem:[%s1568 + $0x68] sm:$0xff]
      %v1583 = vld [vmem:[%s1568 + $0x70] sm:$0xff]
      %v1584 = vld [vmem:[%s1568 + $0x78] sm:$0xff]
      %v1586 = vunpack.c.l.b16 %v1567
      %v1587 = vpack.c.b16 %v1586, %v1586
      %v1588 = vrot.slane %v1587, 1
      %v1606 = vunpack.c.l.b16 %v1569
      %v1607 = vunpack.c.h.b16 %v1569
      %v1608 = vunpack.c.l.b16 %v1570
      %v1609 = vunpack.c.h.b16 %v1570
      %v1610 = vunpack.c.l.b16 %v1571
      %v1611 = vunpack.c.h.b16 %v1571
      %v1612 = vunpack.c.l.b16 %v1572
      %v1613 = vunpack.c.h.b16 %v1572
      %v1614 = vunpack.c.l.b16 %v1573
      %v1615 = vunpack.c.h.b16 %v1573
      %v1616 = vunpack.c.l.b16 %v1574
      %v1617 = vunpack.c.h.b16 %v1574
      %v1618 = vunpack.c.l.b16 %v1575
      %v1619 = vunpack.c.h.b16 %v1575
      %v1620 = vunpack.c.l.b16 %v1576
      %v1621 = vunpack.c.h.b16 %v1576
      %v1622 = vunpack.c.l.b16 %v1577
      %v1623 = vunpack.c.h.b16 %v1577
      %v1624 = vunpack.c.l.b16 %v1578
      %v1625 = vunpack.c.h.b16 %v1578
      %v1626 = vunpack.c.l.b16 %v1579
      %v1627 = vunpack.c.h.b16 %v1579
      %v1628 = vunpack.c.l.b16 %v1580
      %v1629 = vunpack.c.h.b16 %v1580
      %v1630 = vunpack.c.l.b16 %v1581
      %v1631 = vunpack.c.h.b16 %v1581
      %v1632 = vunpack.c.l.b16 %v1582
      %v1633 = vunpack.c.h.b16 %v1582
      %v1634 = vunpack.c.l.b16 %v1583
      %v1635 = vunpack.c.h.b16 %v1583
      %v1636 = vunpack.c.l.b16 %v1584
      %v1637 = vunpack.c.h.b16 %v1584
      %v1638 = vpack.c.b16 %v1608, %v1606
      %v1639 = vpack.c.b16 %v1609, %v1607
      %v1640 = vpack.c.b16 %v1612, %v1610
      %v1641 = vpack.c.b16 %v1613, %v1611
      %v1642 = vpack.c.b16 %v1616, %v1614
      %v1643 = vpack.c.b16 %v1617, %v1615
      %v1644 = vpack.c.b16 %v1620, %v1618
      %v1645 = vpack.c.b16 %v1621, %v1619
      %v1646 = vpack.c.b16 %v1624, %v1622
      %v1647 = vpack.c.b16 %v1625, %v1623
      %v1648 = vpack.c.b16 %v1628, %v1626
      %v1649 = vpack.c.b16 %v1629, %v1627
      %v1650 = vpack.c.b16 %v1632, %v1630
      %v1651 = vpack.c.b16 %v1633, %v1631
      %v1652 = vpack.c.b16 %v1636, %v1634
      %v1653 = vpack.c.b16 %v1637, %v1635
      %1670 = vmatprep.subr.bf16.mxu0 %v1639
      %1671 = vmatpush1.bf16.msra.mxu0 %v1638
      %1672 = vmatprep.subr.bf16.mxu0 %v1641
      %1673 = vmatpush1.bf16.msra.mxu0 %v1640
      %1674 = vmatprep.subr.bf16.mxu0 %v1643
      %1675 = vmatpush1.bf16.msra.mxu0 %v1642
      %1676 = vmatprep.subr.bf16.mxu0 %v1645
      %1677 = vmatpush1.bf16.msra.mxu0 %v1644
      %1678 = vmatprep.subr.bf16.mxu0 %v1647
      %1679 = vmatpush1.bf16.msra.mxu0 %v1646
      %1680 = vmatprep.subr.bf16.mxu0 %v1649
      %1681 = vmatpush1.bf16.msra.mxu0 %v1648
      %1682 = vmatprep.subr.bf16.mxu0 %v1651
      %1683 = vmatpush1.bf16.msra.mxu0 %v1650
      %1684 = vmatprep.subr.bf16.mxu0 %v1653
      %1685 = vmatpush1.bf16.msra.mxu0 %v1652
      %1686 = vmatprep.subr.bf16.mxu0 0
      %1687 = vmatpush1.bf16.msra.mxu0 0
      %1688 = vmatprep.subr.bf16.mxu0 0
      %1689 = vmatpush1.bf16.msra.mxu0 0
      %1690 = vmatprep.subr.bf16.mxu0 0
      %1691 = vmatpush1.bf16.msra.mxu0 0
      %1692 = vmatprep.subr.bf16.mxu0 0
      %1693 = vmatpush1.bf16.msra.mxu0 0
      %1694 = vmatprep.subr.bf16.mxu0 0
      %1695 = vmatpush1.bf16.msra.mxu0 0
      %1696 = vmatprep.subr.bf16.mxu0 0
      %1697 = vmatpush1.bf16.msra.mxu0 0
      %1698 = vmatprep.subr.bf16.mxu0 0
      %1699 = vmatpush1.bf16.msra.mxu0 0
      %1700 = vmatprep.subr.bf16.mxu0 0
      %1701 = vmatpush1.bf16.msra.mxu0 0
      %1702 = vmatprep.mubr.bf16.mxu0 0
      %1703 = vmatmul.mubr.bf16.gmra.mrb[0].mxu0 %v1588
      %v1704 = vpop.f32.mrb[0].mxu0
      %v1705 = vadd.f32 0.0, %v1704
      %v1706 = vpop.f32.mrb[0].mxu0
      %v1707 = vadd.f32 0.0, %v1706
      %v1708 = vpop.f32.mrb[0].mxu0
      %v1709 = vpop.f32.mrb[0].mxu0
      %1710 = vdwg.mxu0
      %v1711 = vadd.f32 %v1565, %v1705
      %v1712 = vadd.f32 %v1566, %v1707
      %v1713 = vld [vmem:[%s565] sm:$0x6]
      %s1714 = scalar_lea.vmem %s1, 1408
      %v1715 = vld [vmem:[%s1714] sm:$0xff]
      %v1716 = vld [vmem:[%s1714 + $0x8] sm:$0xff]
      %v1717 = vld [vmem:[%s1714 + $0x10] sm:$0xff]
      %v1718 = vld [vmem:[%s1714 + $0x18] sm:$0xff]
      %v1719 = vld [vmem:[%s1714 + $0x20] sm:$0xff]
      %v1720 = vld [vmem:[%s1714 + $0x28] sm:$0xff]
      %v1721 = vld [vmem:[%s1714 + $0x30] sm:$0xff]
      %v1722 = vld [vmem:[%s1714 + $0x38] sm:$0xff]
      %v1723 = vld [vmem:[%s1714 + $0x40] sm:$0xff]
      %v1724 = vld [vmem:[%s1714 + $0x48] sm:$0xff]
      %v1725 = vld [vmem:[%s1714 + $0x50] sm:$0xff]
      %v1726 = vld [vmem:[%s1714 + $0x58] sm:$0xff]
      %v1727 = vld [vmem:[%s1714 + $0x60] sm:$0xff]
      %v1728 = vld [vmem:[%s1714 + $0x68] sm:$0xff]
      %v1729 = vld [vmem:[%s1714 + $0x70] sm:$0xff]
      %v1730 = vld [vmem:[%s1714 + $0x78] sm:$0xff]
      %v1732 = vunpack.c.l.b16 %v1713
      %v1733 = vpack.c.b16 %v1732, %v1732
      %v1734 = vrot.slane %v1733, 1
      %v1752 = vunpack.c.l.b16 %v1715
      %v1753 = vunpack.c.h.b16 %v1715
      %v1754 = vunpack.c.l.b16 %v1716
      %v1755 = vunpack.c.h.b16 %v1716
      %v1756 = vunpack.c.l.b16 %v1717
      %v1757 = vunpack.c.h.b16 %v1717
      %v1758 = vunpack.c.l.b16 %v1718
      %v1759 = vunpack.c.h.b16 %v1718
      %v1760 = vunpack.c.l.b16 %v1719
      %v1761 = vunpack.c.h.b16 %v1719
      %v1762 = vunpack.c.l.b16 %v1720
      %v1763 = vunpack.c.h.b16 %v1720
      %v1764 = vunpack.c.l.b16 %v1721
      %v1765 = vunpack.c.h.b16 %v1721
      %v1766 = vunpack.c.l.b16 %v1722
      %v1767 = vunpack.c.h.b16 %v1722
      %v1768 = vunpack.c.l.b16 %v1723
      %v1769 = vunpack.c.h.b16 %v1723
      %v1770 = vunpack.c.l.b16 %v1724
      %v1771 = vunpack.c.h.b16 %v1724
      %v1772 = vunpack.c.l.b16 %v1725
      %v1773 = vunpack.c.h.b16 %v1725
      %v1774 = vunpack.c.l.b16 %v1726
      %v1775 = vunpack.c.h.b16 %v1726
      %v1776 = vunpack.c.l.b16 %v1727
      %v1777 = vunpack.c.h.b16 %v1727
      %v1778 = vunpack.c.l.b16 %v1728
      %v1779 = vunpack.c.h.b16 %v1728
      %v1780 = vunpack.c.l.b16 %v1729
      %v1781 = vunpack.c.h.b16 %v1729
      %v1782 = vunpack.c.l.b16 %v1730
      %v1783 = vunpack.c.h.b16 %v1730
      %v1784 = vpack.c.b16 %v1754, %v1752
      %v1785 = vpack.c.b16 %v1755, %v1753
      %v1786 = vpack.c.b16 %v1758, %v1756
      %v1787 = vpack.c.b16 %v1759, %v1757
      %v1788 = vpack.c.b16 %v1762, %v1760
      %v1789 = vpack.c.b16 %v1763, %v1761
      %v1790 = vpack.c.b16 %v1766, %v1764
      %v1791 = vpack.c.b16 %v1767, %v1765
      %v1792 = vpack.c.b16 %v1770, %v1768
      %v1793 = vpack.c.b16 %v1771, %v1769
      %v1794 = vpack.c.b16 %v1774, %v1772
      %v1795 = vpack.c.b16 %v1775, %v1773
      %v1796 = vpack.c.b16 %v1778, %v1776
      %v1797 = vpack.c.b16 %v1779, %v1777
      %v1798 = vpack.c.b16 %v1782, %v1780
      %v1799 = vpack.c.b16 %v1783, %v1781
      %1816 = vmatprep.subr.bf16.mxu0 %v1785
      %1817 = vmatpush1.bf16.msra.mxu0 %v1784
      %1818 = vmatprep.subr.bf16.mxu0 %v1787
      %1819 = vmatpush1.bf16.msra.mxu0 %v1786
      %1820 = vmatprep.subr.bf16.mxu0 %v1789
      %1821 = vmatpush1.bf16.msra.mxu0 %v1788
      %1822 = vmatprep.subr.bf16.mxu0 %v1791
      %1823 = vmatpush1.bf16.msra.mxu0 %v1790
      %1824 = vmatprep.subr.bf16.mxu0 %v1793
      %1825 = vmatpush1.bf16.msra.mxu0 %v1792
      %1826 = vmatprep.subr.bf16.mxu0 %v1795
      %1827 = vmatpush1.bf16.msra.mxu0 %v1794
      %1828 = vmatprep.subr.bf16.mxu0 %v1797
      %1829 = vmatpush1.bf16.msra.mxu0 %v1796
      %1830 = vmatprep.subr.bf16.mxu0 %v1799
      %1831 = vmatpush1.bf16.msra.mxu0 %v1798
      %1832 = vmatprep.subr.bf16.mxu0 0
      %1833 = vmatpush1.bf16.msra.mxu0 0
      %1834 = vmatprep.subr.bf16.mxu0 0
      %1835 = vmatpush1.bf16.msra.mxu0 0
      %1836 = vmatprep.subr.bf16.mxu0 0
      %1837 = vmatpush1.bf16.msra.mxu0 0
      %1838 = vmatprep.subr.bf16.mxu0 0
      %1839 = vmatpush1.bf16.msra.mxu0 0
      %1840 = vmatprep.subr.bf16.mxu0 0
      %1841 = vmatpush1.bf16.msra.mxu0 0
      %1842 = vmatprep.subr.bf16.mxu0 0
      %1843 = vmatpush1.bf16.msra.mxu0 0
      %1844 = vmatprep.subr.bf16.mxu0 0
      %1845 = vmatpush1.bf16.msra.mxu0 0
      %1846 = vmatprep.subr.bf16.mxu0 0
      %1847 = vmatpush1.bf16.msra.mxu0 0
      %1848 = vmatprep.mubr.bf16.mxu0 0
      %1849 = vmatmul.mubr.bf16.gmra.mrb[0].mxu0 %v1734
      %v1850 = vpop.f32.mrb[0].mxu0
      %v1851 = vadd.f32 0.0, %v1850
      %v1852 = vpop.f32.mrb[0].mxu0
      %v1853 = vadd.f32 0.0, %v1852
      %v1854 = vpop.f32.mrb[0].mxu0
      %v1855 = vpop.f32.mrb[0].mxu0
      %1856 = vdwg.mxu0
      %v1857 = vadd.f32 %v1711, %v1851
      %v1858 = vadd.f32 %v1712, %v1853
      %v1859 = vld [vmem:[%s707] sm:$0x6]
      %s1860 = scalar_lea.vmem %s1, 1536
      %v1861 = vld [vmem:[%s1860] sm:$0xff]
      %v1862 = vld [vmem:[%s1860 + $0x8] sm:$0xff]
      %v1863 = vld [vmem:[%s1860 + $0x10] sm:$0xff]
      %v1864 = vld [vmem:[%s1860 + $0x18] sm:$0xff]
      %v1865 = vld [vmem:[%s1860 + $0x20] sm:$0xff]
      %v1866 = vld [vmem:[%s1860 + $0x28] sm:$0xff]
      %v1867 = vld [vmem:[%s1860 + $0x30] sm:$0xff]
      %v1868 = vld [vmem:[%s1860 + $0x38] sm:$0xff]
      %v1869 = vld [vmem:[%s1860 + $0x40] sm:$0xff]
      %v1870 = vld [vmem:[%s1860 + $0x48] sm:$0xff]
      %v1871 = vld [vmem:[%s1860 + $0x50] sm:$0xff]
      %v1872 = vld [vmem:[%s1860 + $0x58] sm:$0xff]
      %v1873 = vld [vmem:[%s1860 + $0x60] sm:$0xff]
      %v1874 = vld [vmem:[%s1860 + $0x68] sm:$0xff]
      %v1875 = vld [vmem:[%s1860 + $0x70] sm:$0xff]
      %v1876 = vld [vmem:[%s1860 + $0x78] sm:$0xff]
      %v1878 = vunpack.c.l.b16 %v1859
      %v1879 = vpack.c.b16 %v1878, %v1878
      %v1880 = vrot.slane %v1879, 1
      %v1898 = vunpack.c.l.b16 %v1861
      %v1899 = vunpack.c.h.b16 %v1861
      %v1900 = vunpack.c.l.b16 %v1862
      %v1901 = vunpack.c.h.b16 %v1862
      %v1902 = vunpack.c.l.b16 %v1863
      %v1903 = vunpack.c.h.b16 %v1863
      %v1904 = vunpack.c.l.b16 %v1864
      %v1905 = vunpack.c.h.b16 %v1864
      %v1906 = vunpack.c.l.b16 %v1865
      %v1907 = vunpack.c.h.b16 %v1865
      %v1908 = vunpack.c.l.b16 %v1866
      %v1909 = vunpack.c.h.b16 %v1866
      %v1910 = vunpack.c.l.b16 %v1867
      %v1911 = vunpack.c.h.b16 %v1867
      %v1912 = vunpack.c.l.b16 %v1868
      %v1913 = vunpack.c.h.b16 %v1868
      %v1914 = vunpack.c.l.b16 %v1869
      %v1915 = vunpack.c.h.b16 %v1869
      %v1916 = vunpack.c.l.b16 %v1870
      %v1917 = vunpack.c.h.b16 %v1870
      %v1918 = vunpack.c.l.b16 %v1871
      %v1919 = vunpack.c.h.b16 %v1871
      %v1920 = vunpack.c.l.b16 %v1872
      %v1921 = vunpack.c.h.b16 %v1872
      %v1922 = vunpack.c.l.b16 %v1873
      %v1923 = vunpack.c.h.b16 %v1873
      %v1924 = vunpack.c.l.b16 %v1874
      %v1925 = vunpack.c.h.b16 %v1874
      %v1926 = vunpack.c.l.b16 %v1875
      %v1927 = vunpack.c.h.b16 %v1875
      %v1928 = vunpack.c.l.b16 %v1876
      %v1929 = vunpack.c.h.b16 %v1876
      %v1930 = vpack.c.b16 %v1900, %v1898
      %v1931 = vpack.c.b16 %v1901, %v1899
      %v1932 = vpack.c.b16 %v1904, %v1902
      %v1933 = vpack.c.b16 %v1905, %v1903
      %v1934 = vpack.c.b16 %v1908, %v1906
      %v1935 = vpack.c.b16 %v1909, %v1907
      %v1936 = vpack.c.b16 %v1912, %v1910
      %v1937 = vpack.c.b16 %v1913, %v1911
      %v1938 = vpack.c.b16 %v1916, %v1914
      %v1939 = vpack.c.b16 %v1917, %v1915
      %v1940 = vpack.c.b16 %v1920, %v1918
      %v1941 = vpack.c.b16 %v1921, %v1919
      %v1942 = vpack.c.b16 %v1924, %v1922
      %v1943 = vpack.c.b16 %v1925, %v1923
      %v1944 = vpack.c.b16 %v1928, %v1926
      %v1945 = vpack.c.b16 %v1929, %v1927
      %1962 = vmatprep.subr.bf16.mxu0 %v1931
      %1963 = vmatpush1.bf16.msra.mxu0 %v1930
      %1964 = vmatprep.subr.bf16.mxu0 %v1933
      %1965 = vmatpush1.bf16.msra.mxu0 %v1932
      %1966 = vmatprep.subr.bf16.mxu0 %v1935
      %1967 = vmatpush1.bf16.msra.mxu0 %v1934
      %1968 = vmatprep.subr.bf16.mxu0 %v1937
      %1969 = vmatpush1.bf16.msra.mxu0 %v1936
      %1970 = vmatprep.subr.bf16.mxu0 %v1939
      %1971 = vmatpush1.bf16.msra.mxu0 %v1938
      %1972 = vmatprep.subr.bf16.mxu0 %v1941
      %1973 = vmatpush1.bf16.msra.mxu0 %v1940
      %1974 = vmatprep.subr.bf16.mxu0 %v1943
      %1975 = vmatpush1.bf16.msra.mxu0 %v1942
      %1976 = vmatprep.subr.bf16.mxu0 %v1945
      %1977 = vmatpush1.bf16.msra.mxu0 %v1944
      %1978 = vmatprep.subr.bf16.mxu0 0
      %1979 = vmatpush1.bf16.msra.mxu0 0
      %1980 = vmatprep.subr.bf16.mxu0 0
      %1981 = vmatpush1.bf16.msra.mxu0 0
      %1982 = vmatprep.subr.bf16.mxu0 0
      %1983 = vmatpush1.bf16.msra.mxu0 0
      %1984 = vmatprep.subr.bf16.mxu0 0
      %1985 = vmatpush1.bf16.msra.mxu0 0
      %1986 = vmatprep.subr.bf16.mxu0 0
      %1987 = vmatpush1.bf16.msra.mxu0 0
      %1988 = vmatprep.subr.bf16.mxu0 0
      %1989 = vmatpush1.bf16.msra.mxu0 0
      %1990 = vmatprep.subr.bf16.mxu0 0
      %1991 = vmatpush1.bf16.msra.mxu0 0
      %1992 = vmatprep.subr.bf16.mxu0 0
      %1993 = vmatpush1.bf16.msra.mxu0 0
      %1994 = vmatprep.mubr.bf16.mxu0 0
      %1995 = vmatmul.mubr.bf16.gmra.mrb[0].mxu0 %v1880
      %v1996 = vpop.f32.mrb[0].mxu0
      %v1997 = vadd.f32 0.0, %v1996
      %v1998 = vpop.f32.mrb[0].mxu0
      %v1999 = vadd.f32 0.0, %v1998
      %v2000 = vpop.f32.mrb[0].mxu0
      %v2001 = vpop.f32.mrb[0].mxu0
      %2002 = vdwg.mxu0
      %v2003 = vadd.f32 %v1857, %v1997
      %v2004 = vadd.f32 %v1858, %v1999
      %v2005 = vld [vmem:[%s849] sm:$0x6]
      %s2006 = scalar_lea.vmem %s1, 1664
      %v2007 = vld [vmem:[%s2006] sm:$0xff]
      %v2008 = vld [vmem:[%s2006 + $0x8] sm:$0xff]
      %v2009 = vld [vmem:[%s2006 + $0x10] sm:$0xff]
      %v2010 = vld [vmem:[%s2006 + $0x18] sm:$0xff]
      %v2011 = vld [vmem:[%s2006 + $0x20] sm:$0xff]
      %v2012 = vld [vmem:[%s2006 + $0x28] sm:$0xff]
      %v2013 = vld [vmem:[%s2006 + $0x30] sm:$0xff]
      %v2014 = vld [vmem:[%s2006 + $0x38] sm:$0xff]
      %v2015 = vld [vmem:[%s2006 + $0x40] sm:$0xff]
      %v2016 = vld [vmem:[%s2006 + $0x48] sm:$0xff]
      %v2017 = vld [vmem:[%s2006 + $0x50] sm:$0xff]
      %v2018 = vld [vmem:[%s2006 + $0x58] sm:$0xff]
      %v2019 = vld [vmem:[%s2006 + $0x60] sm:$0xff]
      %v2020 = vld [vmem:[%s2006 + $0x68] sm:$0xff]
      %v2021 = vld [vmem:[%s2006 + $0x70] sm:$0xff]
      %v2022 = vld [vmem:[%s2006 + $0x78] sm:$0xff]
      %v2024 = vunpack.c.l.b16 %v2005
      %v2025 = vpack.c.b16 %v2024, %v2024
      %v2026 = vrot.slane %v2025, 1
      %v2044 = vunpack.c.l.b16 %v2007
      %v2045 = vunpack.c.h.b16 %v2007
      %v2046 = vunpack.c.l.b16 %v2008
      %v2047 = vunpack.c.h.b16 %v2008
      %v2048 = vunpack.c.l.b16 %v2009
      %v2049 = vunpack.c.h.b16 %v2009
      %v2050 = vunpack.c.l.b16 %v2010
      %v2051 = vunpack.c.h.b16 %v2010
      %v2052 = vunpack.c.l.b16 %v2011
      %v2053 = vunpack.c.h.b16 %v2011
      %v2054 = vunpack.c.l.b16 %v2012
      %v2055 = vunpack.c.h.b16 %v2012
      %v2056 = vunpack.c.l.b16 %v2013
      %v2057 = vunpack.c.h.b16 %v2013
      %v2058 = vunpack.c.l.b16 %v2014
      %v2059 = vunpack.c.h.b16 %v2014
      %v2060 = vunpack.c.l.b16 %v2015
      %v2061 = vunpack.c.h.b16 %v2015
      %v2062 = vunpack.c.l.b16 %v2016
      %v2063 = vunpack.c.h.b16 %v2016
      %v2064 = vunpack.c.l.b16 %v2017
      %v2065 = vunpack.c.h.b16 %v2017
      %v2066 = vunpack.c.l.b16 %v2018
      %v2067 = vunpack.c.h.b16 %v2018
      %v2068 = vunpack.c.l.b16 %v2019
      %v2069 = vunpack.c.h.b16 %v2019
      %v2070 = vunpack.c.l.b16 %v2020
      %v2071 = vunpack.c.h.b16 %v2020
      %v2072 = vunpack.c.l.b16 %v2021
      %v2073 = vunpack.c.h.b16 %v2021
      %v2074 = vunpack.c.l.b16 %v2022
      %v2075 = vunpack.c.h.b16 %v2022
      %v2076 = vpack.c.b16 %v2046, %v2044
      %v2077 = vpack.c.b16 %v2047, %v2045
      %v2078 = vpack.c.b16 %v2050, %v2048
      %v2079 = vpack.c.b16 %v2051, %v2049
      %v2080 = vpack.c.b16 %v2054, %v2052
      %v2081 = vpack.c.b16 %v2055, %v2053
      %v2082 = vpack.c.b16 %v2058, %v2056
      %v2083 = vpack.c.b16 %v2059, %v2057
      %v2084 = vpack.c.b16 %v2062, %v2060
      %v2085 = vpack.c.b16 %v2063, %v2061
      %v2086 = vpack.c.b16 %v2066, %v2064
      %v2087 = vpack.c.b16 %v2067, %v2065
      %v2088 = vpack.c.b16 %v2070, %v2068
      %v2089 = vpack.c.b16 %v2071, %v2069
      %v2090 = vpack.c.b16 %v2074, %v2072
      %v2091 = vpack.c.b16 %v2075, %v2073
      %2108 = vmatprep.subr.bf16.mxu0 %v2077
      %2109 = vmatpush1.bf16.msra.mxu0 %v2076
      %2110 = vmatprep.subr.bf16.mxu0 %v2079
      %2111 = vmatpush1.bf16.msra.mxu0 %v2078
      %2112 = vmatprep.subr.bf16.mxu0 %v2081
      %2113 = vmatpush1.bf16.msra.mxu0 %v2080
      %2114 = vmatprep.subr.bf16.mxu0 %v2083
      %2115 = vmatpush1.bf16.msra.mxu0 %v2082
      %2116 = vmatprep.subr.bf16.mxu0 %v2085
      %2117 = vmatpush1.bf16.msra.mxu0 %v2084
      %2118 = vmatprep.subr.bf16.mxu0 %v2087
      %2119 = vmatpush1.bf16.msra.mxu0 %v2086
      %2120 = vmatprep.subr.bf16.mxu0 %v2089
      %2121 = vmatpush1.bf16.msra.mxu0 %v2088
      %2122 = vmatprep.subr.bf16.mxu0 %v2091
      %2123 = vmatpush1.bf16.msra.mxu0 %v2090
      %2124 = vmatprep.subr.bf16.mxu0 0
      %2125 = vmatpush1.bf16.msra.mxu0 0
      %2126 = vmatprep.subr.bf16.mxu0 0
      %2127 = vmatpush1.bf16.msra.mxu0 0
      %2128 = vmatprep.subr.bf16.mxu0 0
      %2129 = vmatpush1.bf16.msra.mxu0 0
      %2130 = vmatprep.subr.bf16.mxu0 0
      %2131 = vmatpush1.bf16.msra.mxu0 0
      %2132 = vmatprep.subr.bf16.mxu0 0
      %2133 = vmatpush1.bf16.msra.mxu0 0
      %2134 = vmatprep.subr.bf16.mxu0 0
      %2135 = vmatpush1.bf16.msra.mxu0 0
      %2136 = vmatprep.subr.bf16.mxu0 0
      %2137 = vmatpush1.bf16.msra.mxu0 0
      %2138 = vmatprep.subr.bf16.mxu0 0
      %2139 = vmatpush1.bf16.msra.mxu0 0
      %2140 = vmatprep.mubr.bf16.mxu0 0
      %2141 = vmatmul.mubr.bf16.gmra.mrb[0].mxu0 %v2026
      %v2142 = vpop.f32.mrb[0].mxu0
      %v2143 = vadd.f32 0.0, %v2142
      %v2144 = vpop.f32.mrb[0].mxu0
      %v2145 = vadd.f32 0.0, %v2144
      %v2146 = vpop.f32.mrb[0].mxu0
      %v2147 = vpop.f32.mrb[0].mxu0
      %2148 = vdwg.mxu0
      %v2149 = vadd.f32 %v2003, %v2143
      %v2150 = vadd.f32 %v2004, %v2145
      %v2151 = vld [vmem:[%s991] sm:$0x6]
      %s2152 = scalar_lea.vmem %s1, 1792
      %v2153 = vld [vmem:[%s2152] sm:$0xff]
      %v2154 = vld [vmem:[%s2152 + $0x8] sm:$0xff]
      %v2155 = vld [vmem:[%s2152 + $0x10] sm:$0xff]
      %v2156 = vld [vmem:[%s2152 + $0x18] sm:$0xff]
      %v2157 = vld [vmem:[%s2152 + $0x20] sm:$0xff]
      %v2158 = vld [vmem:[%s2152 + $0x28] sm:$0xff]
      %v2159 = vld [vmem:[%s2152 + $0x30] sm:$0xff]
      %v2160 = vld [vmem:[%s2152 + $0x38] sm:$0xff]
      %v2161 = vld [vmem:[%s2152 + $0x40] sm:$0xff]
      %v2162 = vld [vmem:[%s2152 + $0x48] sm:$0xff]
      %v2163 = vld [vmem:[%s2152 + $0x50] sm:$0xff]
      %v2164 = vld [vmem:[%s2152 + $0x58] sm:$0xff]
      %v2165 = vld [vmem:[%s2152 + $0x60] sm:$0xff]
      %v2166 = vld [vmem:[%s2152 + $0x68] sm:$0xff]
      %v2167 = vld [vmem:[%s2152 + $0x70] sm:$0xff]
      %v2168 = vld [vmem:[%s2152 + $0x78] sm:$0xff]
      %v2170 = vunpack.c.l.b16 %v2151
      %v2171 = vpack.c.b16 %v2170, %v2170
      %v2172 = vrot.slane %v2171, 1
      %v2190 = vunpack.c.l.b16 %v2153
      %v2191 = vunpack.c.h.b16 %v2153
      %v2192 = vunpack.c.l.b16 %v2154
      %v2193 = vunpack.c.h.b16 %v2154
      %v2194 = vunpack.c.l.b16 %v2155
      %v2195 = vunpack.c.h.b16 %v2155
      %v2196 = vunpack.c.l.b16 %v2156
      %v2197 = vunpack.c.h.b16 %v2156
      %v2198 = vunpack.c.l.b16 %v2157
      %v2199 = vunpack.c.h.b16 %v2157
      %v2200 = vunpack.c.l.b16 %v2158
      %v2201 = vunpack.c.h.b16 %v2158
      %v2202 = vunpack.c.l.b16 %v2159
      %v2203 = vunpack.c.h.b16 %v2159
      %v2204 = vunpack.c.l.b16 %v2160
      %v2205 = vunpack.c.h.b16 %v2160
      %v2206 = vunpack.c.l.b16 %v2161
      %v2207 = vunpack.c.h.b16 %v2161
      %v2208 = vunpack.c.l.b16 %v2162
      %v2209 = vunpack.c.h.b16 %v2162
      %v2210 = vunpack.c.l.b16 %v2163
      %v2211 = vunpack.c.h.b16 %v2163
      %v2212 = vunpack.c.l.b16 %v2164
      %v2213 = vunpack.c.h.b16 %v2164
      %v2214 = vunpack.c.l.b16 %v2165
      %v2215 = vunpack.c.h.b16 %v2165
      %v2216 = vunpack.c.l.b16 %v2166
      %v2217 = vunpack.c.h.b16 %v2166
      %v2218 = vunpack.c.l.b16 %v2167
      %v2219 = vunpack.c.h.b16 %v2167
      %v2220 = vunpack.c.l.b16 %v2168
      %v2221 = vunpack.c.h.b16 %v2168
      %v2222 = vpack.c.b16 %v2192, %v2190
      %v2223 = vpack.c.b16 %v2193, %v2191
      %v2224 = vpack.c.b16 %v2196, %v2194
      %v2225 = vpack.c.b16 %v2197, %v2195
      %v2226 = vpack.c.b16 %v2200, %v2198
      %v2227 = vpack.c.b16 %v2201, %v2199
      %v2228 = vpack.c.b16 %v2204, %v2202
      %v2229 = vpack.c.b16 %v2205, %v2203
      %v2230 = vpack.c.b16 %v2208, %v2206
      %v2231 = vpack.c.b16 %v2209, %v2207
      %v2232 = vpack.c.b16 %v2212, %v2210
      %v2233 = vpack.c.b16 %v2213, %v2211
      %v2234 = vpack.c.b16 %v2216, %v2214
      %v2235 = vpack.c.b16 %v2217, %v2215
      %v2236 = vpack.c.b16 %v2220, %v2218
      %v2237 = vpack.c.b16 %v2221, %v2219
      %2254 = vmatprep.subr.bf16.mxu0 %v2223
      %2255 = vmatpush1.bf16.msra.mxu0 %v2222
      %2256 = vmatprep.subr.bf16.mxu0 %v2225
      %2257 = vmatpush1.bf16.msra.mxu0 %v2224
      %2258 = vmatprep.subr.bf16.mxu0 %v2227
      %2259 = vmatpush1.bf16.msra.mxu0 %v2226
      %2260 = vmatprep.subr.bf16.mxu0 %v2229
      %2261 = vmatpush1.bf16.msra.mxu0 %v2228
      %2262 = vmatprep.subr.bf16.mxu0 %v2231
      %2263 = vmatpush1.bf16.msra.mxu0 %v2230
      %2264 = vmatprep.subr.bf16.mxu0 %v2233
      %2265 = vmatpush1.bf16.msra.mxu0 %v2232
      %2266 = vmatprep.subr.bf16.mxu0 %v2235
      %2267 = vmatpush1.bf16.msra.mxu0 %v2234
      %2268 = vmatprep.subr.bf16.mxu0 %v2237
      %2269 = vmatpush1.bf16.msra.mxu0 %v2236
      %2270 = vmatprep.subr.bf16.mxu0 0
      %2271 = vmatpush1.bf16.msra.mxu0 0
      %2272 = vmatprep.subr.bf16.mxu0 0
      %2273 = vmatpush1.bf16.msra.mxu0 0
      %2274 = vmatprep.subr.bf16.mxu0 0
      %2275 = vmatpush1.bf16.msra.mxu0 0
      %2276 = vmatprep.subr.bf16.mxu0 0
      %2277 = vmatpush1.bf16.msra.mxu0 0
      %2278 = vmatprep.subr.bf16.mxu0 0
      %2279 = vmatpush1.bf16.msra.mxu0 0
      %2280 = vmatprep.subr.bf16.mxu0 0
      %2281 = vmatpush1.bf16.msra.mxu0 0
      %2282 = vmatprep.subr.bf16.mxu0 0
      %2283 = vmatpush1.bf16.msra.mxu0 0
      %2284 = vmatprep.subr.bf16.mxu0 0
      %2285 = vmatpush1.bf16.msra.mxu0 0
      %2286 = vmatprep.mubr.bf16.mxu0 0
      %2287 = vmatmul.mubr.bf16.gmra.mrb[0].mxu0 %v2172
      %v2288 = vpop.f32.mrb[0].mxu0
      %v2289 = vadd.f32 0.0, %v2288
      %v2290 = vpop.f32.mrb[0].mxu0
      %v2291 = vadd.f32 0.0, %v2290
      %v2292 = vpop.f32.mrb[0].mxu0
      %v2293 = vpop.f32.mrb[0].mxu0
      %2294 = vdwg.mxu0
      %v2295 = vadd.f32 %v2149, %v2289
      %v2296 = vadd.f32 %v2150, %v2291
      %v2297 = vld [vmem:[%s1133] sm:$0x6]
      %s2298 = scalar_lea.vmem %s1, 1920
      %v2299 = vld [vmem:[%s2298] sm:$0xff]
      %v2300 = vld [vmem:[%s2298 + $0x8] sm:$0xff]
      %v2301 = vld [vmem:[%s2298 + $0x10] sm:$0xff]
      %v2302 = vld [vmem:[%s2298 + $0x18] sm:$0xff]
      %v2303 = vld [vmem:[%s2298 + $0x20] sm:$0xff]
      %v2304 = vld [vmem:[%s2298 + $0x28] sm:$0xff]
      %v2305 = vld [vmem:[%s2298 + $0x30] sm:$0xff]
      %v2306 = vld [vmem:[%s2298 + $0x38] sm:$0xff]
      %v2307 = vld [vmem:[%s2298 + $0x40] sm:$0xff]
      %v2308 = vld [vmem:[%s2298 + $0x48] sm:$0xff]
      %v2309 = vld [vmem:[%s2298 + $0x50] sm:$0xff]
      %v2310 = vld [vmem:[%s2298 + $0x58] sm:$0xff]
      %v2311 = vld [vmem:[%s2298 + $0x60] sm:$0xff]
      %v2312 = vld [vmem:[%s2298 + $0x68] sm:$0xff]
      %v2313 = vld [vmem:[%s2298 + $0x70] sm:$0xff]
      %v2314 = vld [vmem:[%s2298 + $0x78] sm:$0xff]
      %v2316 = vunpack.c.l.b16 %v2297
      %v2317 = vpack.c.b16 %v2316, %v2316
      %v2318 = vrot.slane %v2317, 1
      %v2336 = vunpack.c.l.b16 %v2299
      %v2337 = vunpack.c.h.b16 %v2299
      %v2338 = vunpack.c.l.b16 %v2300
      %v2339 = vunpack.c.h.b16 %v2300
      %v2340 = vunpack.c.l.b16 %v2301
      %v2341 = vunpack.c.h.b16 %v2301
      %v2342 = vunpack.c.l.b16 %v2302
      %v2343 = vunpack.c.h.b16 %v2302
      %v2344 = vunpack.c.l.b16 %v2303
      %v2345 = vunpack.c.h.b16 %v2303
      %v2346 = vunpack.c.l.b16 %v2304
      %v2347 = vunpack.c.h.b16 %v2304
      %v2348 = vunpack.c.l.b16 %v2305
      %v2349 = vunpack.c.h.b16 %v2305
      %v2350 = vunpack.c.l.b16 %v2306
      %v2351 = vunpack.c.h.b16 %v2306
      %v2352 = vunpack.c.l.b16 %v2307
      %v2353 = vunpack.c.h.b16 %v2307
      %v2354 = vunpack.c.l.b16 %v2308
      %v2355 = vunpack.c.h.b16 %v2308
      %v2356 = vunpack.c.l.b16 %v2309
      %v2357 = vunpack.c.h.b16 %v2309
      %v2358 = vunpack.c.l.b16 %v2310
      %v2359 = vunpack.c.h.b16 %v2310
      %v2360 = vunpack.c.l.b16 %v2311
      %v2361 = vunpack.c.h.b16 %v2311
      %v2362 = vunpack.c.l.b16 %v2312
      %v2363 = vunpack.c.h.b16 %v2312
      %v2364 = vunpack.c.l.b16 %v2313
      %v2365 = vunpack.c.h.b16 %v2313
      %v2366 = vunpack.c.l.b16 %v2314
      %v2367 = vunpack.c.h.b16 %v2314
      %v2368 = vpack.c.b16 %v2338, %v2336
      %v2369 = vpack.c.b16 %v2339, %v2337
      %v2370 = vpack.c.b16 %v2342, %v2340
      %v2371 = vpack.c.b16 %v2343, %v2341
      %v2372 = vpack.c.b16 %v2346, %v2344
      %v2373 = vpack.c.b16 %v2347, %v2345
      %v2374 = vpack.c.b16 %v2350, %v2348
      %v2375 = vpack.c.b16 %v2351, %v2349
      %v2376 = vpack.c.b16 %v2354, %v2352
      %v2377 = vpack.c.b16 %v2355, %v2353
      %v2378 = vpack.c.b16 %v2358, %v2356
      %v2379 = vpack.c.b16 %v2359, %v2357
      %v2380 = vpack.c.b16 %v2362, %v2360
      %v2381 = vpack.c.b16 %v2363, %v2361
      %v2382 = vpack.c.b16 %v2366, %v2364
      %v2383 = vpack.c.b16 %v2367, %v2365
      %2400 = vmatprep.subr.bf16.mxu0 %v2369
      %2401 = vmatpush1.bf16.msra.mxu0 %v2368
      %2402 = vmatprep.subr.bf16.mxu0 %v2371
      %2403 = vmatpush1.bf16.msra.mxu0 %v2370
      %2404 = vmatprep.subr.bf16.mxu0 %v2373
      %2405 = vmatpush1.bf16.msra.mxu0 %v2372
      %2406 = vmatprep.subr.bf16.mxu0 %v2375
      %2407 = vmatpush1.bf16.msra.mxu0 %v2374
      %2408 = vmatprep.subr.bf16.mxu0 %v2377
      %2409 = vmatpush1.bf16.msra.mxu0 %v2376
      %2410 = vmatprep.subr.bf16.mxu0 %v2379
      %2411 = vmatpush1.bf16.msra.mxu0 %v2378
      %2412 = vmatprep.subr.bf16.mxu0 %v2381
      %2413 = vmatpush1.bf16.msra.mxu0 %v2380
      %2414 = vmatprep.subr.bf16.mxu0 %v2383
      %2415 = vmatpush1.bf16.msra.mxu0 %v2382
      %2416 = vmatprep.subr.bf16.mxu0 0
      %2417 = vmatpush1.bf16.msra.mxu0 0
      %2418 = vmatprep.subr.bf16.mxu0 0
      %2419 = vmatpush1.bf16.msra.mxu0 0
      %2420 = vmatprep.subr.bf16.mxu0 0
      %2421 = vmatpush1.bf16.msra.mxu0 0
      %2422 = vmatprep.subr.bf16.mxu0 0
      %2423 = vmatpush1.bf16.msra.mxu0 0
      %2424 = vmatprep.subr.bf16.mxu0 0
      %2425 = vmatpush1.bf16.msra.mxu0 0
      %2426 = vmatprep.subr.bf16.mxu0 0
      %2427 = vmatpush1.bf16.msra.mxu0 0
      %2428 = vmatprep.subr.bf16.mxu0 0
      %2429 = vmatpush1.bf16.msra.mxu0 0
      %2430 = vmatprep.subr.bf16.mxu0 0
      %2431 = vmatpush1.bf16.msra.mxu0 0
      %2432 = vmatprep.mubr.bf16.mxu0 0
      %2433 = vmatmul.mubr.bf16.gmra.mrb[0].mxu0 %v2318
      %v2434 = vpop.f32.mrb[0].mxu0
      %v2435 = vadd.f32 0.0, %v2434
      %v2436 = vpop.f32.mrb[0].mxu0
      %v2437 = vadd.f32 0.0, %v2436
      %v2438 = vpop.f32.mrb[0].mxu0
      %v2439 = vpop.f32.mrb[0].mxu0
      %2440 = vdwg.mxu0
      %v2441 = vadd.f32 %v2295, %v2435
      %v2442 = vadd.f32 %v2296, %v2437
      %vm2443 = vcmask 1043456
      %v2444 = vsel %vm2443, %v2441, 0.0
      %v2445 = vrot.slane %v2444, 4
      %v2446 = vadd.f32 %v2444, %v2445
      %v2447 = vrot.slane %v2446, 2
      %v2448 = vadd.f32 %v2446, %v2447
      %v2449 = vrot.slane %v2448, 1
      %v2450 = vadd.f32 %v2448, %v2449
      %v2451 = vsel %vm2443, %v2442, 0.0
      %v2452 = vrot.slane %v2451, 4
      %v2453 = vadd.f32 %v2451, %v2452
      %v2454 = vrot.slane %v2453, 2
      %v2455 = vadd.f32 %v2453, %v2454
      %v2456 = vrot.slane %v2455, 1
      %v2457 = vadd.f32 %v2455, %v2456
      %v2458 = vrcp.pop 4.0
      %v2459 = vmul.f32 %v2450, %v2458
      %v2460 = vmul.f32 %v2457, %v2458
      %v2461 = vsub.f32 %v2441, %v2459
      %v2462 = vsub.f32 %v2442, %v2460
      %v2463 = vmul.f32 %v2461, %v2461
      %v2464 = vmul.f32 %v2462, %v2462
      %v2465 = vsel %vm2443, %v2463, 0.0
      %v2466 = vrot.slane %v2465, 4
      %v2467 = vadd.f32 %v2465, %v2466
      %v2468 = vrot.slane %v2467, 2
      %v2469 = vadd.f32 %v2467, %v2468
      %v2470 = vrot.slane %v2469, 1
      %v2471 = vadd.f32 %v2469, %v2470
      %v2472 = vsel %vm2443, %v2464, 0.0
      %v2473 = vrot.slane %v2472, 4
      %v2474 = vadd.f32 %v2472, %v2473
      %v2475 = vrot.slane %v2474, 2
      %v2476 = vadd.f32 %v2474, %v2475
      %v2477 = vrot.slane %v2476, 1
      %v2478 = vadd.f32 %v2476, %v2477
      %v2479 = vmul.f32 %v2471, %v2458
      %v2480 = vmul.f32 %v2478, %v2458
      %v2481 = vadd.f32 %v2479, 1e-05
      %v2482 = vadd.f32 %v2480, 1e-05
      %v2483 = vrsqrt.pop %v2481
      %v2484 = vrsqrt.pop %v2482
      %v2485 = vmul.f32 %v2461, %v2483
      %v2486 = vmul.f32 %v2462, %v2484
      %vm2487 = vcmp.ge.f32.partialorder %v2485, 0.0
      %vm2488 = vcmp.ge.f32.partialorder %v2486, 0.0
      %v2489 = vmul.f32 %v2485, 0.2
      %v2490 = vmul.f32 %v2486, 0.2
      %v2491 = vsel %vm2487, %v2485, %v2489
      %v2492 = vsel %vm2488, %v2486, %v2490
      %v2493 = vpack.c.bf16 %v2491, %v2491
      %v2494 = vpack.c.bf16 %v2492, %v2492
      %v2497 = vcombine.low %v2493, %v2494
      %v2499 = vunpack.c.l.s4 1983009808
      %v2500 = vunpack.c.0.s8 %v2499
      %v2501 = vlaneseq
      %v2502 = vshrl.u32 %v2501, 7
      %v2503 = vsub.s32 %v2500, %v2502
      %v2504 = vrot.slane %v2497, %v2503
      %2506 = vst [vmem:[%s143] sm:$0xf] %v2504
      %p2507 = scmp.lt.s32.totalorder %s13, 1
      %s2508 = scalar_select %p2507, %s13, 1
      %s2509 = smul.addr %s2508, 2
      %s2510 = smul.addr %s2509, 2
      %s2511 = scalar_lea.vmem %s2, %s2510
      // Predicated region
      $region29: #{discriminator_forward.6} parent=27 // pred_check
        %p2512 = pneg %p78
      $region30: #{discriminator_forward.6} parent=27 // pred_check_branch
        %2514 = sbr.rel (%p2512) target = $region32
      $region31: #{discriminator_forward.6} parent=27 // pred_region
        _
      $region32: #{discriminator_forward.6} parent=27 // pred_fallthru
        _
    $region28: #{discriminator_forward.6} parent=5 // pred_fallthru
      _
    %p2515 = scmp.le.s32.totalorder 2, %s8
    // Predicated region
    $region33: #{discriminator_forward.6} parent=5 // pred_check
      %p2516 = pneg %p2515
    $region34: #{discriminator_forward.6} parent=5 // pred_check_branch
      %2518 = sbr.rel (%p2516) target = $region36
    $region35: #{discriminator_forward.6} parent=5 // pred_region
      %s2519 = ssub.s32 %s8, 2
      // Predicated region
      $region37: #{discriminator_forward.6} parent=35 // pred_check
        %p2520 = pneg %p84
      $region38: #{discriminator_forward.6} parent=35 // pred_check_branch
        %2522 = sbr.rel (%p2520) target = $region40
      $region39: #{discriminator_forward.6} parent=35 // pred_region
        %p2523 = scmp.lt.s32.totalorder %s14, 1
        %s2524 = scalar_select %p2523, %s14, 1
        %s2525 = smul.addr %s2524, 2
        %s2526 = smul.addr %s2525, 2
        %s2527 = scalar_lea.vmem %s2, %s2526
      $region40: #{discriminator_forward.6} parent=35 // pred_fallthru
        _
    $region36: #{discriminator_forward.6} parent=5 // pred_fallthru
      _
  $region6: #{discriminator_forward.6} parent=0 // loop_footer
    %s12 = sadd.s32 1, %s8
  $region7: #{discriminator_forward.6} parent=0 // loop_footer_branch
    %7 = sbr.rel target = $region3
  $region8: #{discriminator_forward.6} parent=0 // loop_exit
    _

// kernel: discriminator_forward.7
$region0: #{discriminator_forward.7}
  #allocation0 [shape = 'u32[]', space=smem, size = 0x4, offset = 0x4, fixed_abs, tag = 'smem constant byte address 0x4 - core index']
  #allocation1 [shape = 'u32[144,128]{1,0:T(1,128)}', space=vmem, size = 0x12000, scoped, tag = 'internal scratch']
  %s0 = inlined_call_operand.vmem [shape: bf16[8,4096], index: 0, kind: input, shape index: {}]
  %s1 = inlined_call_operand.vmem [shape: bf16[4096,128], index: 1, kind: input, shape index: {}]
  %s2 = inlined_call_operand.vmem [shape: f32[1,128], index: 2, kind: input, shape index: {}]
  %s3 = inlined_call_operand.vmem [shape: f32[8,128], index: 3, kind: output, shape index: {}]
  %s4 = sld [smem:[#allocation0]]
  $region22: #{discriminator_forward.7} parent=0
    _
  %s6 = ssub.s32 1, %s4
  %s7 = scalar_select 0, %s6, %s4
  // Predicated region
  $region2: #{discriminator_forward.7} parent=0 // pred_check
    _
  $region3: #{discriminator_forward.7} parent=0 // pred_check_branch
    %9 = sbr.rel (0) target = $region5
  $region4: #{discriminator_forward.7} parent=0 // pred_region
    _
  $region5: #{discriminator_forward.7} parent=0 // pred_fallthru
    _
  // Predicated region
  $region6: #{discriminator_forward.7} parent=0 // pred_check
    _
  $region7: #{discriminator_forward.7} parent=0 // pred_check_branch
    %11 = sbr.rel (0) target = $region9
  $region8: #{discriminator_forward.7} parent=0 // pred_region
    _
  $region9: #{discriminator_forward.7} parent=0 // pred_fallthru
    _
  // Predicated region
  $region10: #{discriminator_forward.7} parent=0 // pred_check
    _
  $region11: #{discriminator_forward.7} parent=0 // pred_check_branch
    %13 = sbr.rel (0) target = $region13
  $region12: #{discriminator_forward.7} parent=0 // pred_region
    _
  $region13: #{discriminator_forward.7} parent=0 // pred_fallthru
    _
  %v15 = vld [vmem:[%s0] sm:$0xff]
  %v16 = vld [vmem:[%s0 + $0x8] sm:$0xff]
  %v17 = vld [vmem:[%s0 + $0x10] sm:$0xff]
  %v18 = vld [vmem:[%s0 + $0x18] sm:$0xff]
  %v19 = vld [vmem:[%s0 + $0x20] sm:$0xff]
  %v20 = vld [vmem:[%s0 + $0x28] sm:$0xff]
  %v21 = vld [vmem:[%s0 + $0x30] sm:$0xff]
  %v22 = vld [vmem:[%s0 + $0x38] sm:$0xff]
  %v23 = vld [vmem:[%s0 + $0x40] sm:$0xff]
  %v24 = vld [vmem:[%s0 + $0x48] sm:$0xff]
  %v25 = vld [vmem:[%s0 + $0x50] sm:$0xff]
  %v26 = vld [vmem:[%s0 + $0x58] sm:$0xff]
  %v27 = vld [vmem:[%s0 + $0x60] sm:$0xff]
  %v28 = vld [vmem:[%s0 + $0x68] sm:$0xff]
  %v29 = vld [vmem:[%s0 + $0x70] sm:$0xff]
  %v30 = vld [vmem:[%s0 + $0x78] sm:$0xff]
  %v31 = vld [vmem:[%s1] sm:$0xf]
  %v32 = vld [vmem:[%s1 + $0x4] sm:$0xf]
  %v33 = vld [vmem:[%s1 + $0x8] sm:$0xf]
  %v34 = vld [vmem:[%s1 + $0xc] sm:$0xf]
  %v35 = vld [vmem:[%s1 + $0x10] sm:$0xf]
  %v36 = vld [vmem:[%s1 + $0x14] sm:$0xf]
  %v37 = vld [vmem:[%s1 + $0x18] sm:$0xf]
  %v38 = vld [vmem:[%s1 + $0x1c] sm:$0xf]
  %v39 = vld [vmem:[%s1 + $0x20] sm:$0xf]
  %v40 = vld [vmem:[%s1 + $0x24] sm:$0xf]
  %v41 = vld [vmem:[%s1 + $0x28] sm:$0xf]
  %v42 = vld [vmem:[%s1 + $0x2c] sm:$0xf]
  %v43 = vld [vmem:[%s1 + $0x30] sm:$0xf]
  %v44 = vld [vmem:[%s1 + $0x34] sm:$0xf]
  %v45 = vld [vmem:[%s1 + $0x38] sm:$0xf]
  %v46 = vld [vmem:[%s1 + $0x3c] sm:$0xf]
  %v47 = vld [vmem:[%s1 + $0x40] sm:$0xf]
  %v48 = vld [vmem:[%s1 + $0x44] sm:$0xf]
  %v49 = vld [vmem:[%s1 + $0x48] sm:$0xf]
  %v50 = vld [vmem:[%s1 + $0x4c] sm:$0xf]
  %v51 = vld [vmem:[%s1 + $0x50] sm:$0xf]
  %v52 = vld [vmem:[%s1 + $0x54] sm:$0xf]
  %v53 = vld [vmem:[%s1 + $0x58] sm:$0xf]
  %v54 = vld [vmem:[%s1 + $0x5c] sm:$0xf]
  %v55 = vld [vmem:[%s1 + $0x60] sm:$0xf]
  %v56 = vld [vmem:[%s1 + $0x64] sm:$0xf]
  %v57 = vld [vmem:[%s1 + $0x68] sm:$0xf]
  %v58 = vld [vmem:[%s1 + $0x6c] sm:$0xf]
  %v59 = vld [vmem:[%s1 + $0x70] sm:$0xf]
  %v60 = vld [vmem:[%s1 + $0x74] sm:$0xf]
  %v61 = vld [vmem:[%s1 + $0x78] sm:$0xf]
  %v62 = vld [vmem:[%s1 + $0x7c] sm:$0xf]
  %v63 = vld [vmem:[%s1 + $0x80] sm:$0xf]
  %v64 = vld [vmem:[%s1 + $0x84] sm:$0xf]
  %v65 = vld [vmem:[%s1 + $0x88] sm:$0xf]
  %v66 = vld [vmem:[%s1 + $0x8c] sm:$0xf]
  %v67 = vld [vmem:[%s1 + $0x90] sm:$0xf]
  %v68 = vld [vmem:[%s1 + $0x94] sm:$0xf]
  %v69 = vld [vmem:[%s1 + $0x98] sm:$0xf]
  %v70 = vld [vmem:[%s1 + $0x9c] sm:$0xf]
  %v71 = vld [vmem:[%s1 + $0xa0] sm:$0xf]
  %v72 = vld [vmem:[%s1 + $0xa4] sm:$0xf]
  %v73 = vld [vmem:[%s1 + $0xa8] sm:$0xf]
  %v74 = vld [vmem:[%s1 + $0xac] sm:$0xf]
  %v75 = vld [vmem:[%s1 + $0xb0] sm:$0xf]
  %v76 = vld [vmem:[%s1 + $0xb4] sm:$0xf]
  %v77 = vld [vmem:[%s1 + $0xb8] sm:$0xf]
  %v78 = vld [vmem:[%s1 + $0xbc] sm:$0xf]
  %v79 = vld [vmem:[%s1 + $0xc0] sm:$0xf]
  %v80 = vld [vmem:[%s1 + $0xc4] sm:$0xf]
  %v81 = vld [vmem:[%s1 + $0xc8] sm:$0xf]
  %v82 = vld [vmem:[%s1 + $0xcc] sm:$0xf]
  %v83 = vld [vmem:[%s1 + $0xd0] sm:$0xf]
  %v84 = vld [vmem:[%s1 + $0xd4] sm:$0xf]
  %v85 = vld [vmem:[%s1 + $0xd8] sm:$0xf]
  %v86 = vld [vmem:[%s1 + $0xdc] sm:$0xf]
  %v87 = vld [vmem:[%s1 + $0xe0] sm:$0xf]
  %v88 = vld [vmem:[%s1 + $0xe4] sm:$0xf]
  %v89 = vld [vmem:[%s1 + $0xe8] sm:$0xf]
  %v90 = vld [vmem:[%s1 + $0xec] sm:$0xf]
  %v91 = vld [vmem:[%s1 + $0xf0] sm:$0xf]
  %v92 = vld [vmem:[%s1 + $0xf4] sm:$0xf]
  %v93 = vld [vmem:[%s1 + $0xf8] sm:$0xf]
  %v94 = vld [vmem:[%s1 + $0xfc] sm:$0xf]
  %v95 = vld [vmem:[%s1 + $0x100] sm:$0xf]
  %v96 = vld [vmem:[%s1 + $0x104] sm:$0xf]
  %v97 = vld [vmem:[%s1 + $0x108] sm:$0xf]
  %v98 = vld [vmem:[%s1 + $0x10c] sm:$0xf]
  %v99 = vld [vmem:[%s1 + $0x110] sm:$0xf]
  %v100 = vld [vmem:[%s1 + $0x114] sm:$0xf]
  %v101 = vld [vmem:[%s1 + $0x118] sm:$0xf]
  %v102 = vld [vmem:[%s1 + $0x11c] sm:$0xf]
  %v103 = vld [vmem:[%s1 + $0x120] sm:$0xf]
  %v104 = vld [vmem:[%s1 + $0x124] sm:$0xf]
  %v105 = vld [vmem:[%s1 + $0x128] sm:$0xf]
  %v106 = vld [vmem:[%s1 + $0x12c] sm:$0xf]
  %v107 = vld [vmem:[%s1 + $0x130] sm:$0xf]
  %v108 = vld [vmem:[%s1 + $0x134] sm:$0xf]
  %v109 = vld [vmem:[%s1 + $0x138] sm:$0xf]
  %v110 = vld [vmem:[%s1 + $0x13c] sm:$0xf]
  %v111 = vld [vmem:[%s1 + $0x140] sm:$0xf]
  %v112 = vld [vmem:[%s1 + $0x144] sm:$0xf]
  %v113 = vld [vmem:[%s1 + $0x148] sm:$0xf]
  %v114 = vld [vmem:[%s1 + $0x14c] sm:$0xf]
  %v115 = vld [vmem:[%s1 + $0x150] sm:$0xf]
  %v116 = vld [vmem:[%s1 + $0x154] sm:$0xf]
  %v117 = vld [vmem:[%s1 + $0x158] sm:$0xf]
  %v118 = vld [vmem:[%s1 + $0x15c] sm:$0xf]
  %v119 = vld [vmem:[%s1 + $0x160] sm:$0xf]
  %v120 = vld [vmem:[%s1 + $0x164] sm:$0xf]
  %v121 = vld [vmem:[%s1 + $0x168] sm:$0xf]
  %v122 = vld [vmem:[%s1 + $0x16c] sm:$0xf]
  %v123 = vld [vmem:[%s1 + $0x170] sm:$0xf]
  %v124 = vld [vmem:[%s1 + $0x174] sm:$0xf]
  %v125 = vld [vmem:[%s1 + $0x178] sm:$0xf]
  %v126 = vld [vmem:[%s1 + $0x17c] sm:$0xf]
  %v127 = vld [vmem:[%s1 + $0x180] sm:$0xf]
  %v128 = vld [vmem:[%s1 + $0x184] sm:$0xf]
  %v129 = vld [vmem:[%s1 + $0x188] sm:$0xf]
  %v130 = vld [vmem:[%s1 + $0x18c] sm:$0xf]
  %v131 = vld [vmem:[%s1 + $0x190] sm:$0xf]
  %v132 = vld [vmem:[%s1 + $0x194] sm:$0xf]
  %v133 = vld [vmem:[%s1 + $0x198] sm:$0xf]
  %v134 = vld [vmem:[%s1 + $0x19c] sm:$0xf]
  %v135 = vld [vmem:[%s1 + $0x1a0] sm:$0xf]
  %v136 = vld [vmem:[%s1 + $0x1a4] sm:$0xf]
  %v137 = vld [vmem:[%s1 + $0x1a8] sm:$0xf]
  %v138 = vld [vmem:[%s1 + $0x1ac] sm:$0xf]
  %v139 = vld [vmem:[%s1 + $0x1b0] sm:$0xf]
  %v140 = vld [vmem:[%s1 + $0x1b4] sm:$0xf]
  %v141 = vld [vmem:[%s1 + $0x1b8] sm:$0xf]
  %v142 = vld [vmem:[%s1 + $0x1bc] sm:$0xf]
  %v143 = vld [vmem:[%s1 + $0x1c0] sm:$0xf]
  %v144 = vld [vmem:[%s1 + $0x1c4] sm:$0xf]
  %v145 = vld [vmem:[%s1 + $0x1c8] sm:$0xf]
  %v146 = vld [vmem:[%s1 + $0x1cc] sm:$0xf]
  %v147 = vld [vmem:[%s1 + $0x1d0] sm:$0xf]
  %v148 = vld [vmem:[%s1 + $0x1d4] sm:$0xf]
  %v149 = vld [vmem:[%s1 + $0x1d8] sm:$0xf]
  %v150 = vld [vmem:[%s1 + $0x1dc] sm:$0xf]
  %v151 = vld [vmem:[%s1 + $0x1e0] sm:$0xf]
  %v152 = vld [vmem:[%s1 + $0x1e4] sm:$0xf]
  %v153 = vld [vmem:[%s1 + $0x1e8] sm:$0xf]
  %v154 = vld [vmem:[%s1 + $0x1ec] sm:$0xf]
  %v155 = vld [vmem:[%s1 + $0x1f0] sm:$0xf]
  %v156 = vld [vmem:[%s1 + $0x1f4] sm:$0xf]
  %v157 = vld [vmem:[%s1 + $0x1f8] sm:$0xf]
  %v158 = vld [vmem:[%s1 + $0x1fc] sm:$0xf]
  %v159 = vld [vmem:[%s1 + $0x200] sm:$0xf]
  %v160 = vld [vmem:[%s1 + $0x204] sm:$0xf]
  %v161 = vld [vmem:[%s1 + $0x208] sm:$0xf]
  %v162 = vld [vmem:[%s1 + $0x20c] sm:$0xf]
  %v163 = vld [vmem:[%s1 + $0x210] sm:$0xf]
  %v164 = vld [vmem:[%s1 + $0x214] sm:$0xf]
  %v165 = vld [vmem:[%s1 + $0x218] sm:$0xf]
  %v166 = vld [vmem:[%s1 + $0x21c] sm:$0xf]
  %v167 = vld [vmem:[%s1 + $0x220] sm:$0xf]
  %v168 = vld [vmem:[%s1 + $0x224] sm:$0xf]
  %v169 = vld [vmem:[%s1 + $0x228] sm:$0xf]
  %v170 = vld [vmem:[%s1 + $0x22c] sm:$0xf]
  %v171 = vld [vmem:[%s1 + $0x230] sm:$0xf]
  %v172 = vld [vmem:[%s1 + $0x234] sm:$0xf]
  %v173 = vld [vmem:[%s1 + $0x238] sm:$0xf]
  %v174 = vld [vmem:[%s1 + $0x23c] sm:$0xf]
  %v175 = vld [vmem:[%s1 + $0x240] sm:$0xf]
  %v176 = vld [vmem:[%s1 + $0x244] sm:$0xf]
  %v177 = vld [vmem:[%s1 + $0x248] sm:$0xf]
  %v178 = vld [vmem:[%s1 + $0x24c] sm:$0xf]
  %v179 = vld [vmem:[%s1 + $0x250] sm:$0xf]
  %v180 = vld [vmem:[%s1 + $0x254] sm:$0xf]
  %v181 = vld [vmem:[%s1 + $0x258] sm:$0xf]
  %v182 = vld [vmem:[%s1 + $0x25c] sm:$0xf]
  %v183 = vld [vmem:[%s1 + $0x260] sm:$0xf]
  %v184 = vld [vmem:[%s1 + $0x264] sm:$0xf]
  %v185 = vld [vmem:[%s1 + $0x268] sm:$0xf]
  %v186 = vld [vmem:[%s1 + $0x26c] sm:$0xf]
  %v187 = vld [vmem:[%s1 + $0x270] sm:$0xf]
  %v188 = vld [vmem:[%s1 + $0x274] sm:$0xf]
  %v189 = vld [vmem:[%s1 + $0x278] sm:$0xf]
  %v190 = vld [vmem:[%s1 + $0x27c] sm:$0xf]
  %v191 = vld [vmem:[%s1 + $0x280] sm:$0xf]
  %v192 = vld [vmem:[%s1 + $0x284] sm:$0xf]
  %v193 = vld [vmem:[%s1 + $0x288] sm:$0xf]
  %v194 = vld [vmem:[%s1 + $0x28c] sm:$0xf]
  %v195 = vld [vmem:[%s1 + $0x290] sm:$0xf]
  %v196 = vld [vmem:[%s1 + $0x294] sm:$0xf]
  %v197 = vld [vmem:[%s1 + $0x298] sm:$0xf]
  %v198 = vld [vmem:[%s1 + $0x29c] sm:$0xf]
  %v199 = vld [vmem:[%s1 + $0x2a0] sm:$0xf]
  %v200 = vld [vmem:[%s1 + $0x2a4] sm:$0xf]
  %v201 = vld [vmem:[%s1 + $0x2a8] sm:$0xf]
  %v202 = vld [vmem:[%s1 + $0x2ac] sm:$0xf]
  %v203 = vld [vmem:[%s1 + $0x2b0] sm:$0xf]
  %v204 = vld [vmem:[%s1 + $0x2b4] sm:$0xf]
  %v205 = vld [vmem:[%s1 + $0x2b8] sm:$0xf]
  %v206 = vld [vmem:[%s1 + $0x2bc] sm:$0xf]
  %v207 = vld [vmem:[%s1 + $0x2c0] sm:$0xf]
  %v208 = vld [vmem:[%s1 + $0x2c4] sm:$0xf]
  %v209 = vld [vmem:[%s1 + $0x2c8] sm:$0xf]
  %v210 = vld [vmem:[%s1 + $0x2cc] sm:$0xf]
  %v211 = vld [vmem:[%s1 + $0x2d0] sm:$0xf]
  %v212 = vld [vmem:[%s1 + $0x2d4] sm:$0xf]
  %v213 = vld [vmem:[%s1 + $0x2d8] sm:$0xf]
  %v214 = vld [vmem:[%s1 + $0x2dc] sm:$0xf]
  %v215 = vld [vmem:[%s1 + $0x2e0] sm:$0xf]
  %v216 = vld [vmem:[%s1 + $0x2e4] sm:$0xf]
  %v217 = vld [vmem:[%s1 + $0x2e8] sm:$0xf]
  %v218 = vld [vmem:[%s1 + $0x2ec] sm:$0xf]
  %v219 = vld [vmem:[%s1 + $0x2f0] sm:$0xf]
  %v220 = vld [vmem:[%s1 + $0x2f4] sm:$0xf]
  %v221 = vld [vmem:[%s1 + $0x2f8] sm:$0xf]
  %v222 = vld [vmem:[%s1 + $0x2fc] sm:$0xf]
  %v223 = vld [vmem:[%s1 + $0x300] sm:$0xf]
  %v224 = vld [vmem:[%s1 + $0x304] sm:$0xf]
  %v225 = vld [vmem:[%s1 + $0x308] sm:$0xf]
  %v226 = vld [vmem:[%s1 + $0x30c] sm:$0xf]
  %v227 = vld [vmem:[%s1 + $0x310] sm:$0xf]
  %v228 = vld [vmem:[%s1 + $0x314] sm:$0xf]
  %v229 = vld [vmem:[%s1 + $0x318] sm:$0xf]
  %v230 = vld [vmem:[%s1 + $0x31c] sm:$0xf]
  %v231 = vld [vmem:[%s1 + $0x320] sm:$0xf]
  %v232 = vld [vmem:[%s1 + $0x324] sm:$0xf]
  %v233 = vld [vmem:[%s1 + $0x328] sm:$0xf]
  %v234 = vld [vmem:[%s1 + $0x32c] sm:$0xf]
  %v235 = vld [vmem:[%s1 + $0x330] sm:$0xf]
  %v236 = vld [vmem:[%s1 + $0x334] sm:$0xf]
  %v237 = vld [vmem:[%s1 + $0x338] sm:$0xf]
  %v238 = vld [vmem:[%s1 + $0x33c] sm:$0xf]
  %v239 = vld [vmem:[%s1 + $0x340] sm:$0xf]
  %v240 = vld [vmem:[%s1 + $0x344] sm:$0xf]
  %v241 = vld [vmem:[%s1 + $0x348] sm:$0xf]
  %v242 = vld [vmem:[%s1 + $0x34c] sm:$0xf]
  %v243 = vld [vmem:[%s1 + $0x350] sm:$0xf]
  %v244 = vld [vmem:[%s1 + $0x354] sm:$0xf]
  %v245 = vld [vmem:[%s1 + $0x358] sm:$0xf]
  %v246 = vld [vmem:[%s1 + $0x35c] sm:$0xf]
  %v247 = vld [vmem:[%s1 + $0x360] sm:$0xf]
  %v248 = vld [vmem:[%s1 + $0x364] sm:$0xf]
  %v249 = vld [vmem:[%s1 + $0x368] sm:$0xf]
  %v250 = vld [vmem:[%s1 + $0x36c] sm:$0xf]
  %v251 = vld [vmem:[%s1 + $0x370] sm:$0xf]
  %v252 = vld [vmem:[%s1 + $0x374] sm:$0xf]
  %v253 = vld [vmem:[%s1 + $0x378] sm:$0xf]
  %v254 = vld [vmem:[%s1 + $0x37c] sm:$0xf]
  %v255 = vld [vmem:[%s1 + $0x380] sm:$0xf]
  %v256 = vld [vmem:[%s1 + $0x384] sm:$0xf]
  %v257 = vld [vmem:[%s1 + $0x388] sm:$0xf]
  %v258 = vld [vmem:[%s1 + $0x38c] sm:$0xf]
  %v259 = vld [vmem:[%s1 + $0x390] sm:$0xf]
  %v260 = vld [vmem:[%s1 + $0x394] sm:$0xf]
  %v261 = vld [vmem:[%s1 + $0x398] sm:$0xf]
  %v262 = vld [vmem:[%s1 + $0x39c] sm:$0xf]
  %v263 = vld [vmem:[%s1 + $0x3a0] sm:$0xf]
  %v264 = vld [vmem:[%s1 + $0x3a4] sm:$0xf]
  %v265 = vld [vmem:[%s1 + $0x3a8] sm:$0xf]
  %v266 = vld [vmem:[%s1 + $0x3ac] sm:$0xf]
  %v267 = vld [vmem:[%s1 + $0x3b0] sm:$0xf]
  %v268 = vld [vmem:[%s1 + $0x3b4] sm:$0xf]
  %v269 = vld [vmem:[%s1 + $0x3b8] sm:$0xf]
  %v270 = vld [vmem:[%s1 + $0x3bc] sm:$0xf]
  %v271 = vld [vmem:[%s1 + $0x3c0] sm:$0xf]
  %v272 = vld [vmem:[%s1 + $0x3c4] sm:$0xf]
  %v273 = vld [vmem:[%s1 + $0x3c8] sm:$0xf]
  %v274 = vld [vmem:[%s1 + $0x3cc] sm:$0xf]
  %v275 = vld [vmem:[%s1 + $0x3d0] sm:$0xf]
  %v276 = vld [vmem:[%s1 + $0x3d4] sm:$0xf]
  %v277 = vld [vmem:[%s1 + $0x3d8] sm:$0xf]
  %v278 = vld [vmem:[%s1 + $0x3dc] sm:$0xf]
  %v279 = vld [vmem:[%s1 + $0x3e0] sm:$0xf]
  %v280 = vld [vmem:[%s1 + $0x3e4] sm:$0xf]
  %v281 = vld [vmem:[%s1 + $0x3e8] sm:$0xf]
  %v282 = vld [vmem:[%s1 + $0x3ec] sm:$0xf]
  %v283 = vld [vmem:[%s1 + $0x3f0] sm:$0xf]
  %v284 = vld [vmem:[%s1 + $0x3f4] sm:$0xf]
  %v285 = vld [vmem:[%s1 + $0x3f8] sm:$0xf]
  %v286 = vld [vmem:[%s1 + $0x3fc] sm:$0xf]
  %v287 = vld [vmem:[%s1 + $0x400] sm:$0xf]
  %v288 = vld [vmem:[%s1 + $0x404] sm:$0xf]
  %v289 = vld [vmem:[%s1 + $0x408] sm:$0xf]
  %v290 = vld [vmem:[%s1 + $0x40c] sm:$0xf]
  %v291 = vld [vmem:[%s1 + $0x410] sm:$0xf]
  %v292 = vld [vmem:[%s1 + $0x414] sm:$0xf]
  %v293 = vld [vmem:[%s1 + $0x418] sm:$0xf]
  %v294 = vld [vmem:[%s1 + $0x41c] sm:$0xf]
  %v295 = vld [vmem:[%s1 + $0x420] sm:$0xf]
  %v296 = vld [vmem:[%s1 + $0x424] sm:$0xf]
  %v297 = vld [vmem:[%s1 + $0x428] sm:$0xf]
  %v298 = vld [vmem:[%s1 + $0x42c] sm:$0xf]
  %v299 = vld [vmem:[%s1 + $0x430] sm:$0xf]
  %v300 = vld [vmem:[%s1 + $0x434] sm:$0xf]
  %v301 = vld [vmem:[%s1 + $0x438] sm:$0xf]
  %v302 = vld [vmem:[%s1 + $0x43c] sm:$0xf]
  %v303 = vld [vmem:[%s1 + $0x440] sm:$0xf]
  %v304 = vld [vmem:[%s1 + $0x444] sm:$0xf]
  %v305 = vld [vmem:[%s1 + $0x448] sm:$0xf]
  %v306 = vld [vmem:[%s1 + $0x44c] sm:$0xf]
  %v307 = vld [vmem:[%s1 + $0x450] sm:$0xf]
  %v308 = vld [vmem:[%s1 + $0x454] sm:$0xf]
  %v309 = vld [vmem:[%s1 + $0x458] sm:$0xf]
  %v310 = vld [vmem:[%s1 + $0x45c] sm:$0xf]
  %v311 = vld [vmem:[%s1 + $0x460] sm:$0xf]
  %v312 = vld [vmem:[%s1 + $0x464] sm:$0xf]
  %v313 = vld [vmem:[%s1 + $0x468] sm:$0xf]
  %v314 = vld [vmem:[%s1 + $0x46c] sm:$0xf]
  %v315 = vld [vmem:[%s1 + $0x470] sm:$0xf]
  %v316 = vld [vmem:[%s1 + $0x474] sm:$0xf]
  %v317 = vld [vmem:[%s1 + $0x478] sm:$0xf]
  %v318 = vld [vmem:[%s1 + $0x47c] sm:$0xf]
  %v319 = vld [vmem:[%s1 + $0x480] sm:$0xf]
  %v320 = vld [vmem:[%s1 + $0x484] sm:$0xf]
  %v321 = vld [vmem:[%s1 + $0x488] sm:$0xf]
  %v322 = vld [vmem:[%s1 + $0x48c] sm:$0xf]
  %v323 = vld [vmem:[%s1 + $0x490] sm:$0xf]
  %v324 = vld [vmem:[%s1 + $0x494] sm:$0xf]
  %v325 = vld [vmem:[%s1 + $0x498] sm:$0xf]
  %v326 = vld [vmem:[%s1 + $0x49c] sm:$0xf]
  %v327 = vld [vmem:[%s1 + $0x4a0] sm:$0xf]
  %v328 = vld [vmem:[%s1 + $0x4a4] sm:$0xf]
  %v329 = vld [vmem:[%s1 + $0x4a8] sm:$0xf]
  %v330 = vld [vmem:[%s1 + $0x4ac] sm:$0xf]
  %v331 = vld [vmem:[%s1 + $0x4b0] sm:$0xf]
  %v332 = vld [vmem:[%s1 + $0x4b4] sm:$0xf]
  %v333 = vld [vmem:[%s1 + $0x4b8] sm:$0xf]
  %v334 = vld [vmem:[%s1 + $0x4bc] sm:$0xf]
  %v335 = vld [vmem:[%s1 + $0x4c0] sm:$0xf]
  %v336 = vld [vmem:[%s1 + $0x4c4] sm:$0xf]
  %v337 = vld [vmem:[%s1 + $0x4c8] sm:$0xf]
  %v338 = vld [vmem:[%s1 + $0x4cc] sm:$0xf]
  %v339 = vld [vmem:[%s1 + $0x4d0] sm:$0xf]
  %v340 = vld [vmem:[%s1 + $0x4d4] sm:$0xf]
  %v341 = vld [vmem:[%s1 + $0x4d8] sm:$0xf]
  %v342 = vld [vmem:[%s1 + $0x4dc] sm:$0xf]
  %v343 = vld [vmem:[%s1 + $0x4e0] sm:$0xf]
  %v344 = vld [vmem:[%s1 + $0x4e4] sm:$0xf]
  %v345 = vld [vmem:[%s1 + $0x4e8] sm:$0xf]
  %v346 = vld [vmem:[%s1 + $0x4ec] sm:$0xf]
  %v347 = vld [vmem:[%s1 + $0x4f0] sm:$0xf]
  %v348 = vld [vmem:[%s1 + $0x4f4] sm:$0xf]
  %v349 = vld [vmem:[%s1 + $0x4f8] sm:$0xf]
  %v350 = vld [vmem:[%s1 + $0x4fc] sm:$0xf]
  %v351 = vld [vmem:[%s1 + $0x500] sm:$0xf]
  %v352 = vld [vmem:[%s1 + $0x504] sm:$0xf]
  %v353 = vld [vmem:[%s1 + $0x508] sm:$0xf]
  %v354 = vld [vmem:[%s1 + $0x50c] sm:$0xf]
  %v355 = vld [vmem:[%s1 + $0x510] sm:$0xf]
  %v356 = vld [vmem:[%s1 + $0x514] sm:$0xf]
  %v357 = vld [vmem:[%s1 + $0x518] sm:$0xf]
  %v358 = vld [vmem:[%s1 + $0x51c] sm:$0xf]
  %v359 = vld [vmem:[%s1 + $0x520] sm:$0xf]
  %v360 = vld [vmem:[%s1 + $0x524] sm:$0xf]
  %v361 = vld [vmem:[%s1 + $0x528] sm:$0xf]
  %v362 = vld [vmem:[%s1 + $0x52c] sm:$0xf]
  %v363 = vld [vmem:[%s1 + $0x530] sm:$0xf]
  %v364 = vld [vmem:[%s1 + $0x534] sm:$0xf]
  %v365 = vld [vmem:[%s1 + $0x538] sm:$0xf]
  %v366 = vld [vmem:[%s1 + $0x53c] sm:$0xf]
  %v367 = vld [vmem:[%s1 + $0x540] sm:$0xf]
  %v368 = vld [vmem:[%s1 + $0x544] sm:$0xf]
  %v369 = vld [vmem:[%s1 + $0x548] sm:$0xf]
  %v370 = vld [vmem:[%s1 + $0x54c] sm:$0xf]
  %v371 = vld [vmem:[%s1 + $0x550] sm:$0xf]
  %v372 = vld [vmem:[%s1 + $0x554] sm:$0xf]
  %v373 = vld [vmem:[%s1 + $0x558] sm:$0xf]
  %v374 = vld [vmem:[%s1 + $0x55c] sm:$0xf]
  %v375 = vld [vmem:[%s1 + $0x560] sm:$0xf]
  %v376 = vld [vmem:[%s1 + $0x564] sm:$0xf]
  %v377 = vld [vmem:[%s1 + $0x568] sm:$0xf]
  %v378 = vld [vmem:[%s1 + $0x56c] sm:$0xf]
  %v379 = vld [vmem:[%s1 + $0x570] sm:$0xf]
  %v380 = vld [vmem:[%s1 + $0x574] sm:$0xf]
  %v381 = vld [vmem:[%s1 + $0x578] sm:$0xf]
  %v382 = vld [vmem:[%s1 + $0x57c] sm:$0xf]
  %v383 = vld [vmem:[%s1 + $0x580] sm:$0xf]
  %v384 = vld [vmem:[%s1 + $0x584] sm:$0xf]
  %v385 = vld [vmem:[%s1 + $0x588] sm:$0xf]
  %v386 = vld [vmem:[%s1 + $0x58c] sm:$0xf]
  %v387 = vld [vmem:[%s1 + $0x590] sm:$0xf]
  %v388 = vld [vmem:[%s1 + $0x594] sm:$0xf]
  %v389 = vld [vmem:[%s1 + $0x598] sm:$0xf]
  %v390 = vld [vmem:[%s1 + $0x59c] sm:$0xf]
  %v391 = vld [vmem:[%s1 + $0x5a0] sm:$0xf]
  %v392 = vld [vmem:[%s1 + $0x5a4] sm:$0xf]
  %v393 = vld [vmem:[%s1 + $0x5a8] sm:$0xf]
  %v394 = vld [vmem:[%s1 + $0x5ac] sm:$0xf]
  %v395 = vld [vmem:[%s1 + $0x5b0] sm:$0xf]
  %v396 = vld [vmem:[%s1 + $0x5b4] sm:$0xf]
  %v397 = vld [vmem:[%s1 + $0x5b8] sm:$0xf]
  %v398 = vld [vmem:[%s1 + $0x5bc] sm:$0xf]
  %v399 = vld [vmem:[%s1 + $0x5c0] sm:$0xf]
  %v400 = vld [vmem:[%s1 + $0x5c4] sm:$0xf]
  %v401 = vld [vmem:[%s1 + $0x5c8] sm:$0xf]
  %v402 = vld [vmem:[%s1 + $0x5cc] sm:$0xf]
  %v403 = vld [vmem:[%s1 + $0x5d0] sm:$0xf]
  %v404 = vld [vmem:[%s1 + $0x5d4] sm:$0xf]
  %v405 = vld [vmem:[%s1 + $0x5d8] sm:$0xf]
  %v406 = vld [vmem:[%s1 + $0x5dc] sm:$0xf]
  %v407 = vld [vmem:[%s1 + $0x5e0] sm:$0xf]
  %v408 = vld [vmem:[%s1 + $0x5e4] sm:$0xf]
  %v409 = vld [vmem:[%s1 + $0x5e8] sm:$0xf]
  %v410 = vld [vmem:[%s1 + $0x5ec] sm:$0xf]
  %v411 = vld [vmem:[%s1 + $0x5f0] sm:$0xf]
  %v412 = vld [vmem:[%s1 + $0x5f4] sm:$0xf]
  %v413 = vld [vmem:[%s1 + $0x5f8] sm:$0xf]
  %v414 = vld [vmem:[%s1 + $0x5fc] sm:$0xf]
  %v415 = vld [vmem:[%s1 + $0x600] sm:$0xf]
  %v416 = vld [vmem:[%s1 + $0x604] sm:$0xf]
  %v417 = vld [vmem:[%s1 + $0x608] sm:$0xf]
  %v418 = vld [vmem:[%s1 + $0x60c] sm:$0xf]
  %v419 = vld [vmem:[%s1 + $0x610] sm:$0xf]
  %v420 = vld [vmem:[%s1 + $0x614] sm:$0xf]
  %v421 = vld [vmem:[%s1 + $0x618] sm:$0xf]
  %v422 = vld [vmem:[%s1 + $0x61c] sm:$0xf]
  %v423 = vld [vmem:[%s1 + $0x620] sm:$0xf]
  %v424 = vld [vmem:[%s1 + $0x624] sm:$0xf]
  %v425 = vld [vmem:[%s1 + $0x628] sm:$0xf]
  %v426 = vld [vmem:[%s1 + $0x62c] sm:$0xf]
  %v427 = vld [vmem:[%s1 + $0x630] sm:$0xf]
  %v428 = vld [vmem:[%s1 + $0x634] sm:$0xf]
  %v429 = vld [vmem:[%s1 + $0x638] sm:$0xf]
  %v430 = vld [vmem:[%s1 + $0x63c] sm:$0xf]
  %v431 = vld [vmem:[%s1 + $0x640] sm:$0xf]
  %v432 = vld [vmem:[%s1 + $0x644] sm:$0xf]
  %v433 = vld [vmem:[%s1 + $0x648] sm:$0xf]
  %v434 = vld [vmem:[%s1 + $0x64c] sm:$0xf]
  %v435 = vld [vmem:[%s1 + $0x650] sm:$0xf]
  %v436 = vld [vmem:[%s1 + $0x654] sm:$0xf]
  %v437 = vld [vmem:[%s1 + $0x658] sm:$0xf]
  %v438 = vld [vmem:[%s1 + $0x65c] sm:$0xf]
  %v439 = vld [vmem:[%s1 + $0x660] sm:$0xf]
  %v440 = vld [vmem:[%s1 + $0x664] sm:$0xf]
  %v441 = vld [vmem:[%s1 + $0x668] sm:$0xf]
  %v442 = vld [vmem:[%s1 + $0x66c] sm:$0xf]
  %v443 = vld [vmem:[%s1 + $0x670] sm:$0xf]
  %v444 = vld [vmem:[%s1 + $0x674] sm:$0xf]
  %v445 = vld [vmem:[%s1 + $0x678] sm:$0xf]
  %v446 = vld [vmem:[%s1 + $0x67c] sm:$0xf]
  %v447 = vld [vmem:[%s1 + $0x680] sm:$0xf]
  %v448 = vld [vmem:[%s1 + $0x684] sm:$0xf]
  %v449 = vld [vmem:[%s1 + $0x688] sm:$0xf]
  %v450 = vld [vmem:[%s1 + $0x68c] sm:$0xf]
  %v451 = vld [vmem:[%s1 + $0x690] sm:$0xf]
  %v452 = vld [vmem:[%s1 + $0x694] sm:$0xf]
  %v453 = vld [vmem:[%s1 + $0x698] sm:$0xf]
  %v454 = vld [vmem:[%s1 + $0x69c] sm:$0xf]
  %v455 = vld [vmem:[%s1 + $0x6a0] sm:$0xf]
  %v456 = vld [vmem:[%s1 + $0x6a4] sm:$0xf]
  %v457 = vld [vmem:[%s1 + $0x6a8] sm:$0xf]
  %v458 = vld [vmem:[%s1 + $0x6ac] sm:$0xf]
  %v459 = vld [vmem:[%s1 + $0x6b0] sm:$0xf]
  %v460 = vld [vmem:[%s1 + $0x6b4] sm:$0xf]
  %v461 = vld [vmem:[%s1 + $0x6b8] sm:$0xf]
  %v462 = vld [vmem:[%s1 + $0x6bc] sm:$0xf]
  %v463 = vld [vmem:[%s1 + $0x6c0] sm:$0xf]
  %v464 = vld [vmem:[%s1 + $0x6c4] sm:$0xf]
  %v465 = vld [vmem:[%s1 + $0x6c8] sm:$0xf]
  %v466 = vld [vmem:[%s1 + $0x6cc] sm:$0xf]
  %v467 = vld [vmem:[%s1 + $0x6d0] sm:$0xf]
  %v468 = vld [vmem:[%s1 + $0x6d4] sm:$0xf]
  %v469 = vld [vmem:[%s1 + $0x6d8] sm:$0xf]
  %v470 = vld [vmem:[%s1 + $0x6dc] sm:$0xf]
  %v471 = vld [vmem:[%s1 + $0x6e0] sm:$0xf]
  %v472 = vld [vmem:[%s1 + $0x6e4] sm:$0xf]
  %v473 = vld [vmem:[%s1 + $0x6e8] sm:$0xf]
  %v474 = vld [vmem:[%s1 + $0x6ec] sm:$0xf]
  %v475 = vld [vmem:[%s1 + $0x6f0] sm:$0xf]
  %v476 = vld [vmem:[%s1 + $0x6f4] sm:$0xf]
  %v477 = vld [vmem:[%s1 + $0x6f8] sm:$0xf]
  %v478 = vld [vmem:[%s1 + $0x6fc] sm:$0xf]
  %v479 = vld [vmem:[%s1 + $0x700] sm:$0xf]
  %v480 = vld [vmem:[%s1 + $0x704] sm:$0xf]
  %v481 = vld [vmem:[%s1 + $0x708] sm:$0xf]
  %v482 = vld [vmem:[%s1 + $0x70c] sm:$0xf]
  %v483 = vld [vmem:[%s1 + $0x710] sm:$0xf]
  %v484 = vld [vmem:[%s1 + $0x714] sm:$0xf]
  %v485 = vld [vmem:[%s1 + $0x718] sm:$0xf]
  %v486 = vld [vmem:[%s1 + $0x71c] sm:$0xf]
  %v487 = vld [vmem:[%s1 + $0x720] sm:$0xf]
  %v488 = vld [vmem:[%s1 + $0x724] sm:$0xf]
  %v489 = vld [vmem:[%s1 + $0x728] sm:$0xf]
  %v490 = vld [vmem:[%s1 + $0x72c] sm:$0xf]
  %v491 = vld [vmem:[%s1 + $0x730] sm:$0xf]
  %v492 = vld [vmem:[%s1 + $0x734] sm:$0xf]
  %v493 = vld [vmem:[%s1 + $0x738] sm:$0xf]
  %v494 = vld [vmem:[%s1 + $0x73c] sm:$0xf]
  %v495 = vld [vmem:[%s1 + $0x740] sm:$0xf]
  %v496 = vld [vmem:[%s1 + $0x744] sm:$0xf]
  %v497 = vld [vmem:[%s1 + $0x748] sm:$0xf]
  %v498 = vld [vmem:[%s1 + $0x74c] sm:$0xf]
  %v499 = vld [vmem:[%s1 + $0x750] sm:$0xf]
  %v500 = vld [vmem:[%s1 + $0x754] sm:$0xf]
  %v501 = vld [vmem:[%s1 + $0x758] sm:$0xf]
  %v502 = vld [vmem:[%s1 + $0x75c] sm:$0xf]
  %v503 = vld [vmem:[%s1 + $0x760] sm:$0xf]
  %v504 = vld [vmem:[%s1 + $0x764] sm:$0xf]
  %v505 = vld [vmem:[%s1 + $0x768] sm:$0xf]
  %v506 = vld [vmem:[%s1 + $0x76c] sm:$0xf]
  %v507 = vld [vmem:[%s1 + $0x770] sm:$0xf]
  %v508 = vld [vmem:[%s1 + $0x774] sm:$0xf]
  %v509 = vld [vmem:[%s1 + $0x778] sm:$0xf]
  %v510 = vld [vmem:[%s1 + $0x77c] sm:$0xf]
  %v511 = vld [vmem:[%s1 + $0x780] sm:$0xf]
  %v512 = vld [vmem:[%s1 + $0x784] sm:$0xf]
  %v513 = vld [vmem:[%s1 + $0x788] sm:$0xf]
  %v514 = vld [vmem:[%s1 + $0x78c] sm:$0xf]
  %v515 = vld [vmem:[%s1 + $0x790] sm:$0xf]
  %v516 = vld [vmem:[%s1 + $0x794] sm:$0xf]
  %v517 = vld [vmem:[%s1 + $0x798] sm:$0xf]
  %v518 = vld [vmem:[%s1 + $0x79c] sm:$0xf]
  %v519 = vld [vmem:[%s1 + $0x7a0] sm:$0xf]
  %v520 = vld [vmem:[%s1 + $0x7a4] sm:$0xf]
  %v521 = vld [vmem:[%s1 + $0x7a8] sm:$0xf]
  %v522 = vld [vmem:[%s1 + $0x7ac] sm:$0xf]
  %v523 = vld [vmem:[%s1 + $0x7b0] sm:$0xf]
  %v524 = vld [vmem:[%s1 + $0x7b4] sm:$0xf]
  %v525 = vld [vmem:[%s1 + $0x7b8] sm:$0xf]
  %v526 = vld [vmem:[%s1 + $0x7bc] sm:$0xf]
  %v527 = vld [vmem:[%s1 + $0x7c0] sm:$0xf]
  %v528 = vld [vmem:[%s1 + $0x7c4] sm:$0xf]
  %v529 = vld [vmem:[%s1 + $0x7c8] sm:$0xf]
  %v530 = vld [vmem:[%s1 + $0x7cc] sm:$0xf]
  %v531 = vld [vmem:[%s1 + $0x7d0] sm:$0xf]
  %v532 = vld [vmem:[%s1 + $0x7d4] sm:$0xf]
  %v533 = vld [vmem:[%s1 + $0x7d8] sm:$0xf]
  %v534 = vld [vmem:[%s1 + $0x7dc] sm:$0xf]
  %v535 = vld [vmem:[%s1 + $0x7e0] sm:$0xf]
  %v536 = vld [vmem:[%s1 + $0x7e4] sm:$0xf]
  %v537 = vld [vmem:[%s1 + $0x7e8] sm:$0xf]
  %v538 = vld [vmem:[%s1 + $0x7ec] sm:$0xf]
  %v539 = vld [vmem:[%s1 + $0x7f0] sm:$0xf]
  %v540 = vld [vmem:[%s1 + $0x7f4] sm:$0xf]
  %v541 = vld [vmem:[%s1 + $0x7f8] sm:$0xf]
  %v542 = vld [vmem:[%s1 + $0x7fc] sm:$0xf]
  %v543 = vld [vmem:[%s2] sm:$0x1]
  %v545 = vlaneseq
  %v546 = vshrl.u32 %v545, 7
  %v547 = vsub.s32 0, %v546
  %v548 = vrot.slane %v543, %v547
  %v566 = vunpack.c.l.b16 %v15
  %v567 = vunpack.c.h.b16 %v15
  %v568 = vunpack.c.l.b16 %v16
  %v569 = vunpack.c.h.b16 %v16
  %v570 = vunpack.c.l.b16 %v17
  %v571 = vunpack.c.h.b16 %v17
  %v572 = vunpack.c.l.b16 %v18
  %v573 = vunpack.c.h.b16 %v18
  %v574 = vunpack.c.l.b16 %v19
  %v575 = vunpack.c.h.b16 %v19
  %v576 = vunpack.c.l.b16 %v20
  %v577 = vunpack.c.h.b16 %v20
  %v578 = vunpack.c.l.b16 %v21
  %v579 = vunpack.c.h.b16 %v21
  %v580 = vunpack.c.l.b16 %v22
  %v581 = vunpack.c.h.b16 %v22
  %v582 = vunpack.c.l.b16 %v23
  %v583 = vunpack.c.h.b16 %v23
  %v584 = vunpack.c.l.b16 %v24
  %v585 = vunpack.c.h.b16 %v24
  %v586 = vunpack.c.l.b16 %v25
  %v587 = vunpack.c.h.b16 %v25
  %v588 = vunpack.c.l.b16 %v26
  %v589 = vunpack.c.h.b16 %v26
  %v590 = vunpack.c.l.b16 %v27
  %v591 = vunpack.c.h.b16 %v27
  %v592 = vunpack.c.l.b16 %v28
  %v593 = vunpack.c.h.b16 %v28
  %v594 = vunpack.c.l.b16 %v29
  %v595 = vunpack.c.h.b16 %v29
  %v596 = vunpack.c.l.b16 %v30
  %v597 = vunpack.c.h.b16 %v30
  %v598 = vpack.c.b16 %v566, %v566
  %v599 = vpack.c.b16 %v567, %v567
  %v600 = vpack.c.b16 %v568, %v568
  %v601 = vpack.c.b16 %v569, %v569
  %v602 = vpack.c.b16 %v570, %v570
  %v603 = vpack.c.b16 %v571, %v571
  %v604 = vpack.c.b16 %v572, %v572
  %v605 = vpack.c.b16 %v573, %v573
  %v606 = vpack.c.b16 %v574, %v574
  %v607 = vpack.c.b16 %v575, %v575
  %v608 = vpack.c.b16 %v576, %v576
  %v609 = vpack.c.b16 %v577, %v577
  %v610 = vpack.c.b16 %v578, %v578
  %v611 = vpack.c.b16 %v579, %v579
  %v612 = vpack.c.b16 %v580, %v580
  %v613 = vpack.c.b16 %v581, %v581
  %v614 = vpack.c.b16 %v582, %v582
  %v615 = vpack.c.b16 %v583, %v583
  %v616 = vpack.c.b16 %v584, %v584
  %v617 = vpack.c.b16 %v585, %v585
  %v618 = vpack.c.b16 %v586, %v586
  %v619 = vpack.c.b16 %v587, %v587
  %v620 = vpack.c.b16 %v588, %v588
  %v621 = vpack.c.b16 %v589, %v589
  %v622 = vpack.c.b16 %v590, %v590
  %v623 = vpack.c.b16 %v591, %v591
  %v624 = vpack.c.b16 %v592, %v592
  %v625 = vpack.c.b16 %v593, %v593
  %v626 = vpack.c.b16 %v594, %v594
  %v627 = vpack.c.b16 %v595, %v595
  %v628 = vpack.c.b16 %v596, %v596
  %v629 = vpack.c.b16 %v597, %v597
  %v1174 = vunpack.c.l.b16 %v31
  %v1175 = vunpack.c.l.b16 %v32
  %v1176 = vunpack.c.l.b16 %v33
  %v1177 = vunpack.c.l.b16 %v34
  %v1178 = vunpack.c.l.b16 %v35
  %v1179 = vunpack.c.l.b16 %v36
  %v1180 = vunpack.c.l.b16 %v37
  %v1181 = vunpack.c.l.b16 %v38
  %v1182 = vunpack.c.l.b16 %v39
  %v1183 = vunpack.c.l.b16 %v40
  %v1184 = vunpack.c.l.b16 %v41
  %v1185 = vunpack.c.l.b16 %v42
  %v1186 = vunpack.c.l.b16 %v43
  %v1187 = vunpack.c.l.b16 %v44
  %v1188 = vunpack.c.l.b16 %v45
  %v1189 = vunpack.c.l.b16 %v46
  %v1190 = vunpack.c.l.b16 %v47
  %v1191 = vunpack.c.l.b16 %v48
  %v1192 = vunpack.c.l.b16 %v49
  %v1193 = vunpack.c.l.b16 %v50
  %v1194 = vunpack.c.l.b16 %v51
  %v1195 = vunpack.c.l.b16 %v52
  %v1196 = vunpack.c.l.b16 %v53
  %v1197 = vunpack.c.l.b16 %v54
  %v1198 = vunpack.c.l.b16 %v55
  %v1199 = vunpack.c.l.b16 %v56
  %v1200 = vunpack.c.l.b16 %v57
  %v1201 = vunpack.c.l.b16 %v58
  %v1202 = vunpack.c.l.b16 %v59
  %v1203 = vunpack.c.l.b16 %v60
  %v1204 = vunpack.c.l.b16 %v61
  %v1205 = vunpack.c.l.b16 %v62
  %v1206 = vunpack.c.l.b16 %v63
  %v1207 = vunpack.c.l.b16 %v64
  %v1208 = vunpack.c.l.b16 %v65
  %v1209 = vunpack.c.l.b16 %v66
  %v1210 = vunpack.c.l.b16 %v67
  %v1211 = vunpack.c.l.b16 %v68
  %v1212 = vunpack.c.l.b16 %v69
  %v1213 = vunpack.c.l.b16 %v70
  %v1214 = vunpack.c.l.b16 %v71
  %v1215 = vunpack.c.l.b16 %v72
  %v1216 = vunpack.c.l.b16 %v73
  %v1217 = vunpack.c.l.b16 %v74
  %v1218 = vunpack.c.l.b16 %v75
  %v1219 = vunpack.c.l.b16 %v76
  %v1220 = vunpack.c.l.b16 %v77
  %v1221 = vunpack.c.l.b16 %v78
  %v1222 = vunpack.c.l.b16 %v79
  %v1223 = vunpack.c.l.b16 %v80
  %v1224 = vunpack.c.l.b16 %v81
  %v1225 = vunpack.c.l.b16 %v82
  %v1226 = vunpack.c.l.b16 %v83
  %v1227 = vunpack.c.l.b16 %v84
  %v1228 = vunpack.c.l.b16 %v85
  %v1229 = vunpack.c.l.b16 %v86
  %v1230 = vunpack.c.l.b16 %v87
  %v1231 = vunpack.c.l.b16 %v88
  %v1232 = vunpack.c.l.b16 %v89
  %v1233 = vunpack.c.l.b16 %v90
  %v1234 = vunpack.c.l.b16 %v91
  %v1235 = vunpack.c.l.b16 %v92
  %v1236 = vunpack.c.l.b16 %v93
  %v1237 = vunpack.c.l.b16 %v94
  %v1238 = vunpack.c.l.b16 %v95
  %v1239 = vunpack.c.l.b16 %v96
  %v1240 = vunpack.c.l.b16 %v97
  %v1241 = vunpack.c.l.b16 %v98
  %v1242 = vunpack.c.l.b16 %v99
  %v1243 = vunpack.c.l.b16 %v100
  %v1244 = vunpack.c.l.b16 %v101
  %v1245 = vunpack.c.l.b16 %v102
  %v1246 = vunpack.c.l.b16 %v103
  %v1247 = vunpack.c.l.b16 %v104
  %v1248 = vunpack.c.l.b16 %v105
  %v1249 = vunpack.c.l.b16 %v106
  %v1250 = vunpack.c.l.b16 %v107
  %v1251 = vunpack.c.l.b16 %v108
  %v1252 = vunpack.c.l.b16 %v109
  %v1253 = vunpack.c.l.b16 %v110
  %v1254 = vunpack.c.l.b16 %v111
  %v1255 = vunpack.c.l.b16 %v112
  %v1256 = vunpack.c.l.b16 %v113
  %v1257 = vunpack.c.l.b16 %v114
  %v1258 = vunpack.c.l.b16 %v115
  %v1259 = vunpack.c.l.b16 %v116
  %v1260 = vunpack.c.l.b16 %v117
  %v1261 = vunpack.c.l.b16 %v118
  %v1262 = vunpack.c.l.b16 %v119
  %v1263 = vunpack.c.l.b16 %v120
  %v1264 = vunpack.c.l.b16 %v121
  %v1265 = vunpack.c.l.b16 %v122
  %v1266 = vunpack.c.l.b16 %v123
  %v1267 = vunpack.c.l.b16 %v124
  %v1268 = vunpack.c.l.b16 %v125
  %v1269 = vunpack.c.l.b16 %v126
  %v1270 = vunpack.c.l.b16 %v127
  %v1271 = vunpack.c.l.b16 %v128
  %v1272 = vunpack.c.l.b16 %v129
  %v1273 = vunpack.c.l.b16 %v130
  %v1274 = vunpack.c.l.b16 %v131
  %v1275 = vunpack.c.l.b16 %v132
  %v1276 = vunpack.c.l.b16 %v133
  %v1277 = vunpack.c.l.b16 %v134
  %v1278 = vunpack.c.l.b16 %v135
  %v1279 = vunpack.c.l.b16 %v136
  %v1280 = vunpack.c.l.b16 %v137
  %v1281 = vunpack.c.l.b16 %v138
  %v1282 = vunpack.c.l.b16 %v139
  %v1283 = vunpack.c.l.b16 %v140
  %v1284 = vunpack.c.l.b16 %v141
  %v1285 = vunpack.c.l.b16 %v142
  %v1286 = vunpack.c.l.b16 %v143
  %v1287 = vunpack.c.l.b16 %v144
  %v1288 = vunpack.c.l.b16 %v145
  %v1289 = vunpack.c.l.b16 %v146
  %v1290 = vunpack.c.l.b16 %v147
  %v1291 = vunpack.c.l.b16 %v148
  %v1292 = vunpack.c.l.b16 %v149
  %v1293 = vunpack.c.l.b16 %v150
  %v1294 = vunpack.c.l.b16 %v151
  %v1295 = vunpack.c.l.b16 %v152
  %v1296 = vunpack.c.l.b16 %v153
  %v1297 = vunpack.c.l.b16 %v154
  %v1298 = vunpack.c.l.b16 %v155
  %v1299 = vunpack.c.l.b16 %v156
  %v1300 = vunpack.c.l.b16 %v157
  %v1301 = vunpack.c.l.b16 %v158
  %v1302 = vunpack.c.l.b16 %v159
  %v1303 = vunpack.c.l.b16 %v160
  %v1304 = vunpack.c.l.b16 %v161
  %v1305 = vunpack.c.l.b16 %v162
  %v1306 = vunpack.c.l.b16 %v163
  %v1307 = vunpack.c.l.b16 %v164
  %v1308 = vunpack.c.l.b16 %v165
  %v1309 = vunpack.c.l.b16 %v166
  %v1310 = vunpack.c.l.b16 %v167
  %v1311 = vunpack.c.l.b16 %v168
  %v1312 = vunpack.c.l.b16 %v169
  %v1313 = vunpack.c.l.b16 %v170
  %v1314 = vunpack.c.l.b16 %v171
  %v1315 = vunpack.c.l.b16 %v172
  %v1316 = vunpack.c.l.b16 %v173
  %v1317 = vunpack.c.l.b16 %v174
  %v1318 = vunpack.c.l.b16 %v175
  %v1319 = vunpack.c.l.b16 %v176
  %v1320 = vunpack.c.l.b16 %v177
  %v1321 = vunpack.c.l.b16 %v178
  %v1322 = vunpack.c.l.b16 %v179
  %v1323 = vunpack.c.l.b16 %v180
  %v1324 = vunpack.c.l.b16 %v181
  %v1325 = vunpack.c.l.b16 %v182
  %v1326 = vunpack.c.l.b16 %v183
  %v1327 = vunpack.c.l.b16 %v184
  %v1328 = vunpack.c.l.b16 %v185
  %v1329 = vunpack.c.l.b16 %v186
  %v1330 = vunpack.c.l.b16 %v187
  %v1331 = vunpack.c.l.b16 %v188
  %v1332 = vunpack.c.l.b16 %v189
  %v1333 = vunpack.c.l.b16 %v190
  %v1334 = vunpack.c.l.b16 %v191
  %v1335 = vunpack.c.l.b16 %v192
  %v1336 = vunpack.c.l.b16 %v193
  %v1337 = vunpack.c.l.b16 %v194
  %v1338 = vunpack.c.l.b16 %v195
  %v1339 = vunpack.c.l.b16 %v196
  %v1340 = vunpack.c.l.b16 %v197
  %v1341 = vunpack.c.l.b16 %v198
  %v1342 = vunpack.c.l.b16 %v199
  %v1343 = vunpack.c.l.b16 %v200
  %v1344 = vunpack.c.l.b16 %v201
  %v1345 = vunpack.c.l.b16 %v202
  %v1346 = vunpack.c.l.b16 %v203
  %v1347 = vunpack.c.l.b16 %v204
  %v1348 = vunpack.c.l.b16 %v205
  %v1349 = vunpack.c.l.b16 %v206
  %v1350 = vunpack.c.l.b16 %v207
  %v1351 = vunpack.c.l.b16 %v208
  %v1352 = vunpack.c.l.b16 %v209
  %v1353 = vunpack.c.l.b16 %v210
  %v1354 = vunpack.c.l.b16 %v211
  %v1355 = vunpack.c.l.b16 %v212
  %v1356 = vunpack.c.l.b16 %v213
  %v1357 = vunpack.c.l.b16 %v214
  %v1358 = vunpack.c.l.b16 %v215
  %v1359 = vunpack.c.l.b16 %v216
  %v1360 = vunpack.c.l.b16 %v217
  %v1361 = vunpack.c.l.b16 %v218
  %v1362 = vunpack.c.l.b16 %v219
  %v1363 = vunpack.c.l.b16 %v220
  %v1364 = vunpack.c.l.b16 %v221
  %v1365 = vunpack.c.l.b16 %v222
  %v1366 = vunpack.c.l.b16 %v223
  %v1367 = vunpack.c.l.b16 %v224
  %v1368 = vunpack.c.l.b16 %v225
  %v1369 = vunpack.c.l.b16 %v226
  %v1370 = vunpack.c.l.b16 %v227
  %v1371 = vunpack.c.l.b16 %v228
  %v1372 = vunpack.c.l.b16 %v229
  %v1373 = vunpack.c.l.b16 %v230
  %v1374 = vunpack.c.l.b16 %v231
  %v1375 = vunpack.c.l.b16 %v232
  %v1376 = vunpack.c.l.b16 %v233
  %v1377 = vunpack.c.l.b16 %v234
  %v1378 = vunpack.c.l.b16 %v235
  %v1379 = vunpack.c.l.b16 %v236
  %v1380 = vunpack.c.l.b16 %v237
  %v1381 = vunpack.c.l.b16 %v238
  %v1382 = vunpack.c.l.b16 %v239
  %v1383 = vunpack.c.l.b16 %v240
  %v1384 = vunpack.c.l.b16 %v241
  %v1385 = vunpack.c.l.b16 %v242
  %v1386 = vunpack.c.l.b16 %v243
  %v1387 = vunpack.c.l.b16 %v244
  %v1388 = vunpack.c.l.b16 %v245
  %v1389 = vunpack.c.l.b16 %v246
  %v1390 = vunpack.c.l.b16 %v247
  %v1391 = vunpack.c.l.b16 %v248
  %v1392 = vunpack.c.l.b16 %v249
  %v1393 = vunpack.c.l.b16 %v250
  %v1394 = vunpack.c.l.b16 %v251
  %v1395 = vunpack.c.l.b16 %v252
  %v1396 = vunpack.c.l.b16 %v253
  %v1397 = vunpack.c.l.b16 %v254
  %v1398 = vunpack.c.l.b16 %v255
  %v1399 = vunpack.c.l.b16 %v256
  %v1400 = vunpack.c.l.b16 %v257
  %v1401 = vunpack.c.l.b16 %v258
  %v1402 = vunpack.c.l.b16 %v259
  %v1403 = vunpack.c.l.b16 %v260
  %v1404 = vunpack.c.l.b16 %v261
  %v1405 = vunpack.c.l.b16 %v262
  %v1406 = vunpack.c.l.b16 %v263
  %v1407 = vunpack.c.l.b16 %v264
  %v1408 = vunpack.c.l.b16 %v265
  %v1409 = vunpack.c.l.b16 %v266
  %v1410 = vunpack.c.l.b16 %v267
  %v1411 = vunpack.c.l.b16 %v268
  %v1412 = vunpack.c.l.b16 %v269
  %v1413 = vunpack.c.l.b16 %v270
  %v1414 = vunpack.c.l.b16 %v271
  %v1415 = vunpack.c.l.b16 %v272
  %v1416 = vunpack.c.l.b16 %v273
  %v1417 = vunpack.c.l.b16 %v274
  %v1418 = vunpack.c.l.b16 %v275
  %v1419 = vunpack.c.l.b16 %v276
  %v1420 = vunpack.c.l.b16 %v277
  %v1421 = vunpack.c.l.b16 %v278
  %v1422 = vunpack.c.l.b16 %v279
  %v1423 = vunpack.c.l.b16 %v280
  %v1424 = vunpack.c.l.b16 %v281
  %v1425 = vunpack.c.l.b16 %v282
  %v1426 = vunpack.c.l.b16 %v283
  %v1427 = vunpack.c.l.b16 %v284
  %v1428 = vunpack.c.l.b16 %v285
  %v1429 = vunpack.c.l.b16 %v286
  %v1430 = vunpack.c.l.b16 %v287
  %v1431 = vunpack.c.l.b16 %v288
  %v1432 = vunpack.c.l.b16 %v289
  %v1433 = vunpack.c.l.b16 %v290
  %v1434 = vunpack.c.l.b16 %v291
  %v1435 = vunpack.c.l.b16 %v292
  %v1436 = vunpack.c.l.b16 %v293
  %v1437 = vunpack.c.l.b16 %v294
  %v1438 = vunpack.c.l.b16 %v295
  %v1439 = vunpack.c.l.b16 %v296
  %v1440 = vunpack.c.l.b16 %v297
  %v1441 = vunpack.c.l.b16 %v298
  %v1442 = vunpack.c.l.b16 %v299
  %v1443 = vunpack.c.l.b16 %v300
  %v1444 = vunpack.c.l.b16 %v301
  %v1445 = vunpack.c.l.b16 %v302
  %v1446 = vunpack.c.l.b16 %v303
  %v1447 = vunpack.c.l.b16 %v304
  %v1448 = vunpack.c.l.b16 %v305
  %v1449 = vunpack.c.l.b16 %v306
  %v1450 = vunpack.c.l.b16 %v307
  %v1451 = vunpack.c.l.b16 %v308
  %v1452 = vunpack.c.l.b16 %v309
  %v1453 = vunpack.c.l.b16 %v310
  %v1454 = vunpack.c.l.b16 %v311
  %v1455 = vunpack.c.l.b16 %v312
  %v1456 = vunpack.c.l.b16 %v313
  %v1457 = vunpack.c.l.b16 %v314
  %v1458 = vunpack.c.l.b16 %v315
  %v1459 = vunpack.c.l.b16 %v316
  %v1460 = vunpack.c.l.b16 %v317
  %v1461 = vunpack.c.l.b16 %v318
  %v1462 = vunpack.c.l.b16 %v319
  %v1463 = vunpack.c.l.b16 %v320
  %v1464 = vunpack.c.l.b16 %v321
  %v1465 = vunpack.c.l.b16 %v322
  %v1466 = vunpack.c.l.b16 %v323
  %v1467 = vunpack.c.l.b16 %v324
  %v1468 = vunpack.c.l.b16 %v325
  %v1469 = vunpack.c.l.b16 %v326
  %v1470 = vunpack.c.l.b16 %v327
  %v1471 = vunpack.c.l.b16 %v328
  %v1472 = vunpack.c.l.b16 %v329
  %v1473 = vunpack.c.l.b16 %v330
  %v1474 = vunpack.c.l.b16 %v331
  %v1475 = vunpack.c.l.b16 %v332
  %v1476 = vunpack.c.l.b16 %v333
  %v1477 = vunpack.c.l.b16 %v334
  %v1478 = vunpack.c.l.b16 %v335
  %v1479 = vunpack.c.l.b16 %v336
  %v1480 = vunpack.c.l.b16 %v337
  %v1481 = vunpack.c.l.b16 %v338
  %v1482 = vunpack.c.l.b16 %v339
  %v1483 = vunpack.c.l.b16 %v340
  %v1484 = vunpack.c.l.b16 %v341
  %v1485 = vunpack.c.l.b16 %v342
  %v1486 = vunpack.c.l.b16 %v343
  %v1487 = vunpack.c.l.b16 %v344
  %v1488 = vunpack.c.l.b16 %v345
  %v1489 = vunpack.c.l.b16 %v346
  %v1490 = vunpack.c.l.b16 %v347
  %v1491 = vunpack.c.l.b16 %v348
  %v1492 = vunpack.c.l.b16 %v349
  %v1493 = vunpack.c.l.b16 %v350
  %v1494 = vunpack.c.l.b16 %v351
  %v1495 = vunpack.c.l.b16 %v352
  %v1496 = vunpack.c.l.b16 %v353
  %v1497 = vunpack.c.l.b16 %v354
  %v1498 = vunpack.c.l.b16 %v355
  %v1499 = vunpack.c.l.b16 %v356
  %v1500 = vunpack.c.l.b16 %v357
  %v1501 = vunpack.c.l.b16 %v358
  %v1502 = vunpack.c.l.b16 %v359
  %v1503 = vunpack.c.l.b16 %v360
  %v1504 = vunpack.c.l.b16 %v361
  %v1505 = vunpack.c.l.b16 %v362
  %v1506 = vunpack.c.l.b16 %v363
  %v1507 = vunpack.c.l.b16 %v364
  %v1508 = vunpack.c.l.b16 %v365
  %v1509 = vunpack.c.l.b16 %v366
  %v1510 = vunpack.c.l.b16 %v367
  %v1511 = vunpack.c.l.b16 %v368
  %v1512 = vunpack.c.l.b16 %v369
  %v1513 = vunpack.c.l.b16 %v370
  %v1514 = vunpack.c.l.b16 %v371
  %v1515 = vunpack.c.l.b16 %v372
  %v1516 = vunpack.c.l.b16 %v373
  %v1517 = vunpack.c.l.b16 %v374
  %v1518 = vunpack.c.l.b16 %v375
  %v1519 = vunpack.c.l.b16 %v376
  %v1520 = vunpack.c.l.b16 %v377
  %v1521 = vunpack.c.l.b16 %v378
  %v1522 = vunpack.c.l.b16 %v379
  %v1523 = vunpack.c.l.b16 %v380
  %v1524 = vunpack.c.l.b16 %v381
  %v1525 = vunpack.c.l.b16 %v382
  %v1526 = vunpack.c.l.b16 %v383
  %v1527 = vunpack.c.l.b16 %v384
  %v1528 = vunpack.c.l.b16 %v385
  %v1529 = vunpack.c.l.b16 %v386
  %v1530 = vunpack.c.l.b16 %v387
  %v1531 = vunpack.c.l.b16 %v388
  %v1532 = vunpack.c.l.b16 %v389
  %v1533 = vunpack.c.l.b16 %v390
  %v1534 = vunpack.c.l.b16 %v391
  %v1535 = vunpack.c.l.b16 %v392
  %v1536 = vunpack.c.l.b16 %v393
  %v1537 = vunpack.c.l.b16 %v394
  %v1538 = vunpack.c.l.b16 %v395
  %v1539 = vunpack.c.l.b16 %v396
  %v1540 = vunpack.c.l.b16 %v397
  %v1541 = vunpack.c.l.b16 %v398
  %v1542 = vunpack.c.l.b16 %v399
  %v1543 = vunpack.c.l.b16 %v400
  %v1544 = vunpack.c.l.b16 %v401
  %v1545 = vunpack.c.l.b16 %v402
  %v1546 = vunpack.c.l.b16 %v403
  %v1547 = vunpack.c.l.b16 %v404
  %v1548 = vunpack.c.l.b16 %v405
  %v1549 = vunpack.c.l.b16 %v406
  %v1550 = vunpack.c.l.b16 %v407
  %v1551 = vunpack.c.l.b16 %v408
  %v1552 = vunpack.c.l.b16 %v409
  %v1553 = vunpack.c.l.b16 %v410
  %v1554 = vunpack.c.l.b16 %v411
  %v1555 = vunpack.c.l.b16 %v412
  %v1556 = vunpack.c.l.b16 %v413
  %v1557 = vunpack.c.l.b16 %v414
  %v1558 = vunpack.c.l.b16 %v415
  %v1559 = vunpack.c.l.b16 %v416
  %v1560 = vunpack.c.l.b16 %v417
  %v1561 = vunpack.c.l.b16 %v418
  %v1562 = vunpack.c.l.b16 %v419
  %v1563 = vunpack.c.l.b16 %v420
  %v1564 = vunpack.c.l.b16 %v421
  %v1565 = vunpack.c.l.b16 %v422
  %v1566 = vunpack.c.l.b16 %v423
  %v1567 = vunpack.c.l.b16 %v424
  %v1568 = vunpack.c.l.b16 %v425
  %v1569 = vunpack.c.l.b16 %v426
  %v1570 = vunpack.c.l.b16 %v427
  %v1571 = vunpack.c.l.b16 %v428
  %v1572 = vunpack.c.l.b16 %v429
  %v1573 = vunpack.c.l.b16 %v430
  %v1574 = vunpack.c.l.b16 %v431
  %v1575 = vunpack.c.l.b16 %v432
  %v1576 = vunpack.c.l.b16 %v433
  %v1577 = vunpack.c.l.b16 %v434
  %v1578 = vunpack.c.l.b16 %v435
  %v1579 = vunpack.c.l.b16 %v436
  %v1580 = vunpack.c.l.b16 %v437
  %v1581 = vunpack.c.l.b16 %v438
  %v1582 = vunpack.c.l.b16 %v439
  %v1583 = vunpack.c.l.b16 %v440
  %v1584 = vunpack.c.l.b16 %v441
  %v1585 = vunpack.c.l.b16 %v442
  %v1586 = vunpack.c.l.b16 %v443
  %v1587 = vunpack.c.l.b16 %v444
  %v1588 = vunpack.c.l.b16 %v445
  %v1589 = vunpack.c.l.b16 %v446
  %v1590 = vunpack.c.l.b16 %v447
  %v1591 = vunpack.c.l.b16 %v448
  %v1592 = vunpack.c.l.b16 %v449
  %v1593 = vunpack.c.l.b16 %v450
  %v1594 = vunpack.c.l.b16 %v451
  %v1595 = vunpack.c.l.b16 %v452
  %v1596 = vunpack.c.l.b16 %v453
  %v1597 = vunpack.c.l.b16 %v454
  %v1598 = vunpack.c.l.b16 %v455
  %v1599 = vunpack.c.l.b16 %v456
  %v1600 = vunpack.c.l.b16 %v457
  %v1601 = vunpack.c.l.b16 %v458
  %v1602 = vunpack.c.l.b16 %v459
  %v1603 = vunpack.c.l.b16 %v460
  %v1604 = vunpack.c.l.b16 %v461
  %v1605 = vunpack.c.l.b16 %v462
  %v1606 = vunpack.c.l.b16 %v463
  %v1607 = vunpack.c.l.b16 %v464
  %v1608 = vunpack.c.l.b16 %v465
  %v1609 = vunpack.c.l.b16 %v466
  %v1610 = vunpack.c.l.b16 %v467
  %v1611 = vunpack.c.l.b16 %v468
  %v1612 = vunpack.c.l.b16 %v469
  %v1613 = vunpack.c.l.b16 %v470
  %v1614 = vunpack.c.l.b16 %v471
  %v1615 = vunpack.c.l.b16 %v472
  %v1616 = vunpack.c.l.b16 %v473
  %v1617 = vunpack.c.l.b16 %v474
  %v1618 = vunpack.c.l.b16 %v475
  %v1619 = vunpack.c.l.b16 %v476
  %v1620 = vunpack.c.l.b16 %v477
  %v1621 = vunpack.c.l.b16 %v478
  %v1622 = vunpack.c.l.b16 %v479
  %v1623 = vunpack.c.l.b16 %v480
  %v1624 = vunpack.c.l.b16 %v481
  %v1625 = vunpack.c.l.b16 %v482
  %v1626 = vunpack.c.l.b16 %v483
  %v1627 = vunpack.c.l.b16 %v484
  %v1628 = vunpack.c.l.b16 %v485
  %v1629 = vunpack.c.l.b16 %v486
  %v1630 = vunpack.c.l.b16 %v487
  %v1631 = vunpack.c.l.b16 %v488
  %v1632 = vunpack.c.l.b16 %v489
  %v1633 = vunpack.c.l.b16 %v490
  %v1634 = vunpack.c.l.b16 %v491
  %v1635 = vunpack.c.l.b16 %v492
  %v1636 = vunpack.c.l.b16 %v493
  %v1637 = vunpack.c.l.b16 %v494
  %v1638 = vunpack.c.l.b16 %v495
  %v1639 = vunpack.c.l.b16 %v496
  %v1640 = vunpack.c.l.b16 %v497
  %v1641 = vunpack.c.l.b16 %v498
  %v1642 = vunpack.c.l.b16 %v499
  %v1643 = vunpack.c.l.b16 %v500
  %v1644 = vunpack.c.l.b16 %v501
  %v1645 = vunpack.c.l.b16 %v502
  %v1646 = vunpack.c.l.b16 %v503
  %v1647 = vunpack.c.l.b16 %v504
  %v1648 = vunpack.c.l.b16 %v505
  %v1649 = vunpack.c.l.b16 %v506
  %v1650 = vunpack.c.l.b16 %v507
  %v1651 = vunpack.c.l.b16 %v508
  %v1652 = vunpack.c.l.b16 %v509
  %v1653 = vunpack.c.l.b16 %v510
  %v1654 = vunpack.c.l.b16 %v511
  %v1655 = vunpack.c.l.b16 %v512
  %v1656 = vunpack.c.l.b16 %v513
  %v1657 = vunpack.c.l.b16 %v514
  %v1658 = vunpack.c.l.b16 %v515
  %v1659 = vunpack.c.l.b16 %v516
  %v1660 = vunpack.c.l.b16 %v517
  %v1661 = vunpack.c.l.b16 %v518
  %v1662 = vunpack.c.l.b16 %v519
  %v1663 = vunpack.c.l.b16 %v520
  %v1664 = vunpack.c.l.b16 %v521
  %v1665 = vunpack.c.l.b16 %v522
  %v1666 = vunpack.c.l.b16 %v523
  %v1667 = vunpack.c.l.b16 %v524
  %v1668 = vunpack.c.l.b16 %v525
  %v1669 = vunpack.c.l.b16 %v526
  %v1670 = vunpack.c.l.b16 %v527
  %v1671 = vunpack.c.l.b16 %v528
  %v1672 = vunpack.c.l.b16 %v529
  %v1673 = vunpack.c.l.b16 %v530
  %v1674 = vunpack.c.l.b16 %v531
  %v1675 = vunpack.c.l.b16 %v532
  %v1676 = vunpack.c.l.b16 %v533
  %v1677 = vunpack.c.l.b16 %v534
  %v1678 = vunpack.c.l.b16 %v535
  %v1679 = vunpack.c.l.b16 %v536
  %v1680 = vunpack.c.l.b16 %v537
  %v1681 = vunpack.c.l.b16 %v538
  %v1682 = vunpack.c.l.b16 %v539
  %v1683 = vunpack.c.l.b16 %v540
  %v1684 = vunpack.c.l.b16 %v541
  %v1685 = vunpack.c.l.b16 %v542
  %v1686 = vpack.c.b16 %v1175, %v1174
  %v1687 = vpack.c.b16 %v1177, %v1176
  %v1688 = vpack.c.b16 %v1179, %v1178
  %v1689 = vpack.c.b16 %v1181, %v1180
  %v1690 = vpack.c.b16 %v1183, %v1182
  %v1691 = vpack.c.b16 %v1185, %v1184
  %v1692 = vpack.c.b16 %v1187, %v1186
  %v1693 = vpack.c.b16 %v1189, %v1188
  %v1694 = vpack.c.b16 %v1191, %v1190
  %v1695 = vpack.c.b16 %v1193, %v1192
  %v1696 = vpack.c.b16 %v1195, %v1194
  %v1697 = vpack.c.b16 %v1197, %v1196
  %v1698 = vpack.c.b16 %v1199, %v1198
  %v1699 = vpack.c.b16 %v1201, %v1200
  %v1700 = vpack.c.b16 %v1203, %v1202
  %v1701 = vpack.c.b16 %v1205, %v1204
  %v1702 = vpack.c.b16 %v1207, %v1206
  %v1703 = vpack.c.b16 %v1209, %v1208
  %v1704 = vpack.c.b16 %v1211, %v1210
  %v1705 = vpack.c.b16 %v1213, %v1212
  %v1706 = vpack.c.b16 %v1215, %v1214
  %v1707 = vpack.c.b16 %v1217, %v1216
  %v1708 = vpack.c.b16 %v1219, %v1218
  %v1709 = vpack.c.b16 %v1221, %v1220
  %v1710 = vpack.c.b16 %v1223, %v1222
  %v1711 = vpack.c.b16 %v1225, %v1224
  %v1712 = vpack.c.b16 %v1227, %v1226
  %v1713 = vpack.c.b16 %v1229, %v1228
  %v1714 = vpack.c.b16 %v1231, %v1230
  %v1715 = vpack.c.b16 %v1233, %v1232
  %v1716 = vpack.c.b16 %v1235, %v1234
  %v1717 = vpack.c.b16 %v1237, %v1236
  %v1718 = vpack.c.b16 %v1239, %v1238
  %v1719 = vpack.c.b16 %v1241, %v1240
  %v1720 = vpack.c.b16 %v1243, %v1242
  %v1721 = vpack.c.b16 %v1245, %v1244
  %v1722 = vpack.c.b16 %v1247, %v1246
  %v1723 = vpack.c.b16 %v1249, %v1248
  %v1724 = vpack.c.b16 %v1251, %v1250
  %v1725 = vpack.c.b16 %v1253, %v1252
  %v1726 = vpack.c.b16 %v1255, %v1254
  %v1727 = vpack.c.b16 %v1257, %v1256
  %v1728 = vpack.c.b16 %v1259, %v1258
  %v1729 = vpack.c.b16 %v1261, %v1260
  %v1730 = vpack.c.b16 %v1263, %v1262
  %v1731 = vpack.c.b16 %v1265, %v1264
  %v1732 = vpack.c.b16 %v1267, %v1266
  %v1733 = vpack.c.b16 %v1269, %v1268
  %v1734 = vpack.c.b16 %v1271, %v1270
  %v1735 = vpack.c.b16 %v1273, %v1272
  %v1736 = vpack.c.b16 %v1275, %v1274
  %v1737 = vpack.c.b16 %v1277, %v1276
  %v1738 = vpack.c.b16 %v1279, %v1278
  %v1739 = vpack.c.b16 %v1281, %v1280
  %v1740 = vpack.c.b16 %v1283, %v1282
  %v1741 = vpack.c.b16 %v1285, %v1284
  %v1742 = vpack.c.b16 %v1287, %v1286
  %v1743 = vpack.c.b16 %v1289, %v1288
  %v1744 = vpack.c.b16 %v1291, %v1290
  %v1745 = vpack.c.b16 %v1293, %v1292
  %v1746 = vpack.c.b16 %v1295, %v1294
  %v1747 = vpack.c.b16 %v1297, %v1296
  %v1748 = vpack.c.b16 %v1299, %v1298
  %v1749 = vpack.c.b16 %v1301, %v1300
  %v1750 = vpack.c.b16 %v1303, %v1302
  %v1751 = vpack.c.b16 %v1305, %v1304
  %v1752 = vpack.c.b16 %v1307, %v1306
  %v1753 = vpack.c.b16 %v1309, %v1308
  %v1754 = vpack.c.b16 %v1311, %v1310
  %v1755 = vpack.c.b16 %v1313, %v1312
  %v1756 = vpack.c.b16 %v1315, %v1314
  %v1757 = vpack.c.b16 %v1317, %v1316
  %v1758 = vpack.c.b16 %v1319, %v1318
  %v1759 = vpack.c.b16 %v1321, %v1320
  %v1760 = vpack.c.b16 %v1323, %v1322
  %v1761 = vpack.c.b16 %v1325, %v1324
  %v1762 = vpack.c.b16 %v1327, %v1326
  %v1763 = vpack.c.b16 %v1329, %v1328
  %v1764 = vpack.c.b16 %v1331, %v1330
  %v1765 = vpack.c.b16 %v1333, %v1332
  %v1766 = vpack.c.b16 %v1335, %v1334
  %v1767 = vpack.c.b16 %v1337, %v1336
  %v1768 = vpack.c.b16 %v1339, %v1338
  %v1769 = vpack.c.b16 %v1341, %v1340
  %v1770 = vpack.c.b16 %v1343, %v1342
  %v1771 = vpack.c.b16 %v1345, %v1344
  %v1772 = vpack.c.b16 %v1347, %v1346
  %v1773 = vpack.c.b16 %v1349, %v1348
  %v1774 = vpack.c.b16 %v1351, %v1350
  %v1775 = vpack.c.b16 %v1353, %v1352
  %v1776 = vpack.c.b16 %v1355, %v1354
  %v1777 = vpack.c.b16 %v1357, %v1356
  %v1778 = vpack.c.b16 %v1359, %v1358
  %v1779 = vpack.c.b16 %v1361, %v1360
  %v1780 = vpack.c.b16 %v1363, %v1362
  %v1781 = vpack.c.b16 %v1365, %v1364
  %v1782 = vpack.c.b16 %v1367, %v1366
  %v1783 = vpack.c.b16 %v1369, %v1368
  %v1784 = vpack.c.b16 %v1371, %v1370
  %v1785 = vpack.c.b16 %v1373, %v1372
  %v1786 = vpack.c.b16 %v1375, %v1374
  %v1787 = vpack.c.b16 %v1377, %v1376
  %v1788 = vpack.c.b16 %v1379, %v1378
  %v1789 = vpack.c.b16 %v1381, %v1380
  %v1790 = vpack.c.b16 %v1383, %v1382
  %v1791 = vpack.c.b16 %v1385, %v1384
  %v1792 = vpack.c.b16 %v1387, %v1386
  %v1793 = vpack.c.b16 %v1389, %v1388
  %v1794 = vpack.c.b16 %v1391, %v1390
  %v1795 = vpack.c.b16 %v1393, %v1392
  %v1796 = vpack.c.b16 %v1395, %v1394
  %v1797 = vpack.c.b16 %v1397, %v1396
  %v1798 = vpack.c.b16 %v1399, %v1398
  %v1799 = vpack.c.b16 %v1401, %v1400
  %v1800 = vpack.c.b16 %v1403, %v1402
  %v1801 = vpack.c.b16 %v1405, %v1404
  %v1802 = vpack.c.b16 %v1407, %v1406
  %v1803 = vpack.c.b16 %v1409, %v1408
  %v1804 = vpack.c.b16 %v1411, %v1410
  %v1805 = vpack.c.b16 %v1413, %v1412
  %v1806 = vpack.c.b16 %v1415, %v1414
  %v1807 = vpack.c.b16 %v1417, %v1416
  %v1808 = vpack.c.b16 %v1419, %v1418
  %v1809 = vpack.c.b16 %v1421, %v1420
  %v1810 = vpack.c.b16 %v1423, %v1422
  %v1811 = vpack.c.b16 %v1425, %v1424
  %v1812 = vpack.c.b16 %v1427, %v1426
  %v1813 = vpack.c.b16 %v1429, %v1428
  %v1814 = vpack.c.b16 %v1431, %v1430
  %v1815 = vpack.c.b16 %v1433, %v1432
  %v1816 = vpack.c.b16 %v1435, %v1434
  %v1817 = vpack.c.b16 %v1437, %v1436
  %v1818 = vpack.c.b16 %v1439, %v1438
  %v1819 = vpack.c.b16 %v1441, %v1440
  %v1820 = vpack.c.b16 %v1443, %v1442
  %v1821 = vpack.c.b16 %v1445, %v1444
  %v1822 = vpack.c.b16 %v1447, %v1446
  %v1823 = vpack.c.b16 %v1449, %v1448
  %v1824 = vpack.c.b16 %v1451, %v1450
  %v1825 = vpack.c.b16 %v1453, %v1452
  %v1826 = vpack.c.b16 %v1455, %v1454
  %v1827 = vpack.c.b16 %v1457, %v1456
  %v1828 = vpack.c.b16 %v1459, %v1458
  %v1829 = vpack.c.b16 %v1461, %v1460
  %v1830 = vpack.c.b16 %v1463, %v1462
  %v1831 = vpack.c.b16 %v1465, %v1464
  %v1832 = vpack.c.b16 %v1467, %v1466
  %v1833 = vpack.c.b16 %v1469, %v1468
  %v1834 = vpack.c.b16 %v1471, %v1470
  %v1835 = vpack.c.b16 %v1473, %v1472
  %v1836 = vpack.c.b16 %v1475, %v1474
  %v1837 = vpack.c.b16 %v1477, %v1476
  %v1838 = vpack.c.b16 %v1479, %v1478
  %v1839 = vpack.c.b16 %v1481, %v1480
  %v1840 = vpack.c.b16 %v1483, %v1482
  %v1841 = vpack.c.b16 %v1485, %v1484
  %v1842 = vpack.c.b16 %v1487, %v1486
  %v1843 = vpack.c.b16 %v1489, %v1488
  %v1844 = vpack.c.b16 %v1491, %v1490
  %v1845 = vpack.c.b16 %v1493, %v1492
  %v1846 = vpack.c.b16 %v1495, %v1494
  %v1847 = vpack.c.b16 %v1497, %v1496
  %v1848 = vpack.c.b16 %v1499, %v1498
  %v1849 = vpack.c.b16 %v1501, %v1500
  %v1850 = vpack.c.b16 %v1503, %v1502
  %v1851 = vpack.c.b16 %v1505, %v1504
  %v1852 = vpack.c.b16 %v1507, %v1506
  %v1853 = vpack.c.b16 %v1509, %v1508
  %v1854 = vpack.c.b16 %v1511, %v1510
  %v1855 = vpack.c.b16 %v1513, %v1512
  %v1856 = vpack.c.b16 %v1515, %v1514
  %v1857 = vpack.c.b16 %v1517, %v1516
  %v1858 = vpack.c.b16 %v1519, %v1518
  %v1859 = vpack.c.b16 %v1521, %v1520
  %v1860 = vpack.c.b16 %v1523, %v1522
  %v1861 = vpack.c.b16 %v1525, %v1524
  %v1862 = vpack.c.b16 %v1527, %v1526
  %v1863 = vpack.c.b16 %v1529, %v1528
  %v1864 = vpack.c.b16 %v1531, %v1530
  %v1865 = vpack.c.b16 %v1533, %v1532
  %v1866 = vpack.c.b16 %v1535, %v1534
  %v1867 = vpack.c.b16 %v1537, %v1536
  %v1868 = vpack.c.b16 %v1539, %v1538
  %v1869 = vpack.c.b16 %v1541, %v1540
  %v1870 = vpack.c.b16 %v1543, %v1542
  %v1871 = vpack.c.b16 %v1545, %v1544
  %v1872 = vpack.c.b16 %v1547, %v1546
  %v1873 = vpack.c.b16 %v1549, %v1548
  %v1874 = vpack.c.b16 %v1551, %v1550
  %v1875 = vpack.c.b16 %v1553, %v1552
  %v1876 = vpack.c.b16 %v1555, %v1554
  %v1877 = vpack.c.b16 %v1557, %v1556
  %v1878 = vpack.c.b16 %v1559, %v1558
  %v1879 = vpack.c.b16 %v1561, %v1560
  %v1880 = vpack.c.b16 %v1563, %v1562
  %v1881 = vpack.c.b16 %v1565, %v1564
  %v1882 = vpack.c.b16 %v1567, %v1566
  %v1883 = vpack.c.b16 %v1569, %v1568
  %v1884 = vpack.c.b16 %v1571, %v1570
  %v1885 = vpack.c.b16 %v1573, %v1572
  %v1886 = vpack.c.b16 %v1575, %v1574
  %v1887 = vpack.c.b16 %v1577, %v1576
  %v1888 = vpack.c.b16 %v1579, %v1578
  %v1889 = vpack.c.b16 %v1581, %v1580
  %v1890 = vpack.c.b16 %v1583, %v1582
  %v1891 = vpack.c.b16 %v1585, %v1584
  %v1892 = vpack.c.b16 %v1587, %v1586
  %v1893 = vpack.c.b16 %v1589, %v1588
  %v1894 = vpack.c.b16 %v1591, %v1590
  %v1895 = vpack.c.b16 %v1593, %v1592
  %v1896 = vpack.c.b16 %v1595, %v1594
  %v1897 = vpack.c.b16 %v1597, %v1596
  %v1898 = vpack.c.b16 %v1599, %v1598
  %v1899 = vpack.c.b16 %v1601, %v1600
  %v1900 = vpack.c.b16 %v1603, %v1602
  %v1901 = vpack.c.b16 %v1605, %v1604
  %v1902 = vpack.c.b16 %v1607, %v1606
  %v1903 = vpack.c.b16 %v1609, %v1608
  %v1904 = vpack.c.b16 %v1611, %v1610
  %v1905 = vpack.c.b16 %v1613, %v1612
  %v1906 = vpack.c.b16 %v1615, %v1614
  %v1907 = vpack.c.b16 %v1617, %v1616
  %v1908 = vpack.c.b16 %v1619, %v1618
  %v1909 = vpack.c.b16 %v1621, %v1620
  %v1910 = vpack.c.b16 %v1623, %v1622
  %v1911 = vpack.c.b16 %v1625, %v1624
  %v1912 = vpack.c.b16 %v1627, %v1626
  %v1913 = vpack.c.b16 %v1629, %v1628
  %v1914 = vpack.c.b16 %v1631, %v1630
  %v1915 = vpack.c.b16 %v1633, %v1632
  %v1916 = vpack.c.b16 %v1635, %v1634
  %v1917 = vpack.c.b16 %v1637, %v1636
  %v1918 = vpack.c.b16 %v1639, %v1638
  %v1919 = vpack.c.b16 %v1641, %v1640
  %v1920 = vpack.c.b16 %v1643, %v1642
  %v1921 = vpack.c.b16 %v1645, %v1644
  %v1922 = vpack.c.b16 %v1647, %v1646
  %v1923 = vpack.c.b16 %v1649, %v1648
  %v1924 = vpack.c.b16 %v1651, %v1650
  %v1925 = vpack.c.b16 %v1653, %v1652
  %v1926 = vpack.c.b16 %v1655, %v1654
  %v1927 = vpack.c.b16 %v1657, %v1656
  %v1928 = vpack.c.b16 %v1659, %v1658
  %v1929 = vpack.c.b16 %v1661, %v1660
  %v1930 = vpack.c.b16 %v1663, %v1662
  %v1931 = vpack.c.b16 %v1665, %v1664
  %v1932 = vpack.c.b16 %v1667, %v1666
  %v1933 = vpack.c.b16 %v1669, %v1668
  %v1934 = vpack.c.b16 %v1671, %v1670
  %v1935 = vpack.c.b16 %v1673, %v1672
  %v1936 = vpack.c.b16 %v1675, %v1674
  %v1937 = vpack.c.b16 %v1677, %v1676
  %v1938 = vpack.c.b16 %v1679, %v1678
  %v1939 = vpack.c.b16 %v1681, %v1680
  %v1940 = vpack.c.b16 %v1683, %v1682
  %v1941 = vpack.c.b16 %v1685, %v1684
  %2198 = vmatprep.subr.bf16.mxu0 0
  %2199 = vmatpush1.bf16.msra.mxu0 %v1686
  %2200 = vmatprep.subr.bf16.mxu0 0
  %2201 = vmatpush1.bf16.msra.mxu0 %v1687
  %2202 = vmatprep.subr.bf16.mxu0 0
  %2203 = vmatpush1.bf16.msra.mxu0 %v1688
  %2204 = vmatprep.subr.bf16.mxu0 0
  %2205 = vmatpush1.bf16.msra.mxu0 %v1689
  %2206 = vmatprep.subr.bf16.mxu0 0
  %2207 = vmatpush1.bf16.msra.mxu0 %v1690
  %2208 = vmatprep.subr.bf16.mxu0 0
  %2209 = vmatpush1.bf16.msra.mxu0 %v1691
  %2210 = vmatprep.subr.bf16.mxu0 0
  %2211 = vmatpush1.bf16.msra.mxu0 %v1692
  %2212 = vmatprep.subr.bf16.mxu0 0
  %2213 = vmatpush1.bf16.msra.mxu0 %v1693
  %2214 = vmatprep.subr.bf16.mxu0 0
  %2215 = vmatpush1.bf16.msra.mxu0 %v1694
  %2216 = vmatprep.subr.bf16.mxu0 0
  %2217 = vmatpush1.bf16.msra.mxu0 %v1695
  %2218 = vmatprep.subr.bf16.mxu0 0
  %2219 = vmatpush1.bf16.msra.mxu0 %v1696
  %2220 = vmatprep.subr.bf16.mxu0 0
  %2221 = vmatpush1.bf16.msra.mxu0 %v1697
  %2222 = vmatprep.subr.bf16.mxu0 0
  %2223 = vmatpush1.bf16.msra.mxu0 %v1698
  %2224 = vmatprep.subr.bf16.mxu0 0
  %2225 = vmatpush1.bf16.msra.mxu0 %v1699
  %2226 = vmatprep.subr.bf16.mxu0 0
  %2227 = vmatpush1.bf16.msra.mxu0 %v1700
  %2228 = vmatprep.subr.bf16.mxu0 0
  %2229 = vmatpush1.bf16.msra.mxu0 %v1701
  %2230 = vmatprep.mubr.bf16.mxu0 %v599
  %2231 = vmatmul.mubr.bf16.gmra.mrb[0].mxu0 %v598
  %v2232 = vpop.f32.mrb[0].mxu0
  %v2233 = vadd.f32 %v548, %v2232
  %v2234 = vpop.f32.mrb[0].mxu0
  %v2235 = vpop.f32.mrb[0].mxu0
  %v2236 = vpop.f32.mrb[0].mxu0
  %2237 = vdwg.mxu0
  %2238 = vmatprep.subr.bf16.mxu0 0
  %2239 = vmatpush1.bf16.msra.mxu0 %v1702
  %2240 = vmatprep.subr.bf16.mxu0 0
  %2241 = vmatpush1.bf16.msra.mxu0 %v1703
  %2242 = vmatprep.subr.bf16.mxu0 0
  %2243 = vmatpush1.bf16.msra.mxu0 %v1704
  %2244 = vmatprep.subr.bf16.mxu0 0
  %2245 = vmatpush1.bf16.msra.mxu0 %v1705
  %2246 = vmatprep.subr.bf16.mxu0 0
  %2247 = vmatpush1.bf16.msra.mxu0 %v1706
  %2248 = vmatprep.subr.bf16.mxu0 0
  %2249 = vmatpush1.bf16.msra.mxu0 %v1707
  %2250 = vmatprep.subr.bf16.mxu0 0
  %2251 = vmatpush1.bf16.msra.mxu0 %v1708
  %2252 = vmatprep.subr.bf16.mxu0 0
  %2253 = vmatpush1.bf16.msra.mxu0 %v1709
  %2254 = vmatprep.subr.bf16.mxu0 0
  %2255 = vmatpush1.bf16.msra.mxu0 %v1710
  %2256 = vmatprep.subr.bf16.mxu0 0
  %2257 = vmatpush1.bf16.msra.mxu0 %v1711
  %2258 = vmatprep.subr.bf16.mxu0 0
  %2259 = vmatpush1.bf16.msra.mxu0 %v1712
  %2260 = vmatprep.subr.bf16.mxu0 0
  %2261 = vmatpush1.bf16.msra.mxu0 %v1713
  %2262 = vmatprep.subr.bf16.mxu0 0
  %2263 = vmatpush1.bf16.msra.mxu0 %v1714
  %2264 = vmatprep.subr.bf16.mxu0 0
  %2265 = vmatpush1.bf16.msra.mxu0 %v1715
  %2266 = vmatprep.subr.bf16.mxu0 0
  %2267 = vmatpush1.bf16.msra.mxu0 %v1716
  %2268 = vmatprep.subr.bf16.mxu0 0
  %2269 = vmatpush1.bf16.msra.mxu0 %v1717
  %2270 = vmatprep.mubr.bf16.mxu0 %v601
  %2271 = vmatmul.mubr.bf16.gmra.mrb[0].mxu0 %v600
  %v2272 = vpop.f32.mrb[0].mxu0
  %v2273 = vadd.f32 %v2233, %v2272
  %v2274 = vpop.f32.mrb[0].mxu0
  %v2275 = vpop.f32.mrb[0].mxu0
  %v2276 = vpop.f32.mrb[0].mxu0
  %2277 = vdwg.mxu0
  %2278 = vmatprep.subr.bf16.mxu0 0
  %2279 = vmatpush1.bf16.msra.mxu0 %v1718
  %2280 = vmatprep.subr.bf16.mxu0 0
  %2281 = vmatpush1.bf16.msra.mxu0 %v1719
  %2282 = vmatprep.subr.bf16.mxu0 0
  %2283 = vmatpush1.bf16.msra.mxu0 %v1720
  %2284 = vmatprep.subr.bf16.mxu0 0
  %2285 = vmatpush1.bf16.msra.mxu0 %v1721
  %2286 = vmatprep.subr.bf16.mxu0 0
  %2287 = vmatpush1.bf16.msra.mxu0 %v1722
  %2288 = vmatprep.subr.bf16.mxu0 0
  %2289 = vmatpush1.bf16.msra.mxu0 %v1723
  %2290 = vmatprep.subr.bf16.mxu0 0
  %2291 = vmatpush1.bf16.msra.mxu0 %v1724
  %2292 = vmatprep.subr.bf16.mxu0 0
  %2293 = vmatpush1.bf16.msra.mxu0 %v1725
  %2294 = vmatprep.subr.bf16.mxu0 0
  %2295 = vmatpush1.bf16.msra.mxu0 %v1726
  %2296 = vmatprep.subr.bf16.mxu0 0
  %2297 = vmatpush1.bf16.msra.mxu0 %v1727
  %2298 = vmatprep.subr.bf16.mxu0 0
  %2299 = vmatpush1.bf16.msra.mxu0 %v1728
  %2300 = vmatprep.subr.bf16.mxu0 0
  %2301 = vmatpush1.bf16.msra.mxu0 %v1729
  %2302 = vmatprep.subr.bf16.mxu0 0
  %2303 = vmatpush1.bf16.msra.mxu0 %v1730
  %2304 = vmatprep.subr.bf16.mxu0 0
  %2305 = vmatpush1.bf16.msra.mxu0 %v1731
  %2306 = vmatprep.subr.bf16.mxu0 0
  %2307 = vmatpush1.bf16.msra.mxu0 %v1732
  %2308 = vmatprep.subr.bf16.mxu0 0
  %2309 = vmatpush1.bf16.msra.mxu0 %v1733
  %2310 = vmatprep.mubr.bf16.mxu0 %v603
  %2311 = vmatmul.mubr.bf16.gmra.mrb[0].mxu0 %v602
  %v2312 = vpop.f32.mrb[0].mxu0
  %v2313 = vadd.f32 %v2273, %v2312
  %v2314 = vpop.f32.mrb[0].mxu0
  %v2315 = vpop.f32.mrb[0].mxu0
  %v2316 = vpop.f32.mrb[0].mxu0
  %2317 = vdwg.mxu0
  %2318 = vmatprep.subr.bf16.mxu0 0
  %2319 = vmatpush1.bf16.msra.mxu0 %v1734
  %2320 = vmatprep.subr.bf16.mxu0 0
  %2321 = vmatpush1.bf16.msra.mxu0 %v1735
  %2322 = vmatprep.subr.bf16.mxu0 0
  %2323 = vmatpush1.bf16.msra.mxu0 %v1736
  %2324 = vmatprep.subr.bf16.mxu0 0
  %2325 = vmatpush1.bf16.msra.mxu0 %v1737
  %2326 = vmatprep.subr.bf16.mxu0 0
  %2327 = vmatpush1.bf16.msra.mxu0 %v1738
  %2328 = vmatprep.subr.bf16.mxu0 0
  %2329 = vmatpush1.bf16.msra.mxu0 %v1739
  %2330 = vmatprep.subr.bf16.mxu0 0
  %2331 = vmatpush1.bf16.msra.mxu0 %v1740
  %2332 = vmatprep.subr.bf16.mxu0 0
  %2333 = vmatpush1.bf16.msra.mxu0 %v1741
  %2334 = vmatprep.subr.bf16.mxu0 0
  %2335 = vmatpush1.bf16.msra.mxu0 %v1742
  %2336 = vmatprep.subr.bf16.mxu0 0
  %2337 = vmatpush1.bf16.msra.mxu0 %v1743
  %2338 = vmatprep.subr.bf16.mxu0 0
  %2339 = vmatpush1.bf16.msra.mxu0 %v1744
  %2340 = vmatprep.subr.bf16.mxu0 0
  %2341 = vmatpush1.bf16.msra.mxu0 %v1745
  %2342 = vmatprep.subr.bf16.mxu0 0
  %2343 = vmatpush1.bf16.msra.mxu0 %v1746
  %2344 = vmatprep.subr.bf16.mxu0 0
  %2345 = vmatpush1.bf16.msra.mxu0 %v1747
  %2346 = vmatprep.subr.bf16.mxu0 0
  %2347 = vmatpush1.bf16.msra.mxu0 %v1748
  %2348 = vmatprep.subr.bf16.mxu0 0
  %2349 = vmatpush1.bf16.msra.mxu0 %v1749
  %2350 = vmatprep.mubr.bf16.mxu0 %v605
  %2351 = vmatmul.mubr.bf16.gmra.mrb[0].mxu0 %v604
  %v2352 = vpop.f32.mrb[0].mxu0
  %v2353 = vadd.f32 %v2313, %v2352
  %v2354 = vpop.f32.mrb[0].mxu0
  %v2355 = vpop.f32.mrb[0].mxu0
  %v2356 = vpop.f32.mrb[0].mxu0
  %2357 = vdwg.mxu0
  %2358 = vmatprep.subr.bf16.mxu0 0
  %2359 = vmatpush1.bf16.msra.mxu0 %v1750
  %2360 = vmatprep.subr.bf16.mxu0 0
  %2361 = vmatpush1.bf16.msra.mxu0 %v1751
  %2362 = vmatprep.subr.bf16.mxu0 0
  %2363 = vmatpush1.bf16.msra.mxu0 %v1752
  %2364 = vmatprep.subr.bf16.mxu0 0
  %2365 = vmatpush1.bf16.msra.mxu0 %v1753
  %2366 = vmatprep.subr.bf16.mxu0 0
  %2367 = vmatpush1.bf16.msra.mxu0 %v1754
  %2368 = vmatprep.subr.bf16.mxu0 0
  %2369 = vmatpush1.bf16.msra.mxu0 %v1755
  %2370 = vmatprep.subr.bf16.mxu0 0
  %2371 = vmatpush1.bf16.msra.mxu0 %v1756
  %2372 = vmatprep.subr.bf16.mxu0 0
  %2373 = vmatpush1.bf16.msra.mxu0 %v1757
  %2374 = vmatprep.subr.bf16.mxu0 0
  %2375 = vmatpush1.bf16.msra.mxu0 %v1758
  %2376 = vmatprep.subr.bf16.mxu0 0
  %2377 = vmatpush1.bf16.msra.mxu0 %v1759
  %2378 = vmatprep.subr.bf16.mxu0 0
  %2379 = vmatpush1.bf16.msra.mxu0 %v1760
  %2380 = vmatprep.subr.bf16.mxu0 0
  %2381 = vmatpush1.bf16.msra.mxu0 %v1761
  %2382 = vmatprep.subr.bf16.mxu0 0
  %2383 = vmatpush1.bf16.msra.mxu0 %v1762
  %2384 = vmatprep.subr.bf16.mxu0 0
  %2385 = vmatpush1.bf16.msra.mxu0 %v1763
  %2386 = vmatprep.subr.bf16.mxu0 0
  %2387 = vmatpush1.bf16.msra.mxu0 %v1764
  %2388 = vmatprep.subr.bf16.mxu0 0
  %2389 = vmatpush1.bf16.msra.mxu0 %v1765
  %2390 = vmatprep.mubr.bf16.mxu0 %v607
  %2391 = vmatmul.mubr.bf16.gmra.mrb[0].mxu0 %v606
  %v2392 = vpop.f32.mrb[0].mxu0
  %v2393 = vadd.f32 %v2353, %v2392
  %v2394 = vpop.f32.mrb[0].mxu0
  %v2395 = vpop.f32.mrb[0].mxu0
  %v2396 = vpop.f32.mrb[0].mxu0
  %2397 = vdwg.mxu0
  %2398 = vmatprep.subr.bf16.mxu0 0
  %2399 = vmatpush1.bf16.msra.mxu0 %v1766
  %2400 = vmatprep.subr.bf16.mxu0 0
  %2401 = vmatpush1.bf16.msra.mxu0 %v1767
  %2402 = vmatprep.subr.bf16.mxu0 0
  %2403 = vmatpush1.bf16.msra.mxu0 %v1768
  %2404 = vmatprep.subr.bf16.mxu0 0
  %2405 = vmatpush1.bf16.msra.mxu0 %v1769
  %2406 = vmatprep.subr.bf16.mxu0 0
  %2407 = vmatpush1.bf16.msra.mxu0 %v1770
  %2408 = vmatprep.subr.bf16.mxu0 0
  %2409 = vmatpush1.bf16.msra.mxu0 %v1771
  %2410 = vmatprep.subr.bf16.mxu0 0
  %2411 = vmatpush1.bf16.msra.mxu0 %v1772
  %2412 = vmatprep.subr.bf16.mxu0 0
  %2413 = vmatpush1.bf16.msra.mxu0 %v1773
  %2414 = vmatprep.subr.bf16.mxu0 0
  %2415 = vmatpush1.bf16.msra.mxu0 %v1774
  %2416 = vmatprep.subr.bf16.mxu0 0
  %2417 = vmatpush1.bf16.msra.mxu0 %v1775
  %2418 = vmatprep.subr.bf16.mxu0 0
  %2419 = vmatpush1.bf16.msra.mxu0 %v1776
  %2420 = vmatprep.subr.bf16.mxu0 0
  %2421 = vmatpush1.bf16.msra.mxu0 %v1777
  %2422 = vmatprep.subr.bf16.mxu0 0
  %2423 = vmatpush1.bf16.msra.mxu0 %v1778
  %2424 = vmatprep.subr.bf16.mxu0 0
  %2425 = vmatpush1.bf16.msra.mxu0 %v1779
  %2426 = vmatprep.subr.bf16.mxu0 0
  %2427 = vmatpush1.bf16.msra.mxu0 %v1780
  %2428 = vmatprep.subr.bf16.mxu0 0
  %2429 = vmatpush1.bf16.msra.mxu0 %v1781
  %2430 = vmatprep.mubr.bf16.mxu0 %v609
  %2431 = vmatmul.mubr.bf16.gmra.mrb[0].mxu0 %v608
  %v2432 = vpop.f32.mrb[0].mxu0
  %v2433 = vadd.f32 %v2393, %v2432
  %v2434 = vpop.f32.mrb[0].mxu0
  %v2435 = vpop.f32.mrb[0].mxu0
  %v2436 = vpop.f32.mrb[0].mxu0
  %2437 = vdwg.mxu0
  %2438 = vmatprep.subr.bf16.mxu0 0
  %2439 = vmatpush1.bf16.msra.mxu0 %v1782
  %2440 = vmatprep.subr.bf16.mxu0 0
  %2441 = vmatpush1.bf16.msra.mxu0 %v1783
  %2442 = vmatprep.subr.bf16.mxu0 0
  %2443 = vmatpush1.bf16.msra.mxu0 %v1784
  %2444 = vmatprep.subr.bf16.mxu0 0
  %2445 = vmatpush1.bf16.msra.mxu0 %v1785
  %2446 = vmatprep.subr.bf16.mxu0 0
  %2447 = vmatpush1.bf16.msra.mxu0 %v1786
  %2448 = vmatprep.subr.bf16.mxu0 0
  %2449 = vmatpush1.bf16.msra.mxu0 %v1787
  %2450 = vmatprep.subr.bf16.mxu0 0
  %2451 = vmatpush1.bf16.msra.mxu0 %v1788
  %2452 = vmatprep.subr.bf16.mxu0 0
  %2453 = vmatpush1.bf16.msra.mxu0 %v1789
  %2454 = vmatprep.subr.bf16.mxu0 0
  %2455 = vmatpush1.bf16.msra.mxu0 %v1790
  %2456 = vmatprep.subr.bf16.mxu0 0
  %2457 = vmatpush1.bf16.msra.mxu0 %v1791
  %2458 = vmatprep.subr.bf16.mxu0 0
  %2459 = vmatpush1.bf16.msra.mxu0 %v1792
  %2460 = vmatprep.subr.bf16.mxu0 0
  %2461 = vmatpush1.bf16.msra.mxu0 %v1793
  %2462 = vmatprep.subr.bf16.mxu0 0
  %2463 = vmatpush1.bf16.msra.mxu0 %v1794
  %2464 = vmatprep.subr.bf16.mxu0 0
  %2465 = vmatpush1.bf16.msra.mxu0 %v1795
  %2466 = vmatprep.subr.bf16.mxu0 0
  %2467 = vmatpush1.bf16.msra.mxu0 %v1796
  %2468 = vmatprep.subr.bf16.mxu0 0
  %2469 = vmatpush1.bf16.msra.mxu0 %v1797
  %2470 = vmatprep.mubr.bf16.mxu0 %v611
  %2471 = vmatmul.mubr.bf16.gmra.mrb[0].mxu0 %v610
  %v2472 = vpop.f32.mrb[0].mxu0
  %v2473 = vadd.f32 %v2433, %v2472
  %v2474 = vpop.f32.mrb[0].mxu0
  %v2475 = vpop.f32.mrb[0].mxu0
  %v2476 = vpop.f32.mrb[0].mxu0
  %2477 = vdwg.mxu0
  %2478 = vmatprep.subr.bf16.mxu0 0
  %2479 = vmatpush1.bf16.msra.mxu0 %v1798
  %2480 = vmatprep.subr.bf16.mxu0 0
  %2481 = vmatpush1.bf16.msra.mxu0 %v1799
  %2482 = vmatprep.subr.bf16.mxu0 0
  %2483 = vmatpush1.bf16.msra.mxu0 %v1800
  %2484 = vmatprep.subr.bf16.mxu0 0
  %2485 = vmatpush1.bf16.msra.mxu0 %v1801
  %2486 = vmatprep.subr.bf16.mxu0 0
  %2487 = vmatpush1.bf16.msra.mxu0 %v1802
  %2488 = vmatprep.subr.bf16.mxu0 0
  %2489 = vmatpush1.bf16.msra.mxu0 %v1803
  %2490 = vmatprep.subr.bf16.mxu0 0
  %2491 = vmatpush1.bf16.msra.mxu0 %v1804
  %2492 = vmatprep.subr.bf16.mxu0 0
  %2493 = vmatpush1.bf16.msra.mxu0 %v1805
  %2494 = vmatprep.subr.bf16.mxu0 0
  %2495 = vmatpush1.bf16.msra.mxu0 %v1806
  %2496 = vmatprep.subr.bf16.mxu0 0
  %2497 = vmatpush1.bf16.msra.mxu0 %v1807
  %2498 = vmatprep.subr.bf16.mxu0 0
  %2499 = vmatpush1.bf16.msra.mxu0 %v1808
  %2500 = vmatprep.subr.bf16.mxu0 0
  %2501 = vmatpush1.bf16.msra.mxu0 %v1809
  %2502 = vmatprep.subr.bf16.mxu0 0
  %2503 = vmatpush1.bf16.msra.mxu0 %v1810
  %2504 = vmatprep.subr.bf16.mxu0 0
  %2505 = vmatpush1.bf16.msra.mxu0 %v1811
  %2506 = vmatprep.subr.bf16.mxu0 0
  %2507 = vmatpush1.bf16.msra.mxu0 %v1812
  %2508 = vmatprep.subr.bf16.mxu0 0
  %2509 = vmatpush1.bf16.msra.mxu0 %v1813
  %2510 = vmatprep.mubr.bf16.mxu0 %v613
  %2511 = vmatmul.mubr.bf16.gmra.mrb[0].mxu0 %v612
  %v2512 = vpop.f32.mrb[0].mxu0
  %v2513 = vadd.f32 %v2473, %v2512
  %v2514 = vpop.f32.mrb[0].mxu0
  %v2515 = vpop.f32.mrb[0].mxu0
  %v2516 = vpop.f32.mrb[0].mxu0
  %2517 = vdwg.mxu0
  %2518 = vmatprep.subr.bf16.mxu0 0
  %2519 = vmatpush1.bf16.msra.mxu0 %v1814
  %2520 = vmatprep.subr.bf16.mxu0 0
  %2521 = vmatpush1.bf16.msra.mxu0 %v1815
  %2522 = vmatprep.subr.bf16.mxu0 0
  %2523 = vmatpush1.bf16.msra.mxu0 %v1816
  %2524 = vmatprep.subr.bf16.mxu0 0
  %2525 = vmatpush1.bf16.msra.mxu0 %v1817
  %2526 = vmatprep.subr.bf16.mxu0 0
  %2527 = vmatpush1.bf16.msra.mxu0 %v1818
  %2528 = vmatprep.subr.bf16.mxu0 0
  %2529 = vmatpush1.bf16.msra.mxu0 %v1819
  %2530 = vmatprep.subr.bf16.mxu0 0
  %2531 = vmatpush1.bf16.msra.mxu0 %v1820
  %2532 = vmatprep.subr.bf16.mxu0 0
  %2533 = vmatpush1.bf16.msra.mxu0 %v1821
  %2534 = vmatprep.subr.bf16.mxu0 0
  %2535 = vmatpush1.bf16.msra.mxu0 %v1822
  %2536 = vmatprep.subr.bf16.mxu0 0
  %2537 = vmatpush1.bf16.msra.mxu0 %v1823
  %2538 = vmatprep.subr.bf16.mxu0 0
  %2539 = vmatpush1.bf16.msra.mxu0 %v1824
  %2540 = vmatprep.subr.bf16.mxu0 0
  %2541 = vmatpush1.bf16.msra.mxu0 %v1825
  %2542 = vmatprep.subr.bf16.mxu0 0
  %2543 = vmatpush1.bf16.msra.mxu0 %v1826
  %2544 = vmatprep.subr.bf16.mxu0 0
  %2545 = vmatpush1.bf16.msra.mxu0 %v1827
  %2546 = vmatprep.subr.bf16.mxu0 0
  %2547 = vmatpush1.bf16.msra.mxu0 %v1828
  %2548 = vmatprep.subr.bf16.mxu0 0
  %2549 = vmatpush1.bf16.msra.mxu0 %v1829
  %2550 = vmatprep.mubr.bf16.mxu0 %v615
  %2551 = vmatmul.mubr.bf16.gmra.mrb[0].mxu0 %v614
  %v2552 = vpop.f32.mrb[0].mxu0
  %v2553 = vadd.f32 %v2513, %v2552
  %v2554 = vpop.f32.mrb[0].mxu0
  %v2555 = vpop.f32.mrb[0].mxu0
  %v2556 = vpop.f32.mrb[0].mxu0
  %2557 = vdwg.mxu0
  %2558 = vmatprep.subr.bf16.mxu0 0
  %2559 = vmatpush1.bf16.msra.mxu0 %v1830
  %2560 = vmatprep.subr.bf16.mxu0 0
  %2561 = vmatpush1.bf16.msra.mxu0 %v1831
  %2562 = vmatprep.subr.bf16.mxu0 0
  %2563 = vmatpush1.bf16.msra.mxu0 %v1832
  %2564 = vmatprep.subr.bf16.mxu0 0
  %2565 = vmatpush1.bf16.msra.mxu0 %v1833
  %2566 = vmatprep.subr.bf16.mxu0 0
  %2567 = vmatpush1.bf16.msra.mxu0 %v1834
  %2568 = vmatprep.subr.bf16.mxu0 0
  %2569 = vmatpush1.bf16.msra.mxu0 %v1835
  %2570 = vmatprep.subr.bf16.mxu0 0
  %2571 = vmatpush1.bf16.msra.mxu0 %v1836
  %2572 = vmatprep.subr.bf16.mxu0 0
  %2573 = vmatpush1.bf16.msra.mxu0 %v1837
  %2574 = vmatprep.subr.bf16.mxu0 0
  %2575 = vmatpush1.bf16.msra.mxu0 %v1838
  %2576 = vmatprep.subr.bf16.mxu0 0
  %2577 = vmatpush1.bf16.msra.mxu0 %v1839
  %2578 = vmatprep.subr.bf16.mxu0 0
  %2579 = vmatpush1.bf16.msra.mxu0 %v1840
  %2580 = vmatprep.subr.bf16.mxu0 0
  %2581 = vmatpush1.bf16.msra.mxu0 %v1841
  %2582 = vmatprep.subr.bf16.mxu0 0
  %2583 = vmatpush1.bf16.msra.mxu0 %v1842
  %2584 = vmatprep.subr.bf16.mxu0 0
  %2585 = vmatpush1.bf16.msra.mxu0 %v1843
  %2586 = vmatprep.subr.bf16.mxu0 0
  %2587 = vmatpush1.bf16.msra.mxu0 %v1844
  %2588 = vmatprep.subr.bf16.mxu0 0
  %2589 = vmatpush1.bf16.msra.mxu0 %v1845
  %2590 = vmatprep.mubr.bf16.mxu0 %v617
  %2591 = vmatmul.mubr.bf16.gmra.mrb[0].mxu0 %v616
  %v2592 = vpop.f32.mrb[0].mxu0
  %v2593 = vadd.f32 %v2553, %v2592
  %v2594 = vpop.f32.mrb[0].mxu0
  %v2595 = vpop.f32.mrb[0].mxu0
  %v2596 = vpop.f32.mrb[0].mxu0
  %2597 = vdwg.mxu0
  %2598 = vmatprep.subr.bf16.mxu0 0
  %2599 = vmatpush1.bf16.msra.mxu0 %v1846
  %2600 = vmatprep.subr.bf16.mxu0 0
  %2601 = vmatpush1.bf16.msra.mxu0 %v1847
  %2602 = vmatprep.subr.bf16.mxu0 0
  %2603 = vmatpush1.bf16.msra.mxu0 %v1848
  %2604 = vmatprep.subr.bf16.mxu0 0
  %2605 = vmatpush1.bf16.msra.mxu0 %v1849
  %2606 = vmatprep.subr.bf16.mxu0 0
  %2607 = vmatpush1.bf16.msra.mxu0 %v1850
  %2608 = vmatprep.subr.bf16.mxu0 0
  %2609 = vmatpush1.bf16.msra.mxu0 %v1851
  %2610 = vmatprep.subr.bf16.mxu0 0
  %2611 = vmatpush1.bf16.msra.mxu0 %v1852
  %2612 = vmatprep.subr.bf16.mxu0 0
  %2613 = vmatpush1.bf16.msra.mxu0 %v1853
  %2614 = vmatprep.subr.bf16.mxu0 0
  %2615 = vmatpush1.bf16.msra.mxu0 %v1854
  %2616 = vmatprep.subr.bf16.mxu0 0
  %2617 = vmatpush1.bf16.msra.mxu0 %v1855
  %2618 = vmatprep.subr.bf16.mxu0 0
  %2619 = vmatpush1.bf16.msra.mxu0 %v1856
  %2620 = vmatprep.subr.bf16.mxu0 0
  %2621 = vmatpush1.bf16.msra.mxu0 %v1857
  %2622 = vmatprep.subr.bf16.mxu0 0
  %2623 = vmatpush1.bf16.msra.mxu0 %v1858
  %2624 = vmatprep.subr.bf16.mxu0 0
  %2625 = vmatpush1.bf16.msra.mxu0 %v1859
  %2626 = vmatprep.subr.bf16.mxu0 0
  %2627 = vmatpush1.bf16.msra.mxu0 %v1860
  %2628 = vmatprep.subr.bf16.mxu0 0
  %2629 = vmatpush1.bf16.msra.mxu0 %v1861
  %2630 = vmatprep.mubr.bf16.mxu0 %v619
  %2631 = vmatmul.mubr.bf16.gmra.mrb[0].mxu0 %v618
  %v2632 = vpop.f32.mrb[0].mxu0
  %v2633 = vadd.f32 %v2593, %v2632
  %v2634 = vpop.f32.mrb[0].mxu0
  %v2635 = vpop.f32.mrb[0].mxu0
  %v2636 = vpop.f32.mrb[0].mxu0
  %2637 = vdwg.mxu0
  %2638 = vmatprep.subr.bf16.mxu0 0
  %2639 = vmatpush1.bf16.msra.mxu0 %v1862
  %2640 = vmatprep.subr.bf16.mxu0 0
  %2641 = vmatpush1.bf16.msra.mxu0 %v1863
  %2642 = vmatprep.subr.bf16.mxu0 0
  %2643 = vmatpush1.bf16.msra.mxu0 %v1864
  %2644 = vmatprep.subr.bf16.mxu0 0
  %2645 = vmatpush1.bf16.msra.mxu0 %v1865
  %2646 = vmatprep.subr.bf16.mxu0 0
  %2647 = vmatpush1.bf16.msra.mxu0 %v1866
  %2648 = vmatprep.subr.bf16.mxu0 0
  %2649 = vmatpush1.bf16.msra.mxu0 %v1867
  %2650 = vmatprep.subr.bf16.mxu0 0
  %2651 = vmatpush1.bf16.msra.mxu0 %v1868
  %2652 = vmatprep.subr.bf16.mxu0 0
  %2653 = vmatpush1.bf16.msra.mxu0 %v1869
  %2654 = vmatprep.subr.bf16.mxu0 0
  %2655 = vmatpush1.bf16.msra.mxu0 %v1870
  %2656 = vmatprep.subr.bf16.mxu0 0
  %2657 = vmatpush1.bf16.msra.mxu0 %v1871
  %2658 = vmatprep.subr.bf16.mxu0 0
  %2659 = vmatpush1.bf16.msra.mxu0 %v1872
  %2660 = vmatprep.subr.bf16.mxu0 0
  %2661 = vmatpush1.bf16.msra.mxu0 %v1873
  %2662 = vmatprep.subr.bf16.mxu0 0
  %2663 = vmatpush1.bf16.msra.mxu0 %v1874
  %2664 = vmatprep.subr.bf16.mxu0 0
  %2665 = vmatpush1.bf16.msra.mxu0 %v1875
  %2666 = vmatprep.subr.bf16.mxu0 0
  %2667 = vmatpush1.bf16.msra.mxu0 %v1876
  %2668 = vmatprep.subr.bf16.mxu0 0
  %2669 = vmatpush1.bf16.msra.mxu0 %v1877
  %2670 = vmatprep.mubr.bf16.mxu0 %v621
  %2671 = vmatmul.mubr.bf16.gmra.mrb[0].mxu0 %v620
  %v2672 = vpop.f32.mrb[0].mxu0
  %v2673 = vadd.f32 %v2633, %v2672
  %v2674 = vpop.f32.mrb[0].mxu0
  %v2675 = vpop.f32.mrb[0].mxu0
  %v2676 = vpop.f32.mrb[0].mxu0
  %2677 = vdwg.mxu0
  %2678 = vmatprep.subr.bf16.mxu0 0
  %2679 = vmatpush1.bf16.msra.mxu0 %v1878
  %2680 = vmatprep.subr.bf16.mxu0 0
  %2681 = vmatpush1.bf16.msra.mxu0 %v1879
  %2682 = vmatprep.subr.bf16.mxu0 0
  %2683 = vmatpush1.bf16.msra.mxu0 %v1880
  %2684 = vmatprep.subr.bf16.mxu0 0
  %2685 = vmatpush1.bf16.msra.mxu0 %v1881
  %2686 = vmatprep.subr.bf16.mxu0 0
  %2687 = vmatpush1.bf16.msra.mxu0 %v1882
  %2688 = vmatprep.subr.bf16.mxu0 0
  %2689 = vmatpush1.bf16.msra.mxu0 %v1883
  %2690 = vmatprep.subr.bf16.mxu0 0
  %2691 = vmatpush1.bf16.msra.mxu0 %v1884
  %2692 = vmatprep.subr.bf16.mxu0 0
  %2693 = vmatpush1.bf16.msra.mxu0 %v1885
  %2694 = vmatprep.subr.bf16.mxu0 0
  %2695 = vmatpush1.bf16.msra.mxu0 %v1886
  %2696 = vmatprep.subr.bf16.mxu0 0
  %2697 = vmatpush1.bf16.msra.mxu0 %v1887
  %2698 = vmatprep.subr.bf16.mxu0 0
  %2699 = vmatpush1.bf16.msra.mxu0 %v1888
  %2700 = vmatprep.subr.bf16.mxu0 0
  %2701 = vmatpush1.bf16.msra.mxu0 %v1889
  %2702 = vmatprep.subr.bf16.mxu0 0
  %2703 = vmatpush1.bf16.msra.mxu0 %v1890
  %2704 = vmatprep.subr.bf16.mxu0 0
  %2705 = vmatpush1.bf16.msra.mxu0 %v1891
  %2706 = vmatprep.subr.bf16.mxu0 0
  %2707 = vmatpush1.bf16.msra.mxu0 %v1892
  %2708 = vmatprep.subr.bf16.mxu0 0
  %2709 = vmatpush1.bf16.msra.mxu0 %v1893
  %2710 = vmatprep.mubr.bf16.mxu0 %v623
  %2711 = vmatmul.mubr.bf16.gmra.mrb[0].mxu0 %v622
  %v2712 = vpop.f32.mrb[0].mxu0
  %v2713 = vadd.f32 %v2673, %v2712
  %v2714 = vpop.f32.mrb[0].mxu0
  %v2715 = vpop.f32.mrb[0].mxu0
  %v2716 = vpop.f32.mrb[0].mxu0
  %2717 = vdwg.mxu0
  %2718 = vmatprep.subr.bf16.mxu0 0
  %2719 = vmatpush1.bf16.msra.mxu0 %v1894
  %2720 = vmatprep.subr.bf16.mxu0 0
  %2721 = vmatpush1.bf16.msra.mxu0 %v1895
  %2722 = vmatprep.subr.bf16.mxu0 0
  %2723 = vmatpush1.bf16.msra.mxu0 %v1896
  %2724 = vmatprep.subr.bf16.mxu0 0
  %2725 = vmatpush1.bf16.msra.mxu0 %v1897
  %2726 = vmatprep.subr.bf16.mxu0 0
  %2727 = vmatpush1.bf16.msra.mxu0 %v1898
  %2728 = vmatprep.subr.bf16.mxu0 0
  %2729 = vmatpush1.bf16.msra.mxu0 %v1899
  %2730 = vmatprep.subr.bf16.mxu0 0
  %2731 = vmatpush1.bf16.msra.mxu0 %v1900
  %2732 = vmatprep.subr.bf16.mxu0 0
  %2733 = vmatpush1.bf16.msra.mxu0 %v1901
  %2734 = vmatprep.subr.bf16.mxu0 0
  %2735 = vmatpush1.bf16.msra.mxu0 %v1902
  %2736 = vmatprep.subr.bf16.mxu0 0
  %2737 = vmatpush1.bf16.msra.mxu0 %v1903
  %2738 = vmatprep.subr.bf16.mxu0 0
  %2739 = vmatpush1.bf16.msra.mxu0 %v1904
  %2740 = vmatprep.subr.bf16.mxu0 0
  %2741 = vmatpush1.bf16.msra.mxu0 %v1905
  %2742 = vmatprep.subr.bf16.mxu0 0
  %2743 = vmatpush1.bf16.msra.mxu0 %v1906
  %2744 = vmatprep.subr.bf16.mxu0 0
  %2745 = vmatpush1.bf16.msra.mxu0 %v1907
  %2746 = vmatprep.subr.bf16.mxu0 0
  %2747 = vmatpush1.bf16.msra.mxu0 %v1908
  %2748 = vmatprep.subr.bf16.mxu0 0
  %2749 = vmatpush1.bf16.msra.mxu0 %v1909
  %2750 = vmatprep.mubr.bf16.mxu0 %v625
  %2751 = vmatmul.mubr.bf16.gmra.mrb[0].mxu0 %v624
  %v2752 = vpop.f32.mrb[0].mxu0
  %v2753 = vadd.f32 %v2713, %v2752
  %v2754 = vpop.f32.mrb[0].mxu0
  %v2755 = vpop.f32.mrb[0].mxu0
  %v2756 = vpop.f32.mrb[0].mxu0
  %2757 = vdwg.mxu0
  %2758 = vmatprep.subr.bf16.mxu0 0
  %2759 = vmatpush1.bf16.msra.mxu0 %v1910
  %2760 = vmatprep.subr.bf16.mxu0 0
  %2761 = vmatpush1.bf16.msra.mxu0 %v1911
  %2762 = vmatprep.subr.bf16.mxu0 0
  %2763 = vmatpush1.bf16.msra.mxu0 %v1912
  %2764 = vmatprep.subr.bf16.mxu0 0
  %2765 = vmatpush1.bf16.msra.mxu0 %v1913
  %2766 = vmatprep.subr.bf16.mxu0 0
  %2767 = vmatpush1.bf16.msra.mxu0 %v1914
  %2768 = vmatprep.subr.bf16.mxu0 0
  %2769 = vmatpush1.bf16.msra.mxu0 %v1915
  %2770 = vmatprep.subr.bf16.mxu0 0
  %2771 = vmatpush1.bf16.msra.mxu0 %v1916
  %2772 = vmatprep.subr.bf16.mxu0 0
  %2773 = vmatpush1.bf16.msra.mxu0 %v1917
  %2774 = vmatprep.subr.bf16.mxu0 0
  %2775 = vmatpush1.bf16.msra.mxu0 %v1918
  %2776 = vmatprep.subr.bf16.mxu0 0
  %2777 = vmatpush1.bf16.msra.mxu0 %v1919
  %2778 = vmatprep.subr.bf16.mxu0 0
  %2779 = vmatpush1.bf16.msra.mxu0 %v1920
  %2780 = vmatprep.subr.bf16.mxu0 0
  %2781 = vmatpush1.bf16.msra.mxu0 %v1921
  %2782 = vmatprep.subr.bf16.mxu0 0
  %2783 = vmatpush1.bf16.msra.mxu0 %v1922
  %2784 = vmatprep.subr.bf16.mxu0 0
  %2785 = vmatpush1.bf16.msra.mxu0 %v1923
  %2786 = vmatprep.subr.bf16.mxu0 0
  %2787 = vmatpush1.bf16.msra.mxu0 %v1924
  %2788 = vmatprep.subr.bf16.mxu0 0
  %2789 = vmatpush1.bf16.msra.mxu0 %v1925
  %2790 = vmatprep.mubr.bf16.mxu0 %v627
  %2791 = vmatmul.mubr.bf16.gmra.mrb[0].mxu0 %v626
  %v2792 = vpop.f32.mrb[0].mxu0
  %v2793 = vadd.f32 %v2753, %v2792
  %v2794 = vpop.f32.mrb[0].mxu0
  %v2795 = vpop.f32.mrb[0].mxu0
  %v2796 = vpop.f32.mrb[0].mxu0
  %2797 = vdwg.mxu0
  %2798 = vmatprep.subr.bf16.mxu0 0
  %2799 = vmatpush1.bf16.msra.mxu0 %v1926
  %2800 = vmatprep.subr.bf16.mxu0 0
  %2801 = vmatpush1.bf16.msra.mxu0 %v1927
  %2802 = vmatprep.subr.bf16.mxu0 0
  %2803 = vmatpush1.bf16.msra.mxu0 %v1928
  %2804 = vmatprep.subr.bf16.mxu0 0
  %2805 = vmatpush1.bf16.msra.mxu0 %v1929
  %2806 = vmatprep.subr.bf16.mxu0 0
  %2807 = vmatpush1.bf16.msra.mxu0 %v1930
  %2808 = vmatprep.subr.bf16.mxu0 0
  %2809 = vmatpush1.bf16.msra.mxu0 %v1931
  %2810 = vmatprep.subr.bf16.mxu0 0
  %2811 = vmatpush1.bf16.msra.mxu0 %v1932
  %2812 = vmatprep.subr.bf16.mxu0 0
  %2813 = vmatpush1.bf16.msra.mxu0 %v1933
  %2814 = vmatprep.subr.bf16.mxu0 0
  %2815 = vmatpush1.bf16.msra.mxu0 %v1934
  %2816 = vmatprep.subr.bf16.mxu0 0
  %2817 = vmatpush1.bf16.msra.mxu0 %v1935
  %2818 = vmatprep.subr.bf16.mxu0 0
  %2819 = vmatpush1.bf16.msra.mxu0 %v1936
  %2820 = vmatprep.subr.bf16.mxu0 0
  %2821 = vmatpush1.bf16.msra.mxu0 %v1937
  %2822 = vmatprep.subr.bf16.mxu0 0
  %2823 = vmatpush1.bf16.msra.mxu0 %v1938
  %2824 = vmatprep.subr.bf16.mxu0 0
  %2825 = vmatpush1.bf16.msra.mxu0 %v1939
  %2826 = vmatprep.subr.bf16.mxu0 0
  %2827 = vmatpush1.bf16.msra.mxu0 %v1940
  %2828 = vmatprep.subr.bf16.mxu0 0
  %2829 = vmatpush1.bf16.msra.mxu0 %v1941
  %2830 = vmatprep.mubr.bf16.mxu0 %v629
  %2831 = vmatmul.mubr.bf16.gmra.mrb[0].mxu0 %v628
  %v2832 = vpop.f32.mrb[0].mxu0
  %v2833 = vadd.f32 %v2793, %v2832
  %v2834 = vpop.f32.mrb[0].mxu0
  %v2835 = vpop.f32.mrb[0].mxu0
  %v2836 = vpop.f32.mrb[0].mxu0
  %2837 = vdwg.mxu0
  %2838 = vst [vmem:[%s3] sm:$0xff] %v2833
  // Predicated region
  $region14: #{discriminator_forward.7} parent=0 // pred_check
    _
  $region15: #{discriminator_forward.7} parent=0 // pred_check_branch
    %2840 = sbr.rel (0) target = $region17
  $region16: #{discriminator_forward.7} parent=0 // pred_region
    _
  $region17: #{discriminator_forward.7} parent=0 // pred_fallthru
    _
  // Predicated region
  $region18: #{discriminator_forward.7} parent=0 // pred_check
    _
  $region19: #{discriminator_forward.7} parent=0 // pred_check_branch
    %2842 = sbr.rel (0) target = $region21
  $region20: #{discriminator_forward.7} parent=0 // pred_region
    _
  $region21: #{discriminator_forward.7} parent=0 // pred_fallthru
    _

</llo_original>
